<compile_context>
chip_gen: v6e
topology: v6e:2x2x1
jax: 0.10.0
libtpu: 0.0.40
codegen_flags: <defaults>
</compile_context>

<pallas_src>
import functools
import math

import jax
import jax.numpy as jnp
from jax import lax
from jax.experimental import pallas as pl
from jax.experimental.pallas import tpu as pltpu

C_IN = 512    # input feature channels of CrossAttentionHead
C_MID = 256   # spatial-attention bottleneck channels
C_HID = 32    # channel-attention hidden size

# layout of the packed "small params" slab: one (SMALL_ROWS, C_IN) block / head
ROW_WL1T = 0             # rows [ 0,32) : Linear(512->32) weight, transposed
ROW_WL2 = C_HID          # rows [32,64) : Linear(32->512) weight
ROW_B1 = 2 * C_HID       # row 64       : folded 1x1-conv bias (first C_MID lanes)
ROW_BSUM = ROW_B1 + 1    # row 65       : folded summed conv bias
ROW_BL1 = ROW_B1 + 2     # row 66       : folded Linear+BN1d bias (first C_HID lanes)
ROW_BL2 = ROW_B1 + 3     # row 67       : second Linear bias
SMALL_ROWS = 72          # padded to a multiple of 8 sublanes


def _head_kernel(B, H, W, xf_ref, xb_ref, w1_ref, weff_ref, small_ref, ca_ref,
                 ypad_ref, col_ref):
    """One grid step == one CrossAttentionHead.forward.  Grid axis = head."""
    BHW = B * H * W
    HW = H * W

    # ---------------- SpatialAttention ----------------
    # 1x1 conv (+ folded BN2d); bf16 operands (x cast hoisted to the host),
    # f32 accumulation on the MXU.
    b1 = small_ref[ROW_B1:ROW_B1 + 1, :C_MID]
    y = jnp.dot(xb_ref[...], w1_ref[...],
                preferred_element_type=jnp.float32) + b1       # (BHW, 256) f32

    # bf16 zero-padded staging buffer; only the halo needs zeroing (the
    # interior is fully overwritten every head).  Tap slices below only read
    # columns [dw, dw+W) subset of [0, W+2), so the unzeroed staging columns
    # W+2 .. Wp-1 are never read (see assert in the wrapper).
    # TODO(synk): zero the halo once per core when a guaranteed-initialized
    # per-core flag is available (program_id==0 is wrong under 'parallel').
    Wp = ypad_ref.shape[2]
    zrow = jnp.zeros((B, 1, Wp, C_MID), jnp.bfloat16)
    zcol = jnp.zeros((B, H + 2, 1, C_MID), jnp.bfloat16)
    ypad_ref[:, 0:1, :, :] = zrow
    ypad_ref[:, H + 1:H + 2, :, :] = zrow
    ypad_ref[:, :, 0:1, :] = zcol
    ypad_ref[:, :, W + 1:W + 2, :] = zcol
    ypad_ref[:, 1:1 + H, 1:1 + W, :] = (
        y.astype(jnp.bfloat16).reshape(B, H, W, C_MID))

    # im2col: 9 spatially shifted bf16 copies -> one (BHW, 9*C_MID) matrix.
    # TODO(synk): build taps straight from `y` with pltpu.roll + edge masks
    # (and per-tap MRB accumulation on v7x) to drop this staging entirely.
    for dh in range(3):
        for dw in range(3):
            tap = dh * 3 + dw
            col_ref[:, tap * C_MID:(tap + 1) * C_MID] = (
                ypad_ref[:, dh:dh + H, dw:dw + W, :].reshape(BHW, C_MID))

    # fused 3x3 + 1x3 + 3x1 convs (+ folded BN2d's): one big-K MXU matmul,
    # accumulator produced once instead of once per tap.
    # TODO(synk): int8 (v5e/v6e) / fp8 (v7x) weff with per-output-channel
    # scales would halve the dominant weight DMA; needs tolerance revalidation.
    bsum = small_ref[ROW_BSUM:ROW_BSUM + 1, :]
    z = jnp.dot(col_ref[...], weff_ref[...],
                preferred_element_type=jnp.float32) + bsum     # (BHW, 512)
    z = jnp.maximum(z, 0.0)                                    # ReLU
    s = jnp.sum(z, axis=-1, keepdims=True)                     # (BHW, 1)

    # ---------------- ChannelAttention ----------------
    # gap = AdaptiveAvgPool2d(1)(x * s) with the multiply fused into the
    # pooling reduction per batch image (no (BHW, 512) f32 sa materialization).
    gap_rows = []
    for b in range(B):
        x_img = xf_ref[b * HW:(b + 1) * HW, :]                 # (HW, 512) f32
        s_img = s[b * HW:(b + 1) * HW, :]                      # (HW, 1)   f32
        gap_rows.append(jnp.sum(x_img * s_img, axis=0, keepdims=True))
    gap = jnp.concatenate(gap_rows, axis=0) * (1.0 / HW)       # (B, 512)

    wl1t = small_ref[ROW_WL1T:ROW_WL1T + C_HID, :]             # (32, 512)
    wl2 = small_ref[ROW_WL2:ROW_WL2 + C_HID, :]                # (32, 512)
    bl1 = small_ref[ROW_BL1:ROW_BL1 + 1, :C_HID]
    bl2 = small_ref[ROW_BL2:ROW_BL2 + 1, :]
    # Linear(512->32) with the weight stored transposed (NT matmul) + BN1d + ReLU
    h1 = lax.dot_general(gap, wl1t, (((1,), (1,)), ((), ())),
                         preferred_element_type=jnp.float32) + bl1
    h1 = jnp.maximum(h1, 0.0)
    h2 = jnp.dot(h1, wl2, preferred_element_type=jnp.float32) + bl2
    att = 1.0 / (1.0 + jnp.exp(-h2))                           # Sigmoid
    ca_ref[...] = gap * att                                    # (B, 512)


def cross_attention_heads(x_nchw, params, num_head):
    """Runs `num_head` CrossAttentionHead forwards; returns (B, num_head, 512)."""
    B, C, H, W = x_nchw.shape
    assert C == C_IN
    x_nhwc = jnp.transpose(x_nchw, (0, 2, 3, 1)).astype(jnp.float32)   # NHWC
    BHW = B * H * W
    xf = x_nhwc.reshape(BHW, C_IN)                 # f32, for the fused GAP
    xb = xf.astype(jnp.bfloat16)                   # bf16 MXU operand (hoisted cast)
    w1, weff, small = params

    Wp = ((W + 2 + 15) // 16) * 16                 # bf16 sublane tiling of staging W
    assert Wp >= W + 2, "tap slices read staging columns [0, W+2)"

    kernel = functools.partial(_head_kernel, B, H, W)
    grid_spec = pltpu.PrefetchScalarGridSpec(
        num_scalar_prefetch=0,
        grid=(num_head,),
        in_specs=[
            pl.BlockSpec((BHW, C_IN), lambda h: (0, 0)),                  # x f32 (head-invariant)
            pl.BlockSpec((BHW, C_IN), lambda h: (0, 0)),                  # x bf16 (head-invariant)
            pl.BlockSpec((None, C_IN, C_MID), lambda h: (h, 0, 0)),       # 1x1 conv w (bf16)
            pl.BlockSpec((None, 9 * C_MID, C_IN), lambda h: (h, 0, 0)),   # folded conv w (bf16)
            pl.BlockSpec((None, SMALL_ROWS, C_IN), lambda h: (h, 0, 0)),  # packed small params
        ],
        out_specs=pl.BlockSpec((None, B, C_IN), lambda h: (h, 0, 0)),     # per-head ca
        scratch_shapes=[
            pltpu.VMEM((B, H + 2, Wp, C_MID), jnp.bfloat16),  # padded conv staging (bf16)
            pltpu.VMEM((BHW, 9 * C_MID), jnp.bfloat16),       # im2col buffer (bf16)
        ],
    )
    # Advisory cost estimate so XLA overlaps the transpose / epilogue with the kernel.
    flops = num_head * (2 * BHW * C_IN * C_MID            # 1x1 conv
                        + 2 * BHW * 9 * C_MID * C_IN      # fused 3x3/1x3/3x1 convs
                        + 2 * BHW * C_IN                  # fused x*s GAP reduction
                        + 2 * B * C_IN * C_HID * 2)       # channel-attention linears
    bytes_accessed = (BHW * C_IN * (4 + 2)                # x f32 + x bf16 (once)
                      + num_head * (C_IN * C_MID * 2      # w1 bf16
                                    + 9 * C_MID * C_IN * 2  # weff bf16
                                    + SMALL_ROWS * C_IN * 4  # small params
                                    + B * C_IN * 4))      # per-head output
    cost = pl.CostEstimate(flops=flops,
                           transcendentals=num_head * B * C_IN,
                           bytes_accessed=bytes_accessed)

    ca_hb = pl.pallas_call(
        kernel,
        out_shape=jax.ShapeDtypeStruct((num_head, B, C_IN), jnp.float32),
        grid_spec=grid_spec,
        compiler_params=pltpu.CompilerParams(
            dimension_semantics=("parallel",)),   # heads shard across TCs on v7x
        cost_estimate=cost,
    )(xf, xb, w1, weff, small)
    return jnp.transpose(ca_hb, (1, 0, 2))        # (B, num_head, 512)


def dan_forward(x_nchw, params, num_head):
    """DAN-level glue around the heads: log_softmax fusion as a JAX epilogue."""
    ca = cross_attention_heads(x_nchw, params, num_head)      # (B, num_head, 512)
    heads = jax.nn.log_softmax(ca, axis=1) if num_head > 1 else ca
    out = jnp.sum(heads, axis=1)
    return out, x_nchw, heads


def init_params(key, num_head):
    """Synthetic init matching CrossAttentionHead.init_weights.

    Kaiming-normal(fan_out) convs with zero bias, Linear std=0.001 zero bias,
    BatchNorm gamma=1 beta=0 mean=0 var=1 -> eval-mode fold is a per-channel
    scale of 1/sqrt(1+eps).  Conv weights are rounded to bf16 (shared by the
    kernel and the f32 reference); the 1x3 / 3x1 kernels are folded into the
    3x3 tap stack exactly.
    """
    eps = 1e-5
    bn_scale = 1.0 / math.sqrt(1.0 + eps)
    head_keys = jax.random.split(key, num_head)

    def q(w):   # quantize to bf16, keep an f32 container for the reference
        return w.astype(jnp.bfloat16).astype(jnp.float32)

    ref_params = []
    w1_l, weff_l, small_l = [], [], []
    for h in range(num_head):
        k = jax.random.split(head_keys[h], 6)
        w1 = q(jax.random.normal(k[0], (1, 1, C_IN, C_MID), jnp.float32)
               * math.sqrt(2.0 / (C_MID * 1 * 1)) * bn_scale)
        w33 = q(jax.random.normal(k[1], (3, 3, C_MID, C_IN), jnp.float32)
                * math.sqrt(2.0 / (C_IN * 9)) * bn_scale)
        w13 = q(jax.random.normal(k[2], (1, 3, C_MID, C_IN), jnp.float32)
                * math.sqrt(2.0 / (C_IN * 3)) * bn_scale)
        w31 = q(jax.random.normal(k[3], (3, 1, C_MID, C_IN), jnp.float32)
                * math.sqrt(2.0 / (C_IN * 3)) * bn_scale)
        wl1 = jax.random.normal(k[4], (C_IN, C_HID), jnp.float32) * 0.001 * bn_scale
        wl2 = jax.random.normal(k[5], (C_HID, C_IN), jnp.float32) * 0.001
        ref_params.append(dict(w1=w1, w33=w33, w13=w13, w31=w31, wl1=wl1, wl2=wl2))

        # exact fold of the 1x3 / 3x1 kernels into the 3x3 tap stack
        w_eff = w33
        w_eff = w_eff.at[1, :, :, :].add(w13[0])        # dh == 1 row
        w_eff = w_eff.at[:, 1, :, :].add(w31[:, 0])     # dw == 1 column
        w1_l.append(w1.reshape(C_IN, C_MID).astype(jnp.bfloat16))
        weff_l.append(w_eff.reshape(9 * C_MID, C_IN).astype(jnp.bfloat16))

        # packed small per-head params (bias rows stay zero for this BN init)
        small = jnp.zeros((SMALL_ROWS, C_IN), jnp.float32)
        small = small.at[ROW_WL1T:ROW_WL1T + C_HID, :].set(wl1.T)
        small = small.at[ROW_WL2:ROW_WL2 + C_HID, :].set(wl2)
        small_l.append(small)

    packed = (jnp.stack(w1_l), jnp.stack(weff_l), jnp.stack(small_l))
    return packed, ref_params


def ref_forward(x_nchw, ref_params, num_head):
    """Pure-JAX f32 reference (lax.conv, unfused 3x3/1x3/3x1 path)."""
    x = jnp.transpose(x_nchw, (0, 2, 3, 1)).astype(jnp.float32)
    dn = ('NHWC', 'HWIO', 'NHWC')
    prec = lax.Precision.HIGHEST

    def conv(a, w, pad):
        return lax.conv_general_dilated(a, w, (1, 1), pad,
                                        dimension_numbers=dn, precision=prec)

    cas = []
    for h in range(num_head):
        p = ref_params[h]
        y = conv(x, p['w1'], [(0, 0), (0, 0)])
        z = (conv(y, p['w33'], [(1, 1), (1, 1)])
             + conv(y, p['w13'], [(0, 0), (1, 1)])
             + conv(y, p['w31'], [(1, 1), (0, 0)]))
        z = jnp.maximum(z, 0.0)
        s = jnp.sum(z, axis=-1, keepdims=True)
        sa = x * s
        gap = jnp.mean(sa, axis=(1, 2))
        h1 = jnp.maximum(jnp.dot(gap, p['wl1'], precision=prec), 0.0)
        att = jax.nn.sigmoid(jnp.dot(h1, p['wl2'], precision=prec))
        cas.append(gap * att)
    return jnp.stack(cas, axis=1)                         # (B, num_head, 512)


if __name__ == "__main__":
    num_head = 4
    B, H, W = 2, 8, 8                                     # feature map (B, 512, 8, 8)

    key = jax.random.PRNGKey(0)
    kx, kp = jax.random.split(key)
    x_nchw = jax.random.normal(kx, (B, C_IN, H, W), jnp.float32)
    params, ref_params = init_params(kp, num_head)

    ca = cross_attention_heads(x_nchw, params, num_head)
    out, feat, heads = dan_forward(x_nchw, params, num_head)
    jax.block_until_ready((ca, out, heads))

    assert ca.shape == (B, num_head, C_IN)
    assert out.shape == (B, C_IN)
    assert feat.shape == (B, C_IN, H, W)
    assert heads.shape == (B, num_head, C_IN)

    # Reference on the same (bf16-rounded) weights, f32 activations.
    ca_r = ref_forward(x_nchw, ref_params, num_head)
    heads_r = jax.nn.log_softmax(ca_r, axis=1) if num_head > 1 else ca_r
    out_r = jnp.sum(heads_r, axis=1)

    # Kernel feeds bf16 operands to the MXU while the reference keeps f32
    # activations, so tolerances are set for bf16.
    assert jnp.allclose(ca, ca_r, rtol=2e-2, atol=3e-1), \
        float(jnp.max(jnp.abs(ca - ca_r)))
    assert jnp.allclose(heads, heads_r, rtol=2e-2, atol=5e-1), \
        float(jnp.max(jnp.abs(heads - heads_r)))
    assert jnp.allclose(out, out_r, rtol=2e-2, atol=1.0), \
        float(jnp.max(jnp.abs(out - out_r)))

    print("KERNEL_OK")
</pallas_src>

<mosaic_0001>
module attributes {stable_mosaic.version = 11 : i64} {
  func.func @_head_kernel(%arg0: i32, %arg1: memref<128x512xf32, #tpu.memory_space<vmem>>, %arg2: memref<128x512xbf16, #tpu.memory_space<vmem>>, %arg3: memref<1x512x256xbf16, #tpu.memory_space<vmem>>, %arg4: memref<1x2304x512xbf16, #tpu.memory_space<vmem>>, %arg5: memref<1x72x512xf32, #tpu.memory_space<vmem>>, %arg6: memref<1x2x512xf32, #tpu.memory_space<vmem>>, %arg7: memref<2x10x16x256xbf16, #tpu.memory_space<vmem>>, %arg8: memref<128x2304xbf16, #tpu.memory_space<vmem>>) attributes {dimension_semantics = [#tpu.dimension_semantics<parallel>], iteration_bounds = array<i64: 4>, scalar_prefetch = 0 : i64, scratch_operands = 2 : i64, tpu.core_type = #tpu.core_type<tc>, window_params = [{pipeline_mode = #tpu.pipeline_mode<synchronous>, transform_indices = @transform_0, window_bounds = array<i64: 128, 512>}, {pipeline_mode = #tpu.pipeline_mode<synchronous>, transform_indices = @transform_1, window_bounds = array<i64: 128, 512>}, {transform_indices = @transform_2, window_bounds = array<i64: 1, 512, 256>}, {transform_indices = @transform_3, window_bounds = array<i64: 1, 2304, 512>}, {transform_indices = @transform_4, window_bounds = array<i64: 1, 72, 512>}, {transform_indices = @transform_5, window_bounds = array<i64: 1, 2, 512>}]} {
    %c0 = arith.constant 0 : index
    %c64 = arith.constant 64 : index
    %c0_0 = arith.constant 0 : index
    %0 = vector.load %arg5[%c0, %c64, %c0_0] : memref<1x72x512xf32, #tpu.memory_space<vmem>>, vector<1x1x256xf32>
    %1 = vector.shape_cast %0 : vector<1x1x256xf32> to vector<1x256xf32>
    %c0_1 = arith.constant 0 : index
    %c0_2 = arith.constant 0 : index
    %2 = vector.load %arg2[%c0_1, %c0_2] : memref<128x512xbf16, #tpu.memory_space<vmem>>, vector<128x512xbf16>
    %c0_3 = arith.constant 0 : index
    %c0_4 = arith.constant 0 : index
    %c0_5 = arith.constant 0 : index
    %3 = vector.load %arg3[%c0_3, %c0_4, %c0_5] : memref<1x512x256xbf16, #tpu.memory_space<vmem>>, vector<1x512x256xbf16>
    %4 = vector.shape_cast %3 : vector<1x512x256xbf16> to vector<512x256xbf16>
    %cst = arith.constant dense<0.000000e+00> : vector<128x256xf32>
    %5 = tpu.matmul %2, %4, %cst {dimension_numbers = #tpu.dot_dimension_numbers<[1], [0], [0], [1], [0, 0, 1, 1], [], []>} : vector<128x512xbf16>, vector<512x256xbf16>, vector<128x256xf32> -> vector<128x256xf32>
    %6 = vector.broadcast %1 : vector<1x256xf32> to vector<128x256xf32>
    %7 = arith.addf %5, %6 : vector<128x256xf32>
    %cst_6 = arith.constant 0.000000e+00 : bf16
    %8 = vector.broadcast %cst_6 : bf16 to vector<2x1x16x256xbf16>
    %cst_7 = arith.constant 0.000000e+00 : bf16
    %9 = vector.broadcast %cst_7 : bf16 to vector<2x10x1x256xbf16>
    %c0_8 = arith.constant 0 : index
    %c0_9 = arith.constant 0 : index
    %c0_10 = arith.constant 0 : index
    %c0_11 = arith.constant 0 : index
    %10 = vector.load %arg7[%c0_8, %c0_9, %c0_10, %c0_11] : memref<2x10x16x256xbf16, #tpu.memory_space<vmem>>, vector<2x1x16x256xbf16>
    tpu.vector_store %arg7[%c0_8, %c0_9, %c0_10, %c0_11], %8 {strides = array<i32>} : memref<2x10x16x256xbf16, #tpu.memory_space<vmem>>, vector<2x1x16x256xbf16>,
    %c0_12 = arith.constant 0 : index
    %c9 = arith.constant 9 : index
    %c0_13 = arith.constant 0 : index
    %c0_14 = arith.constant 0 : index
    %11 = vector.load %arg7[%c0_12, %c9, %c0_13, %c0_14] : memref<2x10x16x256xbf16, #tpu.memory_space<vmem>>, vector<2x1x16x256xbf16>
    tpu.vector_store %arg7[%c0_12, %c9, %c0_13, %c0_14], %8 {strides = array<i32>} : memref<2x10x16x256xbf16, #tpu.memory_space<vmem>>, vector<2x1x16x256xbf16>,
    %c0_15 = arith.constant 0 : index
    %c0_16 = arith.constant 0 : index
    %c0_17 = arith.constant 0 : index
    %c0_18 = arith.constant 0 : index
    %12 = vector.load %arg7[%c0_15, %c0_16, %c0_17, %c0_18] : memref<2x10x16x256xbf16, #tpu.memory_space<vmem>>, vector<2x10x1x256xbf16>
    tpu.vector_store %arg7[%c0_15, %c0_16, %c0_17, %c0_18], %9 {strides = array<i32>} : memref<2x10x16x256xbf16, #tpu.memory_space<vmem>>, vector<2x10x1x256xbf16>,
    %c0_19 = arith.constant 0 : index
    %c0_20 = arith.constant 0 : index
    %c9_21 = arith.constant 9 : index
    %c0_22 = arith.constant 0 : index
    %13 = vector.load %arg7[%c0_19, %c0_20, %c9_21, %c0_22] : memref<2x10x16x256xbf16, #tpu.memory_space<vmem>>, vector<2x10x1x256xbf16>
    tpu.vector_store %arg7[%c0_19, %c0_20, %c9_21, %c0_22], %9 {strides = array<i32>} : memref<2x10x16x256xbf16, #tpu.memory_space<vmem>>, vector<2x10x1x256xbf16>,
    %14 = arith.truncf %7 : vector<128x256xf32> to vector<128x256xbf16>
    %15 = vector.shape_cast %14 : vector<128x256xbf16> to vector<2x8x8x256xbf16>
    %c0_23 = arith.constant 0 : index
    %c1 = arith.constant 1 : index
    %c1_24 = arith.constant 1 : index
    %c0_25 = arith.constant 0 : index
    %16 = vector.load %arg7[%c0_23, %c1, %c1_24, %c0_25] : memref<2x10x16x256xbf16, #tpu.memory_space<vmem>>, vector<2x8x8x256xbf16>
    tpu.vector_store %arg7[%c0_23, %c1, %c1_24, %c0_25], %15 {strides = array<i32>} : memref<2x10x16x256xbf16, #tpu.memory_space<vmem>>, vector<2x8x8x256xbf16>,
    %c0_26 = arith.constant 0 : index
    %c0_27 = arith.constant 0 : index
    %c0_28 = arith.constant 0 : index
    %c0_29 = arith.constant 0 : index
    %17 = vector.load %arg7[%c0_26, %c0_27, %c0_28, %c0_29] : memref<2x10x16x256xbf16, #tpu.memory_space<vmem>>, vector<2x8x8x256xbf16>
    %18 = vector.shape_cast %17 : vector<2x8x8x256xbf16> to vector<128x256xbf16>
    %c0_30 = arith.constant 0 : index
    %c0_31 = arith.constant 0 : index
    %19 = vector.load %arg8[%c0_30, %c0_31] : memref<128x2304xbf16, #tpu.memory_space<vmem>>, vector<128x256xbf16>
    tpu.vector_store %arg8[%c0_30, %c0_31], %18 {strides = array<i32>} : memref<128x2304xbf16, #tpu.memory_space<vmem>>, vector<128x256xbf16>,
    %c0_32 = arith.constant 0 : index
    %c0_33 = arith.constant 0 : index
    %c1_34 = arith.constant 1 : index
    %c0_35 = arith.constant 0 : index
    %20 = vector.load %arg7[%c0_32, %c0_33, %c1_34, %c0_35] : memref<2x10x16x256xbf16, #tpu.memory_space<vmem>>, vector<2x8x8x256xbf16>
    %21 = vector.shape_cast %20 : vector<2x8x8x256xbf16> to vector<128x256xbf16>
    %c0_36 = arith.constant 0 : index
    %c256 = arith.constant 256 : index
    %22 = vector.load %arg8[%c0_36, %c256] : memref<128x2304xbf16, #tpu.memory_space<vmem>>, vector<128x256xbf16>
    tpu.vector_store %arg8[%c0_36, %c256], %21 {strides = array<i32>} : memref<128x2304xbf16, #tpu.memory_space<vmem>>, vector<128x256xbf16>,
    %c0_37 = arith.constant 0 : index
    %c0_38 = arith.constant 0 : index
    %c2 = arith.constant 2 : index
    %c0_39 = arith.constant 0 : index
    %23 = vector.load %arg7[%c0_37, %c0_38, %c2, %c0_39] : memref<2x10x16x256xbf16, #tpu.memory_space<vmem>>, vector<2x8x8x256xbf16>
    %24 = vector.shape_cast %23 : vector<2x8x8x256xbf16> to vector<128x256xbf16>
    %c0_40 = arith.constant 0 : index
    %c512 = arith.constant 512 : index
    %25 = vector.load %arg8[%c0_40, %c512] : memref<128x2304xbf16, #tpu.memory_space<vmem>>, vector<128x256xbf16>
    tpu.vector_store %arg8[%c0_40, %c512], %24 {strides = array<i32>} : memref<128x2304xbf16, #tpu.memory_space<vmem>>, vector<128x256xbf16>,
    %c0_41 = arith.constant 0 : index
    %c1_42 = arith.constant 1 : index
    %c0_43 = arith.constant 0 : index
    %c0_44 = arith.constant 0 : index
    %26 = vector.load %arg7[%c0_41, %c1_42, %c0_43, %c0_44] : memref<2x10x16x256xbf16, #tpu.memory_space<vmem>>, vector<2x8x8x256xbf16>
    %27 = vector.shape_cast %26 : vector<2x8x8x256xbf16> to vector<128x256xbf16>
    %c0_45 = arith.constant 0 : index
    %c768 = arith.constant 768 : index
    %28 = vector.load %arg8[%c0_45, %c768] : memref<128x2304xbf16, #tpu.memory_space<vmem>>, vector<128x256xbf16>
    tpu.vector_store %arg8[%c0_45, %c768], %27 {strides = array<i32>} : memref<128x2304xbf16, #tpu.memory_space<vmem>>, vector<128x256xbf16>,
    %c0_46 = arith.constant 0 : index
    %c1_47 = arith.constant 1 : index
    %c1_48 = arith.constant 1 : index
    %c0_49 = arith.constant 0 : index
    %29 = vector.load %arg7[%c0_46, %c1_47, %c1_48, %c0_49] : memref<2x10x16x256xbf16, #tpu.memory_space<vmem>>, vector<2x8x8x256xbf16>
    %30 = vector.shape_cast %29 : vector<2x8x8x256xbf16> to vector<128x256xbf16>
    %c0_50 = arith.constant 0 : index
    %c1024 = arith.constant 1024 : index
    %31 = vector.load %arg8[%c0_50, %c1024] : memref<128x2304xbf16, #tpu.memory_space<vmem>>, vector<128x256xbf16>
    tpu.vector_store %arg8[%c0_50, %c1024], %30 {strides = array<i32>} : memref<128x2304xbf16, #tpu.memory_space<vmem>>, vector<128x256xbf16>,
    %c0_51 = arith.constant 0 : index
    %c1_52 = arith.constant 1 : index
    %c2_53 = arith.constant 2 : index
    %c0_54 = arith.constant 0 : index
    %32 = vector.load %arg7[%c0_51, %c1_52, %c2_53, %c0_54] : memref<2x10x16x256xbf16, #tpu.memory_space<vmem>>, vector<2x8x8x256xbf16>
    %33 = vector.shape_cast %32 : vector<2x8x8x256xbf16> to vector<128x256xbf16>
    %c0_55 = arith.constant 0 : index
    %c1280 = arith.constant 1280 : index
    %34 = vector.load %arg8[%c0_55, %c1280] : memref<128x2304xbf16, #tpu.memory_space<vmem>>, vector<128x256xbf16>
    tpu.vector_store %arg8[%c0_55, %c1280], %33 {strides = array<i32>} : memref<128x2304xbf16, #tpu.memory_space<vmem>>, vector<128x256xbf16>,
    %c0_56 = arith.constant 0 : index
    %c2_57 = arith.constant 2 : index
    %c0_58 = arith.constant 0 : index
    %c0_59 = arith.constant 0 : index
    %35 = vector.load %arg7[%c0_56, %c2_57, %c0_58, %c0_59] : memref<2x10x16x256xbf16, #tpu.memory_space<vmem>>, vector<2x8x8x256xbf16>
    %36 = vector.shape_cast %35 : vector<2x8x8x256xbf16> to vector<128x256xbf16>
    %c0_60 = arith.constant 0 : index
    %c1536 = arith.constant 1536 : index
    %37 = vector.load %arg8[%c0_60, %c1536] : memref<128x2304xbf16, #tpu.memory_space<vmem>>, vector<128x256xbf16>
    tpu.vector_store %arg8[%c0_60, %c1536], %36 {strides = array<i32>} : memref<128x2304xbf16, #tpu.memory_space<vmem>>, vector<128x256xbf16>,
    %c0_61 = arith.constant 0 : index
    %c2_62 = arith.constant 2 : index
    %c1_63 = arith.constant 1 : index
    %c0_64 = arith.constant 0 : index
    %38 = vector.load %arg7[%c0_61, %c2_62, %c1_63, %c0_64] : memref<2x10x16x256xbf16, #tpu.memory_space<vmem>>, vector<2x8x8x256xbf16>
    %39 = vector.shape_cast %38 : vector<2x8x8x256xbf16> to vector<128x256xbf16>
    %c0_65 = arith.constant 0 : index
    %c1792 = arith.constant 1792 : index
    %40 = vector.load %arg8[%c0_65, %c1792] : memref<128x2304xbf16, #tpu.memory_space<vmem>>, vector<128x256xbf16>
    tpu.vector_store %arg8[%c0_65, %c1792], %39 {strides = array<i32>} : memref<128x2304xbf16, #tpu.memory_space<vmem>>, vector<128x256xbf16>,
    %c0_66 = arith.constant 0 : index
    %c2_67 = arith.constant 2 : index
    %c2_68 = arith.constant 2 : index
    %c0_69 = arith.constant 0 : index
    %41 = vector.load %arg7[%c0_66, %c2_67, %c2_68, %c0_69] : memref<2x10x16x256xbf16, #tpu.memory_space<vmem>>, vector<2x8x8x256xbf16>
    %42 = vector.shape_cast %41 : vector<2x8x8x256xbf16> to vector<128x256xbf16>
    %c0_70 = arith.constant 0 : index
    %c2048 = arith.constant 2048 : index
    %43 = vector.load %arg8[%c0_70, %c2048] : memref<128x2304xbf16, #tpu.memory_space<vmem>>, vector<128x256xbf16>
    tpu.vector_store %arg8[%c0_70, %c2048], %42 {strides = array<i32>} : memref<128x2304xbf16, #tpu.memory_space<vmem>>, vector<128x256xbf16>,
    %c0_71 = arith.constant 0 : index
    %c65 = arith.constant 65 : index
    %c0_72 = arith.constant 0 : index
    %44 = vector.load %arg5[%c0_71, %c65, %c0_72] : memref<1x72x512xf32, #tpu.memory_space<vmem>>, vector<1x1x512xf32>
    %45 = vector.shape_cast %44 : vector<1x1x512xf32> to vector<1x512xf32>
    %c0_73 = arith.constant 0 : index
    %c0_74 = arith.constant 0 : index
    %46 = vector.load %arg8[%c0_73, %c0_74] : memref<128x2304xbf16, #tpu.memory_space<vmem>>, vector<128x2304xbf16>
    %c0_75 = arith.constant 0 : index
    %c0_76 = arith.constant 0 : index
    %c0_77 = arith.constant 0 : index
    %47 = vector.load %arg4[%c0_75, %c0_76, %c0_77] : memref<1x2304x512xbf16, #tpu.memory_space<vmem>>, vector<1x2304x512xbf16>
    %48 = vector.shape_cast %47 : vector<1x2304x512xbf16> to vector<2304x512xbf16>
    %cst_78 = arith.constant dense<0.000000e+00> : vector<128x512xf32>
    %49 = tpu.matmul %46, %48, %cst_78 {dimension_numbers = #tpu.dot_dimension_numbers<[1], [0], [0], [1], [0, 0, 1, 1], [], []>} : vector<128x2304xbf16>, vector<2304x512xbf16>, vector<128x512xf32> -> vector<128x512xf32>
    %50 = vector.broadcast %45 : vector<1x512xf32> to vector<128x512xf32>
    %51 = arith.addf %49, %50 : vector<128x512xf32>
    %cst_79 = arith.constant 0.000000e+00 : f32
    %52 = vector.broadcast %cst_79 : f32 to vector<128x512xf32>
    %53 = arith.maximumf %51, %52 : vector<128x512xf32>
    %cst_80 = arith.constant dense<0.000000e+00> : vector<128xf32>
    %54 = vector.multi_reduction <add>, %53, %cst_80 [1] : vector<128x512xf32> to vector<128xf32>
    %55 = vector.shape_cast %54 : vector<128xf32> to vector<128x1xf32>
    %c0_81 = arith.constant 0 : index
    %c0_82 = arith.constant 0 : index
    %56 = vector.load %arg1[%c0_81, %c0_82] : memref<128x512xf32, #tpu.memory_space<vmem>>, vector<64x512xf32>
    %57 = vector.extract_strided_slice %55 {offsets = [0, 0], sizes = [64, 1], strides = [1, 1]} : vector<128x1xf32> to vector<64x1xf32>
    %58 = vector.broadcast %57 : vector<64x1xf32> to vector<64x512xf32>
    %59 = arith.mulf %56, %58 : vector<64x512xf32>
    %cst_83 = arith.constant dense<0.000000e+00> : vector<512xf32>
    %60 = vector.multi_reduction <add>, %59, %cst_83 [0] : vector<64x512xf32> to vector<512xf32>
    %61 = vector.shape_cast %60 : vector<512xf32> to vector<1x512xf32>
    %c64_84 = arith.constant 64 : index
    %c0_85 = arith.constant 0 : index
    %62 = vector.load %arg1[%c64_84, %c0_85] : memref<128x512xf32, #tpu.memory_space<vmem>>, vector<64x512xf32>
    %63 = vector.extract_strided_slice %55 {offsets = [64, 0], sizes = [64, 1], strides = [1, 1]} : vector<128x1xf32> to vector<64x1xf32>
    %64 = vector.broadcast %63 : vector<64x1xf32> to vector<64x512xf32>
    %65 = arith.mulf %62, %64 : vector<64x512xf32>
    %cst_86 = arith.constant dense<0.000000e+00> : vector<512xf32>
    %66 = vector.multi_reduction <add>, %65, %cst_86 [0] : vector<64x512xf32> to vector<512xf32>
    %67 = vector.shape_cast %66 : vector<512xf32> to vector<1x512xf32>
    %68 = tpu.concatenate %61, %67 in 0 : vector<1x512xf32>, vector<1x512xf32> -> vector<2x512xf32>
    %cst_87 = arith.constant 1.562500e-02 : f32
    %69 = vector.broadcast %cst_87 : f32 to vector<2x512xf32>
    %70 = arith.mulf %68, %69 : vector<2x512xf32>
    %c0_88 = arith.constant 0 : index
    %c0_89 = arith.constant 0 : index
    %c0_90 = arith.constant 0 : index
    %71 = vector.load %arg5[%c0_88, %c0_89, %c0_90] : memref<1x72x512xf32, #tpu.memory_space<vmem>>, vector<1x32x512xf32>
    %72 = vector.shape_cast %71 : vector<1x32x512xf32> to vector<32x512xf32>
    %c0_91 = arith.constant 0 : index
    %c32 = arith.constant 32 : index
    %c0_92 = arith.constant 0 : index
    %73 = vector.load %arg5[%c0_91, %c32, %c0_92] : memref<1x72x512xf32, #tpu.memory_space<vmem>>, vector<1x32x512xf32>
    %74 = vector.shape_cast %73 : vector<1x32x512xf32> to vector<32x512xf32>
    %c0_93 = arith.constant 0 : index
    %c66 = arith.constant 66 : index
    %c0_94 = arith.constant 0 : index
    %75 = vector.load %arg5[%c0_93, %c66, %c0_94] : memref<1x72x512xf32, #tpu.memory_space<vmem>>, vector<1x1x32xf32>
    %76 = vector.shape_cast %75 : vector<1x1x32xf32> to vector<1x32xf32>
    %c0_95 = arith.constant 0 : index
    %c67 = arith.constant 67 : index
    %c0_96 = arith.constant 0 : index
    %77 = vector.load %arg5[%c0_95, %c67, %c0_96] : memref<1x72x512xf32, #tpu.memory_space<vmem>>, vector<1x1x512xf32>
    %78 = vector.shape_cast %77 : vector<1x1x512xf32> to vector<1x512xf32>
    %cst_97 = arith.constant dense<0.000000e+00> : vector<2x32xf32>
    %79 = tpu.matmul %70, %72, %cst_97 {dimension_numbers = #tpu.dot_dimension_numbers<[1], [1], [0], [0], [0, 0, 1, 0], [], []>} : vector<2x512xf32>, vector<32x512xf32>, vector<2x32xf32> -> vector<2x32xf32>
    %80 = vector.broadcast %76 : vector<1x32xf32> to vector<2x32xf32>
    %81 = arith.addf %79, %80 : vector<2x32xf32>
    %cst_98 = arith.constant 0.000000e+00 : f32
    %82 = vector.broadcast %cst_98 : f32 to vector<2x32xf32>
    %83 = arith.maximumf %81, %82 : vector<2x32xf32>
    %cst_99 = arith.constant dense<0.000000e+00> : vector<2x512xf32>
    %84 = tpu.matmul %83, %74, %cst_99 {dimension_numbers = #tpu.dot_dimension_numbers<[1], [0], [0], [1], [0, 0, 1, 1], [], []>} : vector<2x32xf32>, vector<32x512xf32>, vector<2x512xf32> -> vector<2x512xf32>
    %85 = vector.broadcast %78 : vector<1x512xf32> to vector<2x512xf32>
    %86 = arith.addf %84, %85 : vector<2x512xf32>
    %cst_100 = arith.constant 0.000000e+00 : f32
    %87 = vector.broadcast %cst_100 : f32 to vector<2x512xf32>
    %88 = arith.subf %87, %86 : vector<2x512xf32>
    %89 = math.exp %88 : vector<2x512xf32>
    %cst_101 = arith.constant 1.000000e+00 : f32
    %90 = vector.broadcast %cst_101 : f32 to vector<2x512xf32>
    %91 = arith.addf %90, %89 : vector<2x512xf32>
    %cst_102 = arith.constant 1.000000e+00 : f32
    %92 = vector.broadcast %cst_102 : f32 to vector<2x512xf32>
    %93 = arith.divf %92, %91 : vector<2x512xf32>
    %94 = arith.mulf %70, %93 : vector<2x512xf32>
    %c0_103 = arith.constant 0 : index
    %c0_104 = arith.constant 0 : index
    %c0_105 = arith.constant 0 : index
    %95 = vector.load %arg6[%c0_103, %c0_104, %c0_105] : memref<1x2x512xf32, #tpu.memory_space<vmem>>, vector<1x2x512xf32>
    %96 = vector.shape_cast %95 : vector<1x2x512xf32> to vector<2x512xf32>
    %97 = vector.shape_cast %94 : vector<2x512xf32> to vector<1x2x512xf32>
    tpu.vector_store %arg6[%c0_103, %c0_104, %c0_105], %97 {strides = array<i32>} : memref<1x2x512xf32, #tpu.memory_space<vmem>>, vector<1x2x512xf32>,
    return
  }
  func.func @transform_0(%arg0: i32) -> (i32, i32) {
    %c0_i32 = arith.constant 0 : i32
    %c0_i32_0 = arith.constant 0 : i32
    %c0_i32_1 = arith.constant 0 : i32
    return %c0_i32, %c0_i32_0 : i32, i32
  }
  func.func @transform_1(%arg0: i32) -> (i32, i32) {
    %c0_i32 = arith.constant 0 : i32
    %c0_i32_0 = arith.constant 0 : i32
    %c0_i32_1 = arith.constant 0 : i32
    return %c0_i32, %c0_i32_0 : i32, i32
  }
  func.func @transform_2(%arg0: i32) -> (i32, i32, i32) {
    %c0_i32 = arith.constant 0 : i32
    %c0_i32_0 = arith.constant 0 : i32
    %c0_i32_1 = arith.constant 0 : i32
    return %arg0, %c0_i32, %c0_i32_0 : i32, i32, i32
  }
  func.func @transform_3(%arg0: i32) -> (i32, i32, i32) {
    %c0_i32 = arith.constant 0 : i32
    %c0_i32_0 = arith.constant 0 : i32
    %c0_i32_1 = arith.constant 0 : i32
    return %arg0, %c0_i32, %c0_i32_0 : i32, i32, i32
  }
  func.func @transform_4(%arg0: i32) -> (i32, i32, i32) {
    %c0_i32 = arith.constant 0 : i32
    %c0_i32_0 = arith.constant 0 : i32
    %c0_i32_1 = arith.constant 0 : i32
    return %arg0, %c0_i32, %c0_i32_0 : i32, i32, i32
  }
  func.func @transform_5(%arg0: i32) -> (i32, i32, i32) {
    %c0_i32 = arith.constant 0 : i32
    %c0_i32_0 = arith.constant 0 : i32
    %c0_i32_1 = arith.constant 0 : i32
    return %arg0, %c0_i32, %c0_i32_0 : i32, i32, i32
  }
}

</mosaic_0001>

<llo_original>
// kernel: tpu_custom_call.1
$region0: #{tpu_custom_call.1}
  #allocation0 [shape = 'u32[]', space=smem, size = 0x4, offset = 0x4, fixed_abs, tag = 'smem constant byte address 0x4 - core index']
  #allocation1 [shape = 'u32[144,128]{1,0:T(1,128)}', space=vmem, size = 0x12000, scoped, tag = 'internal scratch']
  #allocation2 [shape = 'bf16[2,10,16,256]{3,2,1,0:T(8,128)(2,1)}', space=vmem, size = 0x28000, scoped, tag = 'scratch operand']
  #allocation3 [shape = 'bf16[128,2304]{1,0:T(8,128)(2,1)}', space=vmem, size = 0x90000, scoped, tag = 'scratch operand']
  %s0 = inlined_call_operand.hbm [shape: f32[128,512], index: 0, kind: input, shape index: {}]
  %s1 = inlined_call_operand.hbm [shape: bf16[128,512], index: 1, kind: input, shape index: {}]
  %s2 = inlined_call_operand.hbm [shape: bf16[4,512,256], index: 2, kind: input, shape index: {}]
  %s3 = inlined_call_operand.hbm [shape: bf16[4,2304,512], index: 3, kind: input, shape index: {}]
  %s4 = inlined_call_operand.hbm [shape: f32[4,72,512], index: 4, kind: input, shape index: {}]
  %s5 = inlined_call_operand.hbm [shape: f32[4,2,512], index: 5, kind: output, shape index: {}]
  %s6 = sld [smem:[#allocation0]]
  $region73: #{tpu_custom_call.1} parent=0
    _
  %s8 = ssub.s32 1, %s6
  %s9 = scalar_select 0, %s8, %s6
  $region1: #{tpu_custom_call.1} parent=0
    #allocation4 [shape = 'u8[262144]{0}', space=vmem, size = 0x40000, scoped, tag = 'input window, operand 0, single buffered']
    #allocation5 [shape = 's32[2]{0}', space=sflag, size = 0x8, scoped, tag = 'scoped memory for tpu_custom_call.1']
    #allocation6 [shape = 's32[2]{0}', space=sflag, size = 0x8, scoped, tag = 'scoped memory for tpu_custom_call.1']
    #allocation7 [shape = 'u8[131072]{0}', space=vmem, size = 0x20000, scoped, tag = 'input window, operand 1, single buffered']
    #allocation8 [shape = 's32[1]{0}', space=sflag, size = 0x4, scoped, tag = 'scoped memory for tpu_custom_call.1']
    #allocation9 [shape = 'u8[524288]{0}', space=vmem, size = 0x80000, scoped, tag = 'input window, operand 2']
    #allocation10 [shape = 'u8[4718592]{0}', space=vmem, size = 0x480000, scoped, tag = 'input window, operand 3']
    #allocation11 [shape = 'u8[294912]{0}', space=vmem, size = 0x48000, scoped, tag = 'input window, operand 4']
    #allocation12 [shape = 'u8[8192]{0}', space=vmem, size = 0x2000, scoped, tag = 'output window, operand 0']
    %10 = vsyncpa [#allocation5], 0
    %11 = vsyncpa [#allocation8], 0
    %12 = vsyncpa [#allocation6], 0
    %s13 = scalar_lea.sflag [#allocation6], 1
    %14 = vsyncpa %s13, 0
    loop: start=0, step=1, limit=6
    $region2: #{tpu_custom_call.1} parent=1 // loop_pre_header
      _
    $region3: #{tpu_custom_call.1} parent=1 // loop_header
      %s16 = sphi 0, %s20
      %p17 = scmp.ge.s32.totalorder %s16, 6
      %s24 = sphi 0, %s24
      %s26 = sphi 0, %s24
      %s27 = sphi 0, %s26
      %s41 = sphi 0, %s27
      %s45 = sphi 0, %s45
      %s47 = sphi 0, %s45
      %s48 = sphi 0, %s47
      %s62 = sphi 0, %s48
      %s68 = sphi 0, %s70
      %s71 = sphi 0, %s68
      %s72 = sphi 0, %s71
      %s88 = sphi 0, %s72
      %s94 = sphi 0, %s96
      %s97 = sphi 0, %s94
      %s98 = sphi 0, %s97
      %s114 = sphi 0, %s98
      %s120 = sphi 0, %s122
      %s123 = sphi 0, %s120
      %s124 = sphi 0, %s123
      %s140 = sphi 0, %s124
      %s146 = sphi 0, %s148
      %s149 = sphi 0, %s146
      %s150 = sphi 0, %s149
      %s166 = sphi 0, %s150
    $region4: #{tpu_custom_call.1} parent=1 // loop_header_branch
      %19 = sbr.rel (%p17) target = $region8
    $region5: #{tpu_custom_call.1} parent=1 // loop_body
      %s21 = ssub.s32 %s16, 1
      %s22 = ssub.s32 %s16, 2
      %s23 = sadd.s32 %s16, 1
      %s25 = sadd.s32 %s24, 1
      %p28 = scmp.eq.s32.totalorder %s16, 3
      %p29 = scmp.ne.s32.totalorder %s24, %s26
      %p30 = scmp.eq.s32.totalorder %s16, 0
      %p31 = por %p29, %p30
      %p32 = scmp.ne.s32.totalorder %s24, %s26
      %p33 = scmp.eq.s32.totalorder %s21, 3
      %p34 = por %p32, %p33
      %p35 = scmp.ne.s32.totalorder %s26, %s27
      %p36 = scmp.eq.s32.totalorder %s21, 0
      %p37 = por %p35, %p36
      %p38 = scmp.ne.s32.totalorder %s26, %s27
      %p39 = scmp.eq.s32.totalorder %s22, 3
      %p40 = por %p38, %p39
      %p42 = scmp.ne.s32.totalorder %s27, %s41
      %p43 = scmp.eq.s32.totalorder %s22, 0
      %p44 = por %p42, %p43
      %s46 = sadd.s32 %s45, 1
      %p49 = scmp.eq.s32.totalorder %s16, 3
      %p50 = scmp.ne.s32.totalorder %s45, %s47
      %p51 = scmp.eq.s32.totalorder %s16, 0
      %p52 = por %p50, %p51
      %p53 = scmp.ne.s32.totalorder %s45, %s47
      %p54 = scmp.eq.s32.totalorder %s21, 3
      %p55 = por %p53, %p54
      %p56 = scmp.ne.s32.totalorder %s47, %s48
      %p57 = scmp.eq.s32.totalorder %s21, 0
      %p58 = por %p56, %p57
      %p59 = scmp.ne.s32.totalorder %s47, %s48
      %p60 = scmp.eq.s32.totalorder %s22, 3
      %p61 = por %p59, %p60
      %p63 = scmp.ne.s32.totalorder %s48, %s62
      %p64 = scmp.eq.s32.totalorder %s22, 0
      %p65 = por %p63, %p64
      %s66 = ssub.s32 %s16, %s23
      %p67 = scmp.eq.s32.totalorder %s66, 0
      %s69 = sadd.s32 %s68, 1
      %s70 = scalar_select %p67, %s68, %s69
      %p73 = pneg %p67
      %p74 = scmp.eq.s32.totalorder %s16, 3
      %p75 = por %p73, %p74
      %p76 = scmp.ne.s32.totalorder %s68, %s71
      %p77 = scmp.eq.s32.totalorder %s16, 0
      %p78 = por %p76, %p77
      %p79 = scmp.ne.s32.totalorder %s68, %s71
      %p80 = scmp.eq.s32.totalorder %s21, 3
      %p81 = por %p79, %p80
      %p82 = scmp.ne.s32.totalorder %s71, %s72
      %p83 = scmp.eq.s32.totalorder %s21, 0
      %p84 = por %p82, %p83
      %p85 = scmp.ne.s32.totalorder %s71, %s72
      %p86 = scmp.eq.s32.totalorder %s22, 3
      %p87 = por %p85, %p86
      %p89 = scmp.ne.s32.totalorder %s72, %s88
      %p90 = scmp.eq.s32.totalorder %s22, 0
      %p91 = por %p89, %p90
      %s92 = ssub.s32 %s16, %s23
      %p93 = scmp.eq.s32.totalorder %s92, 0
      %s95 = sadd.s32 %s94, 1
      %s96 = scalar_select %p93, %s94, %s95
      %p99 = pneg %p93
      %p100 = scmp.eq.s32.totalorder %s16, 3
      %p101 = por %p99, %p100
      %p102 = scmp.ne.s32.totalorder %s94, %s97
      %p103 = scmp.eq.s32.totalorder %s16, 0
      %p104 = por %p102, %p103
      %p105 = scmp.ne.s32.totalorder %s94, %s97
      %p106 = scmp.eq.s32.totalorder %s21, 3
      %p107 = por %p105, %p106
      %p108 = scmp.ne.s32.totalorder %s97, %s98
      %p109 = scmp.eq.s32.totalorder %s21, 0
      %p110 = por %p108, %p109
      %p111 = scmp.ne.s32.totalorder %s97, %s98
      %p112 = scmp.eq.s32.totalorder %s22, 3
      %p113 = por %p111, %p112
      %p115 = scmp.ne.s32.totalorder %s98, %s114
      %p116 = scmp.eq.s32.totalorder %s22, 0
      %p117 = por %p115, %p116
      %s118 = ssub.s32 %s16, %s23
      %p119 = scmp.eq.s32.totalorder %s118, 0
      %s121 = sadd.s32 %s120, 1
      %s122 = scalar_select %p119, %s120, %s121
      %p125 = pneg %p119
      %p126 = scmp.eq.s32.totalorder %s16, 3
      %p127 = por %p125, %p126
      %p128 = scmp.ne.s32.totalorder %s120, %s123
      %p129 = scmp.eq.s32.totalorder %s16, 0
      %p130 = por %p128, %p129
      %p131 = scmp.ne.s32.totalorder %s120, %s123
      %p132 = scmp.eq.s32.totalorder %s21, 3
      %p133 = por %p131, %p132
      %p134 = scmp.ne.s32.totalorder %s123, %s124
      %p135 = scmp.eq.s32.totalorder %s21, 0
      %p136 = por %p134, %p135
      %p137 = scmp.ne.s32.totalorder %s123, %s124
      %p138 = scmp.eq.s32.totalorder %s22, 3
      %p139 = por %p137, %p138
      %p141 = scmp.ne.s32.totalorder %s124, %s140
      %p142 = scmp.eq.s32.totalorder %s22, 0
      %p143 = por %p141, %p142
      %s144 = ssub.s32 %s16, %s23
      %p145 = scmp.eq.s32.totalorder %s144, 0
      %s147 = sadd.s32 %s146, 1
      %s148 = scalar_select %p145, %s146, %s147
      %p151 = pneg %p145
      %p152 = scmp.eq.s32.totalorder %s16, 3
      %p153 = por %p151, %p152
      %p154 = scmp.ne.s32.totalorder %s146, %s149
      %p155 = scmp.eq.s32.totalorder %s16, 0
      %p156 = por %p154, %p155
      %p157 = scmp.ne.s32.totalorder %s146, %s149
      %p158 = scmp.eq.s32.totalorder %s21, 3
      %p159 = por %p157, %p158
      %p160 = scmp.ne.s32.totalorder %s149, %s150
      %p161 = scmp.eq.s32.totalorder %s21, 0
      %p162 = por %p160, %p161
      %p163 = scmp.ne.s32.totalorder %s149, %s150
      %p164 = scmp.eq.s32.totalorder %s22, 3
      %p165 = por %p163, %p164
      %p167 = scmp.ne.s32.totalorder %s150, %s166
      %p168 = scmp.eq.s32.totalorder %s22, 0
      %p169 = por %p167, %p168
      %p170 = scmp.le.s32.totalorder 1, %s16
      %p171 = scmp.lt.s32.totalorder %s16, 5
      %p172 = pnand %p170, %p171
      %p173 = pneg %p172
      // Predicated region
      $region9: #{tpu_custom_call.1} parent=5 // pred_check
        _
      $region10: #{tpu_custom_call.1} parent=5 // pred_check_branch
        %175 = sbr.rel (%p172) target = $region12
      $region11: #{tpu_custom_call.1} parent=5 // pred_region
        %s176 = ssub.s32 %s16, 1
        // Predicated region
        $region13: #{tpu_custom_call.1} parent=11 // pred_check
          %p177 = pneg %p37
        $region14: #{tpu_custom_call.1} parent=11 // pred_check_branch
          %179 = sbr.rel (%p177) target = $region16
        $region15: #{tpu_custom_call.1} parent=11 // pred_region
          %s181 = ssub.s32 8192, 8192
          %182 = vsyncadd [#allocation5], %s181
          %s183 = sshll.u32 [#allocation4], 4
          %s184 = int_to_ptr.vmem [resolvable:$true] %s183
          %189 = dma.hbm_to_vmem [thread:$0]  %s0, 8192, %s184, [#allocation5], 512, 512, 32
        $region16: #{tpu_custom_call.1} parent=11 // pred_fallthru
          _
        // Predicated region
        $region17: #{tpu_custom_call.1} parent=11 // pred_check
          %p190 = pneg %p58
        $region18: #{tpu_custom_call.1} parent=11 // pred_check_branch
          %192 = sbr.rel (%p190) target = $region20
        $region19: #{tpu_custom_call.1} parent=11 // pred_region
          %s194 = ssub.s32 4096, 4096
          %195 = vsyncadd [#allocation8], %s194
          %s196 = sshll.u32 [#allocation7], 4
          %s197 = int_to_ptr.vmem [resolvable:$true] %s196
          %202 = dma.hbm_to_vmem [thread:$0]  %s1, 4096, %s197, [#allocation8], 256, 256, 16
        $region20: #{tpu_custom_call.1} parent=11 // pred_fallthru
          _
      $region12: #{tpu_custom_call.1} parent=5 // pred_fallthru
        _
      %p203 = scmp.lt.s32.totalorder %s16, 4
      // Predicated region
      $region21: #{tpu_custom_call.1} parent=5 // pred_check
        %p204 = pneg %p203
      $region22: #{tpu_custom_call.1} parent=5 // pred_check_branch
        %206 = sbr.rel (%p204) target = $region24
      $region23: #{tpu_custom_call.1} parent=5 // pred_region
        // Predicated region
        $region25: #{tpu_custom_call.1} parent=23 // pred_check
          %p207 = pneg %p78
        $region26: #{tpu_custom_call.1} parent=23 // pred_check_branch
          %209 = sbr.rel (%p207) target = $region28
        $region27: #{tpu_custom_call.1} parent=23 // pred_region
          %s210 = sand.u32 %s16, 1
          %s211 = scalar_lea.sflag [#allocation5], %s210
          %s212 = sand.u32 %s68, 1
          %s213 = smul.addr %s212, 512
          %s214 = scalar_lea.vmem [#allocation9], %s213
          %s216 = ssub.s32 8192, 8192
          %217 = vsyncadd %s211, %s216
          %s218 = smul.addr %s16, 128
          %s219 = smul.addr %s218, 64
          %s220 = scalar_lea.hbm %s2, %s219
          %s221 = sshll.u32 %s214, 4
          %s222 = int_to_ptr.vmem [resolvable:$true] %s221
          %227 = dma.hbm_to_vmem [thread:$0]  %s220, 8192, %s222, %s211, 128, 128, 8
        $region28: #{tpu_custom_call.1} parent=23 // pred_fallthru
          _
        // Predicated region
        $region29: #{tpu_custom_call.1} parent=23 // pred_check
          %p228 = pneg %p104
        $region30: #{tpu_custom_call.1} parent=23 // pred_check_branch
          %230 = sbr.rel (%p228) target = $region32
        $region31: #{tpu_custom_call.1} parent=23 // pred_region
          %s231 = sand.u32 %s16, 1
          %s232 = scalar_lea.sflag [#allocation5], %s231
          %s233 = sand.u32 %s94, 1
          %s234 = smul.addr %s233, 4608
          %s235 = scalar_lea.vmem [#allocation10], %s234
          %s237 = ssub.s32 73728, 73728
          %238 = vsyncadd %s232, %s237
          %s239 = smul.addr %s16, 1152
          %s240 = smul.addr %s239, 64
          %s241 = scalar_lea.hbm %s3, %s240
          %s242 = sshll.u32 %s235, 4
          %s243 = int_to_ptr.vmem [resolvable:$true] %s242
          %248 = dma.hbm_to_vmem [thread:$0]  %s241, 73728, %s243, %s232, 256, 256, 16
        $region32: #{tpu_custom_call.1} parent=23 // pred_fallthru
          _
        // Predicated region
        $region33: #{tpu_custom_call.1} parent=23 // pred_check
          %p249 = pneg %p130
        $region34: #{tpu_custom_call.1} parent=23 // pred_check_branch
          %251 = sbr.rel (%p249) target = $region36
        $region35: #{tpu_custom_call.1} parent=23 // pred_region
          %s252 = sand.u32 %s16, 1
          %s253 = scalar_lea.sflag [#allocation5], %s252
          %s254 = sand.u32 %s120, 1
          %s255 = smul.addr %s254, 288
          %s256 = scalar_lea.vmem [#allocation11], %s255
          %s258 = ssub.s32 4608, 4608
          %259 = vsyncadd %s253, %s258
          %s260 = smul.addr %s16, 36
          %s261 = smul.addr %s260, 128
          %s262 = scalar_lea.hbm %s4, %s261
          %s263 = sshll.u32 %s256, 4
          %s264 = int_to_ptr.vmem [resolvable:$true] %s263
          %269 = dma.hbm_to_vmem [thread:$0]  %s262, 4608, %s264, %s253, 512, 512, 32
        $region36: #{tpu_custom_call.1} parent=23 // pred_fallthru
          _
      $region24: #{tpu_custom_call.1} parent=5 // pred_fallthru
        _
      %p270 = scmp.le.s32.totalorder 1, %s16
      %p271 = scmp.lt.s32.totalorder %s16, 5
      %p272 = pnand %p270, %p271
      %p273 = pneg %p272
      // Predicated region
      $region37: #{tpu_custom_call.1} parent=5 // pred_check
        _
      $region38: #{tpu_custom_call.1} parent=5 // pred_check_branch
        %275 = sbr.rel (%p272) target = $region40
      $region39: #{tpu_custom_call.1} parent=5 // pred_region
        %s276 = ssub.s32 %s16, 1
        // Predicated region
        $region41: #{tpu_custom_call.1} parent=39 // pred_check
          %p277 = pneg %p37
        $region42: #{tpu_custom_call.1} parent=39 // pred_check_branch
          %279 = sbr.rel (%p277) target = $region44
        $region43: #{tpu_custom_call.1} parent=39 // pred_region
          %280 = dma.done [#allocation5], 8192
        $region44: #{tpu_custom_call.1} parent=39 // pred_fallthru
          _
        // Predicated region
        $region45: #{tpu_custom_call.1} parent=39 // pred_check
          %p281 = pneg %p58
        $region46: #{tpu_custom_call.1} parent=39 // pred_check_branch
          %283 = sbr.rel (%p281) target = $region48
        $region47: #{tpu_custom_call.1} parent=39 // pred_region
          %284 = dma.done [#allocation8], 4096
        $region48: #{tpu_custom_call.1} parent=39 // pred_fallthru
          _
        %s285 = sand.u32 %s21, 1
        %s286 = scalar_lea.sflag [#allocation5], %s285
        %s287 = sand.u32 %s71, 1
        %s288 = smul.addr %s287, 512
        %s289 = scalar_lea.vmem [#allocation9], %s288
        // Predicated region
        $region49: #{tpu_custom_call.1} parent=39 // pred_check
          %p290 = pneg %p84
        $region50: #{tpu_custom_call.1} parent=39 // pred_check_branch
          %292 = sbr.rel (%p290) target = $region52
        $region51: #{tpu_custom_call.1} parent=39 // pred_region
          %293 = dma.done %s286, 8192
        $region52: #{tpu_custom_call.1} parent=39 // pred_fallthru
          _
        %s294 = sand.u32 %s21, 1
        %s295 = scalar_lea.sflag [#allocation5], %s294
        %s296 = sand.u32 %s97, 1
        %s297 = smul.addr %s296, 4608
        %s298 = scalar_lea.vmem [#allocation10], %s297
        // Predicated region
        $region53: #{tpu_custom_call.1} parent=39 // pred_check
          %p299 = pneg %p110
        $region54: #{tpu_custom_call.1} parent=39 // pred_check_branch
          %301 = sbr.rel (%p299) target = $region56
        $region55: #{tpu_custom_call.1} parent=39 // pred_region
          %302 = dma.done %s295, 73728
        $region56: #{tpu_custom_call.1} parent=39 // pred_fallthru
          _
        %s303 = sand.u32 %s21, 1
        %s304 = scalar_lea.sflag [#allocation5], %s303
        %s305 = sand.u32 %s123, 1
        %s306 = smul.addr %s305, 288
        %s307 = scalar_lea.vmem [#allocation11], %s306
        // Predicated region
        $region57: #{tpu_custom_call.1} parent=39 // pred_check
          %p308 = pneg %p136
        $region58: #{tpu_custom_call.1} parent=39 // pred_check_branch
          %310 = sbr.rel (%p308) target = $region60
        $region59: #{tpu_custom_call.1} parent=39 // pred_region
          %311 = dma.done %s304, 4608
        $region60: #{tpu_custom_call.1} parent=39 // pred_fallthru
          _
        %p312 = pneg %p37
        %p313 = pneg %p34
        %p314 = pneg %p58
        %p315 = pneg %p55
        %s316 = sand.u32 %s21, 1
        %s317 = scalar_lea.sflag [#allocation5], %s316
        %s318 = sand.u32 %s71, 1
        %s319 = smul.addr %s318, 512
        %s320 = scalar_lea.vmem [#allocation9], %s319
        %p321 = pneg %p84
        %p322 = pneg %p81
        %s323 = sand.u32 %s21, 1
        %s324 = scalar_lea.sflag [#allocation5], %s323
        %s325 = sand.u32 %s97, 1
        %s326 = smul.addr %s325, 4608
        %s327 = scalar_lea.vmem [#allocation10], %s326
        %p328 = pneg %p110
        %p329 = pneg %p107
        %s330 = sand.u32 %s21, 1
        %s331 = scalar_lea.sflag [#allocation5], %s330
        %s332 = sand.u32 %s123, 1
        %s333 = smul.addr %s332, 288
        %s334 = scalar_lea.vmem [#allocation11], %s333
        %p335 = pneg %p136
        %p336 = pneg %p133
        %p337 = pneg %p162
        %p338 = pneg %p159
        %s339 = sand.u32 %s149, 1
        %s340 = scalar_lea.sflag [#allocation6], %s339
        %s341 = sand.u32 %s149, 1
        %s342 = smul.addr %s341, 8
        %s343 = scalar_lea.vmem [#allocation12], %s342
        %s345 = scalar_lea.vmem %s307, 256 [#allocation11]
        %v346 = vld [vmem:[%s345] ss:$8 sm:$0x3]
        %v347 = vld [vmem:[#allocation7] sm:$0xff]
        %v348 = vld [vmem:[#allocation7 + $0x8] sm:$0xff]
        %v349 = vld [vmem:[#allocation7 + $0x10] sm:$0xff]
        %v350 = vld [vmem:[#allocation7 + $0x18] sm:$0xff]
        %v351 = vld [vmem:[#allocation7 + $0x20] sm:$0xff]
        %v352 = vld [vmem:[#allocation7 + $0x28] sm:$0xff]
        %v353 = vld [vmem:[#allocation7 + $0x30] sm:$0xff]
        %v354 = vld [vmem:[#allocation7 + $0x38] sm:$0xff]
        %v355 = vld [vmem:[#allocation7 + $0x40] sm:$0xff]
        %v356 = vld [vmem:[#allocation7 + $0x48] sm:$0xff]
        %v357 = vld [vmem:[#allocation7 + $0x50] sm:$0xff]
        %v358 = vld [vmem:[#allocation7 + $0x58] sm:$0xff]
        %v359 = vld [vmem:[#allocation7 + $0x60] sm:$0xff]
        %v360 = vld [vmem:[#allocation7 + $0x68] sm:$0xff]
        %v361 = vld [vmem:[#allocation7 + $0x70] sm:$0xff]
        %v362 = vld [vmem:[#allocation7 + $0x78] sm:$0xff]
        %v363 = vld [vmem:[#allocation7 + $0x80] sm:$0xff]
        %v364 = vld [vmem:[#allocation7 + $0x88] sm:$0xff]
        %v365 = vld [vmem:[#allocation7 + $0x90] sm:$0xff]
        %v366 = vld [vmem:[#allocation7 + $0x98] sm:$0xff]
        %v367 = vld [vmem:[#allocation7 + $0xa0] sm:$0xff]
        %v368 = vld [vmem:[#allocation7 + $0xa8] sm:$0xff]
        %v369 = vld [vmem:[#allocation7 + $0xb0] sm:$0xff]
        %v370 = vld [vmem:[#allocation7 + $0xb8] sm:$0xff]
        %v371 = vld [vmem:[#allocation7 + $0xc0] sm:$0xff]
        %v372 = vld [vmem:[#allocation7 + $0xc8] sm:$0xff]
        %v373 = vld [vmem:[#allocation7 + $0xd0] sm:$0xff]
        %v374 = vld [vmem:[#allocation7 + $0xd8] sm:$0xff]
        %v375 = vld [vmem:[#allocation7 + $0xe0] sm:$0xff]
        %v376 = vld [vmem:[#allocation7 + $0xe8] sm:$0xff]
        %v377 = vld [vmem:[#allocation7 + $0xf0] sm:$0xff]
        %v378 = vld [vmem:[#allocation7 + $0xf8] sm:$0xff]
        %v379 = vld [vmem:[%s289] sm:$0xff]
        %v380 = vld [vmem:[%s289 + $0x8] sm:$0xff]
        %v381 = vld [vmem:[%s289 + $0x10] sm:$0xff]
        %v382 = vld [vmem:[%s289 + $0x18] sm:$0xff]
        %v383 = vld [vmem:[%s289 + $0x20] sm:$0xff]
        %v384 = vld [vmem:[%s289 + $0x28] sm:$0xff]
        %v385 = vld [vmem:[%s289 + $0x30] sm:$0xff]
        %v386 = vld [vmem:[%s289 + $0x38] sm:$0xff]
        %v387 = vld [vmem:[%s289 + $0x40] sm:$0xff]
        %v388 = vld [vmem:[%s289 + $0x48] sm:$0xff]
        %v389 = vld [vmem:[%s289 + $0x50] sm:$0xff]
        %v390 = vld [vmem:[%s289 + $0x58] sm:$0xff]
        %v391 = vld [vmem:[%s289 + $0x60] sm:$0xff]
        %v392 = vld [vmem:[%s289 + $0x68] sm:$0xff]
        %v393 = vld [vmem:[%s289 + $0x70] sm:$0xff]
        %v394 = vld [vmem:[%s289 + $0x78] sm:$0xff]
        %v395 = vld [vmem:[%s289 + $0x80] sm:$0xff]
        %v396 = vld [vmem:[%s289 + $0x88] sm:$0xff]
        %v397 = vld [vmem:[%s289 + $0x90] sm:$0xff]
        %v398 = vld [vmem:[%s289 + $0x98] sm:$0xff]
        %v399 = vld [vmem:[%s289 + $0xa0] sm:$0xff]
        %v400 = vld [vmem:[%s289 + $0xa8] sm:$0xff]
        %v401 = vld [vmem:[%s289 + $0xb0] sm:$0xff]
        %v402 = vld [vmem:[%s289 + $0xb8] sm:$0xff]
        %v403 = vld [vmem:[%s289 + $0xc0] sm:$0xff]
        %v404 = vld [vmem:[%s289 + $0xc8] sm:$0xff]
        %v405 = vld [vmem:[%s289 + $0xd0] sm:$0xff]
        %v406 = vld [vmem:[%s289 + $0xd8] sm:$0xff]
        %v407 = vld [vmem:[%s289 + $0xe0] sm:$0xff]
        %v408 = vld [vmem:[%s289 + $0xe8] sm:$0xff]
        %v409 = vld [vmem:[%s289 + $0xf0] sm:$0xff]
        %v410 = vld [vmem:[%s289 + $0xf8] sm:$0xff]
        %v411 = vld [vmem:[%s289 + $0x100] sm:$0xff]
        %v412 = vld [vmem:[%s289 + $0x108] sm:$0xff]
        %v413 = vld [vmem:[%s289 + $0x110] sm:$0xff]
        %v414 = vld [vmem:[%s289 + $0x118] sm:$0xff]
        %v415 = vld [vmem:[%s289 + $0x120] sm:$0xff]
        %v416 = vld [vmem:[%s289 + $0x128] sm:$0xff]
        %v417 = vld [vmem:[%s289 + $0x130] sm:$0xff]
        %v418 = vld [vmem:[%s289 + $0x138] sm:$0xff]
        %v419 = vld [vmem:[%s289 + $0x140] sm:$0xff]
        %v420 = vld [vmem:[%s289 + $0x148] sm:$0xff]
        %v421 = vld [vmem:[%s289 + $0x150] sm:$0xff]
        %v422 = vld [vmem:[%s289 + $0x158] sm:$0xff]
        %v423 = vld [vmem:[%s289 + $0x160] sm:$0xff]
        %v424 = vld [vmem:[%s289 + $0x168] sm:$0xff]
        %v425 = vld [vmem:[%s289 + $0x170] sm:$0xff]
        %v426 = vld [vmem:[%s289 + $0x178] sm:$0xff]
        %v427 = vld [vmem:[%s289 + $0x180] sm:$0xff]
        %v428 = vld [vmem:[%s289 + $0x188] sm:$0xff]
        %v429 = vld [vmem:[%s289 + $0x190] sm:$0xff]
        %v430 = vld [vmem:[%s289 + $0x198] sm:$0xff]
        %v431 = vld [vmem:[%s289 + $0x1a0] sm:$0xff]
        %v432 = vld [vmem:[%s289 + $0x1a8] sm:$0xff]
        %v433 = vld [vmem:[%s289 + $0x1b0] sm:$0xff]
        %v434 = vld [vmem:[%s289 + $0x1b8] sm:$0xff]
        %v435 = vld [vmem:[%s289 + $0x1c0] sm:$0xff]
        %v436 = vld [vmem:[%s289 + $0x1c8] sm:$0xff]
        %v437 = vld [vmem:[%s289 + $0x1d0] sm:$0xff]
        %v438 = vld [vmem:[%s289 + $0x1d8] sm:$0xff]
        %v439 = vld [vmem:[%s289 + $0x1e0] sm:$0xff]
        %v440 = vld [vmem:[%s289 + $0x1e8] sm:$0xff]
        %v441 = vld [vmem:[%s289 + $0x1f0] sm:$0xff]
        %v442 = vld [vmem:[%s289 + $0x1f8] sm:$0xff]
        %v444 = vlaneseq
        %v445 = vshrl.u32 %v444, 7
        %v446 = vsub.s32 0, %v445
        %v447 = vrot.slane %v346, %v446
        %v448 = vlaneseq
        %v449 = vshrl.u32 %v448, 7
        %v450 = vsub.s32 1, %v449
        %v451 = vrot.slane %v346, %v450
        %v486 = vunpack.c.l.b16 %v347
        %v487 = vunpack.c.h.b16 %v347
        %v488 = vunpack.c.l.b16 %v348
        %v489 = vunpack.c.h.b16 %v348
        %v490 = vunpack.c.l.b16 %v349
        %v491 = vunpack.c.h.b16 %v349
        %v492 = vunpack.c.l.b16 %v350
        %v493 = vunpack.c.h.b16 %v350
        %v494 = vunpack.c.l.b16 %v351
        %v495 = vunpack.c.h.b16 %v351
        %v496 = vunpack.c.l.b16 %v352
        %v497 = vunpack.c.h.b16 %v352
        %v498 = vunpack.c.l.b16 %v353
        %v499 = vunpack.c.h.b16 %v353
        %v500 = vunpack.c.l.b16 %v354
        %v501 = vunpack.c.h.b16 %v354
        %v502 = vunpack.c.l.b16 %v355
        %v503 = vunpack.c.h.b16 %v355
        %v504 = vunpack.c.l.b16 %v356
        %v505 = vunpack.c.h.b16 %v356
        %v506 = vunpack.c.l.b16 %v357
        %v507 = vunpack.c.h.b16 %v357
        %v508 = vunpack.c.l.b16 %v358
        %v509 = vunpack.c.h.b16 %v358
        %v510 = vunpack.c.l.b16 %v359
        %v511 = vunpack.c.h.b16 %v359
        %v512 = vunpack.c.l.b16 %v360
        %v513 = vunpack.c.h.b16 %v360
        %v514 = vunpack.c.l.b16 %v361
        %v515 = vunpack.c.h.b16 %v361
        %v516 = vunpack.c.l.b16 %v362
        %v517 = vunpack.c.h.b16 %v362
        %v518 = vunpack.c.l.b16 %v363
        %v519 = vunpack.c.h.b16 %v363
        %v520 = vunpack.c.l.b16 %v364
        %v521 = vunpack.c.h.b16 %v364
        %v522 = vunpack.c.l.b16 %v365
        %v523 = vunpack.c.h.b16 %v365
        %v524 = vunpack.c.l.b16 %v366
        %v525 = vunpack.c.h.b16 %v366
        %v526 = vunpack.c.l.b16 %v367
        %v527 = vunpack.c.h.b16 %v367
        %v528 = vunpack.c.l.b16 %v368
        %v529 = vunpack.c.h.b16 %v368
        %v530 = vunpack.c.l.b16 %v369
        %v531 = vunpack.c.h.b16 %v369
        %v532 = vunpack.c.l.b16 %v370
        %v533 = vunpack.c.h.b16 %v370
        %v534 = vunpack.c.l.b16 %v371
        %v535 = vunpack.c.h.b16 %v371
        %v536 = vunpack.c.l.b16 %v372
        %v537 = vunpack.c.h.b16 %v372
        %v538 = vunpack.c.l.b16 %v373
        %v539 = vunpack.c.h.b16 %v373
        %v540 = vunpack.c.l.b16 %v374
        %v541 = vunpack.c.h.b16 %v374
        %v542 = vunpack.c.l.b16 %v375
        %v543 = vunpack.c.h.b16 %v375
        %v544 = vunpack.c.l.b16 %v376
        %v545 = vunpack.c.h.b16 %v376
        %v546 = vunpack.c.l.b16 %v377
        %v547 = vunpack.c.h.b16 %v377
        %v548 = vunpack.c.l.b16 %v378
        %v549 = vunpack.c.h.b16 %v378
        %v550 = vpack.c.b16 %v490, %v486
        %v551 = vpack.c.b16 %v491, %v487
        %v552 = vpack.c.b16 %v492, %v488
        %v553 = vpack.c.b16 %v493, %v489
        %v554 = vpack.c.b16 %v498, %v494
        %v555 = vpack.c.b16 %v499, %v495
        %v556 = vpack.c.b16 %v500, %v496
        %v557 = vpack.c.b16 %v501, %v497
        %v558 = vpack.c.b16 %v506, %v502
        %v559 = vpack.c.b16 %v507, %v503
        %v560 = vpack.c.b16 %v508, %v504
        %v561 = vpack.c.b16 %v509, %v505
        %v562 = vpack.c.b16 %v514, %v510
        %v563 = vpack.c.b16 %v515, %v511
        %v564 = vpack.c.b16 %v516, %v512
        %v565 = vpack.c.b16 %v517, %v513
        %v566 = vpack.c.b16 %v522, %v518
        %v567 = vpack.c.b16 %v523, %v519
        %v568 = vpack.c.b16 %v524, %v520
        %v569 = vpack.c.b16 %v525, %v521
        %v570 = vpack.c.b16 %v530, %v526
        %v571 = vpack.c.b16 %v531, %v527
        %v572 = vpack.c.b16 %v532, %v528
        %v573 = vpack.c.b16 %v533, %v529
        %v574 = vpack.c.b16 %v538, %v534
        %v575 = vpack.c.b16 %v539, %v535
        %v576 = vpack.c.b16 %v540, %v536
        %v577 = vpack.c.b16 %v541, %v537
        %v578 = vpack.c.b16 %v546, %v542
        %v579 = vpack.c.b16 %v547, %v543
        %v580 = vpack.c.b16 %v548, %v544
        %v581 = vpack.c.b16 %v549, %v545
        %v678 = vunpack.c.l.b16 %v379
        %v679 = vunpack.c.h.b16 %v379
        %v680 = vunpack.c.l.b16 %v380
        %v681 = vunpack.c.h.b16 %v380
        %v682 = vunpack.c.l.b16 %v381
        %v683 = vunpack.c.h.b16 %v381
        %v684 = vunpack.c.l.b16 %v382
        %v685 = vunpack.c.h.b16 %v382
        %v686 = vunpack.c.l.b16 %v383
        %v687 = vunpack.c.h.b16 %v383
        %v688 = vunpack.c.l.b16 %v384
        %v689 = vunpack.c.h.b16 %v384
        %v690 = vunpack.c.l.b16 %v385
        %v691 = vunpack.c.h.b16 %v385
        %v692 = vunpack.c.l.b16 %v386
        %v693 = vunpack.c.h.b16 %v386
        %v694 = vunpack.c.l.b16 %v387
        %v695 = vunpack.c.h.b16 %v387
        %v696 = vunpack.c.l.b16 %v388
        %v697 = vunpack.c.h.b16 %v388
        %v698 = vunpack.c.l.b16 %v389
        %v699 = vunpack.c.h.b16 %v389
        %v700 = vunpack.c.l.b16 %v390
        %v701 = vunpack.c.h.b16 %v390
        %v702 = vunpack.c.l.b16 %v391
        %v703 = vunpack.c.h.b16 %v391
        %v704 = vunpack.c.l.b16 %v392
        %v705 = vunpack.c.h.b16 %v392
        %v706 = vunpack.c.l.b16 %v393
        %v707 = vunpack.c.h.b16 %v393
        %v708 = vunpack.c.l.b16 %v394
        %v709 = vunpack.c.h.b16 %v394
        %v710 = vunpack.c.l.b16 %v395
        %v711 = vunpack.c.h.b16 %v395
        %v712 = vunpack.c.l.b16 %v396
        %v713 = vunpack.c.h.b16 %v396
        %v714 = vunpack.c.l.b16 %v397
        %v715 = vunpack.c.h.b16 %v397
        %v716 = vunpack.c.l.b16 %v398
        %v717 = vunpack.c.h.b16 %v398
        %v718 = vunpack.c.l.b16 %v399
        %v719 = vunpack.c.h.b16 %v399
        %v720 = vunpack.c.l.b16 %v400
        %v721 = vunpack.c.h.b16 %v400
        %v722 = vunpack.c.l.b16 %v401
        %v723 = vunpack.c.h.b16 %v401
        %v724 = vunpack.c.l.b16 %v402
        %v725 = vunpack.c.h.b16 %v402
        %v726 = vunpack.c.l.b16 %v403
        %v727 = vunpack.c.h.b16 %v403
        %v728 = vunpack.c.l.b16 %v404
        %v729 = vunpack.c.h.b16 %v404
        %v730 = vunpack.c.l.b16 %v405
        %v731 = vunpack.c.h.b16 %v405
        %v732 = vunpack.c.l.b16 %v406
        %v733 = vunpack.c.h.b16 %v406
        %v734 = vunpack.c.l.b16 %v407
        %v735 = vunpack.c.h.b16 %v407
        %v736 = vunpack.c.l.b16 %v408
        %v737 = vunpack.c.h.b16 %v408
        %v738 = vunpack.c.l.b16 %v409
        %v739 = vunpack.c.h.b16 %v409
        %v740 = vunpack.c.l.b16 %v410
        %v741 = vunpack.c.h.b16 %v410
        %v742 = vunpack.c.l.b16 %v411
        %v743 = vunpack.c.h.b16 %v411
        %v744 = vunpack.c.l.b16 %v412
        %v745 = vunpack.c.h.b16 %v412
        %v746 = vunpack.c.l.b16 %v413
        %v747 = vunpack.c.h.b16 %v413
        %v748 = vunpack.c.l.b16 %v414
        %v749 = vunpack.c.h.b16 %v414
        %v750 = vunpack.c.l.b16 %v415
        %v751 = vunpack.c.h.b16 %v415
        %v752 = vunpack.c.l.b16 %v416
        %v753 = vunpack.c.h.b16 %v416
        %v754 = vunpack.c.l.b16 %v417
        %v755 = vunpack.c.h.b16 %v417
        %v756 = vunpack.c.l.b16 %v418
        %v757 = vunpack.c.h.b16 %v418
        %v758 = vunpack.c.l.b16 %v419
        %v759 = vunpack.c.h.b16 %v419
        %v760 = vunpack.c.l.b16 %v420
        %v761 = vunpack.c.h.b16 %v420
        %v762 = vunpack.c.l.b16 %v421
        %v763 = vunpack.c.h.b16 %v421
        %v764 = vunpack.c.l.b16 %v422
        %v765 = vunpack.c.h.b16 %v422
        %v766 = vunpack.c.l.b16 %v423
        %v767 = vunpack.c.h.b16 %v423
        %v768 = vunpack.c.l.b16 %v424
        %v769 = vunpack.c.h.b16 %v424
        %v770 = vunpack.c.l.b16 %v425
        %v771 = vunpack.c.h.b16 %v425
        %v772 = vunpack.c.l.b16 %v426
        %v773 = vunpack.c.h.b16 %v426
        %v774 = vunpack.c.l.b16 %v427
        %v775 = vunpack.c.h.b16 %v427
        %v776 = vunpack.c.l.b16 %v428
        %v777 = vunpack.c.h.b16 %v428
        %v778 = vunpack.c.l.b16 %v429
        %v779 = vunpack.c.h.b16 %v429
        %v780 = vunpack.c.l.b16 %v430
        %v781 = vunpack.c.h.b16 %v430
        %v782 = vunpack.c.l.b16 %v431
        %v783 = vunpack.c.h.b16 %v431
        %v784 = vunpack.c.l.b16 %v432
        %v785 = vunpack.c.h.b16 %v432
        %v786 = vunpack.c.l.b16 %v433
        %v787 = vunpack.c.h.b16 %v433
        %v788 = vunpack.c.l.b16 %v434
        %v789 = vunpack.c.h.b16 %v434
        %v790 = vunpack.c.l.b16 %v435
        %v791 = vunpack.c.h.b16 %v435
        %v792 = vunpack.c.l.b16 %v436
        %v793 = vunpack.c.h.b16 %v436
        %v794 = vunpack.c.l.b16 %v437
        %v795 = vunpack.c.h.b16 %v437
        %v796 = vunpack.c.l.b16 %v438
        %v797 = vunpack.c.h.b16 %v438
        %v798 = vunpack.c.l.b16 %v439
        %v799 = vunpack.c.h.b16 %v439
        %v800 = vunpack.c.l.b16 %v440
        %v801 = vunpack.c.h.b16 %v440
        %v802 = vunpack.c.l.b16 %v441
        %v803 = vunpack.c.h.b16 %v441
        %v804 = vunpack.c.l.b16 %v442
        %v805 = vunpack.c.h.b16 %v442
        %v806 = vpack.c.b16 %v680, %v678
        %v807 = vpack.c.b16 %v681, %v679
        %v808 = vpack.c.b16 %v684, %v682
        %v809 = vpack.c.b16 %v685, %v683
        %v810 = vpack.c.b16 %v688, %v686
        %v811 = vpack.c.b16 %v689, %v687
        %v812 = vpack.c.b16 %v692, %v690
        %v813 = vpack.c.b16 %v693, %v691
        %v814 = vpack.c.b16 %v696, %v694
        %v815 = vpack.c.b16 %v697, %v695
        %v816 = vpack.c.b16 %v700, %v698
        %v817 = vpack.c.b16 %v701, %v699
        %v818 = vpack.c.b16 %v704, %v702
        %v819 = vpack.c.b16 %v705, %v703
        %v820 = vpack.c.b16 %v708, %v706
        %v821 = vpack.c.b16 %v709, %v707
        %v822 = vpack.c.b16 %v712, %v710
        %v823 = vpack.c.b16 %v713, %v711
        %v824 = vpack.c.b16 %v716, %v714
        %v825 = vpack.c.b16 %v717, %v715
        %v826 = vpack.c.b16 %v720, %v718
        %v827 = vpack.c.b16 %v721, %v719
        %v828 = vpack.c.b16 %v724, %v722
        %v829 = vpack.c.b16 %v725, %v723
        %v830 = vpack.c.b16 %v728, %v726
        %v831 = vpack.c.b16 %v729, %v727
        %v832 = vpack.c.b16 %v732, %v730
        %v833 = vpack.c.b16 %v733, %v731
        %v834 = vpack.c.b16 %v736, %v734
        %v835 = vpack.c.b16 %v737, %v735
        %v836 = vpack.c.b16 %v740, %v738
        %v837 = vpack.c.b16 %v741, %v739
        %v838 = vpack.c.b16 %v744, %v742
        %v839 = vpack.c.b16 %v745, %v743
        %v840 = vpack.c.b16 %v748, %v746
        %v841 = vpack.c.b16 %v749, %v747
        %v842 = vpack.c.b16 %v752, %v750
        %v843 = vpack.c.b16 %v753, %v751
        %v844 = vpack.c.b16 %v756, %v754
        %v845 = vpack.c.b16 %v757, %v755
        %v846 = vpack.c.b16 %v760, %v758
        %v847 = vpack.c.b16 %v761, %v759
        %v848 = vpack.c.b16 %v764, %v762
        %v849 = vpack.c.b16 %v765, %v763
        %v850 = vpack.c.b16 %v768, %v766
        %v851 = vpack.c.b16 %v769, %v767
        %v852 = vpack.c.b16 %v772, %v770
        %v853 = vpack.c.b16 %v773, %v771
        %v854 = vpack.c.b16 %v776, %v774
        %v855 = vpack.c.b16 %v777, %v775
        %v856 = vpack.c.b16 %v780, %v778
        %v857 = vpack.c.b16 %v781, %v779
        %v858 = vpack.c.b16 %v784, %v782
        %v859 = vpack.c.b16 %v785, %v783
        %v860 = vpack.c.b16 %v788, %v786
        %v861 = vpack.c.b16 %v789, %v787
        %v862 = vpack.c.b16 %v792, %v790
        %v863 = vpack.c.b16 %v793, %v791
        %v864 = vpack.c.b16 %v796, %v794
        %v865 = vpack.c.b16 %v797, %v795
        %v866 = vpack.c.b16 %v800, %v798
        %v867 = vpack.c.b16 %v801, %v799
        %v868 = vpack.c.b16 %v804, %v802
        %v869 = vpack.c.b16 %v805, %v803
        %934 = vmatprep.subr.bf16.mxu0 %v821
        %935 = vmatpush1.bf16.msra.mxu0 %v820
        %936 = vmatprep.subr.bf16.mxu0 %v819
        %937 = vmatpush1.bf16.msra.mxu0 %v818
        %938 = vmatprep.subr.bf16.mxu0 %v817
        %939 = vmatpush1.bf16.msra.mxu0 %v816
        %940 = vmatprep.subr.bf16.mxu0 %v815
        %941 = vmatpush1.bf16.msra.mxu0 %v814
        %942 = vmatprep.subr.bf16.mxu0 %v813
        %943 = vmatpush1.bf16.msra.mxu0 %v812
        %944 = vmatprep.subr.bf16.mxu0 %v811
        %945 = vmatpush1.bf16.msra.mxu0 %v810
        %946 = vmatprep.subr.bf16.mxu0 %v809
        %947 = vmatpush1.bf16.msra.mxu0 %v808
        %948 = vmatprep.subr.bf16.mxu0 %v807
        %949 = vmatpush1.bf16.msra.mxu0 %v806
        %950 = vmatprep.subr.bf16.mxu0 %v837
        %951 = vmatpush2.bf16.msra.mxu0 %v836
        %952 = vmatprep.subr.bf16.mxu0 %v835
        %953 = vmatpush2.bf16.msra.mxu0 %v834
        %954 = vmatprep.subr.bf16.mxu0 %v833
        %955 = vmatpush2.bf16.msra.mxu0 %v832
        %956 = vmatprep.subr.bf16.mxu0 %v831
        %957 = vmatpush2.bf16.msra.mxu0 %v830
        %958 = vmatprep.subr.bf16.mxu0 %v829
        %959 = vmatpush2.bf16.msra.mxu0 %v828
        %960 = vmatprep.subr.bf16.mxu0 %v827
        %961 = vmatpush2.bf16.msra.mxu0 %v826
        %962 = vmatprep.subr.bf16.mxu0 %v825
        %963 = vmatpush2.bf16.msra.mxu0 %v824
        %964 = vmatprep.subr.bf16.mxu0 %v823
        %965 = vmatpush2.bf16.msra.mxu0 %v822
        %966 = vmatprep.mubr.bf16.mxu0 %v551
        %967 = vmatmul.mubr.bf16.gmra.mxu0 %v550
        %v968 = vpop.f32.mrf.mxu0
        %v969 = vadd.f32 %v447, %v968
        %v970 = vpop.f32.mrf.mxu0
        %v971 = vadd.f32 %v451, %v970
        %v972 = vpop.f32.mrf.mxu0
        %v973 = vadd.f32 %v447, %v972
        %v974 = vpop.f32.mrf.mxu0
        %v975 = vadd.f32 %v451, %v974
        %976 = vmatprep.mubr.bf16.mxu0 %v555
        %977 = vmatmul.mubr.bf16.gmra.mxu0 %v554
        %v978 = vpop.f32.mrf.mxu0
        %v979 = vadd.f32 %v447, %v978
        %v980 = vpop.f32.mrf.mxu0
        %v981 = vadd.f32 %v451, %v980
        %v982 = vpop.f32.mrf.mxu0
        %v983 = vadd.f32 %v447, %v982
        %v984 = vpop.f32.mrf.mxu0
        %v985 = vadd.f32 %v451, %v984
        %986 = vmatprep.mubr.bf16.mxu0 %v559
        %987 = vmatmul.mubr.bf16.gmra.mxu0 %v558
        %v988 = vpop.f32.mrf.mxu0
        %v989 = vadd.f32 %v447, %v988
        %v990 = vpop.f32.mrf.mxu0
        %v991 = vadd.f32 %v451, %v990
        %v992 = vpop.f32.mrf.mxu0
        %v993 = vadd.f32 %v447, %v992
        %v994 = vpop.f32.mrf.mxu0
        %v995 = vadd.f32 %v451, %v994
        %996 = vmatprep.mubr.bf16.mxu0 %v563
        %997 = vmatmul.mubr.bf16.gmra.mxu0 %v562
        %v998 = vpop.f32.mrf.mxu0
        %v999 = vadd.f32 %v447, %v998
        %v1000 = vpop.f32.mrf.mxu0
        %v1001 = vadd.f32 %v451, %v1000
        %v1002 = vpop.f32.mrf.mxu0
        %v1003 = vadd.f32 %v447, %v1002
        %v1004 = vpop.f32.mrf.mxu0
        %v1005 = vadd.f32 %v451, %v1004
        %1006 = vmatprep.mubr.bf16.mxu0 %v567
        %1007 = vmatmul.mubr.bf16.gmra.mxu0 %v566
        %v1008 = vpop.f32.mrf.mxu0
        %v1009 = vadd.f32 %v447, %v1008
        %v1010 = vpop.f32.mrf.mxu0
        %v1011 = vadd.f32 %v451, %v1010
        %v1012 = vpop.f32.mrf.mxu0
        %v1013 = vadd.f32 %v447, %v1012
        %v1014 = vpop.f32.mrf.mxu0
        %v1015 = vadd.f32 %v451, %v1014
        %1016 = vmatprep.mubr.bf16.mxu0 %v571
        %1017 = vmatmul.mubr.bf16.gmra.mxu0 %v570
        %v1018 = vpop.f32.mrf.mxu0
        %v1019 = vadd.f32 %v447, %v1018
        %v1020 = vpop.f32.mrf.mxu0
        %v1021 = vadd.f32 %v451, %v1020
        %v1022 = vpop.f32.mrf.mxu0
        %v1023 = vadd.f32 %v447, %v1022
        %v1024 = vpop.f32.mrf.mxu0
        %v1025 = vadd.f32 %v451, %v1024
        %1026 = vmatprep.mubr.bf16.mxu0 %v575
        %1027 = vmatmul.mubr.bf16.gmra.mxu0 %v574
        %v1028 = vpop.f32.mrf.mxu0
        %v1029 = vadd.f32 %v447, %v1028
        %v1030 = vpop.f32.mrf.mxu0
        %v1031 = vadd.f32 %v451, %v1030
        %v1032 = vpop.f32.mrf.mxu0
        %v1033 = vadd.f32 %v447, %v1032
        %v1034 = vpop.f32.mrf.mxu0
        %v1035 = vadd.f32 %v451, %v1034
        %1036 = vmatprep.mubr.bf16.mxu0 %v579
        %1037 = vmatmul.mubr.bf16.gmra.mxu0 %v578
        %v1038 = vpop.f32.mrf.mxu0
        %v1039 = vadd.f32 %v447, %v1038
        %v1040 = vpop.f32.mrf.mxu0
        %v1041 = vadd.f32 %v451, %v1040
        %v1042 = vpop.f32.mrf.mxu0
        %v1043 = vadd.f32 %v447, %v1042
        %v1044 = vpop.f32.mrf.mxu0
        %v1045 = vadd.f32 %v451, %v1044
        %1046 = vdwg.mxu0
        %1047 = vmatprep.subr.bf16.mxu0 %v853
        %1048 = vmatpush1.bf16.msra.mxu0 %v852
        %1049 = vmatprep.subr.bf16.mxu0 %v851
        %1050 = vmatpush1.bf16.msra.mxu0 %v850
        %1051 = vmatprep.subr.bf16.mxu0 %v849
        %1052 = vmatpush1.bf16.msra.mxu0 %v848
        %1053 = vmatprep.subr.bf16.mxu0 %v847
        %1054 = vmatpush1.bf16.msra.mxu0 %v846
        %1055 = vmatprep.subr.bf16.mxu0 %v845
        %1056 = vmatpush1.bf16.msra.mxu0 %v844
        %1057 = vmatprep.subr.bf16.mxu0 %v843
        %1058 = vmatpush1.bf16.msra.mxu0 %v842
        %1059 = vmatprep.subr.bf16.mxu0 %v841
        %1060 = vmatpush1.bf16.msra.mxu0 %v840
        %1061 = vmatprep.subr.bf16.mxu0 %v839
        %1062 = vmatpush1.bf16.msra.mxu0 %v838
        %1063 = vmatprep.subr.bf16.mxu0 %v869
        %1064 = vmatpush2.bf16.msra.mxu0 %v868
        %1065 = vmatprep.subr.bf16.mxu0 %v867
        %1066 = vmatpush2.bf16.msra.mxu0 %v866
        %1067 = vmatprep.subr.bf16.mxu0 %v865
        %1068 = vmatpush2.bf16.msra.mxu0 %v864
        %1069 = vmatprep.subr.bf16.mxu0 %v863
        %1070 = vmatpush2.bf16.msra.mxu0 %v862
        %1071 = vmatprep.subr.bf16.mxu0 %v861
        %1072 = vmatpush2.bf16.msra.mxu0 %v860
        %1073 = vmatprep.subr.bf16.mxu0 %v859
        %1074 = vmatpush2.bf16.msra.mxu0 %v858
        %1075 = vmatprep.subr.bf16.mxu0 %v857
        %1076 = vmatpush2.bf16.msra.mxu0 %v856
        %1077 = vmatprep.subr.bf16.mxu0 %v855
        %1078 = vmatpush2.bf16.msra.mxu0 %v854
        %1079 = vmatprep.mubr.bf16.mxu0 %v553
        %1080 = vmatmul.mubr.bf16.gmra.mxu0 %v552
        %v1081 = vpop.f32.mrf.mxu0
        %v1082 = vadd.f32 %v969, %v1081
        %v1083 = vpop.f32.mrf.mxu0
        %v1084 = vadd.f32 %v971, %v1083
        %v1085 = vpop.f32.mrf.mxu0
        %v1086 = vadd.f32 %v973, %v1085
        %v1087 = vpop.f32.mrf.mxu0
        %v1088 = vadd.f32 %v975, %v1087
        %1089 = vmatprep.mubr.bf16.mxu0 %v557
        %1090 = vmatmul.mubr.bf16.gmra.mxu0 %v556
        %v1091 = vpop.f32.mrf.mxu0
        %v1092 = vadd.f32 %v979, %v1091
        %v1093 = vpop.f32.mrf.mxu0
        %v1094 = vadd.f32 %v981, %v1093
        %v1095 = vpop.f32.mrf.mxu0
        %v1096 = vadd.f32 %v983, %v1095
        %v1097 = vpop.f32.mrf.mxu0
        %v1098 = vadd.f32 %v985, %v1097
        %1099 = vmatprep.mubr.bf16.mxu0 %v561
        %1100 = vmatmul.mubr.bf16.gmra.mxu0 %v560
        %v1101 = vpop.f32.mrf.mxu0
        %v1102 = vadd.f32 %v989, %v1101
        %v1103 = vpop.f32.mrf.mxu0
        %v1104 = vadd.f32 %v991, %v1103
        %v1105 = vpop.f32.mrf.mxu0
        %v1106 = vadd.f32 %v993, %v1105
        %v1107 = vpop.f32.mrf.mxu0
        %v1108 = vadd.f32 %v995, %v1107
        %1109 = vmatprep.mubr.bf16.mxu0 %v565
        %1110 = vmatmul.mubr.bf16.gmra.mxu0 %v564
        %v1111 = vpop.f32.mrf.mxu0
        %v1112 = vadd.f32 %v999, %v1111
        %v1113 = vpop.f32.mrf.mxu0
        %v1114 = vadd.f32 %v1001, %v1113
        %v1115 = vpop.f32.mrf.mxu0
        %v1116 = vadd.f32 %v1003, %v1115
        %v1117 = vpop.f32.mrf.mxu0
        %v1118 = vadd.f32 %v1005, %v1117
        %1119 = vmatprep.mubr.bf16.mxu0 %v569
        %1120 = vmatmul.mubr.bf16.gmra.mxu0 %v568
        %v1121 = vpop.f32.mrf.mxu0
        %v1122 = vadd.f32 %v1009, %v1121
        %v1123 = vpop.f32.mrf.mxu0
        %v1124 = vadd.f32 %v1011, %v1123
        %v1125 = vpop.f32.mrf.mxu0
        %v1126 = vadd.f32 %v1013, %v1125
        %v1127 = vpop.f32.mrf.mxu0
        %v1128 = vadd.f32 %v1015, %v1127
        %1129 = vmatprep.mubr.bf16.mxu0 %v573
        %1130 = vmatmul.mubr.bf16.gmra.mxu0 %v572
        %v1131 = vpop.f32.mrf.mxu0
        %v1132 = vadd.f32 %v1019, %v1131
        %v1133 = vpop.f32.mrf.mxu0
        %v1134 = vadd.f32 %v1021, %v1133
        %v1135 = vpop.f32.mrf.mxu0
        %v1136 = vadd.f32 %v1023, %v1135
        %v1137 = vpop.f32.mrf.mxu0
        %v1138 = vadd.f32 %v1025, %v1137
        %1139 = vmatprep.mubr.bf16.mxu0 %v577
        %1140 = vmatmul.mubr.bf16.gmra.mxu0 %v576
        %v1141 = vpop.f32.mrf.mxu0
        %v1142 = vadd.f32 %v1029, %v1141
        %v1143 = vpop.f32.mrf.mxu0
        %v1144 = vadd.f32 %v1031, %v1143
        %v1145 = vpop.f32.mrf.mxu0
        %v1146 = vadd.f32 %v1033, %v1145
        %v1147 = vpop.f32.mrf.mxu0
        %v1148 = vadd.f32 %v1035, %v1147
        %1149 = vmatprep.mubr.bf16.mxu0 %v581
        %1150 = vmatmul.mubr.bf16.gmra.mxu0 %v580
        %v1151 = vpop.f32.mrf.mxu0
        %v1152 = vadd.f32 %v1039, %v1151
        %v1153 = vpop.f32.mrf.mxu0
        %v1154 = vadd.f32 %v1041, %v1153
        %v1155 = vpop.f32.mrf.mxu0
        %v1156 = vadd.f32 %v1043, %v1155
        %v1157 = vpop.f32.mrf.mxu0
        %v1158 = vadd.f32 %v1045, %v1157
        %1159 = vdwg.mxu0
        %1160 = vst [vmem:[#allocation2] sm:$0xff] 0
        %1161 = vst [vmem:[#allocation2 + $0x8] sm:$0xff] 0
        %1162 = vst [vmem:[#allocation2 + $0xa0] sm:$0xff] 0
        %1163 = vst [vmem:[#allocation2 + $0xa8] sm:$0xff] 0
        %s1164 = scalar_lea.vmem [#allocation2], 144
        %1165 = vst [vmem:[%s1164] sm:$0xff] 0
        %1166 = vst [vmem:[%s1164 + $0x8] sm:$0xff] 0
        %1167 = vst [vmem:[%s1164 + $0xa0] sm:$0xff] 0
        %1168 = vst [vmem:[%s1164 + $0xa8] sm:$0xff] 0
        %vm1169 = vcmask 1040384
        %vm1170 = vsmask.f32 256
        %vm1171 = vmand %vm1169, %vm1170
        %vm1172 = vcmask 1044484
        %vm1173 = vsmask.f32 4352
        %vm1174 = vmand %vm1172, %vm1173
        %vm1175 = vmor %vm1174, %vm1171
        %v1176 = vld [vmem:[#allocation2] sm:$0x11]
        %v1177 = vsel %vm1175, 0, %v1176
        %1178 = vst [vmem:[#allocation2] sm:$0x11] %v1177
        %v1179 = vld [vmem:[#allocation2 + $0x10] sm:$0x11]
        %v1180 = vsel %vm1175, 0, %v1179
        %1181 = vst [vmem:[#allocation2 + $0x10] sm:$0x11] %v1180
        %v1182 = vld [vmem:[#allocation2 + $0x20] sm:$0x11]
        %v1183 = vsel %vm1175, 0, %v1182
        %1184 = vst [vmem:[#allocation2 + $0x20] sm:$0x11] %v1183
        %v1185 = vld [vmem:[#allocation2 + $0x30] sm:$0x11]
        %v1186 = vsel %vm1175, 0, %v1185
        %1187 = vst [vmem:[#allocation2 + $0x30] sm:$0x11] %v1186
        %v1188 = vld [vmem:[#allocation2 + $0x40] sm:$0x11]
        %v1189 = vsel %vm1175, 0, %v1188
        %1190 = vst [vmem:[#allocation2 + $0x40] sm:$0x11] %v1189
        %v1191 = vld [vmem:[#allocation2 + $0x50] sm:$0x11]
        %v1192 = vsel %vm1175, 0, %v1191
        %1193 = vst [vmem:[#allocation2 + $0x50] sm:$0x11] %v1192
        %v1194 = vld [vmem:[#allocation2 + $0x60] sm:$0x11]
        %v1195 = vsel %vm1175, 0, %v1194
        %1196 = vst [vmem:[#allocation2 + $0x60] sm:$0x11] %v1195
        %v1197 = vld [vmem:[#allocation2 + $0x70] sm:$0x11]
        %v1198 = vsel %vm1175, 0, %v1197
        %1199 = vst [vmem:[#allocation2 + $0x70] sm:$0x11] %v1198
        %v1200 = vld [vmem:[#allocation2 + $0x80] sm:$0x11]
        %v1201 = vsel %vm1175, 0, %v1200
        %1202 = vst [vmem:[#allocation2 + $0x80] sm:$0x11] %v1201
        %v1203 = vld [vmem:[#allocation2 + $0x90] sm:$0x11]
        %v1204 = vsel %vm1175, 0, %v1203
        %1205 = vst [vmem:[#allocation2 + $0x90] sm:$0x11] %v1204
        %v1206 = vld [vmem:[#allocation2 + $0xa0] sm:$0x11]
        %v1207 = vsel %vm1175, 0, %v1206
        %1208 = vst [vmem:[#allocation2 + $0xa0] sm:$0x11] %v1207
        %v1209 = vld [vmem:[#allocation2 + $0xb0] sm:$0x11]
        %v1210 = vsel %vm1175, 0, %v1209
        %1211 = vst [vmem:[#allocation2 + $0xb0] sm:$0x11] %v1210
        %v1212 = vld [vmem:[#allocation2 + $0xc0] sm:$0x11]
        %v1213 = vsel %vm1175, 0, %v1212
        %1214 = vst [vmem:[#allocation2 + $0xc0] sm:$0x11] %v1213
        %v1215 = vld [vmem:[#allocation2 + $0xd0] sm:$0x11]
        %v1216 = vsel %vm1175, 0, %v1215
        %1217 = vst [vmem:[#allocation2 + $0xd0] sm:$0x11] %v1216
        %v1218 = vld [vmem:[#allocation2 + $0xe0] sm:$0x11]
        %v1219 = vsel %vm1175, 0, %v1218
        %1220 = vst [vmem:[#allocation2 + $0xe0] sm:$0x11] %v1219
        %v1221 = vld [vmem:[#allocation2 + $0xf0] sm:$0x11]
        %v1222 = vsel %vm1175, 0, %v1221
        %1223 = vst [vmem:[#allocation2 + $0xf0] sm:$0x11] %v1222
        %v1224 = vld [vmem:[#allocation2 + $0x100] sm:$0x11]
        %v1225 = vsel %vm1175, 0, %v1224
        %1226 = vst [vmem:[#allocation2 + $0x100] sm:$0x11] %v1225
        %v1227 = vld [vmem:[#allocation2 + $0x110] sm:$0x11]
        %v1228 = vsel %vm1175, 0, %v1227
        %1229 = vst [vmem:[#allocation2 + $0x110] sm:$0x11] %v1228
        %v1230 = vld [vmem:[#allocation2 + $0x120] sm:$0x11]
        %v1231 = vsel %vm1175, 0, %v1230
        %1232 = vst [vmem:[#allocation2 + $0x120] sm:$0x11] %v1231
        %v1233 = vld [vmem:[#allocation2 + $0x130] sm:$0x11]
        %v1234 = vsel %vm1175, 0, %v1233
        %1235 = vst [vmem:[#allocation2 + $0x130] sm:$0x11] %v1234
        %vm1236 = vsmask.f32 7938
        %vm1237 = vmand %vm1169, %vm1236
        %vm1238 = vsmask.f32 7954
        %vm1239 = vmand %vm1172, %vm1238
        %vm1240 = vmor %vm1239, %vm1237
        %v1241 = vld [vmem:[#allocation2 + $0x8] sm:$0x11]
        %v1242 = vsel %vm1240, 0, %v1241
        %1243 = vst [vmem:[#allocation2 + $0x8] sm:$0x11] %v1242
        %v1244 = vld [vmem:[#allocation2 + $0x18] sm:$0x11]
        %v1245 = vsel %vm1240, 0, %v1244
        %1246 = vst [vmem:[#allocation2 + $0x18] sm:$0x11] %v1245
        %v1247 = vld [vmem:[#allocation2 + $0x28] sm:$0x11]
        %v1248 = vsel %vm1240, 0, %v1247
        %1249 = vst [vmem:[#allocation2 + $0x28] sm:$0x11] %v1248
        %v1250 = vld [vmem:[#allocation2 + $0x38] sm:$0x11]
        %v1251 = vsel %vm1240, 0, %v1250
        %1252 = vst [vmem:[#allocation2 + $0x38] sm:$0x11] %v1251
        %v1253 = vld [vmem:[#allocation2 + $0x48] sm:$0x11]
        %v1254 = vsel %vm1240, 0, %v1253
        %1255 = vst [vmem:[#allocation2 + $0x48] sm:$0x11] %v1254
        %v1256 = vld [vmem:[#allocation2 + $0x58] sm:$0x11]
        %v1257 = vsel %vm1240, 0, %v1256
        %1258 = vst [vmem:[#allocation2 + $0x58] sm:$0x11] %v1257
        %v1259 = vld [vmem:[#allocation2 + $0x68] sm:$0x11]
        %v1260 = vsel %vm1240, 0, %v1259
        %1261 = vst [vmem:[#allocation2 + $0x68] sm:$0x11] %v1260
        %v1262 = vld [vmem:[#allocation2 + $0x78] sm:$0x11]
        %v1263 = vsel %vm1240, 0, %v1262
        %1264 = vst [vmem:[#allocation2 + $0x78] sm:$0x11] %v1263
        %v1265 = vld [vmem:[#allocation2 + $0x88] sm:$0x11]
        %v1266 = vsel %vm1240, 0, %v1265
        %1267 = vst [vmem:[#allocation2 + $0x88] sm:$0x11] %v1266
        %v1268 = vld [vmem:[#allocation2 + $0x98] sm:$0x11]
        %v1269 = vsel %vm1240, 0, %v1268
        %1270 = vst [vmem:[#allocation2 + $0x98] sm:$0x11] %v1269
        %v1271 = vld [vmem:[#allocation2 + $0xa8] sm:$0x11]
        %v1272 = vsel %vm1240, 0, %v1271
        %1273 = vst [vmem:[#allocation2 + $0xa8] sm:$0x11] %v1272
        %v1274 = vld [vmem:[#allocation2 + $0xb8] sm:$0x11]
        %v1275 = vsel %vm1240, 0, %v1274
        %1276 = vst [vmem:[#allocation2 + $0xb8] sm:$0x11] %v1275
        %v1277 = vld [vmem:[#allocation2 + $0xc8] sm:$0x11]
        %v1278 = vsel %vm1240, 0, %v1277
        %1279 = vst [vmem:[#allocation2 + $0xc8] sm:$0x11] %v1278
        %v1280 = vld [vmem:[#allocation2 + $0xd8] sm:$0x11]
        %v1281 = vsel %vm1240, 0, %v1280
        %1282 = vst [vmem:[#allocation2 + $0xd8] sm:$0x11] %v1281
        %v1283 = vld [vmem:[#allocation2 + $0xe8] sm:$0x11]
        %v1284 = vsel %vm1240, 0, %v1283
        %1285 = vst [vmem:[#allocation2 + $0xe8] sm:$0x11] %v1284
        %v1286 = vld [vmem:[#allocation2 + $0xf8] sm:$0x11]
        %v1287 = vsel %vm1240, 0, %v1286
        %1288 = vst [vmem:[#allocation2 + $0xf8] sm:$0x11] %v1287
        %v1289 = vld [vmem:[#allocation2 + $0x108] sm:$0x11]
        %v1290 = vsel %vm1240, 0, %v1289
        %1291 = vst [vmem:[#allocation2 + $0x108] sm:$0x11] %v1290
        %v1292 = vld [vmem:[#allocation2 + $0x118] sm:$0x11]
        %v1293 = vsel %vm1240, 0, %v1292
        %1294 = vst [vmem:[#allocation2 + $0x118] sm:$0x11] %v1293
        %v1295 = vld [vmem:[#allocation2 + $0x128] sm:$0x11]
        %v1296 = vsel %vm1240, 0, %v1295
        %1297 = vst [vmem:[#allocation2 + $0x128] sm:$0x11] %v1296
        %v1298 = vld [vmem:[#allocation2 + $0x138] sm:$0x11]
        %v1299 = vsel %vm1240, 0, %v1298
        %1300 = vst [vmem:[#allocation2 + $0x138] sm:$0x11] %v1299
        %v1301 = vpack.c.bf16 %v1086, %v1082
        %v1302 = vpack.c.bf16 %v1088, %v1084
        %v1303 = vpack.c.bf16 %v1096, %v1092
        %v1304 = vpack.c.bf16 %v1098, %v1094
        %v1305 = vpack.c.bf16 %v1106, %v1102
        %v1306 = vpack.c.bf16 %v1108, %v1104
        %v1307 = vpack.c.bf16 %v1116, %v1112
        %v1308 = vpack.c.bf16 %v1118, %v1114
        %v1309 = vpack.c.bf16 %v1126, %v1122
        %v1310 = vpack.c.bf16 %v1128, %v1124
        %v1311 = vpack.c.bf16 %v1136, %v1132
        %v1312 = vpack.c.bf16 %v1138, %v1134
        %v1313 = vpack.c.bf16 %v1146, %v1142
        %v1314 = vpack.c.bf16 %v1148, %v1144
        %v1315 = vpack.c.bf16 %v1156, %v1152
        %v1316 = vpack.c.bf16 %v1158, %v1154
        %v1333 = vunpack.c.l.b16 %v1301
        %v1334 = vunpack.c.l.b16 %v1302
        %v1335 = vunpack.c.h.b16 %v1301
        %v1336 = vunpack.c.h.b16 %v1302
        %v1337 = vunpack.c.l.b16 %v1303
        %v1338 = vunpack.c.l.b16 %v1304
        %v1339 = vunpack.c.h.b16 %v1303
        %v1340 = vunpack.c.h.b16 %v1304
        %v1341 = vunpack.c.l.b16 %v1305
        %v1342 = vunpack.c.l.b16 %v1306
        %v1343 = vunpack.c.h.b16 %v1305
        %v1344 = vunpack.c.h.b16 %v1306
        %v1345 = vunpack.c.l.b16 %v1307
        %v1346 = vunpack.c.l.b16 %v1308
        %v1347 = vunpack.c.h.b16 %v1307
        %v1348 = vunpack.c.h.b16 %v1308
        %v1349 = vunpack.c.l.b16 %v1309
        %v1350 = vunpack.c.l.b16 %v1310
        %v1351 = vunpack.c.h.b16 %v1309
        %v1352 = vunpack.c.h.b16 %v1310
        %v1353 = vunpack.c.l.b16 %v1311
        %v1354 = vunpack.c.l.b16 %v1312
        %v1355 = vunpack.c.h.b16 %v1311
        %v1356 = vunpack.c.h.b16 %v1312
        %v1357 = vunpack.c.l.b16 %v1313
        %v1358 = vunpack.c.l.b16 %v1314
        %v1359 = vunpack.c.h.b16 %v1313
        %v1360 = vunpack.c.h.b16 %v1314
        %v1361 = vunpack.c.l.b16 %v1315
        %v1362 = vunpack.c.l.b16 %v1316
        %v1363 = vunpack.c.h.b16 %v1315
        %v1364 = vunpack.c.h.b16 %v1316
        %v1365 = vpack.c.b16 %v1334, %v1333
        %v1366 = vpack.c.b16 %v1336, %v1335
        %v1367 = vpack.c.b16 %v1338, %v1337
        %v1368 = vpack.c.b16 %v1340, %v1339
        %v1369 = vpack.c.b16 %v1342, %v1341
        %v1370 = vpack.c.b16 %v1344, %v1343
        %v1371 = vpack.c.b16 %v1346, %v1345
        %v1372 = vpack.c.b16 %v1348, %v1347
        %v1373 = vpack.c.b16 %v1350, %v1349
        %v1374 = vpack.c.b16 %v1352, %v1351
        %v1375 = vpack.c.b16 %v1354, %v1353
        %v1376 = vpack.c.b16 %v1356, %v1355
        %v1377 = vpack.c.b16 %v1358, %v1357
        %v1378 = vpack.c.b16 %v1360, %v1359
        %v1379 = vpack.c.b16 %v1362, %v1361
        %v1380 = vpack.c.b16 %v1364, %v1363
        %v1382 = vshrl.u32 %v1365, 16
        %v1384 = vrot.slane %v1382, 7
        %v1385 = vshll.u32 %v1365, 16
        %v1387 = vor.u32 %v1384, %v1385
        %v1388 = vrot.slane %v1384, 4
        %v1390 = vshrl.u32 %v1366, 16
        %v1392 = vrot.slane %v1390, 7
        %v1393 = vshll.u32 %v1366, 16
        %v1395 = vor.u32 %v1392, %v1393
        %v1396 = vrot.slane %v1392, 4
        %v1398 = vshrl.u32 %v1367, 16
        %v1400 = vrot.slane %v1398, 7
        %v1401 = vshll.u32 %v1367, 16
        %v1403 = vor.u32 %v1400, %v1401
        %v1404 = vrot.slane %v1400, 4
        %v1406 = vshrl.u32 %v1368, 16
        %v1408 = vrot.slane %v1406, 7
        %v1409 = vshll.u32 %v1368, 16
        %v1411 = vor.u32 %v1408, %v1409
        %v1412 = vrot.slane %v1408, 4
        %v1414 = vshrl.u32 %v1369, 16
        %v1416 = vrot.slane %v1414, 7
        %v1417 = vshll.u32 %v1369, 16
        %v1419 = vor.u32 %v1416, %v1417
        %v1420 = vrot.slane %v1416, 4
        %v1422 = vshrl.u32 %v1370, 16
        %v1424 = vrot.slane %v1422, 7
        %v1425 = vshll.u32 %v1370, 16
        %v1427 = vor.u32 %v1424, %v1425
        %v1428 = vrot.slane %v1424, 4
        %v1430 = vshrl.u32 %v1371, 16
        %v1432 = vrot.slane %v1430, 7
        %v1433 = vshll.u32 %v1371, 16
        %v1435 = vor.u32 %v1432, %v1433
        %v1436 = vrot.slane %v1432, 4
        %v1438 = vshrl.u32 %v1372, 16
        %v1440 = vrot.slane %v1438, 7
        %v1441 = vshll.u32 %v1372, 16
        %v1443 = vor.u32 %v1440, %v1441
        %v1444 = vrot.slane %v1440, 4
        %v1446 = vshrl.u32 %v1373, 16
        %v1448 = vrot.slane %v1446, 7
        %v1449 = vshll.u32 %v1373, 16
        %v1451 = vor.u32 %v1448, %v1449
        %v1452 = vrot.slane %v1448, 4
        %v1454 = vshrl.u32 %v1374, 16
        %v1456 = vrot.slane %v1454, 7
        %v1457 = vshll.u32 %v1374, 16
        %v1459 = vor.u32 %v1456, %v1457
        %v1460 = vrot.slane %v1456, 4
        %v1462 = vshrl.u32 %v1375, 16
        %v1464 = vrot.slane %v1462, 7
        %v1465 = vshll.u32 %v1375, 16
        %v1467 = vor.u32 %v1464, %v1465
        %v1468 = vrot.slane %v1464, 4
        %v1470 = vshrl.u32 %v1376, 16
        %v1472 = vrot.slane %v1470, 7
        %v1473 = vshll.u32 %v1376, 16
        %v1475 = vor.u32 %v1472, %v1473
        %v1476 = vrot.slane %v1472, 4
        %v1478 = vshrl.u32 %v1377, 16
        %v1480 = vrot.slane %v1478, 7
        %v1481 = vshll.u32 %v1377, 16
        %v1483 = vor.u32 %v1480, %v1481
        %v1484 = vrot.slane %v1480, 4
        %v1486 = vshrl.u32 %v1378, 16
        %v1488 = vrot.slane %v1486, 7
        %v1489 = vshll.u32 %v1378, 16
        %v1491 = vor.u32 %v1488, %v1489
        %v1492 = vrot.slane %v1488, 4
        %v1494 = vshrl.u32 %v1379, 16
        %v1496 = vrot.slane %v1494, 7
        %v1497 = vshll.u32 %v1379, 16
        %v1499 = vor.u32 %v1496, %v1497
        %v1500 = vrot.slane %v1496, 4
        %v1502 = vshrl.u32 %v1380, 16
        %v1504 = vrot.slane %v1502, 7
        %v1505 = vshll.u32 %v1380, 16
        %v1507 = vor.u32 %v1504, %v1505
        %v1508 = vrot.slane %v1504, 4
        %s1541 = scalar_lea.vmem [#allocation2], 16
        %vm1542 = vcmask 1043456
        %vm1543 = vmand %vm1542, %vm1236
        %vm1544 = vcmask 1047556
        %vm1545 = vmand %vm1544, %vm1238
        %vm1546 = vmor %vm1545, %vm1543
        %v1547 = vld [vmem:[%s1541] sm:$0xff]
        %v1548 = vsel %vm1546, %v1387, %v1547
        %1549 = vst [vmem:[%s1541] sm:$0xff] %v1548
        %v1550 = vld [vmem:[%s1541 + $0x8] sm:$0x11]
        %v1551 = vsel %vm1175, %v1388, %v1550
        %1552 = vst [vmem:[%s1541 + $0x8] sm:$0x11] %v1551
        %v1553 = vld [vmem:[%s1541 + $0x10] sm:$0xff]
        %v1554 = vsel %vm1546, %v1395, %v1553
        %1555 = vst [vmem:[%s1541 + $0x10] sm:$0xff] %v1554
        %v1556 = vld [vmem:[%s1541 + $0x18] sm:$0x11]
        %v1557 = vsel %vm1175, %v1396, %v1556
        %1558 = vst [vmem:[%s1541 + $0x18] sm:$0x11] %v1557
        %v1559 = vld [vmem:[%s1541 + $0x20] sm:$0xff]
        %v1560 = vsel %vm1546, %v1403, %v1559
        %1561 = vst [vmem:[%s1541 + $0x20] sm:$0xff] %v1560
        %v1562 = vld [vmem:[%s1541 + $0x28] sm:$0x11]
        %v1563 = vsel %vm1175, %v1404, %v1562
        %1564 = vst [vmem:[%s1541 + $0x28] sm:$0x11] %v1563
        %v1565 = vld [vmem:[%s1541 + $0x30] sm:$0xff]
        %v1566 = vsel %vm1546, %v1411, %v1565
        %1567 = vst [vmem:[%s1541 + $0x30] sm:$0xff] %v1566
        %v1568 = vld [vmem:[%s1541 + $0x38] sm:$0x11]
        %v1569 = vsel %vm1175, %v1412, %v1568
        %1570 = vst [vmem:[%s1541 + $0x38] sm:$0x11] %v1569
        %v1571 = vld [vmem:[%s1541 + $0x40] sm:$0xff]
        %v1572 = vsel %vm1546, %v1419, %v1571
        %1573 = vst [vmem:[%s1541 + $0x40] sm:$0xff] %v1572
        %v1574 = vld [vmem:[%s1541 + $0x48] sm:$0x11]
        %v1575 = vsel %vm1175, %v1420, %v1574
        %1576 = vst [vmem:[%s1541 + $0x48] sm:$0x11] %v1575
        %v1577 = vld [vmem:[%s1541 + $0x50] sm:$0xff]
        %v1578 = vsel %vm1546, %v1427, %v1577
        %1579 = vst [vmem:[%s1541 + $0x50] sm:$0xff] %v1578
        %v1580 = vld [vmem:[%s1541 + $0x58] sm:$0x11]
        %v1581 = vsel %vm1175, %v1428, %v1580
        %1582 = vst [vmem:[%s1541 + $0x58] sm:$0x11] %v1581
        %v1583 = vld [vmem:[%s1541 + $0x60] sm:$0xff]
        %v1584 = vsel %vm1546, %v1435, %v1583
        %1585 = vst [vmem:[%s1541 + $0x60] sm:$0xff] %v1584
        %v1586 = vld [vmem:[%s1541 + $0x68] sm:$0x11]
        %v1587 = vsel %vm1175, %v1436, %v1586
        %1588 = vst [vmem:[%s1541 + $0x68] sm:$0x11] %v1587
        %v1589 = vld [vmem:[%s1541 + $0x70] sm:$0xff]
        %v1590 = vsel %vm1546, %v1443, %v1589
        %1591 = vst [vmem:[%s1541 + $0x70] sm:$0xff] %v1590
        %v1592 = vld [vmem:[%s1541 + $0x78] sm:$0x11]
        %v1593 = vsel %vm1175, %v1444, %v1592
        %1594 = vst [vmem:[%s1541 + $0x78] sm:$0x11] %v1593
        %v1595 = vld [vmem:[%s1541 + $0xa0] sm:$0xff]
        %v1596 = vsel %vm1546, %v1451, %v1595
        %1597 = vst [vmem:[%s1541 + $0xa0] sm:$0xff] %v1596
        %v1598 = vld [vmem:[%s1541 + $0xa8] sm:$0x11]
        %v1599 = vsel %vm1175, %v1452, %v1598
        %1600 = vst [vmem:[%s1541 + $0xa8] sm:$0x11] %v1599
        %v1601 = vld [vmem:[%s1541 + $0xb0] sm:$0xff]
        %v1602 = vsel %vm1546, %v1459, %v1601
        %1603 = vst [vmem:[%s1541 + $0xb0] sm:$0xff] %v1602
        %v1604 = vld [vmem:[%s1541 + $0xb8] sm:$0x11]
        %v1605 = vsel %vm1175, %v1460, %v1604
        %1606 = vst [vmem:[%s1541 + $0xb8] sm:$0x11] %v1605
        %v1607 = vld [vmem:[%s1541 + $0xc0] sm:$0xff]
        %v1608 = vsel %vm1546, %v1467, %v1607
        %1609 = vst [vmem:[%s1541 + $0xc0] sm:$0xff] %v1608
        %v1610 = vld [vmem:[%s1541 + $0xc8] sm:$0x11]
        %v1611 = vsel %vm1175, %v1468, %v1610
        %1612 = vst [vmem:[%s1541 + $0xc8] sm:$0x11] %v1611
        %v1613 = vld [vmem:[%s1541 + $0xd0] sm:$0xff]
        %v1614 = vsel %vm1546, %v1475, %v1613
        %1615 = vst [vmem:[%s1541 + $0xd0] sm:$0xff] %v1614
        %v1616 = vld [vmem:[%s1541 + $0xd8] sm:$0x11]
        %v1617 = vsel %vm1175, %v1476, %v1616
        %1618 = vst [vmem:[%s1541 + $0xd8] sm:$0x11] %v1617
        %v1619 = vld [vmem:[%s1541 + $0xe0] sm:$0xff]
        %v1620 = vsel %vm1546, %v1483, %v1619
        %1621 = vst [vmem:[%s1541 + $0xe0] sm:$0xff] %v1620
        %v1622 = vld [vmem:[%s1541 + $0xe8] sm:$0x11]
        %v1623 = vsel %vm1175, %v1484, %v1622
        %1624 = vst [vmem:[%s1541 + $0xe8] sm:$0x11] %v1623
        %v1625 = vld [vmem:[%s1541 + $0xf0] sm:$0xff]
        %v1626 = vsel %vm1546, %v1491, %v1625
        %1627 = vst [vmem:[%s1541 + $0xf0] sm:$0xff] %v1626
        %v1628 = vld [vmem:[%s1541 + $0xf8] sm:$0x11]
        %v1629 = vsel %vm1175, %v1492, %v1628
        %1630 = vst [vmem:[%s1541 + $0xf8] sm:$0x11] %v1629
        %v1631 = vld [vmem:[%s1541 + $0x100] sm:$0xff]
        %v1632 = vsel %vm1546, %v1499, %v1631
        %1633 = vst [vmem:[%s1541 + $0x100] sm:$0xff] %v1632
        %v1634 = vld [vmem:[%s1541 + $0x108] sm:$0x11]
        %v1635 = vsel %vm1175, %v1500, %v1634
        %1636 = vst [vmem:[%s1541 + $0x108] sm:$0x11] %v1635
        %v1637 = vld [vmem:[%s1541 + $0x110] sm:$0xff]
        %v1638 = vsel %vm1546, %v1507, %v1637
        %1639 = vst [vmem:[%s1541 + $0x110] sm:$0xff] %v1638
        %v1640 = vld [vmem:[%s1541 + $0x118] sm:$0x11]
        %v1641 = vsel %vm1175, %v1508, %v1640
        %1642 = vst [vmem:[%s1541 + $0x118] sm:$0x11] %v1641
        %v1643 = vld [vmem:[#allocation2] sm:$0xff]
        %v1644 = vld [vmem:[#allocation2 + $0x10] sm:$0xff]
        %v1645 = vld [vmem:[#allocation2 + $0x20] sm:$0xff]
        %v1646 = vld [vmem:[#allocation2 + $0x30] sm:$0xff]
        %v1647 = vld [vmem:[#allocation2 + $0x40] sm:$0xff]
        %v1648 = vld [vmem:[#allocation2 + $0x50] sm:$0xff]
        %v1649 = vld [vmem:[#allocation2 + $0x60] sm:$0xff]
        %v1650 = vld [vmem:[#allocation2 + $0x70] sm:$0xff]
        %v1651 = vld [vmem:[#allocation2 + $0xa0] sm:$0xff]
        %v1652 = vld [vmem:[#allocation2 + $0xb0] sm:$0xff]
        %v1653 = vld [vmem:[#allocation2 + $0xc0] sm:$0xff]
        %v1654 = vld [vmem:[#allocation2 + $0xd0] sm:$0xff]
        %v1655 = vld [vmem:[#allocation2 + $0xe0] sm:$0xff]
        %v1656 = vld [vmem:[#allocation2 + $0xf0] sm:$0xff]
        %v1657 = vld [vmem:[#allocation2 + $0x100] sm:$0xff]
        %v1658 = vld [vmem:[#allocation2 + $0x110] sm:$0xff]
        %1659 = vst [vmem:[#allocation3] sm:$0xff] %v1643
        %1660 = vst [vmem:[#allocation3 + $0x48] sm:$0xff] %v1644
        %1661 = vst [vmem:[#allocation3 + $0x90] sm:$0xff] %v1645
        %1662 = vst [vmem:[#allocation3 + $0xd8] sm:$0xff] %v1646
        %1663 = vst [vmem:[#allocation3 + $0x120] sm:$0xff] %v1647
        %1664 = vst [vmem:[#allocation3 + $0x168] sm:$0xff] %v1648
        %1665 = vst [vmem:[#allocation3 + $0x1b0] sm:$0xff] %v1649
        %1666 = vst [vmem:[#allocation3 + $0x1f8] sm:$0xff] %v1650
        %1667 = vst [vmem:[#allocation3 + $0x240] sm:$0xff] %v1651
        %1668 = vst [vmem:[#allocation3 + $0x288] sm:$0xff] %v1652
        %1669 = vst [vmem:[#allocation3 + $0x2d0] sm:$0xff] %v1653
        %1670 = vst [vmem:[#allocation3 + $0x318] sm:$0xff] %v1654
        %1671 = vst [vmem:[#allocation3 + $0x360] sm:$0xff] %v1655
        %1672 = vst [vmem:[#allocation3 + $0x3a8] sm:$0xff] %v1656
        %1673 = vst [vmem:[#allocation3 + $0x3f0] sm:$0xff] %v1657
        %1674 = vst [vmem:[#allocation3 + $0x438] sm:$0xff] %v1658
        %v1675 = vld [vmem:[#allocation2] sm:$0xff]
        %v1676 = vld [vmem:[#allocation2 + $0x8] sm:$0x11]
        %v1677 = vld [vmem:[#allocation2 + $0x10] sm:$0xff]
        %v1678 = vld [vmem:[#allocation2 + $0x18] sm:$0x11]
        %v1679 = vld [vmem:[#allocation2 + $0x20] sm:$0xff]
        %v1680 = vld [vmem:[#allocation2 + $0x28] sm:$0x11]
        %v1681 = vld [vmem:[#allocation2 + $0x30] sm:$0xff]
        %v1682 = vld [vmem:[#allocation2 + $0x38] sm:$0x11]
        %v1683 = vld [vmem:[#allocation2 + $0x40] sm:$0xff]
        %v1684 = vld [vmem:[#allocation2 + $0x48] sm:$0x11]
        %v1685 = vld [vmem:[#allocation2 + $0x50] sm:$0xff]
        %v1686 = vld [vmem:[#allocation2 + $0x58] sm:$0x11]
        %v1687 = vld [vmem:[#allocation2 + $0x60] sm:$0xff]
        %v1688 = vld [vmem:[#allocation2 + $0x68] sm:$0x11]
        %v1689 = vld [vmem:[#allocation2 + $0x70] sm:$0xff]
        %v1690 = vld [vmem:[#allocation2 + $0x78] sm:$0x11]
        %v1691 = vld [vmem:[#allocation2 + $0xa0] sm:$0xff]
        %v1692 = vld [vmem:[#allocation2 + $0xa8] sm:$0x11]
        %v1693 = vld [vmem:[#allocation2 + $0xb0] sm:$0xff]
        %v1694 = vld [vmem:[#allocation2 + $0xb8] sm:$0x11]
        %v1695 = vld [vmem:[#allocation2 + $0xc0] sm:$0xff]
        %v1696 = vld [vmem:[#allocation2 + $0xc8] sm:$0x11]
        %v1697 = vld [vmem:[#allocation2 + $0xd0] sm:$0xff]
        %v1698 = vld [vmem:[#allocation2 + $0xd8] sm:$0x11]
        %v1699 = vld [vmem:[#allocation2 + $0xe0] sm:$0xff]
        %v1700 = vld [vmem:[#allocation2 + $0xe8] sm:$0x11]
        %v1701 = vld [vmem:[#allocation2 + $0xf0] sm:$0xff]
        %v1702 = vld [vmem:[#allocation2 + $0xf8] sm:$0x11]
        %v1703 = vld [vmem:[#allocation2 + $0x100] sm:$0xff]
        %v1704 = vld [vmem:[#allocation2 + $0x108] sm:$0x11]
        %v1705 = vld [vmem:[#allocation2 + $0x110] sm:$0xff]
        %v1706 = vld [vmem:[#allocation2 + $0x118] sm:$0x11]
        %vm1707 = vsmask.f32 3328
        %vm1708 = vsmask.f32 7440
        %vm1709 = vmor %vm1707, %vm1708
        %v1711 = vshrl.u32 %v1675, 16
        %v1713 = vrot.slane %v1711, 4
        %v1714 = vshll.u32 %v1675, 16
        %v1716 = vrot.slane %v1714, 5
        %v1717 = vor.u32 %v1713, %v1716
        %v1718 = vrot.slane %v1717, 4
        %v1720 = vshll.u32 %v1676, 16
        %v1722 = vrot.slane %v1720, 5
        %v1723 = vsel %vm1709, %v1718, %v1722
        %v1725 = vshrl.u32 %v1677, 16
        %v1727 = vrot.slane %v1725, 4
        %v1728 = vshll.u32 %v1677, 16
        %v1730 = vrot.slane %v1728, 5
        %v1731 = vor.u32 %v1727, %v1730
        %v1732 = vrot.slane %v1731, 4
        %v1734 = vshll.u32 %v1678, 16
        %v1736 = vrot.slane %v1734, 5
        %v1737 = vsel %vm1709, %v1732, %v1736
        %v1739 = vshrl.u32 %v1679, 16
        %v1741 = vrot.slane %v1739, 4
        %v1742 = vshll.u32 %v1679, 16
        %v1744 = vrot.slane %v1742, 5
        %v1745 = vor.u32 %v1741, %v1744
        %v1746 = vrot.slane %v1745, 4
        %v1748 = vshll.u32 %v1680, 16
        %v1750 = vrot.slane %v1748, 5
        %v1751 = vsel %vm1709, %v1746, %v1750
        %v1753 = vshrl.u32 %v1681, 16
        %v1755 = vrot.slane %v1753, 4
        %v1756 = vshll.u32 %v1681, 16
        %v1758 = vrot.slane %v1756, 5
        %v1759 = vor.u32 %v1755, %v1758
        %v1760 = vrot.slane %v1759, 4
        %v1762 = vshll.u32 %v1682, 16
        %v1764 = vrot.slane %v1762, 5
        %v1765 = vsel %vm1709, %v1760, %v1764
        %v1767 = vshrl.u32 %v1683, 16
        %v1769 = vrot.slane %v1767, 4
        %v1770 = vshll.u32 %v1683, 16
        %v1772 = vrot.slane %v1770, 5
        %v1773 = vor.u32 %v1769, %v1772
        %v1774 = vrot.slane %v1773, 4
        %v1776 = vshll.u32 %v1684, 16
        %v1778 = vrot.slane %v1776, 5
        %v1779 = vsel %vm1709, %v1774, %v1778
        %v1781 = vshrl.u32 %v1685, 16
        %v1783 = vrot.slane %v1781, 4
        %v1784 = vshll.u32 %v1685, 16
        %v1786 = vrot.slane %v1784, 5
        %v1787 = vor.u32 %v1783, %v1786
        %v1788 = vrot.slane %v1787, 4
        %v1790 = vshll.u32 %v1686, 16
        %v1792 = vrot.slane %v1790, 5
        %v1793 = vsel %vm1709, %v1788, %v1792
        %v1795 = vshrl.u32 %v1687, 16
        %v1797 = vrot.slane %v1795, 4
        %v1798 = vshll.u32 %v1687, 16
        %v1800 = vrot.slane %v1798, 5
        %v1801 = vor.u32 %v1797, %v1800
        %v1802 = vrot.slane %v1801, 4
        %v1804 = vshll.u32 %v1688, 16
        %v1806 = vrot.slane %v1804, 5
        %v1807 = vsel %vm1709, %v1802, %v1806
        %v1809 = vshrl.u32 %v1689, 16
        %v1811 = vrot.slane %v1809, 4
        %v1812 = vshll.u32 %v1689, 16
        %v1814 = vrot.slane %v1812, 5
        %v1815 = vor.u32 %v1811, %v1814
        %v1816 = vrot.slane %v1815, 4
        %v1818 = vshll.u32 %v1690, 16
        %v1820 = vrot.slane %v1818, 5
        %v1821 = vsel %vm1709, %v1816, %v1820
        %v1823 = vshrl.u32 %v1691, 16
        %v1825 = vrot.slane %v1823, 4
        %v1826 = vshll.u32 %v1691, 16
        %v1828 = vrot.slane %v1826, 5
        %v1829 = vor.u32 %v1825, %v1828
        %v1830 = vrot.slane %v1829, 4
        %v1832 = vshll.u32 %v1692, 16
        %v1834 = vrot.slane %v1832, 5
        %v1835 = vsel %vm1709, %v1830, %v1834
        %v1837 = vshrl.u32 %v1693, 16
        %v1839 = vrot.slane %v1837, 4
        %v1840 = vshll.u32 %v1693, 16
        %v1842 = vrot.slane %v1840, 5
        %v1843 = vor.u32 %v1839, %v1842
        %v1844 = vrot.slane %v1843, 4
        %v1846 = vshll.u32 %v1694, 16
        %v1848 = vrot.slane %v1846, 5
        %v1849 = vsel %vm1709, %v1844, %v1848
        %v1851 = vshrl.u32 %v1695, 16
        %v1853 = vrot.slane %v1851, 4
        %v1854 = vshll.u32 %v1695, 16
        %v1856 = vrot.slane %v1854, 5
        %v1857 = vor.u32 %v1853, %v1856
        %v1858 = vrot.slane %v1857, 4
        %v1860 = vshll.u32 %v1696, 16
        %v1862 = vrot.slane %v1860, 5
        %v1863 = vsel %vm1709, %v1858, %v1862
        %v1865 = vshrl.u32 %v1697, 16
        %v1867 = vrot.slane %v1865, 4
        %v1868 = vshll.u32 %v1697, 16
        %v1870 = vrot.slane %v1868, 5
        %v1871 = vor.u32 %v1867, %v1870
        %v1872 = vrot.slane %v1871, 4
        %v1874 = vshll.u32 %v1698, 16
        %v1876 = vrot.slane %v1874, 5
        %v1877 = vsel %vm1709, %v1872, %v1876
        %v1879 = vshrl.u32 %v1699, 16
        %v1881 = vrot.slane %v1879, 4
        %v1882 = vshll.u32 %v1699, 16
        %v1884 = vrot.slane %v1882, 5
        %v1885 = vor.u32 %v1881, %v1884
        %v1886 = vrot.slane %v1885, 4
        %v1888 = vshll.u32 %v1700, 16
        %v1890 = vrot.slane %v1888, 5
        %v1891 = vsel %vm1709, %v1886, %v1890
        %v1893 = vshrl.u32 %v1701, 16
        %v1895 = vrot.slane %v1893, 4
        %v1896 = vshll.u32 %v1701, 16
        %v1898 = vrot.slane %v1896, 5
        %v1899 = vor.u32 %v1895, %v1898
        %v1900 = vrot.slane %v1899, 4
        %v1902 = vshll.u32 %v1702, 16
        %v1904 = vrot.slane %v1902, 5
        %v1905 = vsel %vm1709, %v1900, %v1904
        %v1907 = vshrl.u32 %v1703, 16
        %v1909 = vrot.slane %v1907, 4
        %v1910 = vshll.u32 %v1703, 16
        %v1912 = vrot.slane %v1910, 5
        %v1913 = vor.u32 %v1909, %v1912
        %v1914 = vrot.slane %v1913, 4
        %v1916 = vshll.u32 %v1704, 16
        %v1918 = vrot.slane %v1916, 5
        %v1919 = vsel %vm1709, %v1914, %v1918
        %v1921 = vshrl.u32 %v1705, 16
        %v1923 = vrot.slane %v1921, 4
        %v1924 = vshll.u32 %v1705, 16
        %v1926 = vrot.slane %v1924, 5
        %v1927 = vor.u32 %v1923, %v1926
        %v1928 = vrot.slane %v1927, 4
        %v1930 = vshll.u32 %v1706, 16
        %v1932 = vrot.slane %v1930, 5
        %v1933 = vsel %vm1709, %v1928, %v1932
        %1950 = vst [vmem:[#allocation3 + $0x8] sm:$0xff] %v1723
        %1951 = vst [vmem:[#allocation3 + $0x50] sm:$0xff] %v1737
        %1952 = vst [vmem:[#allocation3 + $0x98] sm:$0xff] %v1751
        %1953 = vst [vmem:[#allocation3 + $0xe0] sm:$0xff] %v1765
        %1954 = vst [vmem:[#allocation3 + $0x128] sm:$0xff] %v1779
        %1955 = vst [vmem:[#allocation3 + $0x170] sm:$0xff] %v1793
        %1956 = vst [vmem:[#allocation3 + $0x1b8] sm:$0xff] %v1807
        %1957 = vst [vmem:[#allocation3 + $0x200] sm:$0xff] %v1821
        %1958 = vst [vmem:[#allocation3 + $0x248] sm:$0xff] %v1835
        %1959 = vst [vmem:[#allocation3 + $0x290] sm:$0xff] %v1849
        %1960 = vst [vmem:[#allocation3 + $0x2d8] sm:$0xff] %v1863
        %1961 = vst [vmem:[#allocation3 + $0x320] sm:$0xff] %v1877
        %1962 = vst [vmem:[#allocation3 + $0x368] sm:$0xff] %v1891
        %1963 = vst [vmem:[#allocation3 + $0x3b0] sm:$0xff] %v1905
        %1964 = vst [vmem:[#allocation3 + $0x3f8] sm:$0xff] %v1919
        %1965 = vst [vmem:[#allocation3 + $0x440] sm:$0xff] %v1933
        %v1966 = vld [vmem:[#allocation2] sm:$0xee]
        %v1967 = vld [vmem:[#allocation2 + $0x8] sm:$0x11]
        %v1968 = vld [vmem:[#allocation2 + $0x10] sm:$0xee]
        %v1969 = vld [vmem:[#allocation2 + $0x18] sm:$0x11]
        %v1970 = vld [vmem:[#allocation2 + $0x20] sm:$0xee]
        %v1971 = vld [vmem:[#allocation2 + $0x28] sm:$0x11]
        %v1972 = vld [vmem:[#allocation2 + $0x30] sm:$0xee]
        %v1973 = vld [vmem:[#allocation2 + $0x38] sm:$0x11]
        %v1974 = vld [vmem:[#allocation2 + $0x40] sm:$0xee]
        %v1975 = vld [vmem:[#allocation2 + $0x48] sm:$0x11]
        %v1976 = vld [vmem:[#allocation2 + $0x50] sm:$0xee]
        %v1977 = vld [vmem:[#allocation2 + $0x58] sm:$0x11]
        %v1978 = vld [vmem:[#allocation2 + $0x60] sm:$0xee]
        %v1979 = vld [vmem:[#allocation2 + $0x68] sm:$0x11]
        %v1980 = vld [vmem:[#allocation2 + $0x70] sm:$0xee]
        %v1981 = vld [vmem:[#allocation2 + $0x78] sm:$0x11]
        %v1982 = vld [vmem:[#allocation2 + $0xa0] sm:$0xee]
        %v1983 = vld [vmem:[#allocation2 + $0xa8] sm:$0x11]
        %v1984 = vld [vmem:[#allocation2 + $0xb0] sm:$0xee]
        %v1985 = vld [vmem:[#allocation2 + $0xb8] sm:$0x11]
        %v1986 = vld [vmem:[#allocation2 + $0xc0] sm:$0xee]
        %v1987 = vld [vmem:[#allocation2 + $0xc8] sm:$0x11]
        %v1988 = vld [vmem:[#allocation2 + $0xd0] sm:$0xee]
        %v1989 = vld [vmem:[#allocation2 + $0xd8] sm:$0x11]
        %v1990 = vld [vmem:[#allocation2 + $0xe0] sm:$0xee]
        %v1991 = vld [vmem:[#allocation2 + $0xe8] sm:$0x11]
        %v1992 = vld [vmem:[#allocation2 + $0xf0] sm:$0xee]
        %v1993 = vld [vmem:[#allocation2 + $0xf8] sm:$0x11]
        %v1994 = vld [vmem:[#allocation2 + $0x100] sm:$0xee]
        %v1995 = vld [vmem:[#allocation2 + $0x108] sm:$0x11]
        %v1996 = vld [vmem:[#allocation2 + $0x110] sm:$0xee]
        %v1997 = vld [vmem:[#allocation2 + $0x118] sm:$0x11]
        %vm2030 = vcmask 1042432
        %vm2031 = vcmask 1046532
        %vm2032 = vmor %vm2030, %vm2031
        %v2033 = vrot.slane %v1966, 5
        %v2034 = vrot.slane %v2033, 4
        %v2035 = vrot.slane %v1967, 5
        %v2036 = vsel %vm2032, %v2034, %v2035
        %v2037 = vrot.slane %v1968, 5
        %v2038 = vrot.slane %v2037, 4
        %v2039 = vrot.slane %v1969, 5
        %v2040 = vsel %vm2032, %v2038, %v2039
        %v2041 = vrot.slane %v1970, 5
        %v2042 = vrot.slane %v2041, 4
        %v2043 = vrot.slane %v1971, 5
        %v2044 = vsel %vm2032, %v2042, %v2043
        %v2045 = vrot.slane %v1972, 5
        %v2046 = vrot.slane %v2045, 4
        %v2047 = vrot.slane %v1973, 5
        %v2048 = vsel %vm2032, %v2046, %v2047
        %v2049 = vrot.slane %v1974, 5
        %v2050 = vrot.slane %v2049, 4
        %v2051 = vrot.slane %v1975, 5
        %v2052 = vsel %vm2032, %v2050, %v2051
        %v2053 = vrot.slane %v1976, 5
        %v2054 = vrot.slane %v2053, 4
        %v2055 = vrot.slane %v1977, 5
        %v2056 = vsel %vm2032, %v2054, %v2055
        %v2057 = vrot.slane %v1978, 5
        %v2058 = vrot.slane %v2057, 4
        %v2059 = vrot.slane %v1979, 5
        %v2060 = vsel %vm2032, %v2058, %v2059
        %v2061 = vrot.slane %v1980, 5
        %v2062 = vrot.slane %v2061, 4
        %v2063 = vrot.slane %v1981, 5
        %v2064 = vsel %vm2032, %v2062, %v2063
        %v2065 = vrot.slane %v1982, 5
        %v2066 = vrot.slane %v2065, 4
        %v2067 = vrot.slane %v1983, 5
        %v2068 = vsel %vm2032, %v2066, %v2067
        %v2069 = vrot.slane %v1984, 5
        %v2070 = vrot.slane %v2069, 4
        %v2071 = vrot.slane %v1985, 5
        %v2072 = vsel %vm2032, %v2070, %v2071
        %v2073 = vrot.slane %v1986, 5
        %v2074 = vrot.slane %v2073, 4
        %v2075 = vrot.slane %v1987, 5
        %v2076 = vsel %vm2032, %v2074, %v2075
        %v2077 = vrot.slane %v1988, 5
        %v2078 = vrot.slane %v2077, 4
        %v2079 = vrot.slane %v1989, 5
        %v2080 = vsel %vm2032, %v2078, %v2079
        %v2081 = vrot.slane %v1990, 5
        %v2082 = vrot.slane %v2081, 4
        %v2083 = vrot.slane %v1991, 5
        %v2084 = vsel %vm2032, %v2082, %v2083
        %v2085 = vrot.slane %v1992, 5
        %v2086 = vrot.slane %v2085, 4
        %v2087 = vrot.slane %v1993, 5
        %v2088 = vsel %vm2032, %v2086, %v2087
        %v2089 = vrot.slane %v1994, 5
        %v2090 = vrot.slane %v2089, 4
        %v2091 = vrot.slane %v1995, 5
        %v2092 = vsel %vm2032, %v2090, %v2091
        %v2093 = vrot.slane %v1996, 5
        %v2094 = vrot.slane %v2093, 4
        %v2095 = vrot.slane %v1997, 5
        %v2096 = vsel %vm2032, %v2094, %v2095
        %2113 = vst [vmem:[#allocation3 + $0x10] sm:$0xff] %v2036
        %2114 = vst [vmem:[#allocation3 + $0x58] sm:$0xff] %v2040
        %2115 = vst [vmem:[#allocation3 + $0xa0] sm:$0xff] %v2044
        %2116 = vst [vmem:[#allocation3 + $0xe8] sm:$0xff] %v2048
        %2117 = vst [vmem:[#allocation3 + $0x130] sm:$0xff] %v2052
        %2118 = vst [vmem:[#allocation3 + $0x178] sm:$0xff] %v2056
        %2119 = vst [vmem:[#allocation3 + $0x1c0] sm:$0xff] %v2060
        %2120 = vst [vmem:[#allocation3 + $0x208] sm:$0xff] %v2064
        %2121 = vst [vmem:[#allocation3 + $0x250] sm:$0xff] %v2068
        %2122 = vst [vmem:[#allocation3 + $0x298] sm:$0xff] %v2072
        %2123 = vst [vmem:[#allocation3 + $0x2e0] sm:$0xff] %v2076
        %2124 = vst [vmem:[#allocation3 + $0x328] sm:$0xff] %v2080
        %2125 = vst [vmem:[#allocation3 + $0x370] sm:$0xff] %v2084
        %2126 = vst [vmem:[#allocation3 + $0x3b8] sm:$0xff] %v2088
        %2127 = vst [vmem:[#allocation3 + $0x400] sm:$0xff] %v2092
        %2128 = vst [vmem:[#allocation3 + $0x448] sm:$0xff] %v2096
        %v2129 = vld [vmem:[%s1541] sm:$0xff]
        %v2130 = vld [vmem:[%s1541 + $0x10] sm:$0xff]
        %v2131 = vld [vmem:[%s1541 + $0x20] sm:$0xff]
        %v2132 = vld [vmem:[%s1541 + $0x30] sm:$0xff]
        %v2133 = vld [vmem:[%s1541 + $0x40] sm:$0xff]
        %v2134 = vld [vmem:[%s1541 + $0x50] sm:$0xff]
        %v2135 = vld [vmem:[%s1541 + $0x60] sm:$0xff]
        %v2136 = vld [vmem:[%s1541 + $0x70] sm:$0xff]
        %v2137 = vld [vmem:[%s1541 + $0xa0] sm:$0xff]
        %v2138 = vld [vmem:[%s1541 + $0xb0] sm:$0xff]
        %v2139 = vld [vmem:[%s1541 + $0xc0] sm:$0xff]
        %v2140 = vld [vmem:[%s1541 + $0xd0] sm:$0xff]
        %v2141 = vld [vmem:[%s1541 + $0xe0] sm:$0xff]
        %v2142 = vld [vmem:[%s1541 + $0xf0] sm:$0xff]
        %v2143 = vld [vmem:[%s1541 + $0x100] sm:$0xff]
        %v2144 = vld [vmem:[%s1541 + $0x110] sm:$0xff]
        %2145 = vst [vmem:[#allocation3 + $0x18] sm:$0xff] %v2129
        %2146 = vst [vmem:[#allocation3 + $0x60] sm:$0xff] %v2130
        %2147 = vst [vmem:[#allocation3 + $0xa8] sm:$0xff] %v2131
        %2148 = vst [vmem:[#allocation3 + $0xf0] sm:$0xff] %v2132
        %2149 = vst [vmem:[#allocation3 + $0x138] sm:$0xff] %v2133
        %2150 = vst [vmem:[#allocation3 + $0x180] sm:$0xff] %v2134
        %2151 = vst [vmem:[#allocation3 + $0x1c8] sm:$0xff] %v2135
        %2152 = vst [vmem:[#allocation3 + $0x210] sm:$0xff] %v2136
        %2153 = vst [vmem:[#allocation3 + $0x258] sm:$0xff] %v2137
        %2154 = vst [vmem:[#allocation3 + $0x2a0] sm:$0xff] %v2138
        %2155 = vst [vmem:[#allocation3 + $0x2e8] sm:$0xff] %v2139
        %2156 = vst [vmem:[#allocation3 + $0x330] sm:$0xff] %v2140
        %2157 = vst [vmem:[#allocation3 + $0x378] sm:$0xff] %v2141
        %2158 = vst [vmem:[#allocation3 + $0x3c0] sm:$0xff] %v2142
        %2159 = vst [vmem:[#allocation3 + $0x408] sm:$0xff] %v2143
        %2160 = vst [vmem:[#allocation3 + $0x450] sm:$0xff] %v2144
        %v2161 = vld [vmem:[%s1541] sm:$0xff]
        %v2162 = vld [vmem:[%s1541 + $0x8] sm:$0x11]
        %v2163 = vld [vmem:[%s1541 + $0x10] sm:$0xff]
        %v2164 = vld [vmem:[%s1541 + $0x18] sm:$0x11]
        %v2165 = vld [vmem:[%s1541 + $0x20] sm:$0xff]
        %v2166 = vld [vmem:[%s1541 + $0x28] sm:$0x11]
        %v2167 = vld [vmem:[%s1541 + $0x30] sm:$0xff]
        %v2168 = vld [vmem:[%s1541 + $0x38] sm:$0x11]
        %v2169 = vld [vmem:[%s1541 + $0x40] sm:$0xff]
        %v2170 = vld [vmem:[%s1541 + $0x48] sm:$0x11]
        %v2171 = vld [vmem:[%s1541 + $0x50] sm:$0xff]
        %v2172 = vld [vmem:[%s1541 + $0x58] sm:$0x11]
        %v2173 = vld [vmem:[%s1541 + $0x60] sm:$0xff]
        %v2174 = vld [vmem:[%s1541 + $0x68] sm:$0x11]
        %v2175 = vld [vmem:[%s1541 + $0x70] sm:$0xff]
        %v2176 = vld [vmem:[%s1541 + $0x78] sm:$0x11]
        %v2177 = vld [vmem:[%s1541 + $0xa0] sm:$0xff]
        %v2178 = vld [vmem:[%s1541 + $0xa8] sm:$0x11]
        %v2179 = vld [vmem:[%s1541 + $0xb0] sm:$0xff]
        %v2180 = vld [vmem:[%s1541 + $0xb8] sm:$0x11]
        %v2181 = vld [vmem:[%s1541 + $0xc0] sm:$0xff]
        %v2182 = vld [vmem:[%s1541 + $0xc8] sm:$0x11]
        %v2183 = vld [vmem:[%s1541 + $0xd0] sm:$0xff]
        %v2184 = vld [vmem:[%s1541 + $0xd8] sm:$0x11]
        %v2185 = vld [vmem:[%s1541 + $0xe0] sm:$0xff]
        %v2186 = vld [vmem:[%s1541 + $0xe8] sm:$0x11]
        %v2187 = vld [vmem:[%s1541 + $0xf0] sm:$0xff]
        %v2188 = vld [vmem:[%s1541 + $0xf8] sm:$0x11]
        %v2189 = vld [vmem:[%s1541 + $0x100] sm:$0xff]
        %v2190 = vld [vmem:[%s1541 + $0x108] sm:$0x11]
        %v2191 = vld [vmem:[%s1541 + $0x110] sm:$0xff]
        %v2192 = vld [vmem:[%s1541 + $0x118] sm:$0x11]
        %v2194 = vshrl.u32 %v2161, 16
        %v2196 = vrot.slane %v2194, 4
        %v2197 = vshll.u32 %v2161, 16
        %v2199 = vrot.slane %v2197, 5
        %v2200 = vor.u32 %v2196, %v2199
        %v2201 = vrot.slane %v2200, 4
        %v2203 = vshll.u32 %v2162, 16
        %v2205 = vrot.slane %v2203, 5
        %v2206 = vsel %vm1709, %v2201, %v2205
        %v2208 = vshrl.u32 %v2163, 16
        %v2210 = vrot.slane %v2208, 4
        %v2211 = vshll.u32 %v2163, 16
        %v2213 = vrot.slane %v2211, 5
        %v2214 = vor.u32 %v2210, %v2213
        %v2215 = vrot.slane %v2214, 4
        %v2217 = vshll.u32 %v2164, 16
        %v2219 = vrot.slane %v2217, 5
        %v2220 = vsel %vm1709, %v2215, %v2219
        %v2222 = vshrl.u32 %v2165, 16
        %v2224 = vrot.slane %v2222, 4
        %v2225 = vshll.u32 %v2165, 16
        %v2227 = vrot.slane %v2225, 5
        %v2228 = vor.u32 %v2224, %v2227
        %v2229 = vrot.slane %v2228, 4
        %v2231 = vshll.u32 %v2166, 16
        %v2233 = vrot.slane %v2231, 5
        %v2234 = vsel %vm1709, %v2229, %v2233
        %v2236 = vshrl.u32 %v2167, 16
        %v2238 = vrot.slane %v2236, 4
        %v2239 = vshll.u32 %v2167, 16
        %v2241 = vrot.slane %v2239, 5
        %v2242 = vor.u32 %v2238, %v2241
        %v2243 = vrot.slane %v2242, 4
        %v2245 = vshll.u32 %v2168, 16
        %v2247 = vrot.slane %v2245, 5
        %v2248 = vsel %vm1709, %v2243, %v2247
        %v2250 = vshrl.u32 %v2169, 16
        %v2252 = vrot.slane %v2250, 4
        %v2253 = vshll.u32 %v2169, 16
        %v2255 = vrot.slane %v2253, 5
        %v2256 = vor.u32 %v2252, %v2255
        %v2257 = vrot.slane %v2256, 4
        %v2259 = vshll.u32 %v2170, 16
        %v2261 = vrot.slane %v2259, 5
        %v2262 = vsel %vm1709, %v2257, %v2261
        %v2264 = vshrl.u32 %v2171, 16
        %v2266 = vrot.slane %v2264, 4
        %v2267 = vshll.u32 %v2171, 16
        %v2269 = vrot.slane %v2267, 5
        %v2270 = vor.u32 %v2266, %v2269
        %v2271 = vrot.slane %v2270, 4
        %v2273 = vshll.u32 %v2172, 16
        %v2275 = vrot.slane %v2273, 5
        %v2276 = vsel %vm1709, %v2271, %v2275
        %v2278 = vshrl.u32 %v2173, 16
        %v2280 = vrot.slane %v2278, 4
        %v2281 = vshll.u32 %v2173, 16
        %v2283 = vrot.slane %v2281, 5
        %v2284 = vor.u32 %v2280, %v2283
        %v2285 = vrot.slane %v2284, 4
        %v2287 = vshll.u32 %v2174, 16
        %v2289 = vrot.slane %v2287, 5
        %v2290 = vsel %vm1709, %v2285, %v2289
        %v2292 = vshrl.u32 %v2175, 16
        %v2294 = vrot.slane %v2292, 4
        %v2295 = vshll.u32 %v2175, 16
        %v2297 = vrot.slane %v2295, 5
        %v2298 = vor.u32 %v2294, %v2297
        %v2299 = vrot.slane %v2298, 4
        %v2301 = vshll.u32 %v2176, 16
        %v2303 = vrot.slane %v2301, 5
        %v2304 = vsel %vm1709, %v2299, %v2303
        %v2306 = vshrl.u32 %v2177, 16
        %v2308 = vrot.slane %v2306, 4
        %v2309 = vshll.u32 %v2177, 16
        %v2311 = vrot.slane %v2309, 5
        %v2312 = vor.u32 %v2308, %v2311
        %v2313 = vrot.slane %v2312, 4
        %v2315 = vshll.u32 %v2178, 16
        %v2317 = vrot.slane %v2315, 5
        %v2318 = vsel %vm1709, %v2313, %v2317
        %v2320 = vshrl.u32 %v2179, 16
        %v2322 = vrot.slane %v2320, 4
        %v2323 = vshll.u32 %v2179, 16
        %v2325 = vrot.slane %v2323, 5
        %v2326 = vor.u32 %v2322, %v2325
        %v2327 = vrot.slane %v2326, 4
        %v2329 = vshll.u32 %v2180, 16
        %v2331 = vrot.slane %v2329, 5
        %v2332 = vsel %vm1709, %v2327, %v2331
        %v2334 = vshrl.u32 %v2181, 16
        %v2336 = vrot.slane %v2334, 4
        %v2337 = vshll.u32 %v2181, 16
        %v2339 = vrot.slane %v2337, 5
        %v2340 = vor.u32 %v2336, %v2339
        %v2341 = vrot.slane %v2340, 4
        %v2343 = vshll.u32 %v2182, 16
        %v2345 = vrot.slane %v2343, 5
        %v2346 = vsel %vm1709, %v2341, %v2345
        %v2348 = vshrl.u32 %v2183, 16
        %v2350 = vrot.slane %v2348, 4
        %v2351 = vshll.u32 %v2183, 16
        %v2353 = vrot.slane %v2351, 5
        %v2354 = vor.u32 %v2350, %v2353
        %v2355 = vrot.slane %v2354, 4
        %v2357 = vshll.u32 %v2184, 16
        %v2359 = vrot.slane %v2357, 5
        %v2360 = vsel %vm1709, %v2355, %v2359
        %v2362 = vshrl.u32 %v2185, 16
        %v2364 = vrot.slane %v2362, 4
        %v2365 = vshll.u32 %v2185, 16
        %v2367 = vrot.slane %v2365, 5
        %v2368 = vor.u32 %v2364, %v2367
        %v2369 = vrot.slane %v2368, 4
        %v2371 = vshll.u32 %v2186, 16
        %v2373 = vrot.slane %v2371, 5
        %v2374 = vsel %vm1709, %v2369, %v2373
        %v2376 = vshrl.u32 %v2187, 16
        %v2378 = vrot.slane %v2376, 4
        %v2379 = vshll.u32 %v2187, 16
        %v2381 = vrot.slane %v2379, 5
        %v2382 = vor.u32 %v2378, %v2381
        %v2383 = vrot.slane %v2382, 4
        %v2385 = vshll.u32 %v2188, 16
        %v2387 = vrot.slane %v2385, 5
        %v2388 = vsel %vm1709, %v2383, %v2387
        %v2390 = vshrl.u32 %v2189, 16
        %v2392 = vrot.slane %v2390, 4
        %v2393 = vshll.u32 %v2189, 16
        %v2395 = vrot.slane %v2393, 5
        %v2396 = vor.u32 %v2392, %v2395
        %v2397 = vrot.slane %v2396, 4
        %v2399 = vshll.u32 %v2190, 16
        %v2401 = vrot.slane %v2399, 5
        %v2402 = vsel %vm1709, %v2397, %v2401
        %v2404 = vshrl.u32 %v2191, 16
        %v2406 = vrot.slane %v2404, 4
        %v2407 = vshll.u32 %v2191, 16
        %v2409 = vrot.slane %v2407, 5
        %v2410 = vor.u32 %v2406, %v2409
        %v2411 = vrot.slane %v2410, 4
        %v2413 = vshll.u32 %v2192, 16
        %v2415 = vrot.slane %v2413, 5
        %v2416 = vsel %vm1709, %v2411, %v2415
        %2433 = vst [vmem:[#allocation3 + $0x20] sm:$0xff] %v2206
        %2434 = vst [vmem:[#allocation3 + $0x68] sm:$0xff] %v2220
        %2435 = vst [vmem:[#allocation3 + $0xb0] sm:$0xff] %v2234
        %2436 = vst [vmem:[#allocation3 + $0xf8] sm:$0xff] %v2248
        %2437 = vst [vmem:[#allocation3 + $0x140] sm:$0xff] %v2262
        %2438 = vst [vmem:[#allocation3 + $0x188] sm:$0xff] %v2276
        %2439 = vst [vmem:[#allocation3 + $0x1d0] sm:$0xff] %v2290
        %2440 = vst [vmem:[#allocation3 + $0x218] sm:$0xff] %v2304
        %2441 = vst [vmem:[#allocation3 + $0x260] sm:$0xff] %v2318
        %2442 = vst [vmem:[#allocation3 + $0x2a8] sm:$0xff] %v2332
        %2443 = vst [vmem:[#allocation3 + $0x2f0] sm:$0xff] %v2346
        %2444 = vst [vmem:[#allocation3 + $0x338] sm:$0xff] %v2360
        %2445 = vst [vmem:[#allocation3 + $0x380] sm:$0xff] %v2374
        %2446 = vst [vmem:[#allocation3 + $0x3c8] sm:$0xff] %v2388
        %2447 = vst [vmem:[#allocation3 + $0x410] sm:$0xff] %v2402
        %2448 = vst [vmem:[#allocation3 + $0x458] sm:$0xff] %v2416
        %v2449 = vld [vmem:[%s1541] sm:$0xee]
        %v2450 = vld [vmem:[%s1541 + $0x8] sm:$0x11]
        %v2451 = vld [vmem:[%s1541 + $0x10] sm:$0xee]
        %v2452 = vld [vmem:[%s1541 + $0x18] sm:$0x11]
        %v2453 = vld [vmem:[%s1541 + $0x20] sm:$0xee]
        %v2454 = vld [vmem:[%s1541 + $0x28] sm:$0x11]
        %v2455 = vld [vmem:[%s1541 + $0x30] sm:$0xee]
        %v2456 = vld [vmem:[%s1541 + $0x38] sm:$0x11]
        %v2457 = vld [vmem:[%s1541 + $0x40] sm:$0xee]
        %v2458 = vld [vmem:[%s1541 + $0x48] sm:$0x11]
        %v2459 = vld [vmem:[%s1541 + $0x50] sm:$0xee]
        %v2460 = vld [vmem:[%s1541 + $0x58] sm:$0x11]
        %v2461 = vld [vmem:[%s1541 + $0x60] sm:$0xee]
        %v2462 = vld [vmem:[%s1541 + $0x68] sm:$0x11]
        %v2463 = vld [vmem:[%s1541 + $0x70] sm:$0xee]
        %v2464 = vld [vmem:[%s1541 + $0x78] sm:$0x11]
        %v2465 = vld [vmem:[%s1541 + $0xa0] sm:$0xee]
        %v2466 = vld [vmem:[%s1541 + $0xa8] sm:$0x11]
        %v2467 = vld [vmem:[%s1541 + $0xb0] sm:$0xee]
        %v2468 = vld [vmem:[%s1541 + $0xb8] sm:$0x11]
        %v2469 = vld [vmem:[%s1541 + $0xc0] sm:$0xee]
        %v2470 = vld [vmem:[%s1541 + $0xc8] sm:$0x11]
        %v2471 = vld [vmem:[%s1541 + $0xd0] sm:$0xee]
        %v2472 = vld [vmem:[%s1541 + $0xd8] sm:$0x11]
        %v2473 = vld [vmem:[%s1541 + $0xe0] sm:$0xee]
        %v2474 = vld [vmem:[%s1541 + $0xe8] sm:$0x11]
        %v2475 = vld [vmem:[%s1541 + $0xf0] sm:$0xee]
        %v2476 = vld [vmem:[%s1541 + $0xf8] sm:$0x11]
        %v2477 = vld [vmem:[%s1541 + $0x100] sm:$0xee]
        %v2478 = vld [vmem:[%s1541 + $0x108] sm:$0x11]
        %v2479 = vld [vmem:[%s1541 + $0x110] sm:$0xee]
        %v2480 = vld [vmem:[%s1541 + $0x118] sm:$0x11]
        %v2513 = vrot.slane %v2449, 5
        %v2514 = vrot.slane %v2513, 4
        %v2515 = vrot.slane %v2450, 5
        %v2516 = vsel %vm2032, %v2514, %v2515
        %v2517 = vrot.slane %v2451, 5
        %v2518 = vrot.slane %v2517, 4
        %v2519 = vrot.slane %v2452, 5
        %v2520 = vsel %vm2032, %v2518, %v2519
        %v2521 = vrot.slane %v2453, 5
        %v2522 = vrot.slane %v2521, 4
        %v2523 = vrot.slane %v2454, 5
        %v2524 = vsel %vm2032, %v2522, %v2523
        %v2525 = vrot.slane %v2455, 5
        %v2526 = vrot.slane %v2525, 4
        %v2527 = vrot.slane %v2456, 5
        %v2528 = vsel %vm2032, %v2526, %v2527
        %v2529 = vrot.slane %v2457, 5
        %v2530 = vrot.slane %v2529, 4
        %v2531 = vrot.slane %v2458, 5
        %v2532 = vsel %vm2032, %v2530, %v2531
        %v2533 = vrot.slane %v2459, 5
        %v2534 = vrot.slane %v2533, 4
        %v2535 = vrot.slane %v2460, 5
        %v2536 = vsel %vm2032, %v2534, %v2535
        %v2537 = vrot.slane %v2461, 5
        %v2538 = vrot.slane %v2537, 4
        %v2539 = vrot.slane %v2462, 5
        %v2540 = vsel %vm2032, %v2538, %v2539
        %v2541 = vrot.slane %v2463, 5
        %v2542 = vrot.slane %v2541, 4
        %v2543 = vrot.slane %v2464, 5
        %v2544 = vsel %vm2032, %v2542, %v2543
        %v2545 = vrot.slane %v2465, 5
        %v2546 = vrot.slane %v2545, 4
        %v2547 = vrot.slane %v2466, 5
        %v2548 = vsel %vm2032, %v2546, %v2547
        %v2549 = vrot.slane %v2467, 5
        %v2550 = vrot.slane %v2549, 4
        %v2551 = vrot.slane %v2468, 5
        %v2552 = vsel %vm2032, %v2550, %v2551
        %v2553 = vrot.slane %v2469, 5
        %v2554 = vrot.slane %v2553, 4
        %v2555 = vrot.slane %v2470, 5
        %v2556 = vsel %vm2032, %v2554, %v2555
        %v2557 = vrot.slane %v2471, 5
        %v2558 = vrot.slane %v2557, 4
        %v2559 = vrot.slane %v2472, 5
        %v2560 = vsel %vm2032, %v2558, %v2559
        %v2561 = vrot.slane %v2473, 5
        %v2562 = vrot.slane %v2561, 4
        %v2563 = vrot.slane %v2474, 5
        %v2564 = vsel %vm2032, %v2562, %v2563
        %v2565 = vrot.slane %v2475, 5
        %v2566 = vrot.slane %v2565, 4
        %v2567 = vrot.slane %v2476, 5
        %v2568 = vsel %vm2032, %v2566, %v2567
        %v2569 = vrot.slane %v2477, 5
        %v2570 = vrot.slane %v2569, 4
        %v2571 = vrot.slane %v2478, 5
        %v2572 = vsel %vm2032, %v2570, %v2571
        %v2573 = vrot.slane %v2479, 5
        %v2574 = vrot.slane %v2573, 4
        %v2575 = vrot.slane %v2480, 5
        %v2576 = vsel %vm2032, %v2574, %v2575
        %2593 = vst [vmem:[#allocation3 + $0x28] sm:$0xff] %v2516
        %2594 = vst [vmem:[#allocation3 + $0x70] sm:$0xff] %v2520
        %2595 = vst [vmem:[#allocation3 + $0xb8] sm:$0xff] %v2524
        %2596 = vst [vmem:[#allocation3 + $0x100] sm:$0xff] %v2528
        %2597 = vst [vmem:[#allocation3 + $0x148] sm:$0xff] %v2532
        %2598 = vst [vmem:[#allocation3 + $0x190] sm:$0xff] %v2536
        %2599 = vst [vmem:[#allocation3 + $0x1d8] sm:$0xff] %v2540
        %2600 = vst [vmem:[#allocation3 + $0x220] sm:$0xff] %v2544
        %2601 = vst [vmem:[#allocation3 + $0x268] sm:$0xff] %v2548
        %2602 = vst [vmem:[#allocation3 + $0x2b0] sm:$0xff] %v2552
        %2603 = vst [vmem:[#allocation3 + $0x2f8] sm:$0xff] %v2556
        %2604 = vst [vmem:[#allocation3 + $0x340] sm:$0xff] %v2560
        %2605 = vst [vmem:[#allocation3 + $0x388] sm:$0xff] %v2564
        %2606 = vst [vmem:[#allocation3 + $0x3d0] sm:$0xff] %v2568
        %2607 = vst [vmem:[#allocation3 + $0x418] sm:$0xff] %v2572
        %2608 = vst [vmem:[#allocation3 + $0x460] sm:$0xff] %v2576
        %s2609 = scalar_lea.vmem [#allocation2], 32
        %v2610 = vld [vmem:[%s2609] sm:$0xff]
        %v2611 = vld [vmem:[%s2609 + $0x10] sm:$0xff]
        %v2612 = vld [vmem:[%s2609 + $0x20] sm:$0xff]
        %v2613 = vld [vmem:[%s2609 + $0x30] sm:$0xff]
        %v2614 = vld [vmem:[%s2609 + $0x40] sm:$0xff]
        %v2615 = vld [vmem:[%s2609 + $0x50] sm:$0xff]
        %v2616 = vld [vmem:[%s2609 + $0x60] sm:$0xff]
        %v2617 = vld [vmem:[%s2609 + $0x70] sm:$0xff]
        %v2618 = vld [vmem:[%s2609 + $0xa0] sm:$0xff]
        %v2619 = vld [vmem:[%s2609 + $0xb0] sm:$0xff]
        %v2620 = vld [vmem:[%s2609 + $0xc0] sm:$0xff]
        %v2621 = vld [vmem:[%s2609 + $0xd0] sm:$0xff]
        %v2622 = vld [vmem:[%s2609 + $0xe0] sm:$0xff]
        %v2623 = vld [vmem:[%s2609 + $0xf0] sm:$0xff]
        %v2624 = vld [vmem:[%s2609 + $0x100] sm:$0xff]
        %v2625 = vld [vmem:[%s2609 + $0x110] sm:$0xff]
        %2626 = vst [vmem:[#allocation3 + $0x30] sm:$0xff] %v2610
        %2627 = vst [vmem:[#allocation3 + $0x78] sm:$0xff] %v2611
        %2628 = vst [vmem:[#allocation3 + $0xc0] sm:$0xff] %v2612
        %2629 = vst [vmem:[#allocation3 + $0x108] sm:$0xff] %v2613
        %2630 = vst [vmem:[#allocation3 + $0x150] sm:$0xff] %v2614
        %2631 = vst [vmem:[#allocation3 + $0x198] sm:$0xff] %v2615
        %2632 = vst [vmem:[#allocation3 + $0x1e0] sm:$0xff] %v2616
        %2633 = vst [vmem:[#allocation3 + $0x228] sm:$0xff] %v2617
        %2634 = vst [vmem:[#allocation3 + $0x270] sm:$0xff] %v2618
        %2635 = vst [vmem:[#allocation3 + $0x2b8] sm:$0xff] %v2619
        %2636 = vst [vmem:[#allocation3 + $0x300] sm:$0xff] %v2620
        %2637 = vst [vmem:[#allocation3 + $0x348] sm:$0xff] %v2621
        %2638 = vst [vmem:[#allocation3 + $0x390] sm:$0xff] %v2622
        %2639 = vst [vmem:[#allocation3 + $0x3d8] sm:$0xff] %v2623
        %2640 = vst [vmem:[#allocation3 + $0x420] sm:$0xff] %v2624
        %2641 = vst [vmem:[#allocation3 + $0x468] sm:$0xff] %v2625
        %v2642 = vld [vmem:[%s2609] sm:$0xff]
        %v2643 = vld [vmem:[%s2609 + $0x8] sm:$0x11]
        %v2644 = vld [vmem:[%s2609 + $0x10] sm:$0xff]
        %v2645 = vld [vmem:[%s2609 + $0x18] sm:$0x11]
        %v2646 = vld [vmem:[%s2609 + $0x20] sm:$0xff]
        %v2647 = vld [vmem:[%s2609 + $0x28] sm:$0x11]
        %v2648 = vld [vmem:[%s2609 + $0x30] sm:$0xff]
        %v2649 = vld [vmem:[%s2609 + $0x38] sm:$0x11]
        %v2650 = vld [vmem:[%s2609 + $0x40] sm:$0xff]
        %v2651 = vld [vmem:[%s2609 + $0x48] sm:$0x11]
        %v2652 = vld [vmem:[%s2609 + $0x50] sm:$0xff]
        %v2653 = vld [vmem:[%s2609 + $0x58] sm:$0x11]
        %v2654 = vld [vmem:[%s2609 + $0x60] sm:$0xff]
        %v2655 = vld [vmem:[%s2609 + $0x68] sm:$0x11]
        %v2656 = vld [vmem:[%s2609 + $0x70] sm:$0xff]
        %v2657 = vld [vmem:[%s2609 + $0x78] sm:$0x11]
        %v2658 = vld [vmem:[%s2609 + $0xa0] sm:$0xff]
        %v2659 = vld [vmem:[%s2609 + $0xa8] sm:$0x11]
        %v2660 = vld [vmem:[%s2609 + $0xb0] sm:$0xff]
        %v2661 = vld [vmem:[%s2609 + $0xb8] sm:$0x11]
        %v2662 = vld [vmem:[%s2609 + $0xc0] sm:$0xff]
        %v2663 = vld [vmem:[%s2609 + $0xc8] sm:$0x11]
        %v2664 = vld [vmem:[%s2609 + $0xd0] sm:$0xff]
        %v2665 = vld [vmem:[%s2609 + $0xd8] sm:$0x11]
        %v2666 = vld [vmem:[%s2609 + $0xe0] sm:$0xff]
        %v2667 = vld [vmem:[%s2609 + $0xe8] sm:$0x11]
        %v2668 = vld [vmem:[%s2609 + $0xf0] sm:$0xff]
        %v2669 = vld [vmem:[%s2609 + $0xf8] sm:$0x11]
        %v2670 = vld [vmem:[%s2609 + $0x100] sm:$0xff]
        %v2671 = vld [vmem:[%s2609 + $0x108] sm:$0x11]
        %v2672 = vld [vmem:[%s2609 + $0x110] sm:$0xff]
        %v2673 = vld [vmem:[%s2609 + $0x118] sm:$0x11]
        %v2675 = vshrl.u32 %v2642, 16
        %v2677 = vrot.slane %v2675, 4
        %v2678 = vshll.u32 %v2642, 16
        %v2680 = vrot.slane %v2678, 5
        %v2681 = vor.u32 %v2677, %v2680
        %v2682 = vrot.slane %v2681, 4
        %v2684 = vshll.u32 %v2643, 16
        %v2686 = vrot.slane %v2684, 5
        %v2687 = vsel %vm1709, %v2682, %v2686
        %v2689 = vshrl.u32 %v2644, 16
        %v2691 = vrot.slane %v2689, 4
        %v2692 = vshll.u32 %v2644, 16
        %v2694 = vrot.slane %v2692, 5
        %v2695 = vor.u32 %v2691, %v2694
        %v2696 = vrot.slane %v2695, 4
        %v2698 = vshll.u32 %v2645, 16
        %v2700 = vrot.slane %v2698, 5
        %v2701 = vsel %vm1709, %v2696, %v2700
        %v2703 = vshrl.u32 %v2646, 16
        %v2705 = vrot.slane %v2703, 4
        %v2706 = vshll.u32 %v2646, 16
        %v2708 = vrot.slane %v2706, 5
        %v2709 = vor.u32 %v2705, %v2708
        %v2710 = vrot.slane %v2709, 4
        %v2712 = vshll.u32 %v2647, 16
        %v2714 = vrot.slane %v2712, 5
        %v2715 = vsel %vm1709, %v2710, %v2714
        %v2717 = vshrl.u32 %v2648, 16
        %v2719 = vrot.slane %v2717, 4
        %v2720 = vshll.u32 %v2648, 16
        %v2722 = vrot.slane %v2720, 5
        %v2723 = vor.u32 %v2719, %v2722
        %v2724 = vrot.slane %v2723, 4
        %v2726 = vshll.u32 %v2649, 16
        %v2728 = vrot.slane %v2726, 5
        %v2729 = vsel %vm1709, %v2724, %v2728
        %v2731 = vshrl.u32 %v2650, 16
        %v2733 = vrot.slane %v2731, 4
        %v2734 = vshll.u32 %v2650, 16
        %v2736 = vrot.slane %v2734, 5
        %v2737 = vor.u32 %v2733, %v2736
        %v2738 = vrot.slane %v2737, 4
        %v2740 = vshll.u32 %v2651, 16
        %v2742 = vrot.slane %v2740, 5
        %v2743 = vsel %vm1709, %v2738, %v2742
        %v2745 = vshrl.u32 %v2652, 16
        %v2747 = vrot.slane %v2745, 4
        %v2748 = vshll.u32 %v2652, 16
        %v2750 = vrot.slane %v2748, 5
        %v2751 = vor.u32 %v2747, %v2750
        %v2752 = vrot.slane %v2751, 4
        %v2754 = vshll.u32 %v2653, 16
        %v2756 = vrot.slane %v2754, 5
        %v2757 = vsel %vm1709, %v2752, %v2756
        %v2759 = vshrl.u32 %v2654, 16
        %v2761 = vrot.slane %v2759, 4
        %v2762 = vshll.u32 %v2654, 16
        %v2764 = vrot.slane %v2762, 5
        %v2765 = vor.u32 %v2761, %v2764
        %v2766 = vrot.slane %v2765, 4
        %v2768 = vshll.u32 %v2655, 16
        %v2770 = vrot.slane %v2768, 5
        %v2771 = vsel %vm1709, %v2766, %v2770
        %v2773 = vshrl.u32 %v2656, 16
        %v2775 = vrot.slane %v2773, 4
        %v2776 = vshll.u32 %v2656, 16
        %v2778 = vrot.slane %v2776, 5
        %v2779 = vor.u32 %v2775, %v2778
        %v2780 = vrot.slane %v2779, 4
        %v2782 = vshll.u32 %v2657, 16
        %v2784 = vrot.slane %v2782, 5
        %v2785 = vsel %vm1709, %v2780, %v2784
        %v2787 = vshrl.u32 %v2658, 16
        %v2789 = vrot.slane %v2787, 4
        %v2790 = vshll.u32 %v2658, 16
        %v2792 = vrot.slane %v2790, 5
        %v2793 = vor.u32 %v2789, %v2792
        %v2794 = vrot.slane %v2793, 4
        %v2796 = vshll.u32 %v2659, 16
        %v2798 = vrot.slane %v2796, 5
        %v2799 = vsel %vm1709, %v2794, %v2798
        %v2801 = vshrl.u32 %v2660, 16
        %v2803 = vrot.slane %v2801, 4
        %v2804 = vshll.u32 %v2660, 16
        %v2806 = vrot.slane %v2804, 5
        %v2807 = vor.u32 %v2803, %v2806
        %v2808 = vrot.slane %v2807, 4
        %v2810 = vshll.u32 %v2661, 16
        %v2812 = vrot.slane %v2810, 5
        %v2813 = vsel %vm1709, %v2808, %v2812
        %v2815 = vshrl.u32 %v2662, 16
        %v2817 = vrot.slane %v2815, 4
        %v2818 = vshll.u32 %v2662, 16
        %v2820 = vrot.slane %v2818, 5
        %v2821 = vor.u32 %v2817, %v2820
        %v2822 = vrot.slane %v2821, 4
        %v2824 = vshll.u32 %v2663, 16
        %v2826 = vrot.slane %v2824, 5
        %v2827 = vsel %vm1709, %v2822, %v2826
        %v2829 = vshrl.u32 %v2664, 16
        %v2831 = vrot.slane %v2829, 4
        %v2832 = vshll.u32 %v2664, 16
        %v2834 = vrot.slane %v2832, 5
        %v2835 = vor.u32 %v2831, %v2834
        %v2836 = vrot.slane %v2835, 4
        %v2838 = vshll.u32 %v2665, 16
        %v2840 = vrot.slane %v2838, 5
        %v2841 = vsel %vm1709, %v2836, %v2840
        %v2843 = vshrl.u32 %v2666, 16
        %v2845 = vrot.slane %v2843, 4
        %v2846 = vshll.u32 %v2666, 16
        %v2848 = vrot.slane %v2846, 5
        %v2849 = vor.u32 %v2845, %v2848
        %v2850 = vrot.slane %v2849, 4
        %v2852 = vshll.u32 %v2667, 16
        %v2854 = vrot.slane %v2852, 5
        %v2855 = vsel %vm1709, %v2850, %v2854
        %v2857 = vshrl.u32 %v2668, 16
        %v2859 = vrot.slane %v2857, 4
        %v2860 = vshll.u32 %v2668, 16
        %v2862 = vrot.slane %v2860, 5
        %v2863 = vor.u32 %v2859, %v2862
        %v2864 = vrot.slane %v2863, 4
        %v2866 = vshll.u32 %v2669, 16
        %v2868 = vrot.slane %v2866, 5
        %v2869 = vsel %vm1709, %v2864, %v2868
        %v2871 = vshrl.u32 %v2670, 16
        %v2873 = vrot.slane %v2871, 4
        %v2874 = vshll.u32 %v2670, 16
        %v2876 = vrot.slane %v2874, 5
        %v2877 = vor.u32 %v2873, %v2876
        %v2878 = vrot.slane %v2877, 4
        %v2880 = vshll.u32 %v2671, 16
        %v2882 = vrot.slane %v2880, 5
        %v2883 = vsel %vm1709, %v2878, %v2882
        %v2885 = vshrl.u32 %v2672, 16
        %v2887 = vrot.slane %v2885, 4
        %v2888 = vshll.u32 %v2672, 16
        %v2890 = vrot.slane %v2888, 5
        %v2891 = vor.u32 %v2887, %v2890
        %v2892 = vrot.slane %v2891, 4
        %v2894 = vshll.u32 %v2673, 16
        %v2896 = vrot.slane %v2894, 5
        %v2897 = vsel %vm1709, %v2892, %v2896
        %2914 = vst [vmem:[#allocation3 + $0x38] sm:$0xff] %v2687
        %2915 = vst [vmem:[#allocation3 + $0x80] sm:$0xff] %v2701
        %2916 = vst [vmem:[#allocation3 + $0xc8] sm:$0xff] %v2715
        %2917 = vst [vmem:[#allocation3 + $0x110] sm:$0xff] %v2729
        %2918 = vst [vmem:[#allocation3 + $0x158] sm:$0xff] %v2743
        %2919 = vst [vmem:[#allocation3 + $0x1a0] sm:$0xff] %v2757
        %2920 = vst [vmem:[#allocation3 + $0x1e8] sm:$0xff] %v2771
        %2921 = vst [vmem:[#allocation3 + $0x230] sm:$0xff] %v2785
        %2922 = vst [vmem:[#allocation3 + $0x278] sm:$0xff] %v2799
        %2923 = vst [vmem:[#allocation3 + $0x2c0] sm:$0xff] %v2813
        %2924 = vst [vmem:[#allocation3 + $0x308] sm:$0xff] %v2827
        %2925 = vst [vmem:[#allocation3 + $0x350] sm:$0xff] %v2841
        %2926 = vst [vmem:[#allocation3 + $0x398] sm:$0xff] %v2855
        %2927 = vst [vmem:[#allocation3 + $0x3e0] sm:$0xff] %v2869
        %2928 = vst [vmem:[#allocation3 + $0x428] sm:$0xff] %v2883
        %2929 = vst [vmem:[#allocation3 + $0x470] sm:$0xff] %v2897
        %v2930 = vld [vmem:[%s2609] sm:$0xee]
        %v2931 = vld [vmem:[%s2609 + $0x8] sm:$0x11]
        %v2932 = vld [vmem:[%s2609 + $0x10] sm:$0xee]
        %v2933 = vld [vmem:[%s2609 + $0x18] sm:$0x11]
        %v2934 = vld [vmem:[%s2609 + $0x20] sm:$0xee]
        %v2935 = vld [vmem:[%s2609 + $0x28] sm:$0x11]
        %v2936 = vld [vmem:[%s2609 + $0x30] sm:$0xee]
        %v2937 = vld [vmem:[%s2609 + $0x38] sm:$0x11]
        %v2938 = vld [vmem:[%s2609 + $0x40] sm:$0xee]
        %v2939 = vld [vmem:[%s2609 + $0x48] sm:$0x11]
        %v2940 = vld [vmem:[%s2609 + $0x50] sm:$0xee]
        %v2941 = vld [vmem:[%s2609 + $0x58] sm:$0x11]
        %v2942 = vld [vmem:[%s2609 + $0x60] sm:$0xee]
        %v2943 = vld [vmem:[%s2609 + $0x68] sm:$0x11]
        %v2944 = vld [vmem:[%s2609 + $0x70] sm:$0xee]
        %v2945 = vld [vmem:[%s2609 + $0x78] sm:$0x11]
        %v2946 = vld [vmem:[%s2609 + $0xa0] sm:$0xee]
        %v2947 = vld [vmem:[%s2609 + $0xa8] sm:$0x11]
        %v2948 = vld [vmem:[%s2609 + $0xb0] sm:$0xee]
        %v2949 = vld [vmem:[%s2609 + $0xb8] sm:$0x11]
        %v2950 = vld [vmem:[%s2609 + $0xc0] sm:$0xee]
        %v2951 = vld [vmem:[%s2609 + $0xc8] sm:$0x11]
        %v2952 = vld [vmem:[%s2609 + $0xd0] sm:$0xee]
        %v2953 = vld [vmem:[%s2609 + $0xd8] sm:$0x11]
        %v2954 = vld [vmem:[%s2609 + $0xe0] sm:$0xee]
        %v2955 = vld [vmem:[%s2609 + $0xe8] sm:$0x11]
        %v2956 = vld [vmem:[%s2609 + $0xf0] sm:$0xee]
        %v2957 = vld [vmem:[%s2609 + $0xf8] sm:$0x11]
        %v2958 = vld [vmem:[%s2609 + $0x100] sm:$0xee]
        %v2959 = vld [vmem:[%s2609 + $0x108] sm:$0x11]
        %v2960 = vld [vmem:[%s2609 + $0x110] sm:$0xee]
        %v2961 = vld [vmem:[%s2609 + $0x118] sm:$0x11]
        %v2994 = vrot.slane %v2930, 5
        %v2995 = vrot.slane %v2994, 4
        %v2996 = vrot.slane %v2931, 5
        %v2997 = vsel %vm2032, %v2995, %v2996
        %v2998 = vrot.slane %v2932, 5
        %v2999 = vrot.slane %v2998, 4
        %v3000 = vrot.slane %v2933, 5
        %v3001 = vsel %vm2032, %v2999, %v3000
        %v3002 = vrot.slane %v2934, 5
        %v3003 = vrot.slane %v3002, 4
        %v3004 = vrot.slane %v2935, 5
        %v3005 = vsel %vm2032, %v3003, %v3004
        %v3006 = vrot.slane %v2936, 5
        %v3007 = vrot.slane %v3006, 4
        %v3008 = vrot.slane %v2937, 5
        %v3009 = vsel %vm2032, %v3007, %v3008
        %v3010 = vrot.slane %v2938, 5
        %v3011 = vrot.slane %v3010, 4
        %v3012 = vrot.slane %v2939, 5
        %v3013 = vsel %vm2032, %v3011, %v3012
        %v3014 = vrot.slane %v2940, 5
        %v3015 = vrot.slane %v3014, 4
        %v3016 = vrot.slane %v2941, 5
        %v3017 = vsel %vm2032, %v3015, %v3016
        %v3018 = vrot.slane %v2942, 5
        %v3019 = vrot.slane %v3018, 4
        %v3020 = vrot.slane %v2943, 5
        %v3021 = vsel %vm2032, %v3019, %v3020
        %v3022 = vrot.slane %v2944, 5
        %v3023 = vrot.slane %v3022, 4
        %v3024 = vrot.slane %v2945, 5
        %v3025 = vsel %vm2032, %v3023, %v3024
        %v3026 = vrot.slane %v2946, 5
        %v3027 = vrot.slane %v3026, 4
        %v3028 = vrot.slane %v2947, 5
        %v3029 = vsel %vm2032, %v3027, %v3028
        %v3030 = vrot.slane %v2948, 5
        %v3031 = vrot.slane %v3030, 4
        %v3032 = vrot.slane %v2949, 5
        %v3033 = vsel %vm2032, %v3031, %v3032
        %v3034 = vrot.slane %v2950, 5
        %v3035 = vrot.slane %v3034, 4
        %v3036 = vrot.slane %v2951, 5
        %v3037 = vsel %vm2032, %v3035, %v3036
        %v3038 = vrot.slane %v2952, 5
        %v3039 = vrot.slane %v3038, 4
        %v3040 = vrot.slane %v2953, 5
        %v3041 = vsel %vm2032, %v3039, %v3040
        %v3042 = vrot.slane %v2954, 5
        %v3043 = vrot.slane %v3042, 4
        %v3044 = vrot.slane %v2955, 5
        %v3045 = vsel %vm2032, %v3043, %v3044
        %v3046 = vrot.slane %v2956, 5
        %v3047 = vrot.slane %v3046, 4
        %v3048 = vrot.slane %v2957, 5
        %v3049 = vsel %vm2032, %v3047, %v3048
        %v3050 = vrot.slane %v2958, 5
        %v3051 = vrot.slane %v3050, 4
        %v3052 = vrot.slane %v2959, 5
        %v3053 = vsel %vm2032, %v3051, %v3052
        %v3054 = vrot.slane %v2960, 5
        %v3055 = vrot.slane %v3054, 4
        %v3056 = vrot.slane %v2961, 5
        %v3057 = vsel %vm2032, %v3055, %v3056
        %3074 = vst [vmem:[#allocation3 + $0x40] sm:$0xff] %v2997
        %3075 = vst [vmem:[#allocation3 + $0x88] sm:$0xff] %v3001
        %3076 = vst [vmem:[#allocation3 + $0xd0] sm:$0xff] %v3005
        %3077 = vst [vmem:[#allocation3 + $0x118] sm:$0xff] %v3009
        %3078 = vst [vmem:[#allocation3 + $0x160] sm:$0xff] %v3013
        %3079 = vst [vmem:[#allocation3 + $0x1a8] sm:$0xff] %v3017
        %3080 = vst [vmem:[#allocation3 + $0x1f0] sm:$0xff] %v3021
        %3081 = vst [vmem:[#allocation3 + $0x238] sm:$0xff] %v3025
        %3082 = vst [vmem:[#allocation3 + $0x280] sm:$0xff] %v3029
        %3083 = vst [vmem:[#allocation3 + $0x2c8] sm:$0xff] %v3033
        %3084 = vst [vmem:[#allocation3 + $0x310] sm:$0xff] %v3037
        %3085 = vst [vmem:[#allocation3 + $0x358] sm:$0xff] %v3041
        %3086 = vst [vmem:[#allocation3 + $0x3a0] sm:$0xff] %v3045
        %3087 = vst [vmem:[#allocation3 + $0x3e8] sm:$0xff] %v3049
        %3088 = vst [vmem:[#allocation3 + $0x430] sm:$0xff] %v3053
        %3089 = vst [vmem:[#allocation3 + $0x478] sm:$0xff] %v3057
        %s3090 = scalar_lea.vmem %s307, 257 [#allocation11]
        %v3091 = vld [vmem:[%s3090] ss:$8 sm:$0xf]
        %v3092 = vld [vmem:[#allocation3] sm:$0xff]
        %v3093 = vld [vmem:[#allocation3 + $0x8] sm:$0xff]
        %v3094 = vld [vmem:[#allocation3 + $0x10] sm:$0xff]
        %v3095 = vld [vmem:[#allocation3 + $0x18] sm:$0xff]
        %v3096 = vld [vmem:[#allocation3 + $0x20] sm:$0xff]
        %v3097 = vld [vmem:[#allocation3 + $0x28] sm:$0xff]
        %v3098 = vld [vmem:[#allocation3 + $0x30] sm:$0xff]
        %v3099 = vld [vmem:[#allocation3 + $0x38] sm:$0xff]
        %v3100 = vld [vmem:[#allocation3 + $0x40] sm:$0xff]
        %v3101 = vld [vmem:[#allocation3 + $0x48] sm:$0xff]
        %v3102 = vld [vmem:[#allocation3 + $0x50] sm:$0xff]
        %v3103 = vld [vmem:[#allocation3 + $0x58] sm:$0xff]
        %v3104 = vld [vmem:[#allocation3 + $0x60] sm:$0xff]
        %v3105 = vld [vmem:[#allocation3 + $0x68] sm:$0xff]
        %v3106 = vld [vmem:[#allocation3 + $0x70] sm:$0xff]
        %v3107 = vld [vmem:[#allocation3 + $0x78] sm:$0xff]
        %v3108 = vld [vmem:[#allocation3 + $0x80] sm:$0xff]
        %v3109 = vld [vmem:[#allocation3 + $0x88] sm:$0xff]
        %v3110 = vld [vmem:[#allocation3 + $0x90] sm:$0xff]
        %v3111 = vld [vmem:[#allocation3 + $0x98] sm:$0xff]
        %v3112 = vld [vmem:[#allocation3 + $0xa0] sm:$0xff]
        %v3113 = vld [vmem:[#allocation3 + $0xa8] sm:$0xff]
        %v3114 = vld [vmem:[#allocation3 + $0xb0] sm:$0xff]
        %v3115 = vld [vmem:[#allocation3 + $0xb8] sm:$0xff]
        %v3116 = vld [vmem:[#allocation3 + $0xc0] sm:$0xff]
        %v3117 = vld [vmem:[#allocation3 + $0xc8] sm:$0xff]
        %v3118 = vld [vmem:[#allocation3 + $0xd0] sm:$0xff]
        %v3119 = vld [vmem:[#allocation3 + $0xd8] sm:$0xff]
        %v3120 = vld [vmem:[#allocation3 + $0xe0] sm:$0xff]
        %v3121 = vld [vmem:[#allocation3 + $0xe8] sm:$0xff]
        %v3122 = vld [vmem:[#allocation3 + $0xf0] sm:$0xff]
        %v3123 = vld [vmem:[#allocation3 + $0xf8] sm:$0xff]
        %v3124 = vld [vmem:[#allocation3 + $0x100] sm:$0xff]
        %v3125 = vld [vmem:[#allocation3 + $0x108] sm:$0xff]
        %v3126 = vld [vmem:[#allocation3 + $0x110] sm:$0xff]
        %v3127 = vld [vmem:[#allocation3 + $0x118] sm:$0xff]
        %v3128 = vld [vmem:[#allocation3 + $0x120] sm:$0xff]
        %v3129 = vld [vmem:[#allocation3 + $0x128] sm:$0xff]
        %v3130 = vld [vmem:[#allocation3 + $0x130] sm:$0xff]
        %v3131 = vld [vmem:[#allocation3 + $0x138] sm:$0xff]
        %v3132 = vld [vmem:[#allocation3 + $0x140] sm:$0xff]
        %v3133 = vld [vmem:[#allocation3 + $0x148] sm:$0xff]
        %v3134 = vld [vmem:[#allocation3 + $0x150] sm:$0xff]
        %v3135 = vld [vmem:[#allocation3 + $0x158] sm:$0xff]
        %v3136 = vld [vmem:[#allocation3 + $0x160] sm:$0xff]
        %v3137 = vld [vmem:[#allocation3 + $0x168] sm:$0xff]
        %v3138 = vld [vmem:[#allocation3 + $0x170] sm:$0xff]
        %v3139 = vld [vmem:[#allocation3 + $0x178] sm:$0xff]
        %v3140 = vld [vmem:[#allocation3 + $0x180] sm:$0xff]
        %v3141 = vld [vmem:[#allocation3 + $0x188] sm:$0xff]
        %v3142 = vld [vmem:[#allocation3 + $0x190] sm:$0xff]
        %v3143 = vld [vmem:[#allocation3 + $0x198] sm:$0xff]
        %v3144 = vld [vmem:[#allocation3 + $0x1a0] sm:$0xff]
        %v3145 = vld [vmem:[#allocation3 + $0x1a8] sm:$0xff]
        %v3146 = vld [vmem:[#allocation3 + $0x1b0] sm:$0xff]
        %v3147 = vld [vmem:[#allocation3 + $0x1b8] sm:$0xff]
        %v3148 = vld [vmem:[#allocation3 + $0x1c0] sm:$0xff]
        %v3149 = vld [vmem:[#allocation3 + $0x1c8] sm:$0xff]
        %v3150 = vld [vmem:[#allocation3 + $0x1d0] sm:$0xff]
        %v3151 = vld [vmem:[#allocation3 + $0x1d8] sm:$0xff]
        %v3152 = vld [vmem:[#allocation3 + $0x1e0] sm:$0xff]
        %v3153 = vld [vmem:[#allocation3 + $0x1e8] sm:$0xff]
        %v3154 = vld [vmem:[#allocation3 + $0x1f0] sm:$0xff]
        %v3155 = vld [vmem:[#allocation3 + $0x1f8] sm:$0xff]
        %v3156 = vld [vmem:[#allocation3 + $0x200] sm:$0xff]
        %v3157 = vld [vmem:[#allocation3 + $0x208] sm:$0xff]
        %v3158 = vld [vmem:[#allocation3 + $0x210] sm:$0xff]
        %v3159 = vld [vmem:[#allocation3 + $0x218] sm:$0xff]
        %v3160 = vld [vmem:[#allocation3 + $0x220] sm:$0xff]
        %v3161 = vld [vmem:[#allocation3 + $0x228] sm:$0xff]
        %v3162 = vld [vmem:[#allocation3 + $0x230] sm:$0xff]
        %v3163 = vld [vmem:[#allocation3 + $0x238] sm:$0xff]
        %v3164 = vld [vmem:[#allocation3 + $0x240] sm:$0xff]
        %v3165 = vld [vmem:[#allocation3 + $0x248] sm:$0xff]
        %v3166 = vld [vmem:[#allocation3 + $0x250] sm:$0xff]
        %v3167 = vld [vmem:[#allocation3 + $0x258] sm:$0xff]
        %v3168 = vld [vmem:[#allocation3 + $0x260] sm:$0xff]
        %v3169 = vld [vmem:[#allocation3 + $0x268] sm:$0xff]
        %v3170 = vld [vmem:[#allocation3 + $0x270] sm:$0xff]
        %v3171 = vld [vmem:[#allocation3 + $0x278] sm:$0xff]
        %v3172 = vld [vmem:[#allocation3 + $0x280] sm:$0xff]
        %v3173 = vld [vmem:[#allocation3 + $0x288] sm:$0xff]
        %v3174 = vld [vmem:[#allocation3 + $0x290] sm:$0xff]
        %v3175 = vld [vmem:[#allocation3 + $0x298] sm:$0xff]
        %v3176 = vld [vmem:[#allocation3 + $0x2a0] sm:$0xff]
        %v3177 = vld [vmem:[#allocation3 + $0x2a8] sm:$0xff]
        %v3178 = vld [vmem:[#allocation3 + $0x2b0] sm:$0xff]
        %v3179 = vld [vmem:[#allocation3 + $0x2b8] sm:$0xff]
        %v3180 = vld [vmem:[#allocation3 + $0x2c0] sm:$0xff]
        %v3181 = vld [vmem:[#allocation3 + $0x2c8] sm:$0xff]
        %v3182 = vld [vmem:[#allocation3 + $0x2d0] sm:$0xff]
        %v3183 = vld [vmem:[#allocation3 + $0x2d8] sm:$0xff]
        %v3184 = vld [vmem:[#allocation3 + $0x2e0] sm:$0xff]
        %v3185 = vld [vmem:[#allocation3 + $0x2e8] sm:$0xff]
        %v3186 = vld [vmem:[#allocation3 + $0x2f0] sm:$0xff]
        %v3187 = vld [vmem:[#allocation3 + $0x2f8] sm:$0xff]
        %v3188 = vld [vmem:[#allocation3 + $0x300] sm:$0xff]
        %v3189 = vld [vmem:[#allocation3 + $0x308] sm:$0xff]
        %v3190 = vld [vmem:[#allocation3 + $0x310] sm:$0xff]
        %v3191 = vld [vmem:[#allocation3 + $0x318] sm:$0xff]
        %v3192 = vld [vmem:[#allocation3 + $0x320] sm:$0xff]
        %v3193 = vld [vmem:[#allocation3 + $0x328] sm:$0xff]
        %v3194 = vld [vmem:[#allocation3 + $0x330] sm:$0xff]
        %v3195 = vld [vmem:[#allocation3 + $0x338] sm:$0xff]
        %v3196 = vld [vmem:[#allocation3 + $0x340] sm:$0xff]
        %v3197 = vld [vmem:[#allocation3 + $0x348] sm:$0xff]
        %v3198 = vld [vmem:[#allocation3 + $0x350] sm:$0xff]
        %v3199 = vld [vmem:[#allocation3 + $0x358] sm:$0xff]
        %v3200 = vld [vmem:[#allocation3 + $0x360] sm:$0xff]
        %v3201 = vld [vmem:[#allocation3 + $0x368] sm:$0xff]
        %v3202 = vld [vmem:[#allocation3 + $0x370] sm:$0xff]
        %v3203 = vld [vmem:[#allocation3 + $0x378] sm:$0xff]
        %v3204 = vld [vmem:[#allocation3 + $0x380] sm:$0xff]
        %v3205 = vld [vmem:[#allocation3 + $0x388] sm:$0xff]
        %v3206 = vld [vmem:[#allocation3 + $0x390] sm:$0xff]
        %v3207 = vld [vmem:[#allocation3 + $0x398] sm:$0xff]
        %v3208 = vld [vmem:[#allocation3 + $0x3a0] sm:$0xff]
        %v3209 = vld [vmem:[#allocation3 + $0x3a8] sm:$0xff]
        %v3210 = vld [vmem:[#allocation3 + $0x3b0] sm:$0xff]
        %v3211 = vld [vmem:[#allocation3 + $0x3b8] sm:$0xff]
        %v3212 = vld [vmem:[#allocation3 + $0x3c0] sm:$0xff]
        %v3213 = vld [vmem:[#allocation3 + $0x3c8] sm:$0xff]
        %v3214 = vld [vmem:[#allocation3 + $0x3d0] sm:$0xff]
        %v3215 = vld [vmem:[#allocation3 + $0x3d8] sm:$0xff]
        %v3216 = vld [vmem:[#allocation3 + $0x3e0] sm:$0xff]
        %v3217 = vld [vmem:[#allocation3 + $0x3e8] sm:$0xff]
        %v3218 = vld [vmem:[#allocation3 + $0x3f0] sm:$0xff]
        %v3219 = vld [vmem:[#allocation3 + $0x3f8] sm:$0xff]
        %v3220 = vld [vmem:[#allocation3 + $0x400] sm:$0xff]
        %v3221 = vld [vmem:[#allocation3 + $0x408] sm:$0xff]
        %v3222 = vld [vmem:[#allocation3 + $0x410] sm:$0xff]
        %v3223 = vld [vmem:[#allocation3 + $0x418] sm:$0xff]
        %v3224 = vld [vmem:[#allocation3 + $0x420] sm:$0xff]
        %v3225 = vld [vmem:[#allocation3 + $0x428] sm:$0xff]
        %v3226 = vld [vmem:[#allocation3 + $0x430] sm:$0xff]
        %v3227 = vld [vmem:[#allocation3 + $0x438] sm:$0xff]
        %v3228 = vld [vmem:[#allocation3 + $0x440] sm:$0xff]
        %v3229 = vld [vmem:[#allocation3 + $0x448] sm:$0xff]
        %v3230 = vld [vmem:[#allocation3 + $0x450] sm:$0xff]
        %v3231 = vld [vmem:[#allocation3 + $0x458] sm:$0xff]
        %v3232 = vld [vmem:[#allocation3 + $0x460] sm:$0xff]
        %v3233 = vld [vmem:[#allocation3 + $0x468] sm:$0xff]
        %v3234 = vld [vmem:[#allocation3 + $0x470] sm:$0xff]
        %v3235 = vld [vmem:[#allocation3 + $0x478] sm:$0xff]
        %v3236 = vld [vmem:[%s298] sm:$0xff]
        %v3237 = vld [vmem:[%s298 + $0x8] sm:$0xff]
        %v3238 = vld [vmem:[%s298 + $0x10] sm:$0xff]
        %v3239 = vld [vmem:[%s298 + $0x18] sm:$0xff]
        %v3240 = vld [vmem:[%s298 + $0x20] sm:$0xff]
        %v3241 = vld [vmem:[%s298 + $0x28] sm:$0xff]
        %v3242 = vld [vmem:[%s298 + $0x30] sm:$0xff]
        %v3243 = vld [vmem:[%s298 + $0x38] sm:$0xff]
        %v3244 = vld [vmem:[%s298 + $0x40] sm:$0xff]
        %v3245 = vld [vmem:[%s298 + $0x48] sm:$0xff]
        %v3246 = vld [vmem:[%s298 + $0x50] sm:$0xff]
        %v3247 = vld [vmem:[%s298 + $0x58] sm:$0xff]
        %v3248 = vld [vmem:[%s298 + $0x60] sm:$0xff]
        %v3249 = vld [vmem:[%s298 + $0x68] sm:$0xff]
        %v3250 = vld [vmem:[%s298 + $0x70] sm:$0xff]
        %v3251 = vld [vmem:[%s298 + $0x78] sm:$0xff]
        %v3252 = vld [vmem:[%s298 + $0x80] sm:$0xff]
        %v3253 = vld [vmem:[%s298 + $0x88] sm:$0xff]
        %v3254 = vld [vmem:[%s298 + $0x90] sm:$0xff]
        %v3255 = vld [vmem:[%s298 + $0x98] sm:$0xff]
        %v3256 = vld [vmem:[%s298 + $0xa0] sm:$0xff]
        %v3257 = vld [vmem:[%s298 + $0xa8] sm:$0xff]
        %v3258 = vld [vmem:[%s298 + $0xb0] sm:$0xff]
        %v3259 = vld [vmem:[%s298 + $0xb8] sm:$0xff]
        %v3260 = vld [vmem:[%s298 + $0xc0] sm:$0xff]
        %v3261 = vld [vmem:[%s298 + $0xc8] sm:$0xff]
        %v3262 = vld [vmem:[%s298 + $0xd0] sm:$0xff]
        %v3263 = vld [vmem:[%s298 + $0xd8] sm:$0xff]
        %v3264 = vld [vmem:[%s298 + $0xe0] sm:$0xff]
        %v3265 = vld [vmem:[%s298 + $0xe8] sm:$0xff]
        %v3266 = vld [vmem:[%s298 + $0xf0] sm:$0xff]
        %v3267 = vld [vmem:[%s298 + $0xf8] sm:$0xff]
        %v3268 = vld [vmem:[%s298 + $0x100] sm:$0xff]
        %v3269 = vld [vmem:[%s298 + $0x108] sm:$0xff]
        %v3270 = vld [vmem:[%s298 + $0x110] sm:$0xff]
        %v3271 = vld [vmem:[%s298 + $0x118] sm:$0xff]
        %v3272 = vld [vmem:[%s298 + $0x120] sm:$0xff]
        %v3273 = vld [vmem:[%s298 + $0x128] sm:$0xff]
        %v3274 = vld [vmem:[%s298 + $0x130] sm:$0xff]
        %v3275 = vld [vmem:[%s298 + $0x138] sm:$0xff]
        %v3276 = vld [vmem:[%s298 + $0x140] sm:$0xff]
        %v3277 = vld [vmem:[%s298 + $0x148] sm:$0xff]
        %v3278 = vld [vmem:[%s298 + $0x150] sm:$0xff]
        %v3279 = vld [vmem:[%s298 + $0x158] sm:$0xff]
        %v3280 = vld [vmem:[%s298 + $0x160] sm:$0xff]
        %v3281 = vld [vmem:[%s298 + $0x168] sm:$0xff]
        %v3282 = vld [vmem:[%s298 + $0x170] sm:$0xff]
        %v3283 = vld [vmem:[%s298 + $0x178] sm:$0xff]
        %v3284 = vld [vmem:[%s298 + $0x180] sm:$0xff]
        %v3285 = vld [vmem:[%s298 + $0x188] sm:$0xff]
        %v3286 = vld [vmem:[%s298 + $0x190] sm:$0xff]
        %v3287 = vld [vmem:[%s298 + $0x198] sm:$0xff]
        %v3288 = vld [vmem:[%s298 + $0x1a0] sm:$0xff]
        %v3289 = vld [vmem:[%s298 + $0x1a8] sm:$0xff]
        %v3290 = vld [vmem:[%s298 + $0x1b0] sm:$0xff]
        %v3291 = vld [vmem:[%s298 + $0x1b8] sm:$0xff]
        %v3292 = vld [vmem:[%s298 + $0x1c0] sm:$0xff]
        %v3293 = vld [vmem:[%s298 + $0x1c8] sm:$0xff]
        %v3294 = vld [vmem:[%s298 + $0x1d0] sm:$0xff]
        %v3295 = vld [vmem:[%s298 + $0x1d8] sm:$0xff]
        %v3296 = vld [vmem:[%s298 + $0x1e0] sm:$0xff]
        %v3297 = vld [vmem:[%s298 + $0x1e8] sm:$0xff]
        %v3298 = vld [vmem:[%s298 + $0x1f0] sm:$0xff]
        %v3299 = vld [vmem:[%s298 + $0x1f8] sm:$0xff]
        %v3300 = vld [vmem:[%s298 + $0x200] sm:$0xff]
        %v3301 = vld [vmem:[%s298 + $0x208] sm:$0xff]
        %v3302 = vld [vmem:[%s298 + $0x210] sm:$0xff]
        %v3303 = vld [vmem:[%s298 + $0x218] sm:$0xff]
        %v3304 = vld [vmem:[%s298 + $0x220] sm:$0xff]
        %v3305 = vld [vmem:[%s298 + $0x228] sm:$0xff]
        %v3306 = vld [vmem:[%s298 + $0x230] sm:$0xff]
        %v3307 = vld [vmem:[%s298 + $0x238] sm:$0xff]
        %v3308 = vld [vmem:[%s298 + $0x240] sm:$0xff]
        %v3309 = vld [vmem:[%s298 + $0x248] sm:$0xff]
        %v3310 = vld [vmem:[%s298 + $0x250] sm:$0xff]
        %v3311 = vld [vmem:[%s298 + $0x258] sm:$0xff]
        %v3312 = vld [vmem:[%s298 + $0x260] sm:$0xff]
        %v3313 = vld [vmem:[%s298 + $0x268] sm:$0xff]
        %v3314 = vld [vmem:[%s298 + $0x270] sm:$0xff]
        %v3315 = vld [vmem:[%s298 + $0x278] sm:$0xff]
        %v3316 = vld [vmem:[%s298 + $0x280] sm:$0xff]
        %v3317 = vld [vmem:[%s298 + $0x288] sm:$0xff]
        %v3318 = vld [vmem:[%s298 + $0x290] sm:$0xff]
        %v3319 = vld [vmem:[%s298 + $0x298] sm:$0xff]
        %v3320 = vld [vmem:[%s298 + $0x2a0] sm:$0xff]
        %v3321 = vld [vmem:[%s298 + $0x2a8] sm:$0xff]
        %v3322 = vld [vmem:[%s298 + $0x2b0] sm:$0xff]
        %v3323 = vld [vmem:[%s298 + $0x2b8] sm:$0xff]
        %v3324 = vld [vmem:[%s298 + $0x2c0] sm:$0xff]
        %v3325 = vld [vmem:[%s298 + $0x2c8] sm:$0xff]
        %v3326 = vld [vmem:[%s298 + $0x2d0] sm:$0xff]
        %v3327 = vld [vmem:[%s298 + $0x2d8] sm:$0xff]
        %v3328 = vld [vmem:[%s298 + $0x2e0] sm:$0xff]
        %v3329 = vld [vmem:[%s298 + $0x2e8] sm:$0xff]
        %v3330 = vld [vmem:[%s298 + $0x2f0] sm:$0xff]
        %v3331 = vld [vmem:[%s298 + $0x2f8] sm:$0xff]
        %v3332 = vld [vmem:[%s298 + $0x300] sm:$0xff]
        %v3333 = vld [vmem:[%s298 + $0x308] sm:$0xff]
        %v3334 = vld [vmem:[%s298 + $0x310] sm:$0xff]
        %v3335 = vld [vmem:[%s298 + $0x318] sm:$0xff]
        %v3336 = vld [vmem:[%s298 + $0x320] sm:$0xff]
        %v3337 = vld [vmem:[%s298 + $0x328] sm:$0xff]
        %v3338 = vld [vmem:[%s298 + $0x330] sm:$0xff]
        %v3339 = vld [vmem:[%s298 + $0x338] sm:$0xff]
        %v3340 = vld [vmem:[%s298 + $0x340] sm:$0xff]
        %v3341 = vld [vmem:[%s298 + $0x348] sm:$0xff]
        %v3342 = vld [vmem:[%s298 + $0x350] sm:$0xff]
        %v3343 = vld [vmem:[%s298 + $0x358] sm:$0xff]
        %v3344 = vld [vmem:[%s298 + $0x360] sm:$0xff]
        %v3345 = vld [vmem:[%s298 + $0x368] sm:$0xff]
        %v3346 = vld [vmem:[%s298 + $0x370] sm:$0xff]
        %v3347 = vld [vmem:[%s298 + $0x378] sm:$0xff]
        %v3348 = vld [vmem:[%s298 + $0x380] sm:$0xff]
        %v3349 = vld [vmem:[%s298 + $0x388] sm:$0xff]
        %v3350 = vld [vmem:[%s298 + $0x390] sm:$0xff]
        %v3351 = vld [vmem:[%s298 + $0x398] sm:$0xff]
        %v3352 = vld [vmem:[%s298 + $0x3a0] sm:$0xff]
        %v3353 = vld [vmem:[%s298 + $0x3a8] sm:$0xff]
        %v3354 = vld [vmem:[%s298 + $0x3b0] sm:$0xff]
        %v3355 = vld [vmem:[%s298 + $0x3b8] sm:$0xff]
        %v3356 = vld [vmem:[%s298 + $0x3c0] sm:$0xff]
        %v3357 = vld [vmem:[%s298 + $0x3c8] sm:$0xff]
        %v3358 = vld [vmem:[%s298 + $0x3d0] sm:$0xff]
        %v3359 = vld [vmem:[%s298 + $0x3d8] sm:$0xff]
        %v3360 = vld [vmem:[%s298 + $0x3e0] sm:$0xff]
        %v3361 = vld [vmem:[%s298 + $0x3e8] sm:$0xff]
        %v3362 = vld [vmem:[%s298 + $0x3f0] sm:$0xff]
        %v3363 = vld [vmem:[%s298 + $0x3f8] sm:$0xff]
        %v3364 = vld [vmem:[%s298 + $0x400] sm:$0xff]
        %v3365 = vld [vmem:[%s298 + $0x408] sm:$0xff]
        %v3366 = vld [vmem:[%s298 + $0x410] sm:$0xff]
        %v3367 = vld [vmem:[%s298 + $0x418] sm:$0xff]
        %v3368 = vld [vmem:[%s298 + $0x420] sm:$0xff]
        %v3369 = vld [vmem:[%s298 + $0x428] sm:$0xff]
        %v3370 = vld [vmem:[%s298 + $0x430] sm:$0xff]
        %v3371 = vld [vmem:[%s298 + $0x438] sm:$0xff]
        %v3372 = vld [vmem:[%s298 + $0x440] sm:$0xff]
        %v3373 = vld [vmem:[%s298 + $0x448] sm:$0xff]
        %v3374 = vld [vmem:[%s298 + $0x450] sm:$0xff]
        %v3375 = vld [vmem:[%s298 + $0x458] sm:$0xff]
        %v3376 = vld [vmem:[%s298 + $0x460] sm:$0xff]
        %v3377 = vld [vmem:[%s298 + $0x468] sm:$0xff]
        %v3378 = vld [vmem:[%s298 + $0x470] sm:$0xff]
        %v3379 = vld [vmem:[%s298 + $0x478] sm:$0xff]
        %v3380 = vld [vmem:[%s298 + $0x480] sm:$0xff]
        %v3381 = vld [vmem:[%s298 + $0x488] sm:$0xff]
        %v3382 = vld [vmem:[%s298 + $0x490] sm:$0xff]
        %v3383 = vld [vmem:[%s298 + $0x498] sm:$0xff]
        %v3384 = vld [vmem:[%s298 + $0x4a0] sm:$0xff]
        %v3385 = vld [vmem:[%s298 + $0x4a8] sm:$0xff]
        %v3386 = vld [vmem:[%s298 + $0x4b0] sm:$0xff]
        %v3387 = vld [vmem:[%s298 + $0x4b8] sm:$0xff]
        %v3388 = vld [vmem:[%s298 + $0x4c0] sm:$0xff]
        %v3389 = vld [vmem:[%s298 + $0x4c8] sm:$0xff]
        %v3390 = vld [vmem:[%s298 + $0x4d0] sm:$0xff]
        %v3391 = vld [vmem:[%s298 + $0x4d8] sm:$0xff]
        %v3392 = vld [vmem:[%s298 + $0x4e0] sm:$0xff]
        %v3393 = vld [vmem:[%s298 + $0x4e8] sm:$0xff]
        %v3394 = vld [vmem:[%s298 + $0x4f0] sm:$0xff]
        %v3395 = vld [vmem:[%s298 + $0x4f8] sm:$0xff]
        %v3396 = vld [vmem:[%s298 + $0x500] sm:$0xff]
        %v3397 = vld [vmem:[%s298 + $0x508] sm:$0xff]
        %v3398 = vld [vmem:[%s298 + $0x510] sm:$0xff]
        %v3399 = vld [vmem:[%s298 + $0x518] sm:$0xff]
        %v3400 = vld [vmem:[%s298 + $0x520] sm:$0xff]
        %v3401 = vld [vmem:[%s298 + $0x528] sm:$0xff]
        %v3402 = vld [vmem:[%s298 + $0x530] sm:$0xff]
        %v3403 = vld [vmem:[%s298 + $0x538] sm:$0xff]
        %v3404 = vld [vmem:[%s298 + $0x540] sm:$0xff]
        %v3405 = vld [vmem:[%s298 + $0x548] sm:$0xff]
        %v3406 = vld [vmem:[%s298 + $0x550] sm:$0xff]
        %v3407 = vld [vmem:[%s298 + $0x558] sm:$0xff]
        %v3408 = vld [vmem:[%s298 + $0x560] sm:$0xff]
        %v3409 = vld [vmem:[%s298 + $0x568] sm:$0xff]
        %v3410 = vld [vmem:[%s298 + $0x570] sm:$0xff]
        %v3411 = vld [vmem:[%s298 + $0x578] sm:$0xff]
        %v3412 = vld [vmem:[%s298 + $0x580] sm:$0xff]
        %v3413 = vld [vmem:[%s298 + $0x588] sm:$0xff]
        %v3414 = vld [vmem:[%s298 + $0x590] sm:$0xff]
        %v3415 = vld [vmem:[%s298 + $0x598] sm:$0xff]
        %v3416 = vld [vmem:[%s298 + $0x5a0] sm:$0xff]
        %v3417 = vld [vmem:[%s298 + $0x5a8] sm:$0xff]
        %v3418 = vld [vmem:[%s298 + $0x5b0] sm:$0xff]
        %v3419 = vld [vmem:[%s298 + $0x5b8] sm:$0xff]
        %v3420 = vld [vmem:[%s298 + $0x5c0] sm:$0xff]
        %v3421 = vld [vmem:[%s298 + $0x5c8] sm:$0xff]
        %v3422 = vld [vmem:[%s298 + $0x5d0] sm:$0xff]
        %v3423 = vld [vmem:[%s298 + $0x5d8] sm:$0xff]
        %v3424 = vld [vmem:[%s298 + $0x5e0] sm:$0xff]
        %v3425 = vld [vmem:[%s298 + $0x5e8] sm:$0xff]
        %v3426 = vld [vmem:[%s298 + $0x5f0] sm:$0xff]
        %v3427 = vld [vmem:[%s298 + $0x5f8] sm:$0xff]
        %v3428 = vld [vmem:[%s298 + $0x600] sm:$0xff]
        %v3429 = vld [vmem:[%s298 + $0x608] sm:$0xff]
        %v3430 = vld [vmem:[%s298 + $0x610] sm:$0xff]
        %v3431 = vld [vmem:[%s298 + $0x618] sm:$0xff]
        %v3432 = vld [vmem:[%s298 + $0x620] sm:$0xff]
        %v3433 = vld [vmem:[%s298 + $0x628] sm:$0xff]
        %v3434 = vld [vmem:[%s298 + $0x630] sm:$0xff]
        %v3435 = vld [vmem:[%s298 + $0x638] sm:$0xff]
        %v3436 = vld [vmem:[%s298 + $0x640] sm:$0xff]
        %v3437 = vld [vmem:[%s298 + $0x648] sm:$0xff]
        %v3438 = vld [vmem:[%s298 + $0x650] sm:$0xff]
        %v3439 = vld [vmem:[%s298 + $0x658] sm:$0xff]
        %v3440 = vld [vmem:[%s298 + $0x660] sm:$0xff]
        %v3441 = vld [vmem:[%s298 + $0x668] sm:$0xff]
        %v3442 = vld [vmem:[%s298 + $0x670] sm:$0xff]
        %v3443 = vld [vmem:[%s298 + $0x678] sm:$0xff]
        %v3444 = vld [vmem:[%s298 + $0x680] sm:$0xff]
        %v3445 = vld [vmem:[%s298 + $0x688] sm:$0xff]
        %v3446 = vld [vmem:[%s298 + $0x690] sm:$0xff]
        %v3447 = vld [vmem:[%s298 + $0x698] sm:$0xff]
        %v3448 = vld [vmem:[%s298 + $0x6a0] sm:$0xff]
        %v3449 = vld [vmem:[%s298 + $0x6a8] sm:$0xff]
        %v3450 = vld [vmem:[%s298 + $0x6b0] sm:$0xff]
        %v3451 = vld [vmem:[%s298 + $0x6b8] sm:$0xff]
        %v3452 = vld [vmem:[%s298 + $0x6c0] sm:$0xff]
        %v3453 = vld [vmem:[%s298 + $0x6c8] sm:$0xff]
        %v3454 = vld [vmem:[%s298 + $0x6d0] sm:$0xff]
        %v3455 = vld [vmem:[%s298 + $0x6d8] sm:$0xff]
        %v3456 = vld [vmem:[%s298 + $0x6e0] sm:$0xff]
        %v3457 = vld [vmem:[%s298 + $0x6e8] sm:$0xff]
        %v3458 = vld [vmem:[%s298 + $0x6f0] sm:$0xff]
        %v3459 = vld [vmem:[%s298 + $0x6f8] sm:$0xff]
        %v3460 = vld [vmem:[%s298 + $0x700] sm:$0xff]
        %v3461 = vld [vmem:[%s298 + $0x708] sm:$0xff]
        %v3462 = vld [vmem:[%s298 + $0x710] sm:$0xff]
        %v3463 = vld [vmem:[%s298 + $0x718] sm:$0xff]
        %v3464 = vld [vmem:[%s298 + $0x720] sm:$0xff]
        %v3465 = vld [vmem:[%s298 + $0x728] sm:$0xff]
        %v3466 = vld [vmem:[%s298 + $0x730] sm:$0xff]
        %v3467 = vld [vmem:[%s298 + $0x738] sm:$0xff]
        %v3468 = vld [vmem:[%s298 + $0x740] sm:$0xff]
        %v3469 = vld [vmem:[%s298 + $0x748] sm:$0xff]
        %v3470 = vld [vmem:[%s298 + $0x750] sm:$0xff]
        %v3471 = vld [vmem:[%s298 + $0x758] sm:$0xff]
        %v3472 = vld [vmem:[%s298 + $0x760] sm:$0xff]
        %v3473 = vld [vmem:[%s298 + $0x768] sm:$0xff]
        %v3474 = vld [vmem:[%s298 + $0x770] sm:$0xff]
        %v3475 = vld [vmem:[%s298 + $0x778] sm:$0xff]
        %v3476 = vld [vmem:[%s298 + $0x780] sm:$0xff]
        %v3477 = vld [vmem:[%s298 + $0x788] sm:$0xff]
        %v3478 = vld [vmem:[%s298 + $0x790] sm:$0xff]
        %v3479 = vld [vmem:[%s298 + $0x798] sm:$0xff]
        %v3480 = vld [vmem:[%s298 + $0x7a0] sm:$0xff]
        %v3481 = vld [vmem:[%s298 + $0x7a8] sm:$0xff]
        %v3482 = vld [vmem:[%s298 + $0x7b0] sm:$0xff]
        %v3483 = vld [vmem:[%s298 + $0x7b8] sm:$0xff]
        %v3484 = vld [vmem:[%s298 + $0x7c0] sm:$0xff]
        %v3485 = vld [vmem:[%s298 + $0x7c8] sm:$0xff]
        %v3486 = vld [vmem:[%s298 + $0x7d0] sm:$0xff]
        %v3487 = vld [vmem:[%s298 + $0x7d8] sm:$0xff]
        %v3488 = vld [vmem:[%s298 + $0x7e0] sm:$0xff]
        %v3489 = vld [vmem:[%s298 + $0x7e8] sm:$0xff]
        %v3490 = vld [vmem:[%s298 + $0x7f0] sm:$0xff]
        %v3491 = vld [vmem:[%s298 + $0x7f8] sm:$0xff]
        %v3492 = vld [vmem:[%s298 + $0x800] sm:$0xff]
        %v3493 = vld [vmem:[%s298 + $0x808] sm:$0xff]
        %v3494 = vld [vmem:[%s298 + $0x810] sm:$0xff]
        %v3495 = vld [vmem:[%s298 + $0x818] sm:$0xff]
        %v3496 = vld [vmem:[%s298 + $0x820] sm:$0xff]
        %v3497 = vld [vmem:[%s298 + $0x828] sm:$0xff]
        %v3498 = vld [vmem:[%s298 + $0x830] sm:$0xff]
        %v3499 = vld [vmem:[%s298 + $0x838] sm:$0xff]
        %v3500 = vld [vmem:[%s298 + $0x840] sm:$0xff]
        %v3501 = vld [vmem:[%s298 + $0x848] sm:$0xff]
        %v3502 = vld [vmem:[%s298 + $0x850] sm:$0xff]
        %v3503 = vld [vmem:[%s298 + $0x858] sm:$0xff]
        %v3504 = vld [vmem:[%s298 + $0x860] sm:$0xff]
        %v3505 = vld [vmem:[%s298 + $0x868] sm:$0xff]
        %v3506 = vld [vmem:[%s298 + $0x870] sm:$0xff]
        %v3507 = vld [vmem:[%s298 + $0x878] sm:$0xff]
        %v3508 = vld [vmem:[%s298 + $0x880] sm:$0xff]
        %v3509 = vld [vmem:[%s298 + $0x888] sm:$0xff]
        %v3510 = vld [vmem:[%s298 + $0x890] sm:$0xff]
        %v3511 = vld [vmem:[%s298 + $0x898] sm:$0xff]
        %v3512 = vld [vmem:[%s298 + $0x8a0] sm:$0xff]
        %v3513 = vld [vmem:[%s298 + $0x8a8] sm:$0xff]
        %v3514 = vld [vmem:[%s298 + $0x8b0] sm:$0xff]
        %v3515 = vld [vmem:[%s298 + $0x8b8] sm:$0xff]
        %v3516 = vld [vmem:[%s298 + $0x8c0] sm:$0xff]
        %v3517 = vld [vmem:[%s298 + $0x8c8] sm:$0xff]
        %v3518 = vld [vmem:[%s298 + $0x8d0] sm:$0xff]
        %v3519 = vld [vmem:[%s298 + $0x8d8] sm:$0xff]
        %v3520 = vld [vmem:[%s298 + $0x8e0] sm:$0xff]
        %v3521 = vld [vmem:[%s298 + $0x8e8] sm:$0xff]
        %v3522 = vld [vmem:[%s298 + $0x8f0] sm:$0xff]
        %v3523 = vld [vmem:[%s298 + $0x8f8] sm:$0xff]
        %v3524 = vld [vmem:[%s298 + $0x900] sm:$0xff]
        %v3525 = vld [vmem:[%s298 + $0x908] sm:$0xff]
        %v3526 = vld [vmem:[%s298 + $0x910] sm:$0xff]
        %v3527 = vld [vmem:[%s298 + $0x918] sm:$0xff]
        %v3528 = vld [vmem:[%s298 + $0x920] sm:$0xff]
        %v3529 = vld [vmem:[%s298 + $0x928] sm:$0xff]
        %v3530 = vld [vmem:[%s298 + $0x930] sm:$0xff]
        %v3531 = vld [vmem:[%s298 + $0x938] sm:$0xff]
        %v3532 = vld [vmem:[%s298 + $0x940] sm:$0xff]
        %v3533 = vld [vmem:[%s298 + $0x948] sm:$0xff]
        %v3534 = vld [vmem:[%s298 + $0x950] sm:$0xff]
        %v3535 = vld [vmem:[%s298 + $0x958] sm:$0xff]
        %v3536 = vld [vmem:[%s298 + $0x960] sm:$0xff]
        %v3537 = vld [vmem:[%s298 + $0x968] sm:$0xff]
        %v3538 = vld [vmem:[%s298 + $0x970] sm:$0xff]
        %v3539 = vld [vmem:[%s298 + $0x978] sm:$0xff]
        %v3540 = vld [vmem:[%s298 + $0x980] sm:$0xff]
        %v3541 = vld [vmem:[%s298 + $0x988] sm:$0xff]
        %v3542 = vld [vmem:[%s298 + $0x990] sm:$0xff]
        %v3543 = vld [vmem:[%s298 + $0x998] sm:$0xff]
        %v3544 = vld [vmem:[%s298 + $0x9a0] sm:$0xff]
        %v3545 = vld [vmem:[%s298 + $0x9a8] sm:$0xff]
        %v3546 = vld [vmem:[%s298 + $0x9b0] sm:$0xff]
        %v3547 = vld [vmem:[%s298 + $0x9b8] sm:$0xff]
        %v3548 = vld [vmem:[%s298 + $0x9c0] sm:$0xff]
        %v3549 = vld [vmem:[%s298 + $0x9c8] sm:$0xff]
        %v3550 = vld [vmem:[%s298 + $0x9d0] sm:$0xff]
        %v3551 = vld [vmem:[%s298 + $0x9d8] sm:$0xff]
        %v3552 = vld [vmem:[%s298 + $0x9e0] sm:$0xff]
        %v3553 = vld [vmem:[%s298 + $0x9e8] sm:$0xff]
        %v3554 = vld [vmem:[%s298 + $0x9f0] sm:$0xff]
        %v3555 = vld [vmem:[%s298 + $0x9f8] sm:$0xff]
        %v3556 = vld [vmem:[%s298 + $0xa00] sm:$0xff]
        %v3557 = vld [vmem:[%s298 + $0xa08] sm:$0xff]
        %v3558 = vld [vmem:[%s298 + $0xa10] sm:$0xff]
        %v3559 = vld [vmem:[%s298 + $0xa18] sm:$0xff]
        %v3560 = vld [vmem:[%s298 + $0xa20] sm:$0xff]
        %v3561 = vld [vmem:[%s298 + $0xa28] sm:$0xff]
        %v3562 = vld [vmem:[%s298 + $0xa30] sm:$0xff]
        %v3563 = vld [vmem:[%s298 + $0xa38] sm:$0xff]
        %v3564 = vld [vmem:[%s298 + $0xa40] sm:$0xff]
        %v3565 = vld [vmem:[%s298 + $0xa48] sm:$0xff]
        %v3566 = vld [vmem:[%s298 + $0xa50] sm:$0xff]
        %v3567 = vld [vmem:[%s298 + $0xa58] sm:$0xff]
        %v3568 = vld [vmem:[%s298 + $0xa60] sm:$0xff]
        %v3569 = vld [vmem:[%s298 + $0xa68] sm:$0xff]
        %v3570 = vld [vmem:[%s298 + $0xa70] sm:$0xff]
        %v3571 = vld [vmem:[%s298 + $0xa78] sm:$0xff]
        %v3572 = vld [vmem:[%s298 + $0xa80] sm:$0xff]
        %v3573 = vld [vmem:[%s298 + $0xa88] sm:$0xff]
        %v3574 = vld [vmem:[%s298 + $0xa90] sm:$0xff]
        %v3575 = vld [vmem:[%s298 + $0xa98] sm:$0xff]
        %v3576 = vld [vmem:[%s298 + $0xaa0] sm:$0xff]
        %v3577 = vld [vmem:[%s298 + $0xaa8] sm:$0xff]
        %v3578 = vld [vmem:[%s298 + $0xab0] sm:$0xff]
        %v3579 = vld [vmem:[%s298 + $0xab8] sm:$0xff]
        %v3580 = vld [vmem:[%s298 + $0xac0] sm:$0xff]
        %v3581 = vld [vmem:[%s298 + $0xac8] sm:$0xff]
        %v3582 = vld [vmem:[%s298 + $0xad0] sm:$0xff]
        %v3583 = vld [vmem:[%s298 + $0xad8] sm:$0xff]
        %v3584 = vld [vmem:[%s298 + $0xae0] sm:$0xff]
        %v3585 = vld [vmem:[%s298 + $0xae8] sm:$0xff]
        %v3586 = vld [vmem:[%s298 + $0xaf0] sm:$0xff]
        %v3587 = vld [vmem:[%s298 + $0xaf8] sm:$0xff]
        %v3588 = vld [vmem:[%s298 + $0xb00] sm:$0xff]
        %v3589 = vld [vmem:[%s298 + $0xb08] sm:$0xff]
        %v3590 = vld [vmem:[%s298 + $0xb10] sm:$0xff]
        %v3591 = vld [vmem:[%s298 + $0xb18] sm:$0xff]
        %v3592 = vld [vmem:[%s298 + $0xb20] sm:$0xff]
        %v3593 = vld [vmem:[%s298 + $0xb28] sm:$0xff]
        %v3594 = vld [vmem:[%s298 + $0xb30] sm:$0xff]
        %v3595 = vld [vmem:[%s298 + $0xb38] sm:$0xff]
        %v3596 = vld [vmem:[%s298 + $0xb40] sm:$0xff]
        %v3597 = vld [vmem:[%s298 + $0xb48] sm:$0xff]
        %v3598 = vld [vmem:[%s298 + $0xb50] sm:$0xff]
        %v3599 = vld [vmem:[%s298 + $0xb58] sm:$0xff]
        %v3600 = vld [vmem:[%s298 + $0xb60] sm:$0xff]
        %v3601 = vld [vmem:[%s298 + $0xb68] sm:$0xff]
        %v3602 = vld [vmem:[%s298 + $0xb70] sm:$0xff]
        %v3603 = vld [vmem:[%s298 + $0xb78] sm:$0xff]
        %v3604 = vld [vmem:[%s298 + $0xb80] sm:$0xff]
        %v3605 = vld [vmem:[%s298 + $0xb88] sm:$0xff]
        %v3606 = vld [vmem:[%s298 + $0xb90] sm:$0xff]
        %v3607 = vld [vmem:[%s298 + $0xb98] sm:$0xff]
        %v3608 = vld [vmem:[%s298 + $0xba0] sm:$0xff]
        %v3609 = vld [vmem:[%s298 + $0xba8] sm:$0xff]
        %v3610 = vld [vmem:[%s298 + $0xbb0] sm:$0xff]
        %v3611 = vld [vmem:[%s298 + $0xbb8] sm:$0xff]
        %v3612 = vld [vmem:[%s298 + $0xbc0] sm:$0xff]
        %v3613 = vld [vmem:[%s298 + $0xbc8] sm:$0xff]
        %v3614 = vld [vmem:[%s298 + $0xbd0] sm:$0xff]
        %v3615 = vld [vmem:[%s298 + $0xbd8] sm:$0xff]
        %v3616 = vld [vmem:[%s298 + $0xbe0] sm:$0xff]
        %v3617 = vld [vmem:[%s298 + $0xbe8] sm:$0xff]
        %v3618 = vld [vmem:[%s298 + $0xbf0] sm:$0xff]
        %v3619 = vld [vmem:[%s298 + $0xbf8] sm:$0xff]
        %v3620 = vld [vmem:[%s298 + $0xc00] sm:$0xff]
        %v3621 = vld [vmem:[%s298 + $0xc08] sm:$0xff]
        %v3622 = vld [vmem:[%s298 + $0xc10] sm:$0xff]
        %v3623 = vld [vmem:[%s298 + $0xc18] sm:$0xff]
        %v3624 = vld [vmem:[%s298 + $0xc20] sm:$0xff]
        %v3625 = vld [vmem:[%s298 + $0xc28] sm:$0xff]
        %v3626 = vld [vmem:[%s298 + $0xc30] sm:$0xff]
        %v3627 = vld [vmem:[%s298 + $0xc38] sm:$0xff]
        %v3628 = vld [vmem:[%s298 + $0xc40] sm:$0xff]
        %v3629 = vld [vmem:[%s298 + $0xc48] sm:$0xff]
        %v3630 = vld [vmem:[%s298 + $0xc50] sm:$0xff]
        %v3631 = vld [vmem:[%s298 + $0xc58] sm:$0xff]
        %v3632 = vld [vmem:[%s298 + $0xc60] sm:$0xff]
        %v3633 = vld [vmem:[%s298 + $0xc68] sm:$0xff]
        %v3634 = vld [vmem:[%s298 + $0xc70] sm:$0xff]
        %v3635 = vld [vmem:[%s298 + $0xc78] sm:$0xff]
        %v3636 = vld [vmem:[%s298 + $0xc80] sm:$0xff]
        %v3637 = vld [vmem:[%s298 + $0xc88] sm:$0xff]
        %v3638 = vld [vmem:[%s298 + $0xc90] sm:$0xff]
        %v3639 = vld [vmem:[%s298 + $0xc98] sm:$0xff]
        %v3640 = vld [vmem:[%s298 + $0xca0] sm:$0xff]
        %v3641 = vld [vmem:[%s298 + $0xca8] sm:$0xff]
        %v3642 = vld [vmem:[%s298 + $0xcb0] sm:$0xff]
        %v3643 = vld [vmem:[%s298 + $0xcb8] sm:$0xff]
        %v3644 = vld [vmem:[%s298 + $0xcc0] sm:$0xff]
        %v3645 = vld [vmem:[%s298 + $0xcc8] sm:$0xff]
        %v3646 = vld [vmem:[%s298 + $0xcd0] sm:$0xff]
        %v3647 = vld [vmem:[%s298 + $0xcd8] sm:$0xff]
        %v3648 = vld [vmem:[%s298 + $0xce0] sm:$0xff]
        %v3649 = vld [vmem:[%s298 + $0xce8] sm:$0xff]
        %v3650 = vld [vmem:[%s298 + $0xcf0] sm:$0xff]
        %v3651 = vld [vmem:[%s298 + $0xcf8] sm:$0xff]
        %v3652 = vld [vmem:[%s298 + $0xd00] sm:$0xff]
        %v3653 = vld [vmem:[%s298 + $0xd08] sm:$0xff]
        %v3654 = vld [vmem:[%s298 + $0xd10] sm:$0xff]
        %v3655 = vld [vmem:[%s298 + $0xd18] sm:$0xff]
        %v3656 = vld [vmem:[%s298 + $0xd20] sm:$0xff]
        %v3657 = vld [vmem:[%s298 + $0xd28] sm:$0xff]
        %v3658 = vld [vmem:[%s298 + $0xd30] sm:$0xff]
        %v3659 = vld [vmem:[%s298 + $0xd38] sm:$0xff]
        %v3660 = vld [vmem:[%s298 + $0xd40] sm:$0xff]
        %v3661 = vld [vmem:[%s298 + $0xd48] sm:$0xff]
        %v3662 = vld [vmem:[%s298 + $0xd50] sm:$0xff]
        %v3663 = vld [vmem:[%s298 + $0xd58] sm:$0xff]
        %v3664 = vld [vmem:[%s298 + $0xd60] sm:$0xff]
        %v3665 = vld [vmem:[%s298 + $0xd68] sm:$0xff]
        %v3666 = vld [vmem:[%s298 + $0xd70] sm:$0xff]
        %v3667 = vld [vmem:[%s298 + $0xd78] sm:$0xff]
        %v3668 = vld [vmem:[%s298 + $0xd80] sm:$0xff]
        %v3669 = vld [vmem:[%s298 + $0xd88] sm:$0xff]
        %v3670 = vld [vmem:[%s298 + $0xd90] sm:$0xff]
        %v3671 = vld [vmem:[%s298 + $0xd98] sm:$0xff]
        %v3672 = vld [vmem:[%s298 + $0xda0] sm:$0xff]
        %v3673 = vld [vmem:[%s298 + $0xda8] sm:$0xff]
        %v3674 = vld [vmem:[%s298 + $0xdb0] sm:$0xff]
        %v3675 = vld [vmem:[%s298 + $0xdb8] sm:$0xff]
        %v3676 = vld [vmem:[%s298 + $0xdc0] sm:$0xff]
        %v3677 = vld [vmem:[%s298 + $0xdc8] sm:$0xff]
        %v3678 = vld [vmem:[%s298 + $0xdd0] sm:$0xff]
        %v3679 = vld [vmem:[%s298 + $0xdd8] sm:$0xff]
        %v3680 = vld [vmem:[%s298 + $0xde0] sm:$0xff]
        %v3681 = vld [vmem:[%s298 + $0xde8] sm:$0xff]
        %v3682 = vld [vmem:[%s298 + $0xdf0] sm:$0xff]
        %v3683 = vld [vmem:[%s298 + $0xdf8] sm:$0xff]
        %v3684 = vld [vmem:[%s298 + $0xe00] sm:$0xff]
        %v3685 = vld [vmem:[%s298 + $0xe08] sm:$0xff]
        %v3686 = vld [vmem:[%s298 + $0xe10] sm:$0xff]
        %v3687 = vld [vmem:[%s298 + $0xe18] sm:$0xff]
        %v3688 = vld [vmem:[%s298 + $0xe20] sm:$0xff]
        %v3689 = vld [vmem:[%s298 + $0xe28] sm:$0xff]
        %v3690 = vld [vmem:[%s298 + $0xe30] sm:$0xff]
        %v3691 = vld [vmem:[%s298 + $0xe38] sm:$0xff]
        %v3692 = vld [vmem:[%s298 + $0xe40] sm:$0xff]
        %v3693 = vld [vmem:[%s298 + $0xe48] sm:$0xff]
        %v3694 = vld [vmem:[%s298 + $0xe50] sm:$0xff]
        %v3695 = vld [vmem:[%s298 + $0xe58] sm:$0xff]
        %v3696 = vld [vmem:[%s298 + $0xe60] sm:$0xff]
        %v3697 = vld [vmem:[%s298 + $0xe68] sm:$0xff]
        %v3698 = vld [vmem:[%s298 + $0xe70] sm:$0xff]
        %v3699 = vld [vmem:[%s298 + $0xe78] sm:$0xff]
        %v3700 = vld [vmem:[%s298 + $0xe80] sm:$0xff]
        %v3701 = vld [vmem:[%s298 + $0xe88] sm:$0xff]
        %v3702 = vld [vmem:[%s298 + $0xe90] sm:$0xff]
        %v3703 = vld [vmem:[%s298 + $0xe98] sm:$0xff]
        %v3704 = vld [vmem:[%s298 + $0xea0] sm:$0xff]
        %v3705 = vld [vmem:[%s298 + $0xea8] sm:$0xff]
        %v3706 = vld [vmem:[%s298 + $0xeb0] sm:$0xff]
        %v3707 = vld [vmem:[%s298 + $0xeb8] sm:$0xff]
        %v3708 = vld [vmem:[%s298 + $0xec0] sm:$0xff]
        %v3709 = vld [vmem:[%s298 + $0xec8] sm:$0xff]
        %v3710 = vld [vmem:[%s298 + $0xed0] sm:$0xff]
        %v3711 = vld [vmem:[%s298 + $0xed8] sm:$0xff]
        %v3712 = vld [vmem:[%s298 + $0xee0] sm:$0xff]
        %v3713 = vld [vmem:[%s298 + $0xee8] sm:$0xff]
        %v3714 = vld [vmem:[%s298 + $0xef0] sm:$0xff]
        %v3715 = vld [vmem:[%s298 + $0xef8] sm:$0xff]
        %v3716 = vld [vmem:[%s298 + $0xf00] sm:$0xff]
        %v3717 = vld [vmem:[%s298 + $0xf08] sm:$0xff]
        %v3718 = vld [vmem:[%s298 + $0xf10] sm:$0xff]
        %v3719 = vld [vmem:[%s298 + $0xf18] sm:$0xff]
        %v3720 = vld [vmem:[%s298 + $0xf20] sm:$0xff]
        %v3721 = vld [vmem:[%s298 + $0xf28] sm:$0xff]
        %v3722 = vld [vmem:[%s298 + $0xf30] sm:$0xff]
        %v3723 = vld [vmem:[%s298 + $0xf38] sm:$0xff]
        %v3724 = vld [vmem:[%s298 + $0xf40] sm:$0xff]
        %v3725 = vld [vmem:[%s298 + $0xf48] sm:$0xff]
        %v3726 = vld [vmem:[%s298 + $0xf50] sm:$0xff]
        %v3727 = vld [vmem:[%s298 + $0xf58] sm:$0xff]
        %v3728 = vld [vmem:[%s298 + $0xf60] sm:$0xff]
        %v3729 = vld [vmem:[%s298 + $0xf68] sm:$0xff]
        %v3730 = vld [vmem:[%s298 + $0xf70] sm:$0xff]
        %v3731 = vld [vmem:[%s298 + $0xf78] sm:$0xff]
        %v3732 = vld [vmem:[%s298 + $0xf80] sm:$0xff]
        %v3733 = vld [vmem:[%s298 + $0xf88] sm:$0xff]
        %v3734 = vld [vmem:[%s298 + $0xf90] sm:$0xff]
        %v3735 = vld [vmem:[%s298 + $0xf98] sm:$0xff]
        %v3736 = vld [vmem:[%s298 + $0xfa0] sm:$0xff]
        %v3737 = vld [vmem:[%s298 + $0xfa8] sm:$0xff]
        %v3738 = vld [vmem:[%s298 + $0xfb0] sm:$0xff]
        %v3739 = vld [vmem:[%s298 + $0xfb8] sm:$0xff]
        %v3740 = vld [vmem:[%s298 + $0xfc0] sm:$0xff]
        %v3741 = vld [vmem:[%s298 + $0xfc8] sm:$0xff]
        %v3742 = vld [vmem:[%s298 + $0xfd0] sm:$0xff]
        %v3743 = vld [vmem:[%s298 + $0xfd8] sm:$0xff]
        %v3744 = vld [vmem:[%s298 + $0xfe0] sm:$0xff]
        %v3745 = vld [vmem:[%s298 + $0xfe8] sm:$0xff]
        %v3746 = vld [vmem:[%s298 + $0xff0] sm:$0xff]
        %v3747 = vld [vmem:[%s298 + $0xff8] sm:$0xff]
        %v3748 = vld [vmem:[%s298 + $0x1000] sm:$0xff]
        %v3749 = vld [vmem:[%s298 + $0x1008] sm:$0xff]
        %v3750 = vld [vmem:[%s298 + $0x1010] sm:$0xff]
        %v3751 = vld [vmem:[%s298 + $0x1018] sm:$0xff]
        %v3752 = vld [vmem:[%s298 + $0x1020] sm:$0xff]
        %v3753 = vld [vmem:[%s298 + $0x1028] sm:$0xff]
        %v3754 = vld [vmem:[%s298 + $0x1030] sm:$0xff]
        %v3755 = vld [vmem:[%s298 + $0x1038] sm:$0xff]
        %v3756 = vld [vmem:[%s298 + $0x1040] sm:$0xff]
        %v3757 = vld [vmem:[%s298 + $0x1048] sm:$0xff]
        %v3758 = vld [vmem:[%s298 + $0x1050] sm:$0xff]
        %v3759 = vld [vmem:[%s298 + $0x1058] sm:$0xff]
        %v3760 = vld [vmem:[%s298 + $0x1060] sm:$0xff]
        %v3761 = vld [vmem:[%s298 + $0x1068] sm:$0xff]
        %v3762 = vld [vmem:[%s298 + $0x1070] sm:$0xff]
        %v3763 = vld [vmem:[%s298 + $0x1078] sm:$0xff]
        %v3764 = vld [vmem:[%s298 + $0x1080] sm:$0xff]
        %v3765 = vld [vmem:[%s298 + $0x1088] sm:$0xff]
        %v3766 = vld [vmem:[%s298 + $0x1090] sm:$0xff]
        %v3767 = vld [vmem:[%s298 + $0x1098] sm:$0xff]
        %v3768 = vld [vmem:[%s298 + $0x10a0] sm:$0xff]
        %v3769 = vld [vmem:[%s298 + $0x10a8] sm:$0xff]
        %v3770 = vld [vmem:[%s298 + $0x10b0] sm:$0xff]
        %v3771 = vld [vmem:[%s298 + $0x10b8] sm:$0xff]
        %v3772 = vld [vmem:[%s298 + $0x10c0] sm:$0xff]
        %v3773 = vld [vmem:[%s298 + $0x10c8] sm:$0xff]
        %v3774 = vld [vmem:[%s298 + $0x10d0] sm:$0xff]
        %v3775 = vld [vmem:[%s298 + $0x10d8] sm:$0xff]
        %v3776 = vld [vmem:[%s298 + $0x10e0] sm:$0xff]
        %v3777 = vld [vmem:[%s298 + $0x10e8] sm:$0xff]
        %v3778 = vld [vmem:[%s298 + $0x10f0] sm:$0xff]
        %v3779 = vld [vmem:[%s298 + $0x10f8] sm:$0xff]
        %v3780 = vld [vmem:[%s298 + $0x1100] sm:$0xff]
        %v3781 = vld [vmem:[%s298 + $0x1108] sm:$0xff]
        %v3782 = vld [vmem:[%s298 + $0x1110] sm:$0xff]
        %v3783 = vld [vmem:[%s298 + $0x1118] sm:$0xff]
        %v3784 = vld [vmem:[%s298 + $0x1120] sm:$0xff]
        %v3785 = vld [vmem:[%s298 + $0x1128] sm:$0xff]
        %v3786 = vld [vmem:[%s298 + $0x1130] sm:$0xff]
        %v3787 = vld [vmem:[%s298 + $0x1138] sm:$0xff]
        %v3788 = vld [vmem:[%s298 + $0x1140] sm:$0xff]
        %v3789 = vld [vmem:[%s298 + $0x1148] sm:$0xff]
        %v3790 = vld [vmem:[%s298 + $0x1150] sm:$0xff]
        %v3791 = vld [vmem:[%s298 + $0x1158] sm:$0xff]
        %v3792 = vld [vmem:[%s298 + $0x1160] sm:$0xff]
        %v3793 = vld [vmem:[%s298 + $0x1168] sm:$0xff]
        %v3794 = vld [vmem:[%s298 + $0x1170] sm:$0xff]
        %v3795 = vld [vmem:[%s298 + $0x1178] sm:$0xff]
        %v3796 = vld [vmem:[%s298 + $0x1180] sm:$0xff]
        %v3797 = vld [vmem:[%s298 + $0x1188] sm:$0xff]
        %v3798 = vld [vmem:[%s298 + $0x1190] sm:$0xff]
        %v3799 = vld [vmem:[%s298 + $0x1198] sm:$0xff]
        %v3800 = vld [vmem:[%s298 + $0x11a0] sm:$0xff]
        %v3801 = vld [vmem:[%s298 + $0x11a8] sm:$0xff]
        %v3802 = vld [vmem:[%s298 + $0x11b0] sm:$0xff]
        %v3803 = vld [vmem:[%s298 + $0x11b8] sm:$0xff]
        %v3804 = vld [vmem:[%s298 + $0x11c0] sm:$0xff]
        %v3805 = vld [vmem:[%s298 + $0x11c8] sm:$0xff]
        %v3806 = vld [vmem:[%s298 + $0x11d0] sm:$0xff]
        %v3807 = vld [vmem:[%s298 + $0x11d8] sm:$0xff]
        %v3808 = vld [vmem:[%s298 + $0x11e0] sm:$0xff]
        %v3809 = vld [vmem:[%s298 + $0x11e8] sm:$0xff]
        %v3810 = vld [vmem:[%s298 + $0x11f0] sm:$0xff]
        %v3811 = vld [vmem:[%s298 + $0x11f8] sm:$0xff]
        %v3813 = vlaneseq
        %v3814 = vshrl.u32 %v3813, 7
        %v3815 = vsub.s32 0, %v3814
        %v3816 = vrot.slane %v3091, %v3815
        %v3817 = vlaneseq
        %v3818 = vshrl.u32 %v3817, 7
        %v3819 = vsub.s32 1, %v3818
        %v3820 = vrot.slane %v3091, %v3819
        %v3821 = vlaneseq
        %v3822 = vshrl.u32 %v3821, 7
        %v3823 = vsub.s32 2, %v3822
        %v3824 = vrot.slane %v3091, %v3823
        %v3825 = vlaneseq
        %v3826 = vshrl.u32 %v3825, 7
        %v3827 = vsub.s32 3, %v3826
        %v3828 = vrot.slane %v3091, %v3827
        %v3977 = vunpack.c.l.b16 %v3092
        %v3978 = vunpack.c.h.b16 %v3092
        %v3979 = vunpack.c.l.b16 %v3093
        %v3980 = vunpack.c.h.b16 %v3093
        %v3981 = vunpack.c.l.b16 %v3094
        %v3982 = vunpack.c.h.b16 %v3094
        %v3983 = vunpack.c.l.b16 %v3095
        %v3984 = vunpack.c.h.b16 %v3095
        %v3985 = vunpack.c.l.b16 %v3096
        %v3986 = vunpack.c.h.b16 %v3096
        %v3987 = vunpack.c.l.b16 %v3097
        %v3988 = vunpack.c.h.b16 %v3097
        %v3989 = vunpack.c.l.b16 %v3098
        %v3990 = vunpack.c.h.b16 %v3098
        %v3991 = vunpack.c.l.b16 %v3099
        %v3992 = vunpack.c.h.b16 %v3099
        %v3993 = vunpack.c.l.b16 %v3100
        %v3994 = vunpack.c.h.b16 %v3100
        %v3995 = vunpack.c.l.b16 %v3101
        %v3996 = vunpack.c.h.b16 %v3101
        %v3997 = vunpack.c.l.b16 %v3102
        %v3998 = vunpack.c.h.b16 %v3102
        %v3999 = vunpack.c.l.b16 %v3103
        %v4000 = vunpack.c.h.b16 %v3103
        %v4001 = vunpack.c.l.b16 %v3104
        %v4002 = vunpack.c.h.b16 %v3104
        %v4003 = vunpack.c.l.b16 %v3105
        %v4004 = vunpack.c.h.b16 %v3105
        %v4005 = vunpack.c.l.b16 %v3106
        %v4006 = vunpack.c.h.b16 %v3106
        %v4007 = vunpack.c.l.b16 %v3107
        %v4008 = vunpack.c.h.b16 %v3107
        %v4009 = vunpack.c.l.b16 %v3108
        %v4010 = vunpack.c.h.b16 %v3108
        %v4011 = vunpack.c.l.b16 %v3109
        %v4012 = vunpack.c.h.b16 %v3109
        %v4013 = vunpack.c.l.b16 %v3110
        %v4014 = vunpack.c.h.b16 %v3110
        %v4015 = vunpack.c.l.b16 %v3111
        %v4016 = vunpack.c.h.b16 %v3111
        %v4017 = vunpack.c.l.b16 %v3112
        %v4018 = vunpack.c.h.b16 %v3112
        %v4019 = vunpack.c.l.b16 %v3113
        %v4020 = vunpack.c.h.b16 %v3113
        %v4021 = vunpack.c.l.b16 %v3114
        %v4022 = vunpack.c.h.b16 %v3114
        %v4023 = vunpack.c.l.b16 %v3115
        %v4024 = vunpack.c.h.b16 %v3115
        %v4025 = vunpack.c.l.b16 %v3116
        %v4026 = vunpack.c.h.b16 %v3116
        %v4027 = vunpack.c.l.b16 %v3117
        %v4028 = vunpack.c.h.b16 %v3117
        %v4029 = vunpack.c.l.b16 %v3118
        %v4030 = vunpack.c.h.b16 %v3118
        %v4031 = vunpack.c.l.b16 %v3119
        %v4032 = vunpack.c.h.b16 %v3119
        %v4033 = vunpack.c.l.b16 %v3120
        %v4034 = vunpack.c.h.b16 %v3120
        %v4035 = vunpack.c.l.b16 %v3121
        %v4036 = vunpack.c.h.b16 %v3121
        %v4037 = vunpack.c.l.b16 %v3122
        %v4038 = vunpack.c.h.b16 %v3122
        %v4039 = vunpack.c.l.b16 %v3123
        %v4040 = vunpack.c.h.b16 %v3123
        %v4041 = vunpack.c.l.b16 %v3124
        %v4042 = vunpack.c.h.b16 %v3124
        %v4043 = vunpack.c.l.b16 %v3125
        %v4044 = vunpack.c.h.b16 %v3125
        %v4045 = vunpack.c.l.b16 %v3126
        %v4046 = vunpack.c.h.b16 %v3126
        %v4047 = vunpack.c.l.b16 %v3127
        %v4048 = vunpack.c.h.b16 %v3127
        %v4049 = vunpack.c.l.b16 %v3128
        %v4050 = vunpack.c.h.b16 %v3128
        %v4051 = vunpack.c.l.b16 %v3129
        %v4052 = vunpack.c.h.b16 %v3129
        %v4053 = vunpack.c.l.b16 %v3130
        %v4054 = vunpack.c.h.b16 %v3130
        %v4055 = vunpack.c.l.b16 %v3131
        %v4056 = vunpack.c.h.b16 %v3131
        %v4057 = vunpack.c.l.b16 %v3132
        %v4058 = vunpack.c.h.b16 %v3132
        %v4059 = vunpack.c.l.b16 %v3133
        %v4060 = vunpack.c.h.b16 %v3133
        %v4061 = vunpack.c.l.b16 %v3134
        %v4062 = vunpack.c.h.b16 %v3134
        %v4063 = vunpack.c.l.b16 %v3135
        %v4064 = vunpack.c.h.b16 %v3135
        %v4065 = vunpack.c.l.b16 %v3136
        %v4066 = vunpack.c.h.b16 %v3136
        %v4067 = vunpack.c.l.b16 %v3137
        %v4068 = vunpack.c.h.b16 %v3137
        %v4069 = vunpack.c.l.b16 %v3138
        %v4070 = vunpack.c.h.b16 %v3138
        %v4071 = vunpack.c.l.b16 %v3139
        %v4072 = vunpack.c.h.b16 %v3139
        %v4073 = vunpack.c.l.b16 %v3140
        %v4074 = vunpack.c.h.b16 %v3140
        %v4075 = vunpack.c.l.b16 %v3141
        %v4076 = vunpack.c.h.b16 %v3141
        %v4077 = vunpack.c.l.b16 %v3142
        %v4078 = vunpack.c.h.b16 %v3142
        %v4079 = vunpack.c.l.b16 %v3143
        %v4080 = vunpack.c.h.b16 %v3143
        %v4081 = vunpack.c.l.b16 %v3144
        %v4082 = vunpack.c.h.b16 %v3144
        %v4083 = vunpack.c.l.b16 %v3145
        %v4084 = vunpack.c.h.b16 %v3145
        %v4085 = vunpack.c.l.b16 %v3146
        %v4086 = vunpack.c.h.b16 %v3146
        %v4087 = vunpack.c.l.b16 %v3147
        %v4088 = vunpack.c.h.b16 %v3147
        %v4089 = vunpack.c.l.b16 %v3148
        %v4090 = vunpack.c.h.b16 %v3148
        %v4091 = vunpack.c.l.b16 %v3149
        %v4092 = vunpack.c.h.b16 %v3149
        %v4093 = vunpack.c.l.b16 %v3150
        %v4094 = vunpack.c.h.b16 %v3150
        %v4095 = vunpack.c.l.b16 %v3151
        %v4096 = vunpack.c.h.b16 %v3151
        %v4097 = vunpack.c.l.b16 %v3152
        %v4098 = vunpack.c.h.b16 %v3152
        %v4099 = vunpack.c.l.b16 %v3153
        %v4100 = vunpack.c.h.b16 %v3153
        %v4101 = vunpack.c.l.b16 %v3154
        %v4102 = vunpack.c.h.b16 %v3154
        %v4103 = vunpack.c.l.b16 %v3155
        %v4104 = vunpack.c.h.b16 %v3155
        %v4105 = vunpack.c.l.b16 %v3156
        %v4106 = vunpack.c.h.b16 %v3156
        %v4107 = vunpack.c.l.b16 %v3157
        %v4108 = vunpack.c.h.b16 %v3157
        %v4109 = vunpack.c.l.b16 %v3158
        %v4110 = vunpack.c.h.b16 %v3158
        %v4111 = vunpack.c.l.b16 %v3159
        %v4112 = vunpack.c.h.b16 %v3159
        %v4113 = vunpack.c.l.b16 %v3160
        %v4114 = vunpack.c.h.b16 %v3160
        %v4115 = vunpack.c.l.b16 %v3161
        %v4116 = vunpack.c.h.b16 %v3161
        %v4117 = vunpack.c.l.b16 %v3162
        %v4118 = vunpack.c.h.b16 %v3162
        %v4119 = vunpack.c.l.b16 %v3163
        %v4120 = vunpack.c.h.b16 %v3163
        %v4121 = vunpack.c.l.b16 %v3164
        %v4122 = vunpack.c.h.b16 %v3164
        %v4123 = vunpack.c.l.b16 %v3165
        %v4124 = vunpack.c.h.b16 %v3165
        %v4125 = vunpack.c.l.b16 %v3166
        %v4126 = vunpack.c.h.b16 %v3166
        %v4127 = vunpack.c.l.b16 %v3167
        %v4128 = vunpack.c.h.b16 %v3167
        %v4129 = vunpack.c.l.b16 %v3168
        %v4130 = vunpack.c.h.b16 %v3168
        %v4131 = vunpack.c.l.b16 %v3169
        %v4132 = vunpack.c.h.b16 %v3169
        %v4133 = vunpack.c.l.b16 %v3170
        %v4134 = vunpack.c.h.b16 %v3170
        %v4135 = vunpack.c.l.b16 %v3171
        %v4136 = vunpack.c.h.b16 %v3171
        %v4137 = vunpack.c.l.b16 %v3172
        %v4138 = vunpack.c.h.b16 %v3172
        %v4139 = vunpack.c.l.b16 %v3173
        %v4140 = vunpack.c.h.b16 %v3173
        %v4141 = vunpack.c.l.b16 %v3174
        %v4142 = vunpack.c.h.b16 %v3174
        %v4143 = vunpack.c.l.b16 %v3175
        %v4144 = vunpack.c.h.b16 %v3175
        %v4145 = vunpack.c.l.b16 %v3176
        %v4146 = vunpack.c.h.b16 %v3176
        %v4147 = vunpack.c.l.b16 %v3177
        %v4148 = vunpack.c.h.b16 %v3177
        %v4149 = vunpack.c.l.b16 %v3178
        %v4150 = vunpack.c.h.b16 %v3178
        %v4151 = vunpack.c.l.b16 %v3179
        %v4152 = vunpack.c.h.b16 %v3179
        %v4153 = vunpack.c.l.b16 %v3180
        %v4154 = vunpack.c.h.b16 %v3180
        %v4155 = vunpack.c.l.b16 %v3181
        %v4156 = vunpack.c.h.b16 %v3181
        %v4157 = vunpack.c.l.b16 %v3182
        %v4158 = vunpack.c.h.b16 %v3182
        %v4159 = vunpack.c.l.b16 %v3183
        %v4160 = vunpack.c.h.b16 %v3183
        %v4161 = vunpack.c.l.b16 %v3184
        %v4162 = vunpack.c.h.b16 %v3184
        %v4163 = vunpack.c.l.b16 %v3185
        %v4164 = vunpack.c.h.b16 %v3185
        %v4165 = vunpack.c.l.b16 %v3186
        %v4166 = vunpack.c.h.b16 %v3186
        %v4167 = vunpack.c.l.b16 %v3187
        %v4168 = vunpack.c.h.b16 %v3187
        %v4169 = vunpack.c.l.b16 %v3188
        %v4170 = vunpack.c.h.b16 %v3188
        %v4171 = vunpack.c.l.b16 %v3189
        %v4172 = vunpack.c.h.b16 %v3189
        %v4173 = vunpack.c.l.b16 %v3190
        %v4174 = vunpack.c.h.b16 %v3190
        %v4175 = vunpack.c.l.b16 %v3191
        %v4176 = vunpack.c.h.b16 %v3191
        %v4177 = vunpack.c.l.b16 %v3192
        %v4178 = vunpack.c.h.b16 %v3192
        %v4179 = vunpack.c.l.b16 %v3193
        %v4180 = vunpack.c.h.b16 %v3193
        %v4181 = vunpack.c.l.b16 %v3194
        %v4182 = vunpack.c.h.b16 %v3194
        %v4183 = vunpack.c.l.b16 %v3195
        %v4184 = vunpack.c.h.b16 %v3195
        %v4185 = vunpack.c.l.b16 %v3196
        %v4186 = vunpack.c.h.b16 %v3196
        %v4187 = vunpack.c.l.b16 %v3197
        %v4188 = vunpack.c.h.b16 %v3197
        %v4189 = vunpack.c.l.b16 %v3198
        %v4190 = vunpack.c.h.b16 %v3198
        %v4191 = vunpack.c.l.b16 %v3199
        %v4192 = vunpack.c.h.b16 %v3199
        %v4193 = vunpack.c.l.b16 %v3200
        %v4194 = vunpack.c.h.b16 %v3200
        %v4195 = vunpack.c.l.b16 %v3201
        %v4196 = vunpack.c.h.b16 %v3201
        %v4197 = vunpack.c.l.b16 %v3202
        %v4198 = vunpack.c.h.b16 %v3202
        %v4199 = vunpack.c.l.b16 %v3203
        %v4200 = vunpack.c.h.b16 %v3203
        %v4201 = vunpack.c.l.b16 %v3204
        %v4202 = vunpack.c.h.b16 %v3204
        %v4203 = vunpack.c.l.b16 %v3205
        %v4204 = vunpack.c.h.b16 %v3205
        %v4205 = vunpack.c.l.b16 %v3206
        %v4206 = vunpack.c.h.b16 %v3206
        %v4207 = vunpack.c.l.b16 %v3207
        %v4208 = vunpack.c.h.b16 %v3207
        %v4209 = vunpack.c.l.b16 %v3208
        %v4210 = vunpack.c.h.b16 %v3208
        %v4211 = vunpack.c.l.b16 %v3209
        %v4212 = vunpack.c.h.b16 %v3209
        %v4213 = vunpack.c.l.b16 %v3210
        %v4214 = vunpack.c.h.b16 %v3210
        %v4215 = vunpack.c.l.b16 %v3211
        %v4216 = vunpack.c.h.b16 %v3211
        %v4217 = vunpack.c.l.b16 %v3212
        %v4218 = vunpack.c.h.b16 %v3212
        %v4219 = vunpack.c.l.b16 %v3213
        %v4220 = vunpack.c.h.b16 %v3213
        %v4221 = vunpack.c.l.b16 %v3214
        %v4222 = vunpack.c.h.b16 %v3214
        %v4223 = vunpack.c.l.b16 %v3215
        %v4224 = vunpack.c.h.b16 %v3215
        %v4225 = vunpack.c.l.b16 %v3216
        %v4226 = vunpack.c.h.b16 %v3216
        %v4227 = vunpack.c.l.b16 %v3217
        %v4228 = vunpack.c.h.b16 %v3217
        %v4229 = vunpack.c.l.b16 %v3218
        %v4230 = vunpack.c.h.b16 %v3218
        %v4231 = vunpack.c.l.b16 %v3219
        %v4232 = vunpack.c.h.b16 %v3219
        %v4233 = vunpack.c.l.b16 %v3220
        %v4234 = vunpack.c.h.b16 %v3220
        %v4235 = vunpack.c.l.b16 %v3221
        %v4236 = vunpack.c.h.b16 %v3221
        %v4237 = vunpack.c.l.b16 %v3222
        %v4238 = vunpack.c.h.b16 %v3222
        %v4239 = vunpack.c.l.b16 %v3223
        %v4240 = vunpack.c.h.b16 %v3223
        %v4241 = vunpack.c.l.b16 %v3224
        %v4242 = vunpack.c.h.b16 %v3224
        %v4243 = vunpack.c.l.b16 %v3225
        %v4244 = vunpack.c.h.b16 %v3225
        %v4245 = vunpack.c.l.b16 %v3226
        %v4246 = vunpack.c.h.b16 %v3226
        %v4247 = vunpack.c.l.b16 %v3227
        %v4248 = vunpack.c.h.b16 %v3227
        %v4249 = vunpack.c.l.b16 %v3228
        %v4250 = vunpack.c.h.b16 %v3228
        %v4251 = vunpack.c.l.b16 %v3229
        %v4252 = vunpack.c.h.b16 %v3229
        %v4253 = vunpack.c.l.b16 %v3230
        %v4254 = vunpack.c.h.b16 %v3230
        %v4255 = vunpack.c.l.b16 %v3231
        %v4256 = vunpack.c.h.b16 %v3231
        %v4257 = vunpack.c.l.b16 %v3232
        %v4258 = vunpack.c.h.b16 %v3232
        %v4259 = vunpack.c.l.b16 %v3233
        %v4260 = vunpack.c.h.b16 %v3233
        %v4261 = vunpack.c.l.b16 %v3234
        %v4262 = vunpack.c.h.b16 %v3234
        %v4263 = vunpack.c.l.b16 %v3235
        %v4264 = vunpack.c.h.b16 %v3235
        %v4265 = vpack.c.b16 %v3995, %v3977
        %v4266 = vpack.c.b16 %v3996, %v3978
        %v4267 = vpack.c.b16 %v3997, %v3979
        %v4268 = vpack.c.b16 %v3998, %v3980
        %v4269 = vpack.c.b16 %v3999, %v3981
        %v4270 = vpack.c.b16 %v4000, %v3982
        %v4271 = vpack.c.b16 %v4001, %v3983
        %v4272 = vpack.c.b16 %v4002, %v3984
        %v4273 = vpack.c.b16 %v4003, %v3985
        %v4274 = vpack.c.b16 %v4004, %v3986
        %v4275 = vpack.c.b16 %v4005, %v3987
        %v4276 = vpack.c.b16 %v4006, %v3988
        %v4277 = vpack.c.b16 %v4007, %v3989
        %v4278 = vpack.c.b16 %v4008, %v3990
        %v4279 = vpack.c.b16 %v4009, %v3991
        %v4280 = vpack.c.b16 %v4010, %v3992
        %v4281 = vpack.c.b16 %v4011, %v3993
        %v4282 = vpack.c.b16 %v4012, %v3994
        %v4283 = vpack.c.b16 %v4031, %v4013
        %v4284 = vpack.c.b16 %v4032, %v4014
        %v4285 = vpack.c.b16 %v4033, %v4015
        %v4286 = vpack.c.b16 %v4034, %v4016
        %v4287 = vpack.c.b16 %v4035, %v4017
        %v4288 = vpack.c.b16 %v4036, %v4018
        %v4289 = vpack.c.b16 %v4037, %v4019
        %v4290 = vpack.c.b16 %v4038, %v4020
        %v4291 = vpack.c.b16 %v4039, %v4021
        %v4292 = vpack.c.b16 %v4040, %v4022
        %v4293 = vpack.c.b16 %v4041, %v4023
        %v4294 = vpack.c.b16 %v4042, %v4024
        %v4295 = vpack.c.b16 %v4043, %v4025
        %v4296 = vpack.c.b16 %v4044, %v4026
        %v4297 = vpack.c.b16 %v4045, %v4027
        %v4298 = vpack.c.b16 %v4046, %v4028
        %v4299 = vpack.c.b16 %v4047, %v4029
        %v4300 = vpack.c.b16 %v4048, %v4030
        %v4301 = vpack.c.b16 %v4067, %v4049
        %v4302 = vpack.c.b16 %v4068, %v4050
        %v4303 = vpack.c.b16 %v4069, %v4051
        %v4304 = vpack.c.b16 %v4070, %v4052
        %v4305 = vpack.c.b16 %v4071, %v4053
        %v4306 = vpack.c.b16 %v4072, %v4054
        %v4307 = vpack.c.b16 %v4073, %v4055
        %v4308 = vpack.c.b16 %v4074, %v4056
        %v4309 = vpack.c.b16 %v4075, %v4057
        %v4310 = vpack.c.b16 %v4076, %v4058
        %v4311 = vpack.c.b16 %v4077, %v4059
        %v4312 = vpack.c.b16 %v4078, %v4060
        %v4313 = vpack.c.b16 %v4079, %v4061
        %v4314 = vpack.c.b16 %v4080, %v4062
        %v4315 = vpack.c.b16 %v4081, %v4063
        %v4316 = vpack.c.b16 %v4082, %v4064
        %v4317 = vpack.c.b16 %v4083, %v4065
        %v4318 = vpack.c.b16 %v4084, %v4066
        %v4319 = vpack.c.b16 %v4103, %v4085
        %v4320 = vpack.c.b16 %v4104, %v4086
        %v4321 = vpack.c.b16 %v4105, %v4087
        %v4322 = vpack.c.b16 %v4106, %v4088
        %v4323 = vpack.c.b16 %v4107, %v4089
        %v4324 = vpack.c.b16 %v4108, %v4090
        %v4325 = vpack.c.b16 %v4109, %v4091
        %v4326 = vpack.c.b16 %v4110, %v4092
        %v4327 = vpack.c.b16 %v4111, %v4093
        %v4328 = vpack.c.b16 %v4112, %v4094
        %v4329 = vpack.c.b16 %v4113, %v4095
        %v4330 = vpack.c.b16 %v4114, %v4096
        %v4331 = vpack.c.b16 %v4115, %v4097
        %v4332 = vpack.c.b16 %v4116, %v4098
        %v4333 = vpack.c.b16 %v4117, %v4099
        %v4334 = vpack.c.b16 %v4118, %v4100
        %v4335 = vpack.c.b16 %v4119, %v4101
        %v4336 = vpack.c.b16 %v4120, %v4102
        %v4337 = vpack.c.b16 %v4139, %v4121
        %v4338 = vpack.c.b16 %v4140, %v4122
        %v4339 = vpack.c.b16 %v4141, %v4123
        %v4340 = vpack.c.b16 %v4142, %v4124
        %v4341 = vpack.c.b16 %v4143, %v4125
        %v4342 = vpack.c.b16 %v4144, %v4126
        %v4343 = vpack.c.b16 %v4145, %v4127
        %v4344 = vpack.c.b16 %v4146, %v4128
        %v4345 = vpack.c.b16 %v4147, %v4129
        %v4346 = vpack.c.b16 %v4148, %v4130
        %v4347 = vpack.c.b16 %v4149, %v4131
        %v4348 = vpack.c.b16 %v4150, %v4132
        %v4349 = vpack.c.b16 %v4151, %v4133
        %v4350 = vpack.c.b16 %v4152, %v4134
        %v4351 = vpack.c.b16 %v4153, %v4135
        %v4352 = vpack.c.b16 %v4154, %v4136
        %v4353 = vpack.c.b16 %v4155, %v4137
        %v4354 = vpack.c.b16 %v4156, %v4138
        %v4355 = vpack.c.b16 %v4175, %v4157
        %v4356 = vpack.c.b16 %v4176, %v4158
        %v4357 = vpack.c.b16 %v4177, %v4159
        %v4358 = vpack.c.b16 %v4178, %v4160
        %v4359 = vpack.c.b16 %v4179, %v4161
        %v4360 = vpack.c.b16 %v4180, %v4162
        %v4361 = vpack.c.b16 %v4181, %v4163
        %v4362 = vpack.c.b16 %v4182, %v4164
        %v4363 = vpack.c.b16 %v4183, %v4165
        %v4364 = vpack.c.b16 %v4184, %v4166
        %v4365 = vpack.c.b16 %v4185, %v4167
        %v4366 = vpack.c.b16 %v4186, %v4168
        %v4367 = vpack.c.b16 %v4187, %v4169
        %v4368 = vpack.c.b16 %v4188, %v4170
        %v4369 = vpack.c.b16 %v4189, %v4171
        %v4370 = vpack.c.b16 %v4190, %v4172
        %v4371 = vpack.c.b16 %v4191, %v4173
        %v4372 = vpack.c.b16 %v4192, %v4174
        %v4373 = vpack.c.b16 %v4211, %v4193
        %v4374 = vpack.c.b16 %v4212, %v4194
        %v4375 = vpack.c.b16 %v4213, %v4195
        %v4376 = vpack.c.b16 %v4214, %v4196
        %v4377 = vpack.c.b16 %v4215, %v4197
        %v4378 = vpack.c.b16 %v4216, %v4198
        %v4379 = vpack.c.b16 %v4217, %v4199
        %v4380 = vpack.c.b16 %v4218, %v4200
        %v4381 = vpack.c.b16 %v4219, %v4201
        %v4382 = vpack.c.b16 %v4220, %v4202
        %v4383 = vpack.c.b16 %v4221, %v4203
        %v4384 = vpack.c.b16 %v4222, %v4204
        %v4385 = vpack.c.b16 %v4223, %v4205
        %v4386 = vpack.c.b16 %v4224, %v4206
        %v4387 = vpack.c.b16 %v4225, %v4207
        %v4388 = vpack.c.b16 %v4226, %v4208
        %v4389 = vpack.c.b16 %v4227, %v4209
        %v4390 = vpack.c.b16 %v4228, %v4210
        %v4391 = vpack.c.b16 %v4247, %v4229
        %v4392 = vpack.c.b16 %v4248, %v4230
        %v4393 = vpack.c.b16 %v4249, %v4231
        %v4394 = vpack.c.b16 %v4250, %v4232
        %v4395 = vpack.c.b16 %v4251, %v4233
        %v4396 = vpack.c.b16 %v4252, %v4234
        %v4397 = vpack.c.b16 %v4253, %v4235
        %v4398 = vpack.c.b16 %v4254, %v4236
        %v4399 = vpack.c.b16 %v4255, %v4237
        %v4400 = vpack.c.b16 %v4256, %v4238
        %v4401 = vpack.c.b16 %v4257, %v4239
        %v4402 = vpack.c.b16 %v4258, %v4240
        %v4403 = vpack.c.b16 %v4259, %v4241
        %v4404 = vpack.c.b16 %v4260, %v4242
        %v4405 = vpack.c.b16 %v4261, %v4243
        %v4406 = vpack.c.b16 %v4262, %v4244
        %v4407 = vpack.c.b16 %v4263, %v4245
        %v4408 = vpack.c.b16 %v4264, %v4246
        %v5129 = vunpack.c.l.b16 %v3236
        %v5130 = vunpack.c.h.b16 %v3236
        %v5131 = vunpack.c.l.b16 %v3237
        %v5132 = vunpack.c.h.b16 %v3237
        %v5133 = vunpack.c.l.b16 %v3238
        %v5134 = vunpack.c.h.b16 %v3238
        %v5135 = vunpack.c.l.b16 %v3239
        %v5136 = vunpack.c.h.b16 %v3239
        %v5137 = vunpack.c.l.b16 %v3240
        %v5138 = vunpack.c.h.b16 %v3240
        %v5139 = vunpack.c.l.b16 %v3241
        %v5140 = vunpack.c.h.b16 %v3241
        %v5141 = vunpack.c.l.b16 %v3242
        %v5142 = vunpack.c.h.b16 %v3242
        %v5143 = vunpack.c.l.b16 %v3243
        %v5144 = vunpack.c.h.b16 %v3243
        %v5145 = vunpack.c.l.b16 %v3244
        %v5146 = vunpack.c.h.b16 %v3244
        %v5147 = vunpack.c.l.b16 %v3245
        %v5148 = vunpack.c.h.b16 %v3245
        %v5149 = vunpack.c.l.b16 %v3246
        %v5150 = vunpack.c.h.b16 %v3246
        %v5151 = vunpack.c.l.b16 %v3247
        %v5152 = vunpack.c.h.b16 %v3247
        %v5153 = vunpack.c.l.b16 %v3248
        %v5154 = vunpack.c.h.b16 %v3248
        %v5155 = vunpack.c.l.b16 %v3249
        %v5156 = vunpack.c.h.b16 %v3249
        %v5157 = vunpack.c.l.b16 %v3250
        %v5158 = vunpack.c.h.b16 %v3250
        %v5159 = vunpack.c.l.b16 %v3251
        %v5160 = vunpack.c.h.b16 %v3251
        %v5161 = vunpack.c.l.b16 %v3252
        %v5162 = vunpack.c.h.b16 %v3252
        %v5163 = vunpack.c.l.b16 %v3253
        %v5164 = vunpack.c.h.b16 %v3253
        %v5165 = vunpack.c.l.b16 %v3254
        %v5166 = vunpack.c.h.b16 %v3254
        %v5167 = vunpack.c.l.b16 %v3255
        %v5168 = vunpack.c.h.b16 %v3255
        %v5169 = vunpack.c.l.b16 %v3256
        %v5170 = vunpack.c.h.b16 %v3256
        %v5171 = vunpack.c.l.b16 %v3257
        %v5172 = vunpack.c.h.b16 %v3257
        %v5173 = vunpack.c.l.b16 %v3258
        %v5174 = vunpack.c.h.b16 %v3258
        %v5175 = vunpack.c.l.b16 %v3259
        %v5176 = vunpack.c.h.b16 %v3259
        %v5177 = vunpack.c.l.b16 %v3260
        %v5178 = vunpack.c.h.b16 %v3260
        %v5179 = vunpack.c.l.b16 %v3261
        %v5180 = vunpack.c.h.b16 %v3261
        %v5181 = vunpack.c.l.b16 %v3262
        %v5182 = vunpack.c.h.b16 %v3262
        %v5183 = vunpack.c.l.b16 %v3263
        %v5184 = vunpack.c.h.b16 %v3263
        %v5185 = vunpack.c.l.b16 %v3264
        %v5186 = vunpack.c.h.b16 %v3264
        %v5187 = vunpack.c.l.b16 %v3265
        %v5188 = vunpack.c.h.b16 %v3265
        %v5189 = vunpack.c.l.b16 %v3266
        %v5190 = vunpack.c.h.b16 %v3266
        %v5191 = vunpack.c.l.b16 %v3267
        %v5192 = vunpack.c.h.b16 %v3267
        %v5193 = vunpack.c.l.b16 %v3268
        %v5194 = vunpack.c.h.b16 %v3268
        %v5195 = vunpack.c.l.b16 %v3269
        %v5196 = vunpack.c.h.b16 %v3269
        %v5197 = vunpack.c.l.b16 %v3270
        %v5198 = vunpack.c.h.b16 %v3270
        %v5199 = vunpack.c.l.b16 %v3271
        %v5200 = vunpack.c.h.b16 %v3271
        %v5201 = vunpack.c.l.b16 %v3272
        %v5202 = vunpack.c.h.b16 %v3272
        %v5203 = vunpack.c.l.b16 %v3273
        %v5204 = vunpack.c.h.b16 %v3273
        %v5205 = vunpack.c.l.b16 %v3274
        %v5206 = vunpack.c.h.b16 %v3274
        %v5207 = vunpack.c.l.b16 %v3275
        %v5208 = vunpack.c.h.b16 %v3275
        %v5209 = vunpack.c.l.b16 %v3276
        %v5210 = vunpack.c.h.b16 %v3276
        %v5211 = vunpack.c.l.b16 %v3277
        %v5212 = vunpack.c.h.b16 %v3277
        %v5213 = vunpack.c.l.b16 %v3278
        %v5214 = vunpack.c.h.b16 %v3278
        %v5215 = vunpack.c.l.b16 %v3279
        %v5216 = vunpack.c.h.b16 %v3279
        %v5217 = vunpack.c.l.b16 %v3280
        %v5218 = vunpack.c.h.b16 %v3280
        %v5219 = vunpack.c.l.b16 %v3281
        %v5220 = vunpack.c.h.b16 %v3281
        %v5221 = vunpack.c.l.b16 %v3282
        %v5222 = vunpack.c.h.b16 %v3282
        %v5223 = vunpack.c.l.b16 %v3283
        %v5224 = vunpack.c.h.b16 %v3283
        %v5225 = vunpack.c.l.b16 %v3284
        %v5226 = vunpack.c.h.b16 %v3284
        %v5227 = vunpack.c.l.b16 %v3285
        %v5228 = vunpack.c.h.b16 %v3285
        %v5229 = vunpack.c.l.b16 %v3286
        %v5230 = vunpack.c.h.b16 %v3286
        %v5231 = vunpack.c.l.b16 %v3287
        %v5232 = vunpack.c.h.b16 %v3287
        %v5233 = vunpack.c.l.b16 %v3288
        %v5234 = vunpack.c.h.b16 %v3288
        %v5235 = vunpack.c.l.b16 %v3289
        %v5236 = vunpack.c.h.b16 %v3289
        %v5237 = vunpack.c.l.b16 %v3290
        %v5238 = vunpack.c.h.b16 %v3290
        %v5239 = vunpack.c.l.b16 %v3291
        %v5240 = vunpack.c.h.b16 %v3291
        %v5241 = vunpack.c.l.b16 %v3292
        %v5242 = vunpack.c.h.b16 %v3292
        %v5243 = vunpack.c.l.b16 %v3293
        %v5244 = vunpack.c.h.b16 %v3293
        %v5245 = vunpack.c.l.b16 %v3294
        %v5246 = vunpack.c.h.b16 %v3294
        %v5247 = vunpack.c.l.b16 %v3295
        %v5248 = vunpack.c.h.b16 %v3295
        %v5249 = vunpack.c.l.b16 %v3296
        %v5250 = vunpack.c.h.b16 %v3296
        %v5251 = vunpack.c.l.b16 %v3297
        %v5252 = vunpack.c.h.b16 %v3297
        %v5253 = vunpack.c.l.b16 %v3298
        %v5254 = vunpack.c.h.b16 %v3298
        %v5255 = vunpack.c.l.b16 %v3299
        %v5256 = vunpack.c.h.b16 %v3299
        %v5257 = vunpack.c.l.b16 %v3300
        %v5258 = vunpack.c.h.b16 %v3300
        %v5259 = vunpack.c.l.b16 %v3301
        %v5260 = vunpack.c.h.b16 %v3301
        %v5261 = vunpack.c.l.b16 %v3302
        %v5262 = vunpack.c.h.b16 %v3302
        %v5263 = vunpack.c.l.b16 %v3303
        %v5264 = vunpack.c.h.b16 %v3303
        %v5265 = vunpack.c.l.b16 %v3304
        %v5266 = vunpack.c.h.b16 %v3304
        %v5267 = vunpack.c.l.b16 %v3305
        %v5268 = vunpack.c.h.b16 %v3305
        %v5269 = vunpack.c.l.b16 %v3306
        %v5270 = vunpack.c.h.b16 %v3306
        %v5271 = vunpack.c.l.b16 %v3307
        %v5272 = vunpack.c.h.b16 %v3307
        %v5273 = vunpack.c.l.b16 %v3308
        %v5274 = vunpack.c.h.b16 %v3308
        %v5275 = vunpack.c.l.b16 %v3309
        %v5276 = vunpack.c.h.b16 %v3309
        %v5277 = vunpack.c.l.b16 %v3310
        %v5278 = vunpack.c.h.b16 %v3310
        %v5279 = vunpack.c.l.b16 %v3311
        %v5280 = vunpack.c.h.b16 %v3311
        %v5281 = vunpack.c.l.b16 %v3312
        %v5282 = vunpack.c.h.b16 %v3312
        %v5283 = vunpack.c.l.b16 %v3313
        %v5284 = vunpack.c.h.b16 %v3313
        %v5285 = vunpack.c.l.b16 %v3314
        %v5286 = vunpack.c.h.b16 %v3314
        %v5287 = vunpack.c.l.b16 %v3315
        %v5288 = vunpack.c.h.b16 %v3315
        %v5289 = vunpack.c.l.b16 %v3316
        %v5290 = vunpack.c.h.b16 %v3316
        %v5291 = vunpack.c.l.b16 %v3317
        %v5292 = vunpack.c.h.b16 %v3317
        %v5293 = vunpack.c.l.b16 %v3318
        %v5294 = vunpack.c.h.b16 %v3318
        %v5295 = vunpack.c.l.b16 %v3319
        %v5296 = vunpack.c.h.b16 %v3319
        %v5297 = vunpack.c.l.b16 %v3320
        %v5298 = vunpack.c.h.b16 %v3320
        %v5299 = vunpack.c.l.b16 %v3321
        %v5300 = vunpack.c.h.b16 %v3321
        %v5301 = vunpack.c.l.b16 %v3322
        %v5302 = vunpack.c.h.b16 %v3322
        %v5303 = vunpack.c.l.b16 %v3323
        %v5304 = vunpack.c.h.b16 %v3323
        %v5305 = vunpack.c.l.b16 %v3324
        %v5306 = vunpack.c.h.b16 %v3324
        %v5307 = vunpack.c.l.b16 %v3325
        %v5308 = vunpack.c.h.b16 %v3325
        %v5309 = vunpack.c.l.b16 %v3326
        %v5310 = vunpack.c.h.b16 %v3326
        %v5311 = vunpack.c.l.b16 %v3327
        %v5312 = vunpack.c.h.b16 %v3327
        %v5313 = vunpack.c.l.b16 %v3328
        %v5314 = vunpack.c.h.b16 %v3328
        %v5315 = vunpack.c.l.b16 %v3329
        %v5316 = vunpack.c.h.b16 %v3329
        %v5317 = vunpack.c.l.b16 %v3330
        %v5318 = vunpack.c.h.b16 %v3330
        %v5319 = vunpack.c.l.b16 %v3331
        %v5320 = vunpack.c.h.b16 %v3331
        %v5321 = vunpack.c.l.b16 %v3332
        %v5322 = vunpack.c.h.b16 %v3332
        %v5323 = vunpack.c.l.b16 %v3333
        %v5324 = vunpack.c.h.b16 %v3333
        %v5325 = vunpack.c.l.b16 %v3334
        %v5326 = vunpack.c.h.b16 %v3334
        %v5327 = vunpack.c.l.b16 %v3335
        %v5328 = vunpack.c.h.b16 %v3335
        %v5329 = vunpack.c.l.b16 %v3336
        %v5330 = vunpack.c.h.b16 %v3336
        %v5331 = vunpack.c.l.b16 %v3337
        %v5332 = vunpack.c.h.b16 %v3337
        %v5333 = vunpack.c.l.b16 %v3338
        %v5334 = vunpack.c.h.b16 %v3338
        %v5335 = vunpack.c.l.b16 %v3339
        %v5336 = vunpack.c.h.b16 %v3339
        %v5337 = vunpack.c.l.b16 %v3340
        %v5338 = vunpack.c.h.b16 %v3340
        %v5339 = vunpack.c.l.b16 %v3341
        %v5340 = vunpack.c.h.b16 %v3341
        %v5341 = vunpack.c.l.b16 %v3342
        %v5342 = vunpack.c.h.b16 %v3342
        %v5343 = vunpack.c.l.b16 %v3343
        %v5344 = vunpack.c.h.b16 %v3343
        %v5345 = vunpack.c.l.b16 %v3344
        %v5346 = vunpack.c.h.b16 %v3344
        %v5347 = vunpack.c.l.b16 %v3345
        %v5348 = vunpack.c.h.b16 %v3345
        %v5349 = vunpack.c.l.b16 %v3346
        %v5350 = vunpack.c.h.b16 %v3346
        %v5351 = vunpack.c.l.b16 %v3347
        %v5352 = vunpack.c.h.b16 %v3347
        %v5353 = vunpack.c.l.b16 %v3348
        %v5354 = vunpack.c.h.b16 %v3348
        %v5355 = vunpack.c.l.b16 %v3349
        %v5356 = vunpack.c.h.b16 %v3349
        %v5357 = vunpack.c.l.b16 %v3350
        %v5358 = vunpack.c.h.b16 %v3350
        %v5359 = vunpack.c.l.b16 %v3351
        %v5360 = vunpack.c.h.b16 %v3351
        %v5361 = vunpack.c.l.b16 %v3352
        %v5362 = vunpack.c.h.b16 %v3352
        %v5363 = vunpack.c.l.b16 %v3353
        %v5364 = vunpack.c.h.b16 %v3353
        %v5365 = vunpack.c.l.b16 %v3354
        %v5366 = vunpack.c.h.b16 %v3354
        %v5367 = vunpack.c.l.b16 %v3355
        %v5368 = vunpack.c.h.b16 %v3355
        %v5369 = vunpack.c.l.b16 %v3356
        %v5370 = vunpack.c.h.b16 %v3356
        %v5371 = vunpack.c.l.b16 %v3357
        %v5372 = vunpack.c.h.b16 %v3357
        %v5373 = vunpack.c.l.b16 %v3358
        %v5374 = vunpack.c.h.b16 %v3358
        %v5375 = vunpack.c.l.b16 %v3359
        %v5376 = vunpack.c.h.b16 %v3359
        %v5377 = vunpack.c.l.b16 %v3360
        %v5378 = vunpack.c.h.b16 %v3360
        %v5379 = vunpack.c.l.b16 %v3361
        %v5380 = vunpack.c.h.b16 %v3361
        %v5381 = vunpack.c.l.b16 %v3362
        %v5382 = vunpack.c.h.b16 %v3362
        %v5383 = vunpack.c.l.b16 %v3363
        %v5384 = vunpack.c.h.b16 %v3363
        %v5385 = vunpack.c.l.b16 %v3364
        %v5386 = vunpack.c.h.b16 %v3364
        %v5387 = vunpack.c.l.b16 %v3365
        %v5388 = vunpack.c.h.b16 %v3365
        %v5389 = vunpack.c.l.b16 %v3366
        %v5390 = vunpack.c.h.b16 %v3366
        %v5391 = vunpack.c.l.b16 %v3367
        %v5392 = vunpack.c.h.b16 %v3367
        %v5393 = vunpack.c.l.b16 %v3368
        %v5394 = vunpack.c.h.b16 %v3368
        %v5395 = vunpack.c.l.b16 %v3369
        %v5396 = vunpack.c.h.b16 %v3369
        %v5397 = vunpack.c.l.b16 %v3370
        %v5398 = vunpack.c.h.b16 %v3370
        %v5399 = vunpack.c.l.b16 %v3371
        %v5400 = vunpack.c.h.b16 %v3371
        %v5401 = vunpack.c.l.b16 %v3372
        %v5402 = vunpack.c.h.b16 %v3372
        %v5403 = vunpack.c.l.b16 %v3373
        %v5404 = vunpack.c.h.b16 %v3373
        %v5405 = vunpack.c.l.b16 %v3374
        %v5406 = vunpack.c.h.b16 %v3374
        %v5407 = vunpack.c.l.b16 %v3375
        %v5408 = vunpack.c.h.b16 %v3375
        %v5409 = vunpack.c.l.b16 %v3376
        %v5410 = vunpack.c.h.b16 %v3376
        %v5411 = vunpack.c.l.b16 %v3377
        %v5412 = vunpack.c.h.b16 %v3377
        %v5413 = vunpack.c.l.b16 %v3378
        %v5414 = vunpack.c.h.b16 %v3378
        %v5415 = vunpack.c.l.b16 %v3379
        %v5416 = vunpack.c.h.b16 %v3379
        %v5417 = vunpack.c.l.b16 %v3380
        %v5418 = vunpack.c.h.b16 %v3380
        %v5419 = vunpack.c.l.b16 %v3381
        %v5420 = vunpack.c.h.b16 %v3381
        %v5421 = vunpack.c.l.b16 %v3382
        %v5422 = vunpack.c.h.b16 %v3382
        %v5423 = vunpack.c.l.b16 %v3383
        %v5424 = vunpack.c.h.b16 %v3383
        %v5425 = vunpack.c.l.b16 %v3384
        %v5426 = vunpack.c.h.b16 %v3384
        %v5427 = vunpack.c.l.b16 %v3385
        %v5428 = vunpack.c.h.b16 %v3385
        %v5429 = vunpack.c.l.b16 %v3386
        %v5430 = vunpack.c.h.b16 %v3386
        %v5431 = vunpack.c.l.b16 %v3387
        %v5432 = vunpack.c.h.b16 %v3387
        %v5433 = vunpack.c.l.b16 %v3388
        %v5434 = vunpack.c.h.b16 %v3388
        %v5435 = vunpack.c.l.b16 %v3389
        %v5436 = vunpack.c.h.b16 %v3389
        %v5437 = vunpack.c.l.b16 %v3390
        %v5438 = vunpack.c.h.b16 %v3390
        %v5439 = vunpack.c.l.b16 %v3391
        %v5440 = vunpack.c.h.b16 %v3391
        %v5441 = vunpack.c.l.b16 %v3392
        %v5442 = vunpack.c.h.b16 %v3392
        %v5443 = vunpack.c.l.b16 %v3393
        %v5444 = vunpack.c.h.b16 %v3393
        %v5445 = vunpack.c.l.b16 %v3394
        %v5446 = vunpack.c.h.b16 %v3394
        %v5447 = vunpack.c.l.b16 %v3395
        %v5448 = vunpack.c.h.b16 %v3395
        %v5449 = vunpack.c.l.b16 %v3396
        %v5450 = vunpack.c.h.b16 %v3396
        %v5451 = vunpack.c.l.b16 %v3397
        %v5452 = vunpack.c.h.b16 %v3397
        %v5453 = vunpack.c.l.b16 %v3398
        %v5454 = vunpack.c.h.b16 %v3398
        %v5455 = vunpack.c.l.b16 %v3399
        %v5456 = vunpack.c.h.b16 %v3399
        %v5457 = vunpack.c.l.b16 %v3400
        %v5458 = vunpack.c.h.b16 %v3400
        %v5459 = vunpack.c.l.b16 %v3401
        %v5460 = vunpack.c.h.b16 %v3401
        %v5461 = vunpack.c.l.b16 %v3402
        %v5462 = vunpack.c.h.b16 %v3402
        %v5463 = vunpack.c.l.b16 %v3403
        %v5464 = vunpack.c.h.b16 %v3403
        %v5465 = vunpack.c.l.b16 %v3404
        %v5466 = vunpack.c.h.b16 %v3404
        %v5467 = vunpack.c.l.b16 %v3405
        %v5468 = vunpack.c.h.b16 %v3405
        %v5469 = vunpack.c.l.b16 %v3406
        %v5470 = vunpack.c.h.b16 %v3406
        %v5471 = vunpack.c.l.b16 %v3407
        %v5472 = vunpack.c.h.b16 %v3407
        %v5473 = vunpack.c.l.b16 %v3408
        %v5474 = vunpack.c.h.b16 %v3408
        %v5475 = vunpack.c.l.b16 %v3409
        %v5476 = vunpack.c.h.b16 %v3409
        %v5477 = vunpack.c.l.b16 %v3410
        %v5478 = vunpack.c.h.b16 %v3410
        %v5479 = vunpack.c.l.b16 %v3411
        %v5480 = vunpack.c.h.b16 %v3411
        %v5481 = vunpack.c.l.b16 %v3412
        %v5482 = vunpack.c.h.b16 %v3412
        %v5483 = vunpack.c.l.b16 %v3413
        %v5484 = vunpack.c.h.b16 %v3413
        %v5485 = vunpack.c.l.b16 %v3414
        %v5486 = vunpack.c.h.b16 %v3414
        %v5487 = vunpack.c.l.b16 %v3415
        %v5488 = vunpack.c.h.b16 %v3415
        %v5489 = vunpack.c.l.b16 %v3416
        %v5490 = vunpack.c.h.b16 %v3416
        %v5491 = vunpack.c.l.b16 %v3417
        %v5492 = vunpack.c.h.b16 %v3417
        %v5493 = vunpack.c.l.b16 %v3418
        %v5494 = vunpack.c.h.b16 %v3418
        %v5495 = vunpack.c.l.b16 %v3419
        %v5496 = vunpack.c.h.b16 %v3419
        %v5497 = vunpack.c.l.b16 %v3420
        %v5498 = vunpack.c.h.b16 %v3420
        %v5499 = vunpack.c.l.b16 %v3421
        %v5500 = vunpack.c.h.b16 %v3421
        %v5501 = vunpack.c.l.b16 %v3422
        %v5502 = vunpack.c.h.b16 %v3422
        %v5503 = vunpack.c.l.b16 %v3423
        %v5504 = vunpack.c.h.b16 %v3423
        %v5505 = vunpack.c.l.b16 %v3424
        %v5506 = vunpack.c.h.b16 %v3424
        %v5507 = vunpack.c.l.b16 %v3425
        %v5508 = vunpack.c.h.b16 %v3425
        %v5509 = vunpack.c.l.b16 %v3426
        %v5510 = vunpack.c.h.b16 %v3426
        %v5511 = vunpack.c.l.b16 %v3427
        %v5512 = vunpack.c.h.b16 %v3427
        %v5513 = vunpack.c.l.b16 %v3428
        %v5514 = vunpack.c.h.b16 %v3428
        %v5515 = vunpack.c.l.b16 %v3429
        %v5516 = vunpack.c.h.b16 %v3429
        %v5517 = vunpack.c.l.b16 %v3430
        %v5518 = vunpack.c.h.b16 %v3430
        %v5519 = vunpack.c.l.b16 %v3431
        %v5520 = vunpack.c.h.b16 %v3431
        %v5521 = vunpack.c.l.b16 %v3432
        %v5522 = vunpack.c.h.b16 %v3432
        %v5523 = vunpack.c.l.b16 %v3433
        %v5524 = vunpack.c.h.b16 %v3433
        %v5525 = vunpack.c.l.b16 %v3434
        %v5526 = vunpack.c.h.b16 %v3434
        %v5527 = vunpack.c.l.b16 %v3435
        %v5528 = vunpack.c.h.b16 %v3435
        %v5529 = vunpack.c.l.b16 %v3436
        %v5530 = vunpack.c.h.b16 %v3436
        %v5531 = vunpack.c.l.b16 %v3437
        %v5532 = vunpack.c.h.b16 %v3437
        %v5533 = vunpack.c.l.b16 %v3438
        %v5534 = vunpack.c.h.b16 %v3438
        %v5535 = vunpack.c.l.b16 %v3439
        %v5536 = vunpack.c.h.b16 %v3439
        %v5537 = vunpack.c.l.b16 %v3440
        %v5538 = vunpack.c.h.b16 %v3440
        %v5539 = vunpack.c.l.b16 %v3441
        %v5540 = vunpack.c.h.b16 %v3441
        %v5541 = vunpack.c.l.b16 %v3442
        %v5542 = vunpack.c.h.b16 %v3442
        %v5543 = vunpack.c.l.b16 %v3443
        %v5544 = vunpack.c.h.b16 %v3443
        %v5545 = vunpack.c.l.b16 %v3444
        %v5546 = vunpack.c.h.b16 %v3444
        %v5547 = vunpack.c.l.b16 %v3445
        %v5548 = vunpack.c.h.b16 %v3445
        %v5549 = vunpack.c.l.b16 %v3446
        %v5550 = vunpack.c.h.b16 %v3446
        %v5551 = vunpack.c.l.b16 %v3447
        %v5552 = vunpack.c.h.b16 %v3447
        %v5553 = vunpack.c.l.b16 %v3448
        %v5554 = vunpack.c.h.b16 %v3448
        %v5555 = vunpack.c.l.b16 %v3449
        %v5556 = vunpack.c.h.b16 %v3449
        %v5557 = vunpack.c.l.b16 %v3450
        %v5558 = vunpack.c.h.b16 %v3450
        %v5559 = vunpack.c.l.b16 %v3451
        %v5560 = vunpack.c.h.b16 %v3451
        %v5561 = vunpack.c.l.b16 %v3452
        %v5562 = vunpack.c.h.b16 %v3452
        %v5563 = vunpack.c.l.b16 %v3453
        %v5564 = vunpack.c.h.b16 %v3453
        %v5565 = vunpack.c.l.b16 %v3454
        %v5566 = vunpack.c.h.b16 %v3454
        %v5567 = vunpack.c.l.b16 %v3455
        %v5568 = vunpack.c.h.b16 %v3455
        %v5569 = vunpack.c.l.b16 %v3456
        %v5570 = vunpack.c.h.b16 %v3456
        %v5571 = vunpack.c.l.b16 %v3457
        %v5572 = vunpack.c.h.b16 %v3457
        %v5573 = vunpack.c.l.b16 %v3458
        %v5574 = vunpack.c.h.b16 %v3458
        %v5575 = vunpack.c.l.b16 %v3459
        %v5576 = vunpack.c.h.b16 %v3459
        %v5577 = vunpack.c.l.b16 %v3460
        %v5578 = vunpack.c.h.b16 %v3460
        %v5579 = vunpack.c.l.b16 %v3461
        %v5580 = vunpack.c.h.b16 %v3461
        %v5581 = vunpack.c.l.b16 %v3462
        %v5582 = vunpack.c.h.b16 %v3462
        %v5583 = vunpack.c.l.b16 %v3463
        %v5584 = vunpack.c.h.b16 %v3463
        %v5585 = vunpack.c.l.b16 %v3464
        %v5586 = vunpack.c.h.b16 %v3464
        %v5587 = vunpack.c.l.b16 %v3465
        %v5588 = vunpack.c.h.b16 %v3465
        %v5589 = vunpack.c.l.b16 %v3466
        %v5590 = vunpack.c.h.b16 %v3466
        %v5591 = vunpack.c.l.b16 %v3467
        %v5592 = vunpack.c.h.b16 %v3467
        %v5593 = vunpack.c.l.b16 %v3468
        %v5594 = vunpack.c.h.b16 %v3468
        %v5595 = vunpack.c.l.b16 %v3469
        %v5596 = vunpack.c.h.b16 %v3469
        %v5597 = vunpack.c.l.b16 %v3470
        %v5598 = vunpack.c.h.b16 %v3470
        %v5599 = vunpack.c.l.b16 %v3471
        %v5600 = vunpack.c.h.b16 %v3471
        %v5601 = vunpack.c.l.b16 %v3472
        %v5602 = vunpack.c.h.b16 %v3472
        %v5603 = vunpack.c.l.b16 %v3473
        %v5604 = vunpack.c.h.b16 %v3473
        %v5605 = vunpack.c.l.b16 %v3474
        %v5606 = vunpack.c.h.b16 %v3474
        %v5607 = vunpack.c.l.b16 %v3475
        %v5608 = vunpack.c.h.b16 %v3475
        %v5609 = vunpack.c.l.b16 %v3476
        %v5610 = vunpack.c.h.b16 %v3476
        %v5611 = vunpack.c.l.b16 %v3477
        %v5612 = vunpack.c.h.b16 %v3477
        %v5613 = vunpack.c.l.b16 %v3478
        %v5614 = vunpack.c.h.b16 %v3478
        %v5615 = vunpack.c.l.b16 %v3479
        %v5616 = vunpack.c.h.b16 %v3479
        %v5617 = vunpack.c.l.b16 %v3480
        %v5618 = vunpack.c.h.b16 %v3480
        %v5619 = vunpack.c.l.b16 %v3481
        %v5620 = vunpack.c.h.b16 %v3481
        %v5621 = vunpack.c.l.b16 %v3482
        %v5622 = vunpack.c.h.b16 %v3482
        %v5623 = vunpack.c.l.b16 %v3483
        %v5624 = vunpack.c.h.b16 %v3483
        %v5625 = vunpack.c.l.b16 %v3484
        %v5626 = vunpack.c.h.b16 %v3484
        %v5627 = vunpack.c.l.b16 %v3485
        %v5628 = vunpack.c.h.b16 %v3485
        %v5629 = vunpack.c.l.b16 %v3486
        %v5630 = vunpack.c.h.b16 %v3486
        %v5631 = vunpack.c.l.b16 %v3487
        %v5632 = vunpack.c.h.b16 %v3487
        %v5633 = vunpack.c.l.b16 %v3488
        %v5634 = vunpack.c.h.b16 %v3488
        %v5635 = vunpack.c.l.b16 %v3489
        %v5636 = vunpack.c.h.b16 %v3489
        %v5637 = vunpack.c.l.b16 %v3490
        %v5638 = vunpack.c.h.b16 %v3490
        %v5639 = vunpack.c.l.b16 %v3491
        %v5640 = vunpack.c.h.b16 %v3491
        %v5641 = vunpack.c.l.b16 %v3492
        %v5642 = vunpack.c.h.b16 %v3492
        %v5643 = vunpack.c.l.b16 %v3493
        %v5644 = vunpack.c.h.b16 %v3493
        %v5645 = vunpack.c.l.b16 %v3494
        %v5646 = vunpack.c.h.b16 %v3494
        %v5647 = vunpack.c.l.b16 %v3495
        %v5648 = vunpack.c.h.b16 %v3495
        %v5649 = vunpack.c.l.b16 %v3496
        %v5650 = vunpack.c.h.b16 %v3496
        %v5651 = vunpack.c.l.b16 %v3497
        %v5652 = vunpack.c.h.b16 %v3497
        %v5653 = vunpack.c.l.b16 %v3498
        %v5654 = vunpack.c.h.b16 %v3498
        %v5655 = vunpack.c.l.b16 %v3499
        %v5656 = vunpack.c.h.b16 %v3499
        %v5657 = vunpack.c.l.b16 %v3500
        %v5658 = vunpack.c.h.b16 %v3500
        %v5659 = vunpack.c.l.b16 %v3501
        %v5660 = vunpack.c.h.b16 %v3501
        %v5661 = vunpack.c.l.b16 %v3502
        %v5662 = vunpack.c.h.b16 %v3502
        %v5663 = vunpack.c.l.b16 %v3503
        %v5664 = vunpack.c.h.b16 %v3503
        %v5665 = vunpack.c.l.b16 %v3504
        %v5666 = vunpack.c.h.b16 %v3504
        %v5667 = vunpack.c.l.b16 %v3505
        %v5668 = vunpack.c.h.b16 %v3505
        %v5669 = vunpack.c.l.b16 %v3506
        %v5670 = vunpack.c.h.b16 %v3506
        %v5671 = vunpack.c.l.b16 %v3507
        %v5672 = vunpack.c.h.b16 %v3507
        %v5673 = vunpack.c.l.b16 %v3508
        %v5674 = vunpack.c.h.b16 %v3508
        %v5675 = vunpack.c.l.b16 %v3509
        %v5676 = vunpack.c.h.b16 %v3509
        %v5677 = vunpack.c.l.b16 %v3510
        %v5678 = vunpack.c.h.b16 %v3510
        %v5679 = vunpack.c.l.b16 %v3511
        %v5680 = vunpack.c.h.b16 %v3511
        %v5681 = vunpack.c.l.b16 %v3512
        %v5682 = vunpack.c.h.b16 %v3512
        %v5683 = vunpack.c.l.b16 %v3513
        %v5684 = vunpack.c.h.b16 %v3513
        %v5685 = vunpack.c.l.b16 %v3514
        %v5686 = vunpack.c.h.b16 %v3514
        %v5687 = vunpack.c.l.b16 %v3515
        %v5688 = vunpack.c.h.b16 %v3515
        %v5689 = vunpack.c.l.b16 %v3516
        %v5690 = vunpack.c.h.b16 %v3516
        %v5691 = vunpack.c.l.b16 %v3517
        %v5692 = vunpack.c.h.b16 %v3517
        %v5693 = vunpack.c.l.b16 %v3518
        %v5694 = vunpack.c.h.b16 %v3518
        %v5695 = vunpack.c.l.b16 %v3519
        %v5696 = vunpack.c.h.b16 %v3519
        %v5697 = vunpack.c.l.b16 %v3520
        %v5698 = vunpack.c.h.b16 %v3520
        %v5699 = vunpack.c.l.b16 %v3521
        %v5700 = vunpack.c.h.b16 %v3521
        %v5701 = vunpack.c.l.b16 %v3522
        %v5702 = vunpack.c.h.b16 %v3522
        %v5703 = vunpack.c.l.b16 %v3523
        %v5704 = vunpack.c.h.b16 %v3523
        %v5705 = vunpack.c.l.b16 %v3524
        %v5706 = vunpack.c.h.b16 %v3524
        %v5707 = vunpack.c.l.b16 %v3525
        %v5708 = vunpack.c.h.b16 %v3525
        %v5709 = vunpack.c.l.b16 %v3526
        %v5710 = vunpack.c.h.b16 %v3526
        %v5711 = vunpack.c.l.b16 %v3527
        %v5712 = vunpack.c.h.b16 %v3527
        %v5713 = vunpack.c.l.b16 %v3528
        %v5714 = vunpack.c.h.b16 %v3528
        %v5715 = vunpack.c.l.b16 %v3529
        %v5716 = vunpack.c.h.b16 %v3529
        %v5717 = vunpack.c.l.b16 %v3530
        %v5718 = vunpack.c.h.b16 %v3530
        %v5719 = vunpack.c.l.b16 %v3531
        %v5720 = vunpack.c.h.b16 %v3531
        %v5721 = vunpack.c.l.b16 %v3532
        %v5722 = vunpack.c.h.b16 %v3532
        %v5723 = vunpack.c.l.b16 %v3533
        %v5724 = vunpack.c.h.b16 %v3533
        %v5725 = vunpack.c.l.b16 %v3534
        %v5726 = vunpack.c.h.b16 %v3534
        %v5727 = vunpack.c.l.b16 %v3535
        %v5728 = vunpack.c.h.b16 %v3535
        %v5729 = vunpack.c.l.b16 %v3536
        %v5730 = vunpack.c.h.b16 %v3536
        %v5731 = vunpack.c.l.b16 %v3537
        %v5732 = vunpack.c.h.b16 %v3537
        %v5733 = vunpack.c.l.b16 %v3538
        %v5734 = vunpack.c.h.b16 %v3538
        %v5735 = vunpack.c.l.b16 %v3539
        %v5736 = vunpack.c.h.b16 %v3539
        %v5737 = vunpack.c.l.b16 %v3540
        %v5738 = vunpack.c.h.b16 %v3540
        %v5739 = vunpack.c.l.b16 %v3541
        %v5740 = vunpack.c.h.b16 %v3541
        %v5741 = vunpack.c.l.b16 %v3542
        %v5742 = vunpack.c.h.b16 %v3542
        %v5743 = vunpack.c.l.b16 %v3543
        %v5744 = vunpack.c.h.b16 %v3543
        %v5745 = vunpack.c.l.b16 %v3544
        %v5746 = vunpack.c.h.b16 %v3544
        %v5747 = vunpack.c.l.b16 %v3545
        %v5748 = vunpack.c.h.b16 %v3545
        %v5749 = vunpack.c.l.b16 %v3546
        %v5750 = vunpack.c.h.b16 %v3546
        %v5751 = vunpack.c.l.b16 %v3547
        %v5752 = vunpack.c.h.b16 %v3547
        %v5753 = vunpack.c.l.b16 %v3548
        %v5754 = vunpack.c.h.b16 %v3548
        %v5755 = vunpack.c.l.b16 %v3549
        %v5756 = vunpack.c.h.b16 %v3549
        %v5757 = vunpack.c.l.b16 %v3550
        %v5758 = vunpack.c.h.b16 %v3550
        %v5759 = vunpack.c.l.b16 %v3551
        %v5760 = vunpack.c.h.b16 %v3551
        %v5761 = vunpack.c.l.b16 %v3552
        %v5762 = vunpack.c.h.b16 %v3552
        %v5763 = vunpack.c.l.b16 %v3553
        %v5764 = vunpack.c.h.b16 %v3553
        %v5765 = vunpack.c.l.b16 %v3554
        %v5766 = vunpack.c.h.b16 %v3554
        %v5767 = vunpack.c.l.b16 %v3555
        %v5768 = vunpack.c.h.b16 %v3555
        %v5769 = vunpack.c.l.b16 %v3556
        %v5770 = vunpack.c.h.b16 %v3556
        %v5771 = vunpack.c.l.b16 %v3557
        %v5772 = vunpack.c.h.b16 %v3557
        %v5773 = vunpack.c.l.b16 %v3558
        %v5774 = vunpack.c.h.b16 %v3558
        %v5775 = vunpack.c.l.b16 %v3559
        %v5776 = vunpack.c.h.b16 %v3559
        %v5777 = vunpack.c.l.b16 %v3560
        %v5778 = vunpack.c.h.b16 %v3560
        %v5779 = vunpack.c.l.b16 %v3561
        %v5780 = vunpack.c.h.b16 %v3561
        %v5781 = vunpack.c.l.b16 %v3562
        %v5782 = vunpack.c.h.b16 %v3562
        %v5783 = vunpack.c.l.b16 %v3563
        %v5784 = vunpack.c.h.b16 %v3563
        %v5785 = vunpack.c.l.b16 %v3564
        %v5786 = vunpack.c.h.b16 %v3564
        %v5787 = vunpack.c.l.b16 %v3565
        %v5788 = vunpack.c.h.b16 %v3565
        %v5789 = vunpack.c.l.b16 %v3566
        %v5790 = vunpack.c.h.b16 %v3566
        %v5791 = vunpack.c.l.b16 %v3567
        %v5792 = vunpack.c.h.b16 %v3567
        %v5793 = vunpack.c.l.b16 %v3568
        %v5794 = vunpack.c.h.b16 %v3568
        %v5795 = vunpack.c.l.b16 %v3569
        %v5796 = vunpack.c.h.b16 %v3569
        %v5797 = vunpack.c.l.b16 %v3570
        %v5798 = vunpack.c.h.b16 %v3570
        %v5799 = vunpack.c.l.b16 %v3571
        %v5800 = vunpack.c.h.b16 %v3571
        %v5801 = vunpack.c.l.b16 %v3572
        %v5802 = vunpack.c.h.b16 %v3572
        %v5803 = vunpack.c.l.b16 %v3573
        %v5804 = vunpack.c.h.b16 %v3573
        %v5805 = vunpack.c.l.b16 %v3574
        %v5806 = vunpack.c.h.b16 %v3574
        %v5807 = vunpack.c.l.b16 %v3575
        %v5808 = vunpack.c.h.b16 %v3575
        %v5809 = vunpack.c.l.b16 %v3576
        %v5810 = vunpack.c.h.b16 %v3576
        %v5811 = vunpack.c.l.b16 %v3577
        %v5812 = vunpack.c.h.b16 %v3577
        %v5813 = vunpack.c.l.b16 %v3578
        %v5814 = vunpack.c.h.b16 %v3578
        %v5815 = vunpack.c.l.b16 %v3579
        %v5816 = vunpack.c.h.b16 %v3579
        %v5817 = vunpack.c.l.b16 %v3580
        %v5818 = vunpack.c.h.b16 %v3580
        %v5819 = vunpack.c.l.b16 %v3581
        %v5820 = vunpack.c.h.b16 %v3581
        %v5821 = vunpack.c.l.b16 %v3582
        %v5822 = vunpack.c.h.b16 %v3582
        %v5823 = vunpack.c.l.b16 %v3583
        %v5824 = vunpack.c.h.b16 %v3583
        %v5825 = vunpack.c.l.b16 %v3584
        %v5826 = vunpack.c.h.b16 %v3584
        %v5827 = vunpack.c.l.b16 %v3585
        %v5828 = vunpack.c.h.b16 %v3585
        %v5829 = vunpack.c.l.b16 %v3586
        %v5830 = vunpack.c.h.b16 %v3586
        %v5831 = vunpack.c.l.b16 %v3587
        %v5832 = vunpack.c.h.b16 %v3587
        %v5833 = vunpack.c.l.b16 %v3588
        %v5834 = vunpack.c.h.b16 %v3588
        %v5835 = vunpack.c.l.b16 %v3589
        %v5836 = vunpack.c.h.b16 %v3589
        %v5837 = vunpack.c.l.b16 %v3590
        %v5838 = vunpack.c.h.b16 %v3590
        %v5839 = vunpack.c.l.b16 %v3591
        %v5840 = vunpack.c.h.b16 %v3591
        %v5841 = vunpack.c.l.b16 %v3592
        %v5842 = vunpack.c.h.b16 %v3592
        %v5843 = vunpack.c.l.b16 %v3593
        %v5844 = vunpack.c.h.b16 %v3593
        %v5845 = vunpack.c.l.b16 %v3594
        %v5846 = vunpack.c.h.b16 %v3594
        %v5847 = vunpack.c.l.b16 %v3595
        %v5848 = vunpack.c.h.b16 %v3595
        %v5849 = vunpack.c.l.b16 %v3596
        %v5850 = vunpack.c.h.b16 %v3596
        %v5851 = vunpack.c.l.b16 %v3597
        %v5852 = vunpack.c.h.b16 %v3597
        %v5853 = vunpack.c.l.b16 %v3598
        %v5854 = vunpack.c.h.b16 %v3598
        %v5855 = vunpack.c.l.b16 %v3599
        %v5856 = vunpack.c.h.b16 %v3599
        %v5857 = vunpack.c.l.b16 %v3600
        %v5858 = vunpack.c.h.b16 %v3600
        %v5859 = vunpack.c.l.b16 %v3601
        %v5860 = vunpack.c.h.b16 %v3601
        %v5861 = vunpack.c.l.b16 %v3602
        %v5862 = vunpack.c.h.b16 %v3602
        %v5863 = vunpack.c.l.b16 %v3603
        %v5864 = vunpack.c.h.b16 %v3603
        %v5865 = vunpack.c.l.b16 %v3604
        %v5866 = vunpack.c.h.b16 %v3604
        %v5867 = vunpack.c.l.b16 %v3605
        %v5868 = vunpack.c.h.b16 %v3605
        %v5869 = vunpack.c.l.b16 %v3606
        %v5870 = vunpack.c.h.b16 %v3606
        %v5871 = vunpack.c.l.b16 %v3607
        %v5872 = vunpack.c.h.b16 %v3607
        %v5873 = vunpack.c.l.b16 %v3608
        %v5874 = vunpack.c.h.b16 %v3608
        %v5875 = vunpack.c.l.b16 %v3609
        %v5876 = vunpack.c.h.b16 %v3609
        %v5877 = vunpack.c.l.b16 %v3610
        %v5878 = vunpack.c.h.b16 %v3610
        %v5879 = vunpack.c.l.b16 %v3611
        %v5880 = vunpack.c.h.b16 %v3611
        %v5881 = vunpack.c.l.b16 %v3612
        %v5882 = vunpack.c.h.b16 %v3612
        %v5883 = vunpack.c.l.b16 %v3613
        %v5884 = vunpack.c.h.b16 %v3613
        %v5885 = vunpack.c.l.b16 %v3614
        %v5886 = vunpack.c.h.b16 %v3614
        %v5887 = vunpack.c.l.b16 %v3615
        %v5888 = vunpack.c.h.b16 %v3615
        %v5889 = vunpack.c.l.b16 %v3616
        %v5890 = vunpack.c.h.b16 %v3616
        %v5891 = vunpack.c.l.b16 %v3617
        %v5892 = vunpack.c.h.b16 %v3617
        %v5893 = vunpack.c.l.b16 %v3618
        %v5894 = vunpack.c.h.b16 %v3618
        %v5895 = vunpack.c.l.b16 %v3619
        %v5896 = vunpack.c.h.b16 %v3619
        %v5897 = vunpack.c.l.b16 %v3620
        %v5898 = vunpack.c.h.b16 %v3620
        %v5899 = vunpack.c.l.b16 %v3621
        %v5900 = vunpack.c.h.b16 %v3621
        %v5901 = vunpack.c.l.b16 %v3622
        %v5902 = vunpack.c.h.b16 %v3622
        %v5903 = vunpack.c.l.b16 %v3623
        %v5904 = vunpack.c.h.b16 %v3623
        %v5905 = vunpack.c.l.b16 %v3624
        %v5906 = vunpack.c.h.b16 %v3624
        %v5907 = vunpack.c.l.b16 %v3625
        %v5908 = vunpack.c.h.b16 %v3625
        %v5909 = vunpack.c.l.b16 %v3626
        %v5910 = vunpack.c.h.b16 %v3626
        %v5911 = vunpack.c.l.b16 %v3627
        %v5912 = vunpack.c.h.b16 %v3627
        %v5913 = vunpack.c.l.b16 %v3628
        %v5914 = vunpack.c.h.b16 %v3628
        %v5915 = vunpack.c.l.b16 %v3629
        %v5916 = vunpack.c.h.b16 %v3629
        %v5917 = vunpack.c.l.b16 %v3630
        %v5918 = vunpack.c.h.b16 %v3630
        %v5919 = vunpack.c.l.b16 %v3631
        %v5920 = vunpack.c.h.b16 %v3631
        %v5921 = vunpack.c.l.b16 %v3632
        %v5922 = vunpack.c.h.b16 %v3632
        %v5923 = vunpack.c.l.b16 %v3633
        %v5924 = vunpack.c.h.b16 %v3633
        %v5925 = vunpack.c.l.b16 %v3634
        %v5926 = vunpack.c.h.b16 %v3634
        %v5927 = vunpack.c.l.b16 %v3635
        %v5928 = vunpack.c.h.b16 %v3635
        %v5929 = vunpack.c.l.b16 %v3636
        %v5930 = vunpack.c.h.b16 %v3636
        %v5931 = vunpack.c.l.b16 %v3637
        %v5932 = vunpack.c.h.b16 %v3637
        %v5933 = vunpack.c.l.b16 %v3638
        %v5934 = vunpack.c.h.b16 %v3638
        %v5935 = vunpack.c.l.b16 %v3639
        %v5936 = vunpack.c.h.b16 %v3639
        %v5937 = vunpack.c.l.b16 %v3640
        %v5938 = vunpack.c.h.b16 %v3640
        %v5939 = vunpack.c.l.b16 %v3641
        %v5940 = vunpack.c.h.b16 %v3641
        %v5941 = vunpack.c.l.b16 %v3642
        %v5942 = vunpack.c.h.b16 %v3642
        %v5943 = vunpack.c.l.b16 %v3643
        %v5944 = vunpack.c.h.b16 %v3643
        %v5945 = vunpack.c.l.b16 %v3644
        %v5946 = vunpack.c.h.b16 %v3644
        %v5947 = vunpack.c.l.b16 %v3645
        %v5948 = vunpack.c.h.b16 %v3645
        %v5949 = vunpack.c.l.b16 %v3646
        %v5950 = vunpack.c.h.b16 %v3646
        %v5951 = vunpack.c.l.b16 %v3647
        %v5952 = vunpack.c.h.b16 %v3647
        %v5953 = vunpack.c.l.b16 %v3648
        %v5954 = vunpack.c.h.b16 %v3648
        %v5955 = vunpack.c.l.b16 %v3649
        %v5956 = vunpack.c.h.b16 %v3649
        %v5957 = vunpack.c.l.b16 %v3650
        %v5958 = vunpack.c.h.b16 %v3650
        %v5959 = vunpack.c.l.b16 %v3651
        %v5960 = vunpack.c.h.b16 %v3651
        %v5961 = vunpack.c.l.b16 %v3652
        %v5962 = vunpack.c.h.b16 %v3652
        %v5963 = vunpack.c.l.b16 %v3653
        %v5964 = vunpack.c.h.b16 %v3653
        %v5965 = vunpack.c.l.b16 %v3654
        %v5966 = vunpack.c.h.b16 %v3654
        %v5967 = vunpack.c.l.b16 %v3655
        %v5968 = vunpack.c.h.b16 %v3655
        %v5969 = vunpack.c.l.b16 %v3656
        %v5970 = vunpack.c.h.b16 %v3656
        %v5971 = vunpack.c.l.b16 %v3657
        %v5972 = vunpack.c.h.b16 %v3657
        %v5973 = vunpack.c.l.b16 %v3658
        %v5974 = vunpack.c.h.b16 %v3658
        %v5975 = vunpack.c.l.b16 %v3659
        %v5976 = vunpack.c.h.b16 %v3659
        %v5977 = vunpack.c.l.b16 %v3660
        %v5978 = vunpack.c.h.b16 %v3660
        %v5979 = vunpack.c.l.b16 %v3661
        %v5980 = vunpack.c.h.b16 %v3661
        %v5981 = vunpack.c.l.b16 %v3662
        %v5982 = vunpack.c.h.b16 %v3662
        %v5983 = vunpack.c.l.b16 %v3663
        %v5984 = vunpack.c.h.b16 %v3663
        %v5985 = vunpack.c.l.b16 %v3664
        %v5986 = vunpack.c.h.b16 %v3664
        %v5987 = vunpack.c.l.b16 %v3665
        %v5988 = vunpack.c.h.b16 %v3665
        %v5989 = vunpack.c.l.b16 %v3666
        %v5990 = vunpack.c.h.b16 %v3666
        %v5991 = vunpack.c.l.b16 %v3667
        %v5992 = vunpack.c.h.b16 %v3667
        %v5993 = vunpack.c.l.b16 %v3668
        %v5994 = vunpack.c.h.b16 %v3668
        %v5995 = vunpack.c.l.b16 %v3669
        %v5996 = vunpack.c.h.b16 %v3669
        %v5997 = vunpack.c.l.b16 %v3670
        %v5998 = vunpack.c.h.b16 %v3670
        %v5999 = vunpack.c.l.b16 %v3671
        %v6000 = vunpack.c.h.b16 %v3671
        %v6001 = vunpack.c.l.b16 %v3672
        %v6002 = vunpack.c.h.b16 %v3672
        %v6003 = vunpack.c.l.b16 %v3673
        %v6004 = vunpack.c.h.b16 %v3673
        %v6005 = vunpack.c.l.b16 %v3674
        %v6006 = vunpack.c.h.b16 %v3674
        %v6007 = vunpack.c.l.b16 %v3675
        %v6008 = vunpack.c.h.b16 %v3675
        %v6009 = vunpack.c.l.b16 %v3676
        %v6010 = vunpack.c.h.b16 %v3676
        %v6011 = vunpack.c.l.b16 %v3677
        %v6012 = vunpack.c.h.b16 %v3677
        %v6013 = vunpack.c.l.b16 %v3678
        %v6014 = vunpack.c.h.b16 %v3678
        %v6015 = vunpack.c.l.b16 %v3679
        %v6016 = vunpack.c.h.b16 %v3679
        %v6017 = vunpack.c.l.b16 %v3680
        %v6018 = vunpack.c.h.b16 %v3680
        %v6019 = vunpack.c.l.b16 %v3681
        %v6020 = vunpack.c.h.b16 %v3681
        %v6021 = vunpack.c.l.b16 %v3682
        %v6022 = vunpack.c.h.b16 %v3682
        %v6023 = vunpack.c.l.b16 %v3683
        %v6024 = vunpack.c.h.b16 %v3683
        %v6025 = vunpack.c.l.b16 %v3684
        %v6026 = vunpack.c.h.b16 %v3684
        %v6027 = vunpack.c.l.b16 %v3685
        %v6028 = vunpack.c.h.b16 %v3685
        %v6029 = vunpack.c.l.b16 %v3686
        %v6030 = vunpack.c.h.b16 %v3686
        %v6031 = vunpack.c.l.b16 %v3687
        %v6032 = vunpack.c.h.b16 %v3687
        %v6033 = vunpack.c.l.b16 %v3688
        %v6034 = vunpack.c.h.b16 %v3688
        %v6035 = vunpack.c.l.b16 %v3689
        %v6036 = vunpack.c.h.b16 %v3689
        %v6037 = vunpack.c.l.b16 %v3690
        %v6038 = vunpack.c.h.b16 %v3690
        %v6039 = vunpack.c.l.b16 %v3691
        %v6040 = vunpack.c.h.b16 %v3691
        %v6041 = vunpack.c.l.b16 %v3692
        %v6042 = vunpack.c.h.b16 %v3692
        %v6043 = vunpack.c.l.b16 %v3693
        %v6044 = vunpack.c.h.b16 %v3693
        %v6045 = vunpack.c.l.b16 %v3694
        %v6046 = vunpack.c.h.b16 %v3694
        %v6047 = vunpack.c.l.b16 %v3695
        %v6048 = vunpack.c.h.b16 %v3695
        %v6049 = vunpack.c.l.b16 %v3696
        %v6050 = vunpack.c.h.b16 %v3696
        %v6051 = vunpack.c.l.b16 %v3697
        %v6052 = vunpack.c.h.b16 %v3697
        %v6053 = vunpack.c.l.b16 %v3698
        %v6054 = vunpack.c.h.b16 %v3698
        %v6055 = vunpack.c.l.b16 %v3699
        %v6056 = vunpack.c.h.b16 %v3699
        %v6057 = vunpack.c.l.b16 %v3700
        %v6058 = vunpack.c.h.b16 %v3700
        %v6059 = vunpack.c.l.b16 %v3701
        %v6060 = vunpack.c.h.b16 %v3701
        %v6061 = vunpack.c.l.b16 %v3702
        %v6062 = vunpack.c.h.b16 %v3702
        %v6063 = vunpack.c.l.b16 %v3703
        %v6064 = vunpack.c.h.b16 %v3703
        %v6065 = vunpack.c.l.b16 %v3704
        %v6066 = vunpack.c.h.b16 %v3704
        %v6067 = vunpack.c.l.b16 %v3705
        %v6068 = vunpack.c.h.b16 %v3705
        %v6069 = vunpack.c.l.b16 %v3706
        %v6070 = vunpack.c.h.b16 %v3706
        %v6071 = vunpack.c.l.b16 %v3707
        %v6072 = vunpack.c.h.b16 %v3707
        %v6073 = vunpack.c.l.b16 %v3708
        %v6074 = vunpack.c.h.b16 %v3708
        %v6075 = vunpack.c.l.b16 %v3709
        %v6076 = vunpack.c.h.b16 %v3709
        %v6077 = vunpack.c.l.b16 %v3710
        %v6078 = vunpack.c.h.b16 %v3710
        %v6079 = vunpack.c.l.b16 %v3711
        %v6080 = vunpack.c.h.b16 %v3711
        %v6081 = vunpack.c.l.b16 %v3712
        %v6082 = vunpack.c.h.b16 %v3712
        %v6083 = vunpack.c.l.b16 %v3713
        %v6084 = vunpack.c.h.b16 %v3713
        %v6085 = vunpack.c.l.b16 %v3714
        %v6086 = vunpack.c.h.b16 %v3714
        %v6087 = vunpack.c.l.b16 %v3715
        %v6088 = vunpack.c.h.b16 %v3715
        %v6089 = vunpack.c.l.b16 %v3716
        %v6090 = vunpack.c.h.b16 %v3716
        %v6091 = vunpack.c.l.b16 %v3717
        %v6092 = vunpack.c.h.b16 %v3717
        %v6093 = vunpack.c.l.b16 %v3718
        %v6094 = vunpack.c.h.b16 %v3718
        %v6095 = vunpack.c.l.b16 %v3719
        %v6096 = vunpack.c.h.b16 %v3719
        %v6097 = vunpack.c.l.b16 %v3720
        %v6098 = vunpack.c.h.b16 %v3720
        %v6099 = vunpack.c.l.b16 %v3721
        %v6100 = vunpack.c.h.b16 %v3721
        %v6101 = vunpack.c.l.b16 %v3722
        %v6102 = vunpack.c.h.b16 %v3722
        %v6103 = vunpack.c.l.b16 %v3723
        %v6104 = vunpack.c.h.b16 %v3723
        %v6105 = vunpack.c.l.b16 %v3724
        %v6106 = vunpack.c.h.b16 %v3724
        %v6107 = vunpack.c.l.b16 %v3725
        %v6108 = vunpack.c.h.b16 %v3725
        %v6109 = vunpack.c.l.b16 %v3726
        %v6110 = vunpack.c.h.b16 %v3726
        %v6111 = vunpack.c.l.b16 %v3727
        %v6112 = vunpack.c.h.b16 %v3727
        %v6113 = vunpack.c.l.b16 %v3728
        %v6114 = vunpack.c.h.b16 %v3728
        %v6115 = vunpack.c.l.b16 %v3729
        %v6116 = vunpack.c.h.b16 %v3729
        %v6117 = vunpack.c.l.b16 %v3730
        %v6118 = vunpack.c.h.b16 %v3730
        %v6119 = vunpack.c.l.b16 %v3731
        %v6120 = vunpack.c.h.b16 %v3731
        %v6121 = vunpack.c.l.b16 %v3732
        %v6122 = vunpack.c.h.b16 %v3732
        %v6123 = vunpack.c.l.b16 %v3733
        %v6124 = vunpack.c.h.b16 %v3733
        %v6125 = vunpack.c.l.b16 %v3734
        %v6126 = vunpack.c.h.b16 %v3734
        %v6127 = vunpack.c.l.b16 %v3735
        %v6128 = vunpack.c.h.b16 %v3735
        %v6129 = vunpack.c.l.b16 %v3736
        %v6130 = vunpack.c.h.b16 %v3736
        %v6131 = vunpack.c.l.b16 %v3737
        %v6132 = vunpack.c.h.b16 %v3737
        %v6133 = vunpack.c.l.b16 %v3738
        %v6134 = vunpack.c.h.b16 %v3738
        %v6135 = vunpack.c.l.b16 %v3739
        %v6136 = vunpack.c.h.b16 %v3739
        %v6137 = vunpack.c.l.b16 %v3740
        %v6138 = vunpack.c.h.b16 %v3740
        %v6139 = vunpack.c.l.b16 %v3741
        %v6140 = vunpack.c.h.b16 %v3741
        %v6141 = vunpack.c.l.b16 %v3742
        %v6142 = vunpack.c.h.b16 %v3742
        %v6143 = vunpack.c.l.b16 %v3743
        %v6144 = vunpack.c.h.b16 %v3743
        %v6145 = vunpack.c.l.b16 %v3744
        %v6146 = vunpack.c.h.b16 %v3744
        %v6147 = vunpack.c.l.b16 %v3745
        %v6148 = vunpack.c.h.b16 %v3745
        %v6149 = vunpack.c.l.b16 %v3746
        %v6150 = vunpack.c.h.b16 %v3746
        %v6151 = vunpack.c.l.b16 %v3747
        %v6152 = vunpack.c.h.b16 %v3747
        %v6153 = vunpack.c.l.b16 %v3748
        %v6154 = vunpack.c.h.b16 %v3748
        %v6155 = vunpack.c.l.b16 %v3749
        %v6156 = vunpack.c.h.b16 %v3749
        %v6157 = vunpack.c.l.b16 %v3750
        %v6158 = vunpack.c.h.b16 %v3750
        %v6159 = vunpack.c.l.b16 %v3751
        %v6160 = vunpack.c.h.b16 %v3751
        %v6161 = vunpack.c.l.b16 %v3752
        %v6162 = vunpack.c.h.b16 %v3752
        %v6163 = vunpack.c.l.b16 %v3753
        %v6164 = vunpack.c.h.b16 %v3753
        %v6165 = vunpack.c.l.b16 %v3754
        %v6166 = vunpack.c.h.b16 %v3754
        %v6167 = vunpack.c.l.b16 %v3755
        %v6168 = vunpack.c.h.b16 %v3755
        %v6169 = vunpack.c.l.b16 %v3756
        %v6170 = vunpack.c.h.b16 %v3756
        %v6171 = vunpack.c.l.b16 %v3757
        %v6172 = vunpack.c.h.b16 %v3757
        %v6173 = vunpack.c.l.b16 %v3758
        %v6174 = vunpack.c.h.b16 %v3758
        %v6175 = vunpack.c.l.b16 %v3759
        %v6176 = vunpack.c.h.b16 %v3759
        %v6177 = vunpack.c.l.b16 %v3760
        %v6178 = vunpack.c.h.b16 %v3760
        %v6179 = vunpack.c.l.b16 %v3761
        %v6180 = vunpack.c.h.b16 %v3761
        %v6181 = vunpack.c.l.b16 %v3762
        %v6182 = vunpack.c.h.b16 %v3762
        %v6183 = vunpack.c.l.b16 %v3763
        %v6184 = vunpack.c.h.b16 %v3763
        %v6185 = vunpack.c.l.b16 %v3764
        %v6186 = vunpack.c.h.b16 %v3764
        %v6187 = vunpack.c.l.b16 %v3765
        %v6188 = vunpack.c.h.b16 %v3765
        %v6189 = vunpack.c.l.b16 %v3766
        %v6190 = vunpack.c.h.b16 %v3766
        %v6191 = vunpack.c.l.b16 %v3767
        %v6192 = vunpack.c.h.b16 %v3767
        %v6193 = vunpack.c.l.b16 %v3768
        %v6194 = vunpack.c.h.b16 %v3768
        %v6195 = vunpack.c.l.b16 %v3769
        %v6196 = vunpack.c.h.b16 %v3769
        %v6197 = vunpack.c.l.b16 %v3770
        %v6198 = vunpack.c.h.b16 %v3770
        %v6199 = vunpack.c.l.b16 %v3771
        %v6200 = vunpack.c.h.b16 %v3771
        %v6201 = vunpack.c.l.b16 %v3772
        %v6202 = vunpack.c.h.b16 %v3772
        %v6203 = vunpack.c.l.b16 %v3773
        %v6204 = vunpack.c.h.b16 %v3773
        %v6205 = vunpack.c.l.b16 %v3774
        %v6206 = vunpack.c.h.b16 %v3774
        %v6207 = vunpack.c.l.b16 %v3775
        %v6208 = vunpack.c.h.b16 %v3775
        %v6209 = vunpack.c.l.b16 %v3776
        %v6210 = vunpack.c.h.b16 %v3776
        %v6211 = vunpack.c.l.b16 %v3777
        %v6212 = vunpack.c.h.b16 %v3777
        %v6213 = vunpack.c.l.b16 %v3778
        %v6214 = vunpack.c.h.b16 %v3778
        %v6215 = vunpack.c.l.b16 %v3779
        %v6216 = vunpack.c.h.b16 %v3779
        %v6217 = vunpack.c.l.b16 %v3780
        %v6218 = vunpack.c.h.b16 %v3780
        %v6219 = vunpack.c.l.b16 %v3781
        %v6220 = vunpack.c.h.b16 %v3781
        %v6221 = vunpack.c.l.b16 %v3782
        %v6222 = vunpack.c.h.b16 %v3782
        %v6223 = vunpack.c.l.b16 %v3783
        %v6224 = vunpack.c.h.b16 %v3783
        %v6225 = vunpack.c.l.b16 %v3784
        %v6226 = vunpack.c.h.b16 %v3784
        %v6227 = vunpack.c.l.b16 %v3785
        %v6228 = vunpack.c.h.b16 %v3785
        %v6229 = vunpack.c.l.b16 %v3786
        %v6230 = vunpack.c.h.b16 %v3786
        %v6231 = vunpack.c.l.b16 %v3787
        %v6232 = vunpack.c.h.b16 %v3787
        %v6233 = vunpack.c.l.b16 %v3788
        %v6234 = vunpack.c.h.b16 %v3788
        %v6235 = vunpack.c.l.b16 %v3789
        %v6236 = vunpack.c.h.b16 %v3789
        %v6237 = vunpack.c.l.b16 %v3790
        %v6238 = vunpack.c.h.b16 %v3790
        %v6239 = vunpack.c.l.b16 %v3791
        %v6240 = vunpack.c.h.b16 %v3791
        %v6241 = vunpack.c.l.b16 %v3792
        %v6242 = vunpack.c.h.b16 %v3792
        %v6243 = vunpack.c.l.b16 %v3793
        %v6244 = vunpack.c.h.b16 %v3793
        %v6245 = vunpack.c.l.b16 %v3794
        %v6246 = vunpack.c.h.b16 %v3794
        %v6247 = vunpack.c.l.b16 %v3795
        %v6248 = vunpack.c.h.b16 %v3795
        %v6249 = vunpack.c.l.b16 %v3796
        %v6250 = vunpack.c.h.b16 %v3796
        %v6251 = vunpack.c.l.b16 %v3797
        %v6252 = vunpack.c.h.b16 %v3797
        %v6253 = vunpack.c.l.b16 %v3798
        %v6254 = vunpack.c.h.b16 %v3798
        %v6255 = vunpack.c.l.b16 %v3799
        %v6256 = vunpack.c.h.b16 %v3799
        %v6257 = vunpack.c.l.b16 %v3800
        %v6258 = vunpack.c.h.b16 %v3800
        %v6259 = vunpack.c.l.b16 %v3801
        %v6260 = vunpack.c.h.b16 %v3801
        %v6261 = vunpack.c.l.b16 %v3802
        %v6262 = vunpack.c.h.b16 %v3802
        %v6263 = vunpack.c.l.b16 %v3803
        %v6264 = vunpack.c.h.b16 %v3803
        %v6265 = vunpack.c.l.b16 %v3804
        %v6266 = vunpack.c.h.b16 %v3804
        %v6267 = vunpack.c.l.b16 %v3805
        %v6268 = vunpack.c.h.b16 %v3805
        %v6269 = vunpack.c.l.b16 %v3806
        %v6270 = vunpack.c.h.b16 %v3806
        %v6271 = vunpack.c.l.b16 %v3807
        %v6272 = vunpack.c.h.b16 %v3807
        %v6273 = vunpack.c.l.b16 %v3808
        %v6274 = vunpack.c.h.b16 %v3808
        %v6275 = vunpack.c.l.b16 %v3809
        %v6276 = vunpack.c.h.b16 %v3809
        %v6277 = vunpack.c.l.b16 %v3810
        %v6278 = vunpack.c.h.b16 %v3810
        %v6279 = vunpack.c.l.b16 %v3811
        %v6280 = vunpack.c.h.b16 %v3811
        %v6281 = vpack.c.b16 %v5133, %v5129
        %v6282 = vpack.c.b16 %v5134, %v5130
        %v6283 = vpack.c.b16 %v5135, %v5131
        %v6284 = vpack.c.b16 %v5136, %v5132
        %v6285 = vpack.c.b16 %v5141, %v5137
        %v6286 = vpack.c.b16 %v5142, %v5138
        %v6287 = vpack.c.b16 %v5143, %v5139
        %v6288 = vpack.c.b16 %v5144, %v5140
        %v6289 = vpack.c.b16 %v5149, %v5145
        %v6290 = vpack.c.b16 %v5150, %v5146
        %v6291 = vpack.c.b16 %v5151, %v5147
        %v6292 = vpack.c.b16 %v5152, %v5148
        %v6293 = vpack.c.b16 %v5157, %v5153
        %v6294 = vpack.c.b16 %v5158, %v5154
        %v6295 = vpack.c.b16 %v5159, %v5155
        %v6296 = vpack.c.b16 %v5160, %v5156
        %v6297 = vpack.c.b16 %v5165, %v5161
        %v6298 = vpack.c.b16 %v5166, %v5162
        %v6299 = vpack.c.b16 %v5167, %v5163
        %v6300 = vpack.c.b16 %v5168, %v5164
        %v6301 = vpack.c.b16 %v5173, %v5169
        %v6302 = vpack.c.b16 %v5174, %v5170
        %v6303 = vpack.c.b16 %v5175, %v5171
        %v6304 = vpack.c.b16 %v5176, %v5172
        %v6305 = vpack.c.b16 %v5181, %v5177
        %v6306 = vpack.c.b16 %v5182, %v5178
        %v6307 = vpack.c.b16 %v5183, %v5179
        %v6308 = vpack.c.b16 %v5184, %v5180
        %v6309 = vpack.c.b16 %v5189, %v5185
        %v6310 = vpack.c.b16 %v5190, %v5186
        %v6311 = vpack.c.b16 %v5191, %v5187
        %v6312 = vpack.c.b16 %v5192, %v5188
        %v6313 = vpack.c.b16 %v5197, %v5193
        %v6314 = vpack.c.b16 %v5198, %v5194
        %v6315 = vpack.c.b16 %v5199, %v5195
        %v6316 = vpack.c.b16 %v5200, %v5196
        %v6317 = vpack.c.b16 %v5205, %v5201
        %v6318 = vpack.c.b16 %v5206, %v5202
        %v6319 = vpack.c.b16 %v5207, %v5203
        %v6320 = vpack.c.b16 %v5208, %v5204
        %v6321 = vpack.c.b16 %v5213, %v5209
        %v6322 = vpack.c.b16 %v5214, %v5210
        %v6323 = vpack.c.b16 %v5215, %v5211
        %v6324 = vpack.c.b16 %v5216, %v5212
        %v6325 = vpack.c.b16 %v5221, %v5217
        %v6326 = vpack.c.b16 %v5222, %v5218
        %v6327 = vpack.c.b16 %v5223, %v5219
        %v6328 = vpack.c.b16 %v5224, %v5220
        %v6329 = vpack.c.b16 %v5229, %v5225
        %v6330 = vpack.c.b16 %v5230, %v5226
        %v6331 = vpack.c.b16 %v5231, %v5227
        %v6332 = vpack.c.b16 %v5232, %v5228
        %v6333 = vpack.c.b16 %v5237, %v5233
        %v6334 = vpack.c.b16 %v5238, %v5234
        %v6335 = vpack.c.b16 %v5239, %v5235
        %v6336 = vpack.c.b16 %v5240, %v5236
        %v6337 = vpack.c.b16 %v5245, %v5241
        %v6338 = vpack.c.b16 %v5246, %v5242
        %v6339 = vpack.c.b16 %v5247, %v5243
        %v6340 = vpack.c.b16 %v5248, %v5244
        %v6341 = vpack.c.b16 %v5253, %v5249
        %v6342 = vpack.c.b16 %v5254, %v5250
        %v6343 = vpack.c.b16 %v5255, %v5251
        %v6344 = vpack.c.b16 %v5256, %v5252
        %v6345 = vpack.c.b16 %v5261, %v5257
        %v6346 = vpack.c.b16 %v5262, %v5258
        %v6347 = vpack.c.b16 %v5263, %v5259
        %v6348 = vpack.c.b16 %v5264, %v5260
        %v6349 = vpack.c.b16 %v5269, %v5265
        %v6350 = vpack.c.b16 %v5270, %v5266
        %v6351 = vpack.c.b16 %v5271, %v5267
        %v6352 = vpack.c.b16 %v5272, %v5268
        %v6353 = vpack.c.b16 %v5277, %v5273
        %v6354 = vpack.c.b16 %v5278, %v5274
        %v6355 = vpack.c.b16 %v5279, %v5275
        %v6356 = vpack.c.b16 %v5280, %v5276
        %v6357 = vpack.c.b16 %v5285, %v5281
        %v6358 = vpack.c.b16 %v5286, %v5282
        %v6359 = vpack.c.b16 %v5287, %v5283
        %v6360 = vpack.c.b16 %v5288, %v5284
        %v6361 = vpack.c.b16 %v5293, %v5289
        %v6362 = vpack.c.b16 %v5294, %v5290
        %v6363 = vpack.c.b16 %v5295, %v5291
        %v6364 = vpack.c.b16 %v5296, %v5292
        %v6365 = vpack.c.b16 %v5301, %v5297
        %v6366 = vpack.c.b16 %v5302, %v5298
        %v6367 = vpack.c.b16 %v5303, %v5299
        %v6368 = vpack.c.b16 %v5304, %v5300
        %v6369 = vpack.c.b16 %v5309, %v5305
        %v6370 = vpack.c.b16 %v5310, %v5306
        %v6371 = vpack.c.b16 %v5311, %v5307
        %v6372 = vpack.c.b16 %v5312, %v5308
        %v6373 = vpack.c.b16 %v5317, %v5313
        %v6374 = vpack.c.b16 %v5318, %v5314
        %v6375 = vpack.c.b16 %v5319, %v5315
        %v6376 = vpack.c.b16 %v5320, %v5316
        %v6377 = vpack.c.b16 %v5325, %v5321
        %v6378 = vpack.c.b16 %v5326, %v5322
        %v6379 = vpack.c.b16 %v5327, %v5323
        %v6380 = vpack.c.b16 %v5328, %v5324
        %v6381 = vpack.c.b16 %v5333, %v5329
        %v6382 = vpack.c.b16 %v5334, %v5330
        %v6383 = vpack.c.b16 %v5335, %v5331
        %v6384 = vpack.c.b16 %v5336, %v5332
        %v6385 = vpack.c.b16 %v5341, %v5337
        %v6386 = vpack.c.b16 %v5342, %v5338
        %v6387 = vpack.c.b16 %v5343, %v5339
        %v6388 = vpack.c.b16 %v5344, %v5340
        %v6389 = vpack.c.b16 %v5349, %v5345
        %v6390 = vpack.c.b16 %v5350, %v5346
        %v6391 = vpack.c.b16 %v5351, %v5347
        %v6392 = vpack.c.b16 %v5352, %v5348
        %v6393 = vpack.c.b16 %v5357, %v5353
        %v6394 = vpack.c.b16 %v5358, %v5354
        %v6395 = vpack.c.b16 %v5359, %v5355
        %v6396 = vpack.c.b16 %v5360, %v5356
        %v6397 = vpack.c.b16 %v5365, %v5361
        %v6398 = vpack.c.b16 %v5366, %v5362
        %v6399 = vpack.c.b16 %v5367, %v5363
        %v6400 = vpack.c.b16 %v5368, %v5364
        %v6401 = vpack.c.b16 %v5373, %v5369
        %v6402 = vpack.c.b16 %v5374, %v5370
        %v6403 = vpack.c.b16 %v5375, %v5371
        %v6404 = vpack.c.b16 %v5376, %v5372
        %v6405 = vpack.c.b16 %v5381, %v5377
        %v6406 = vpack.c.b16 %v5382, %v5378
        %v6407 = vpack.c.b16 %v5383, %v5379
        %v6408 = vpack.c.b16 %v5384, %v5380
        %v6409 = vpack.c.b16 %v5389, %v5385
        %v6410 = vpack.c.b16 %v5390, %v5386
        %v6411 = vpack.c.b16 %v5391, %v5387
        %v6412 = vpack.c.b16 %v5392, %v5388
        %v6413 = vpack.c.b16 %v5397, %v5393
        %v6414 = vpack.c.b16 %v5398, %v5394
        %v6415 = vpack.c.b16 %v5399, %v5395
        %v6416 = vpack.c.b16 %v5400, %v5396
        %v6417 = vpack.c.b16 %v5405, %v5401
        %v6418 = vpack.c.b16 %v5406, %v5402
        %v6419 = vpack.c.b16 %v5407, %v5403
        %v6420 = vpack.c.b16 %v5408, %v5404
        %v6421 = vpack.c.b16 %v5413, %v5409
        %v6422 = vpack.c.b16 %v5414, %v5410
        %v6423 = vpack.c.b16 %v5415, %v5411
        %v6424 = vpack.c.b16 %v5416, %v5412
        %v6425 = vpack.c.b16 %v5421, %v5417
        %v6426 = vpack.c.b16 %v5422, %v5418
        %v6427 = vpack.c.b16 %v5423, %v5419
        %v6428 = vpack.c.b16 %v5424, %v5420
        %v6429 = vpack.c.b16 %v5429, %v5425
        %v6430 = vpack.c.b16 %v5430, %v5426
        %v6431 = vpack.c.b16 %v5431, %v5427
        %v6432 = vpack.c.b16 %v5432, %v5428
        %v6433 = vpack.c.b16 %v5437, %v5433
        %v6434 = vpack.c.b16 %v5438, %v5434
        %v6435 = vpack.c.b16 %v5439, %v5435
        %v6436 = vpack.c.b16 %v5440, %v5436
        %v6437 = vpack.c.b16 %v5445, %v5441
        %v6438 = vpack.c.b16 %v5446, %v5442
        %v6439 = vpack.c.b16 %v5447, %v5443
        %v6440 = vpack.c.b16 %v5448, %v5444
        %v6441 = vpack.c.b16 %v5453, %v5449
        %v6442 = vpack.c.b16 %v5454, %v5450
        %v6443 = vpack.c.b16 %v5455, %v5451
        %v6444 = vpack.c.b16 %v5456, %v5452
        %v6445 = vpack.c.b16 %v5461, %v5457
        %v6446 = vpack.c.b16 %v5462, %v5458
        %v6447 = vpack.c.b16 %v5463, %v5459
        %v6448 = vpack.c.b16 %v5464, %v5460
        %v6449 = vpack.c.b16 %v5469, %v5465
        %v6450 = vpack.c.b16 %v5470, %v5466
        %v6451 = vpack.c.b16 %v5471, %v5467
        %v6452 = vpack.c.b16 %v5472, %v5468
        %v6453 = vpack.c.b16 %v5477, %v5473
        %v6454 = vpack.c.b16 %v5478, %v5474
        %v6455 = vpack.c.b16 %v5479, %v5475
        %v6456 = vpack.c.b16 %v5480, %v5476
        %v6457 = vpack.c.b16 %v5485, %v5481
        %v6458 = vpack.c.b16 %v5486, %v5482
        %v6459 = vpack.c.b16 %v5487, %v5483
        %v6460 = vpack.c.b16 %v5488, %v5484
        %v6461 = vpack.c.b16 %v5493, %v5489
        %v6462 = vpack.c.b16 %v5494, %v5490
        %v6463 = vpack.c.b16 %v5495, %v5491
        %v6464 = vpack.c.b16 %v5496, %v5492
        %v6465 = vpack.c.b16 %v5501, %v5497
        %v6466 = vpack.c.b16 %v5502, %v5498
        %v6467 = vpack.c.b16 %v5503, %v5499
        %v6468 = vpack.c.b16 %v5504, %v5500
        %v6469 = vpack.c.b16 %v5509, %v5505
        %v6470 = vpack.c.b16 %v5510, %v5506
        %v6471 = vpack.c.b16 %v5511, %v5507
        %v6472 = vpack.c.b16 %v5512, %v5508
        %v6473 = vpack.c.b16 %v5517, %v5513
        %v6474 = vpack.c.b16 %v5518, %v5514
        %v6475 = vpack.c.b16 %v5519, %v5515
        %v6476 = vpack.c.b16 %v5520, %v5516
        %v6477 = vpack.c.b16 %v5525, %v5521
        %v6478 = vpack.c.b16 %v5526, %v5522
        %v6479 = vpack.c.b16 %v5527, %v5523
        %v6480 = vpack.c.b16 %v5528, %v5524
        %v6481 = vpack.c.b16 %v5533, %v5529
        %v6482 = vpack.c.b16 %v5534, %v5530
        %v6483 = vpack.c.b16 %v5535, %v5531
        %v6484 = vpack.c.b16 %v5536, %v5532
        %v6485 = vpack.c.b16 %v5541, %v5537
        %v6486 = vpack.c.b16 %v5542, %v5538
        %v6487 = vpack.c.b16 %v5543, %v5539
        %v6488 = vpack.c.b16 %v5544, %v5540
        %v6489 = vpack.c.b16 %v5549, %v5545
        %v6490 = vpack.c.b16 %v5550, %v5546
        %v6491 = vpack.c.b16 %v5551, %v5547
        %v6492 = vpack.c.b16 %v5552, %v5548
        %v6493 = vpack.c.b16 %v5557, %v5553
        %v6494 = vpack.c.b16 %v5558, %v5554
        %v6495 = vpack.c.b16 %v5559, %v5555
        %v6496 = vpack.c.b16 %v5560, %v5556
        %v6497 = vpack.c.b16 %v5565, %v5561
        %v6498 = vpack.c.b16 %v5566, %v5562
        %v6499 = vpack.c.b16 %v5567, %v5563
        %v6500 = vpack.c.b16 %v5568, %v5564
        %v6501 = vpack.c.b16 %v5573, %v5569
        %v6502 = vpack.c.b16 %v5574, %v5570
        %v6503 = vpack.c.b16 %v5575, %v5571
        %v6504 = vpack.c.b16 %v5576, %v5572
        %v6505 = vpack.c.b16 %v5581, %v5577
        %v6506 = vpack.c.b16 %v5582, %v5578
        %v6507 = vpack.c.b16 %v5583, %v5579
        %v6508 = vpack.c.b16 %v5584, %v5580
        %v6509 = vpack.c.b16 %v5589, %v5585
        %v6510 = vpack.c.b16 %v5590, %v5586
        %v6511 = vpack.c.b16 %v5591, %v5587
        %v6512 = vpack.c.b16 %v5592, %v5588
        %v6513 = vpack.c.b16 %v5597, %v5593
        %v6514 = vpack.c.b16 %v5598, %v5594
        %v6515 = vpack.c.b16 %v5599, %v5595
        %v6516 = vpack.c.b16 %v5600, %v5596
        %v6517 = vpack.c.b16 %v5605, %v5601
        %v6518 = vpack.c.b16 %v5606, %v5602
        %v6519 = vpack.c.b16 %v5607, %v5603
        %v6520 = vpack.c.b16 %v5608, %v5604
        %v6521 = vpack.c.b16 %v5613, %v5609
        %v6522 = vpack.c.b16 %v5614, %v5610
        %v6523 = vpack.c.b16 %v5615, %v5611
        %v6524 = vpack.c.b16 %v5616, %v5612
        %v6525 = vpack.c.b16 %v5621, %v5617
        %v6526 = vpack.c.b16 %v5622, %v5618
        %v6527 = vpack.c.b16 %v5623, %v5619
        %v6528 = vpack.c.b16 %v5624, %v5620
        %v6529 = vpack.c.b16 %v5629, %v5625
        %v6530 = vpack.c.b16 %v5630, %v5626
        %v6531 = vpack.c.b16 %v5631, %v5627
        %v6532 = vpack.c.b16 %v5632, %v5628
        %v6533 = vpack.c.b16 %v5637, %v5633
        %v6534 = vpack.c.b16 %v5638, %v5634
        %v6535 = vpack.c.b16 %v5639, %v5635
        %v6536 = vpack.c.b16 %v5640, %v5636
        %v6537 = vpack.c.b16 %v5645, %v5641
        %v6538 = vpack.c.b16 %v5646, %v5642
        %v6539 = vpack.c.b16 %v5647, %v5643
        %v6540 = vpack.c.b16 %v5648, %v5644
        %v6541 = vpack.c.b16 %v5653, %v5649
        %v6542 = vpack.c.b16 %v5654, %v5650
        %v6543 = vpack.c.b16 %v5655, %v5651
        %v6544 = vpack.c.b16 %v5656, %v5652
        %v6545 = vpack.c.b16 %v5661, %v5657
        %v6546 = vpack.c.b16 %v5662, %v5658
        %v6547 = vpack.c.b16 %v5663, %v5659
        %v6548 = vpack.c.b16 %v5664, %v5660
        %v6549 = vpack.c.b16 %v5669, %v5665
        %v6550 = vpack.c.b16 %v5670, %v5666
        %v6551 = vpack.c.b16 %v5671, %v5667
        %v6552 = vpack.c.b16 %v5672, %v5668
        %v6553 = vpack.c.b16 %v5677, %v5673
        %v6554 = vpack.c.b16 %v5678, %v5674
        %v6555 = vpack.c.b16 %v5679, %v5675
        %v6556 = vpack.c.b16 %v5680, %v5676
        %v6557 = vpack.c.b16 %v5685, %v5681
        %v6558 = vpack.c.b16 %v5686, %v5682
        %v6559 = vpack.c.b16 %v5687, %v5683
        %v6560 = vpack.c.b16 %v5688, %v5684
        %v6561 = vpack.c.b16 %v5693, %v5689
        %v6562 = vpack.c.b16 %v5694, %v5690
        %v6563 = vpack.c.b16 %v5695, %v5691
        %v6564 = vpack.c.b16 %v5696, %v5692
        %v6565 = vpack.c.b16 %v5701, %v5697
        %v6566 = vpack.c.b16 %v5702, %v5698
        %v6567 = vpack.c.b16 %v5703, %v5699
        %v6568 = vpack.c.b16 %v5704, %v5700
        %v6569 = vpack.c.b16 %v5709, %v5705
        %v6570 = vpack.c.b16 %v5710, %v5706
        %v6571 = vpack.c.b16 %v5711, %v5707
        %v6572 = vpack.c.b16 %v5712, %v5708
        %v6573 = vpack.c.b16 %v5717, %v5713
        %v6574 = vpack.c.b16 %v5718, %v5714
        %v6575 = vpack.c.b16 %v5719, %v5715
        %v6576 = vpack.c.b16 %v5720, %v5716
        %v6577 = vpack.c.b16 %v5725, %v5721
        %v6578 = vpack.c.b16 %v5726, %v5722
        %v6579 = vpack.c.b16 %v5727, %v5723
        %v6580 = vpack.c.b16 %v5728, %v5724
        %v6581 = vpack.c.b16 %v5733, %v5729
        %v6582 = vpack.c.b16 %v5734, %v5730
        %v6583 = vpack.c.b16 %v5735, %v5731
        %v6584 = vpack.c.b16 %v5736, %v5732
        %v6585 = vpack.c.b16 %v5741, %v5737
        %v6586 = vpack.c.b16 %v5742, %v5738
        %v6587 = vpack.c.b16 %v5743, %v5739
        %v6588 = vpack.c.b16 %v5744, %v5740
        %v6589 = vpack.c.b16 %v5749, %v5745
        %v6590 = vpack.c.b16 %v5750, %v5746
        %v6591 = vpack.c.b16 %v5751, %v5747
        %v6592 = vpack.c.b16 %v5752, %v5748
        %v6593 = vpack.c.b16 %v5757, %v5753
        %v6594 = vpack.c.b16 %v5758, %v5754
        %v6595 = vpack.c.b16 %v5759, %v5755
        %v6596 = vpack.c.b16 %v5760, %v5756
        %v6597 = vpack.c.b16 %v5765, %v5761
        %v6598 = vpack.c.b16 %v5766, %v5762
        %v6599 = vpack.c.b16 %v5767, %v5763
        %v6600 = vpack.c.b16 %v5768, %v5764
        %v6601 = vpack.c.b16 %v5773, %v5769
        %v6602 = vpack.c.b16 %v5774, %v5770
        %v6603 = vpack.c.b16 %v5775, %v5771
        %v6604 = vpack.c.b16 %v5776, %v5772
        %v6605 = vpack.c.b16 %v5781, %v5777
        %v6606 = vpack.c.b16 %v5782, %v5778
        %v6607 = vpack.c.b16 %v5783, %v5779
        %v6608 = vpack.c.b16 %v5784, %v5780
        %v6609 = vpack.c.b16 %v5789, %v5785
        %v6610 = vpack.c.b16 %v5790, %v5786
        %v6611 = vpack.c.b16 %v5791, %v5787
        %v6612 = vpack.c.b16 %v5792, %v5788
        %v6613 = vpack.c.b16 %v5797, %v5793
        %v6614 = vpack.c.b16 %v5798, %v5794
        %v6615 = vpack.c.b16 %v5799, %v5795
        %v6616 = vpack.c.b16 %v5800, %v5796
        %v6617 = vpack.c.b16 %v5805, %v5801
        %v6618 = vpack.c.b16 %v5806, %v5802
        %v6619 = vpack.c.b16 %v5807, %v5803
        %v6620 = vpack.c.b16 %v5808, %v5804
        %v6621 = vpack.c.b16 %v5813, %v5809
        %v6622 = vpack.c.b16 %v5814, %v5810
        %v6623 = vpack.c.b16 %v5815, %v5811
        %v6624 = vpack.c.b16 %v5816, %v5812
        %v6625 = vpack.c.b16 %v5821, %v5817
        %v6626 = vpack.c.b16 %v5822, %v5818
        %v6627 = vpack.c.b16 %v5823, %v5819
        %v6628 = vpack.c.b16 %v5824, %v5820
        %v6629 = vpack.c.b16 %v5829, %v5825
        %v6630 = vpack.c.b16 %v5830, %v5826
        %v6631 = vpack.c.b16 %v5831, %v5827
        %v6632 = vpack.c.b16 %v5832, %v5828
        %v6633 = vpack.c.b16 %v5837, %v5833
        %v6634 = vpack.c.b16 %v5838, %v5834
        %v6635 = vpack.c.b16 %v5839, %v5835
        %v6636 = vpack.c.b16 %v5840, %v5836
        %v6637 = vpack.c.b16 %v5845, %v5841
        %v6638 = vpack.c.b16 %v5846, %v5842
        %v6639 = vpack.c.b16 %v5847, %v5843
        %v6640 = vpack.c.b16 %v5848, %v5844
        %v6641 = vpack.c.b16 %v5853, %v5849
        %v6642 = vpack.c.b16 %v5854, %v5850
        %v6643 = vpack.c.b16 %v5855, %v5851
        %v6644 = vpack.c.b16 %v5856, %v5852
        %v6645 = vpack.c.b16 %v5861, %v5857
        %v6646 = vpack.c.b16 %v5862, %v5858
        %v6647 = vpack.c.b16 %v5863, %v5859
        %v6648 = vpack.c.b16 %v5864, %v5860
        %v6649 = vpack.c.b16 %v5869, %v5865
        %v6650 = vpack.c.b16 %v5870, %v5866
        %v6651 = vpack.c.b16 %v5871, %v5867
        %v6652 = vpack.c.b16 %v5872, %v5868
        %v6653 = vpack.c.b16 %v5877, %v5873
        %v6654 = vpack.c.b16 %v5878, %v5874
        %v6655 = vpack.c.b16 %v5879, %v5875
        %v6656 = vpack.c.b16 %v5880, %v5876
        %v6657 = vpack.c.b16 %v5885, %v5881
        %v6658 = vpack.c.b16 %v5886, %v5882
        %v6659 = vpack.c.b16 %v5887, %v5883
        %v6660 = vpack.c.b16 %v5888, %v5884
        %v6661 = vpack.c.b16 %v5893, %v5889
        %v6662 = vpack.c.b16 %v5894, %v5890
        %v6663 = vpack.c.b16 %v5895, %v5891
        %v6664 = vpack.c.b16 %v5896, %v5892
        %v6665 = vpack.c.b16 %v5901, %v5897
        %v6666 = vpack.c.b16 %v5902, %v5898
        %v6667 = vpack.c.b16 %v5903, %v5899
        %v6668 = vpack.c.b16 %v5904, %v5900
        %v6669 = vpack.c.b16 %v5909, %v5905
        %v6670 = vpack.c.b16 %v5910, %v5906
        %v6671 = vpack.c.b16 %v5911, %v5907
        %v6672 = vpack.c.b16 %v5912, %v5908
        %v6673 = vpack.c.b16 %v5917, %v5913
        %v6674 = vpack.c.b16 %v5918, %v5914
        %v6675 = vpack.c.b16 %v5919, %v5915
        %v6676 = vpack.c.b16 %v5920, %v5916
        %v6677 = vpack.c.b16 %v5925, %v5921
        %v6678 = vpack.c.b16 %v5926, %v5922
        %v6679 = vpack.c.b16 %v5927, %v5923
        %v6680 = vpack.c.b16 %v5928, %v5924
        %v6681 = vpack.c.b16 %v5933, %v5929
        %v6682 = vpack.c.b16 %v5934, %v5930
        %v6683 = vpack.c.b16 %v5935, %v5931
        %v6684 = vpack.c.b16 %v5936, %v5932
        %v6685 = vpack.c.b16 %v5941, %v5937
        %v6686 = vpack.c.b16 %v5942, %v5938
        %v6687 = vpack.c.b16 %v5943, %v5939
        %v6688 = vpack.c.b16 %v5944, %v5940
        %v6689 = vpack.c.b16 %v5949, %v5945
        %v6690 = vpack.c.b16 %v5950, %v5946
        %v6691 = vpack.c.b16 %v5951, %v5947
        %v6692 = vpack.c.b16 %v5952, %v5948
        %v6693 = vpack.c.b16 %v5957, %v5953
        %v6694 = vpack.c.b16 %v5958, %v5954
        %v6695 = vpack.c.b16 %v5959, %v5955
        %v6696 = vpack.c.b16 %v5960, %v5956
        %v6697 = vpack.c.b16 %v5965, %v5961
        %v6698 = vpack.c.b16 %v5966, %v5962
        %v6699 = vpack.c.b16 %v5967, %v5963
        %v6700 = vpack.c.b16 %v5968, %v5964
        %v6701 = vpack.c.b16 %v5973, %v5969
        %v6702 = vpack.c.b16 %v5974, %v5970
        %v6703 = vpack.c.b16 %v5975, %v5971
        %v6704 = vpack.c.b16 %v5976, %v5972
        %v6705 = vpack.c.b16 %v5981, %v5977
        %v6706 = vpack.c.b16 %v5982, %v5978
        %v6707 = vpack.c.b16 %v5983, %v5979
        %v6708 = vpack.c.b16 %v5984, %v5980
        %v6709 = vpack.c.b16 %v5989, %v5985
        %v6710 = vpack.c.b16 %v5990, %v5986
        %v6711 = vpack.c.b16 %v5991, %v5987
        %v6712 = vpack.c.b16 %v5992, %v5988
        %v6713 = vpack.c.b16 %v5997, %v5993
        %v6714 = vpack.c.b16 %v5998, %v5994
        %v6715 = vpack.c.b16 %v5999, %v5995
        %v6716 = vpack.c.b16 %v6000, %v5996
        %v6717 = vpack.c.b16 %v6005, %v6001
        %v6718 = vpack.c.b16 %v6006, %v6002
        %v6719 = vpack.c.b16 %v6007, %v6003
        %v6720 = vpack.c.b16 %v6008, %v6004
        %v6721 = vpack.c.b16 %v6013, %v6009
        %v6722 = vpack.c.b16 %v6014, %v6010
        %v6723 = vpack.c.b16 %v6015, %v6011
        %v6724 = vpack.c.b16 %v6016, %v6012
        %v6725 = vpack.c.b16 %v6021, %v6017
        %v6726 = vpack.c.b16 %v6022, %v6018
        %v6727 = vpack.c.b16 %v6023, %v6019
        %v6728 = vpack.c.b16 %v6024, %v6020
        %v6729 = vpack.c.b16 %v6029, %v6025
        %v6730 = vpack.c.b16 %v6030, %v6026
        %v6731 = vpack.c.b16 %v6031, %v6027
        %v6732 = vpack.c.b16 %v6032, %v6028
        %v6733 = vpack.c.b16 %v6037, %v6033
        %v6734 = vpack.c.b16 %v6038, %v6034
        %v6735 = vpack.c.b16 %v6039, %v6035
        %v6736 = vpack.c.b16 %v6040, %v6036
        %v6737 = vpack.c.b16 %v6045, %v6041
        %v6738 = vpack.c.b16 %v6046, %v6042
        %v6739 = vpack.c.b16 %v6047, %v6043
        %v6740 = vpack.c.b16 %v6048, %v6044
        %v6741 = vpack.c.b16 %v6053, %v6049
        %v6742 = vpack.c.b16 %v6054, %v6050
        %v6743 = vpack.c.b16 %v6055, %v6051
        %v6744 = vpack.c.b16 %v6056, %v6052
        %v6745 = vpack.c.b16 %v6061, %v6057
        %v6746 = vpack.c.b16 %v6062, %v6058
        %v6747 = vpack.c.b16 %v6063, %v6059
        %v6748 = vpack.c.b16 %v6064, %v6060
        %v6749 = vpack.c.b16 %v6069, %v6065
        %v6750 = vpack.c.b16 %v6070, %v6066
        %v6751 = vpack.c.b16 %v6071, %v6067
        %v6752 = vpack.c.b16 %v6072, %v6068
        %v6753 = vpack.c.b16 %v6077, %v6073
        %v6754 = vpack.c.b16 %v6078, %v6074
        %v6755 = vpack.c.b16 %v6079, %v6075
        %v6756 = vpack.c.b16 %v6080, %v6076
        %v6757 = vpack.c.b16 %v6085, %v6081
        %v6758 = vpack.c.b16 %v6086, %v6082
        %v6759 = vpack.c.b16 %v6087, %v6083
        %v6760 = vpack.c.b16 %v6088, %v6084
        %v6761 = vpack.c.b16 %v6093, %v6089
        %v6762 = vpack.c.b16 %v6094, %v6090
        %v6763 = vpack.c.b16 %v6095, %v6091
        %v6764 = vpack.c.b16 %v6096, %v6092
        %v6765 = vpack.c.b16 %v6101, %v6097
        %v6766 = vpack.c.b16 %v6102, %v6098
        %v6767 = vpack.c.b16 %v6103, %v6099
        %v6768 = vpack.c.b16 %v6104, %v6100
        %v6769 = vpack.c.b16 %v6109, %v6105
        %v6770 = vpack.c.b16 %v6110, %v6106
        %v6771 = vpack.c.b16 %v6111, %v6107
        %v6772 = vpack.c.b16 %v6112, %v6108
        %v6773 = vpack.c.b16 %v6117, %v6113
        %v6774 = vpack.c.b16 %v6118, %v6114
        %v6775 = vpack.c.b16 %v6119, %v6115
        %v6776 = vpack.c.b16 %v6120, %v6116
        %v6777 = vpack.c.b16 %v6125, %v6121
        %v6778 = vpack.c.b16 %v6126, %v6122
        %v6779 = vpack.c.b16 %v6127, %v6123
        %v6780 = vpack.c.b16 %v6128, %v6124
        %v6781 = vpack.c.b16 %v6133, %v6129
        %v6782 = vpack.c.b16 %v6134, %v6130
        %v6783 = vpack.c.b16 %v6135, %v6131
        %v6784 = vpack.c.b16 %v6136, %v6132
        %v6785 = vpack.c.b16 %v6141, %v6137
        %v6786 = vpack.c.b16 %v6142, %v6138
        %v6787 = vpack.c.b16 %v6143, %v6139
        %v6788 = vpack.c.b16 %v6144, %v6140
        %v6789 = vpack.c.b16 %v6149, %v6145
        %v6790 = vpack.c.b16 %v6150, %v6146
        %v6791 = vpack.c.b16 %v6151, %v6147
        %v6792 = vpack.c.b16 %v6152, %v6148
        %v6793 = vpack.c.b16 %v6157, %v6153
        %v6794 = vpack.c.b16 %v6158, %v6154
        %v6795 = vpack.c.b16 %v6159, %v6155
        %v6796 = vpack.c.b16 %v6160, %v6156
        %v6797 = vpack.c.b16 %v6165, %v6161
        %v6798 = vpack.c.b16 %v6166, %v6162
        %v6799 = vpack.c.b16 %v6167, %v6163
        %v6800 = vpack.c.b16 %v6168, %v6164
        %v6801 = vpack.c.b16 %v6173, %v6169
        %v6802 = vpack.c.b16 %v6174, %v6170
        %v6803 = vpack.c.b16 %v6175, %v6171
        %v6804 = vpack.c.b16 %v6176, %v6172
        %v6805 = vpack.c.b16 %v6181, %v6177
        %v6806 = vpack.c.b16 %v6182, %v6178
        %v6807 = vpack.c.b16 %v6183, %v6179
        %v6808 = vpack.c.b16 %v6184, %v6180
        %v6809 = vpack.c.b16 %v6189, %v6185
        %v6810 = vpack.c.b16 %v6190, %v6186
        %v6811 = vpack.c.b16 %v6191, %v6187
        %v6812 = vpack.c.b16 %v6192, %v6188
        %v6813 = vpack.c.b16 %v6197, %v6193
        %v6814 = vpack.c.b16 %v6198, %v6194
        %v6815 = vpack.c.b16 %v6199, %v6195
        %v6816 = vpack.c.b16 %v6200, %v6196
        %v6817 = vpack.c.b16 %v6205, %v6201
        %v6818 = vpack.c.b16 %v6206, %v6202
        %v6819 = vpack.c.b16 %v6207, %v6203
        %v6820 = vpack.c.b16 %v6208, %v6204
        %v6821 = vpack.c.b16 %v6213, %v6209
        %v6822 = vpack.c.b16 %v6214, %v6210
        %v6823 = vpack.c.b16 %v6215, %v6211
        %v6824 = vpack.c.b16 %v6216, %v6212
        %v6825 = vpack.c.b16 %v6221, %v6217
        %v6826 = vpack.c.b16 %v6222, %v6218
        %v6827 = vpack.c.b16 %v6223, %v6219
        %v6828 = vpack.c.b16 %v6224, %v6220
        %v6829 = vpack.c.b16 %v6229, %v6225
        %v6830 = vpack.c.b16 %v6230, %v6226
        %v6831 = vpack.c.b16 %v6231, %v6227
        %v6832 = vpack.c.b16 %v6232, %v6228
        %v6833 = vpack.c.b16 %v6237, %v6233
        %v6834 = vpack.c.b16 %v6238, %v6234
        %v6835 = vpack.c.b16 %v6239, %v6235
        %v6836 = vpack.c.b16 %v6240, %v6236
        %v6837 = vpack.c.b16 %v6245, %v6241
        %v6838 = vpack.c.b16 %v6246, %v6242
        %v6839 = vpack.c.b16 %v6247, %v6243
        %v6840 = vpack.c.b16 %v6248, %v6244
        %v6841 = vpack.c.b16 %v6253, %v6249
        %v6842 = vpack.c.b16 %v6254, %v6250
        %v6843 = vpack.c.b16 %v6255, %v6251
        %v6844 = vpack.c.b16 %v6256, %v6252
        %v6845 = vpack.c.b16 %v6261, %v6257
        %v6846 = vpack.c.b16 %v6262, %v6258
        %v6847 = vpack.c.b16 %v6263, %v6259
        %v6848 = vpack.c.b16 %v6264, %v6260
        %v6849 = vpack.c.b16 %v6269, %v6265
        %v6850 = vpack.c.b16 %v6270, %v6266
        %v6851 = vpack.c.b16 %v6271, %v6267
        %v6852 = vpack.c.b16 %v6272, %v6268
        %v6853 = vpack.c.b16 %v6277, %v6273
        %v6854 = vpack.c.b16 %v6278, %v6274
        %v6855 = vpack.c.b16 %v6279, %v6275
        %v6856 = vpack.c.b16 %v6280, %v6276
        %7433 = vmatprep.subr.bf16.mxu0 %v6310
        %7434 = vmatpush1.bf16.msra.mxu0 %v6309
        %7435 = vmatprep.subr.bf16.mxu0 %v6306
        %7436 = vmatpush1.bf16.msra.mxu0 %v6305
        %7437 = vmatprep.subr.bf16.mxu0 %v6302
        %7438 = vmatpush1.bf16.msra.mxu0 %v6301
        %7439 = vmatprep.subr.bf16.mxu0 %v6298
        %7440 = vmatpush1.bf16.msra.mxu0 %v6297
        %7441 = vmatprep.subr.bf16.mxu0 %v6294
        %7442 = vmatpush1.bf16.msra.mxu0 %v6293
        %7443 = vmatprep.subr.bf16.mxu0 %v6290
        %7444 = vmatpush1.bf16.msra.mxu0 %v6289
        %7445 = vmatprep.subr.bf16.mxu0 %v6286
        %7446 = vmatpush1.bf16.msra.mxu0 %v6285
        %7447 = vmatprep.subr.bf16.mxu0 %v6282
        %7448 = vmatpush1.bf16.msra.mxu0 %v6281
        %7449 = vmatprep.subr.bf16.mxu0 %v6342
        %7450 = vmatpush2.bf16.msra.mxu0 %v6341
        %7451 = vmatprep.subr.bf16.mxu0 %v6338
        %7452 = vmatpush2.bf16.msra.mxu0 %v6337
        %7453 = vmatprep.subr.bf16.mxu0 %v6334
        %7454 = vmatpush2.bf16.msra.mxu0 %v6333
        %7455 = vmatprep.subr.bf16.mxu0 %v6330
        %7456 = vmatpush2.bf16.msra.mxu0 %v6329
        %7457 = vmatprep.subr.bf16.mxu0 %v6326
        %7458 = vmatpush2.bf16.msra.mxu0 %v6325
        %7459 = vmatprep.subr.bf16.mxu0 %v6322
        %7460 = vmatpush2.bf16.msra.mxu0 %v6321
        %7461 = vmatprep.subr.bf16.mxu0 %v6318
        %7462 = vmatpush2.bf16.msra.mxu0 %v6317
        %7463 = vmatprep.subr.bf16.mxu0 %v6314
        %7464 = vmatpush2.bf16.msra.mxu0 %v6313
        %7465 = vmatprep.mubr.bf16.mxu0 %v4266
        %7466 = vmatmul.mubr.bf16.gmra.mxu0 %v4265
        %v7467 = vpop.f32.mrf.mxu0
        %v7468 = vadd.f32 %v3816, %v7467
        %v7469 = vpop.f32.mrf.mxu0
        %v7470 = vadd.f32 %v3820, %v7469
        %v7471 = vpop.f32.mrf.mxu0
        %v7472 = vadd.f32 %v3816, %v7471
        %v7473 = vpop.f32.mrf.mxu0
        %v7474 = vadd.f32 %v3820, %v7473
        %7475 = vmatprep.mubr.bf16.mxu0 %v4284
        %7476 = vmatmul.mubr.bf16.gmra.mxu0 %v4283
        %v7477 = vpop.f32.mrf.mxu0
        %v7478 = vadd.f32 %v3816, %v7477
        %v7479 = vpop.f32.mrf.mxu0
        %v7480 = vadd.f32 %v3820, %v7479
        %v7481 = vpop.f32.mrf.mxu0
        %v7482 = vadd.f32 %v3816, %v7481
        %v7483 = vpop.f32.mrf.mxu0
        %v7484 = vadd.f32 %v3820, %v7483
        %7485 = vmatprep.mubr.bf16.mxu0 %v4302
        %7486 = vmatmul.mubr.bf16.gmra.mxu0 %v4301
        %v7487 = vpop.f32.mrf.mxu0
        %v7488 = vadd.f32 %v3816, %v7487
        %v7489 = vpop.f32.mrf.mxu0
        %v7490 = vadd.f32 %v3820, %v7489
        %v7491 = vpop.f32.mrf.mxu0
        %v7492 = vadd.f32 %v3816, %v7491
        %v7493 = vpop.f32.mrf.mxu0
        %v7494 = vadd.f32 %v3820, %v7493
        %7495 = vmatprep.mubr.bf16.mxu0 %v4320
        %7496 = vmatmul.mubr.bf16.gmra.mxu0 %v4319
        %v7497 = vpop.f32.mrf.mxu0
        %v7498 = vadd.f32 %v3816, %v7497
        %v7499 = vpop.f32.mrf.mxu0
        %v7500 = vadd.f32 %v3820, %v7499
        %v7501 = vpop.f32.mrf.mxu0
        %v7502 = vadd.f32 %v3816, %v7501
        %v7503 = vpop.f32.mrf.mxu0
        %v7504 = vadd.f32 %v3820, %v7503
        %7505 = vmatprep.mubr.bf16.mxu0 %v4338
        %7506 = vmatmul.mubr.bf16.gmra.mxu0 %v4337
        %v7507 = vpop.f32.mrf.mxu0
        %v7508 = vadd.f32 %v3816, %v7507
        %v7509 = vpop.f32.mrf.mxu0
        %v7510 = vadd.f32 %v3820, %v7509
        %v7511 = vpop.f32.mrf.mxu0
        %v7512 = vadd.f32 %v3816, %v7511
        %v7513 = vpop.f32.mrf.mxu0
        %v7514 = vadd.f32 %v3820, %v7513
        %7515 = vmatprep.mubr.bf16.mxu0 %v4356
        %7516 = vmatmul.mubr.bf16.gmra.mxu0 %v4355
        %v7517 = vpop.f32.mrf.mxu0
        %v7518 = vadd.f32 %v3816, %v7517
        %v7519 = vpop.f32.mrf.mxu0
        %v7520 = vadd.f32 %v3820, %v7519
        %v7521 = vpop.f32.mrf.mxu0
        %v7522 = vadd.f32 %v3816, %v7521
        %v7523 = vpop.f32.mrf.mxu0
        %v7524 = vadd.f32 %v3820, %v7523
        %7525 = vmatprep.mubr.bf16.mxu0 %v4374
        %7526 = vmatmul.mubr.bf16.gmra.mxu0 %v4373
        %v7527 = vpop.f32.mrf.mxu0
        %v7528 = vadd.f32 %v3816, %v7527
        %v7529 = vpop.f32.mrf.mxu0
        %v7530 = vadd.f32 %v3820, %v7529
        %v7531 = vpop.f32.mrf.mxu0
        %v7532 = vadd.f32 %v3816, %v7531
        %v7533 = vpop.f32.mrf.mxu0
        %v7534 = vadd.f32 %v3820, %v7533
        %7535 = vmatprep.mubr.bf16.mxu0 %v4392
        %7536 = vmatmul.mubr.bf16.gmra.mxu0 %v4391
        %v7537 = vpop.f32.mrf.mxu0
        %v7538 = vadd.f32 %v3816, %v7537
        %v7539 = vpop.f32.mrf.mxu0
        %v7540 = vadd.f32 %v3820, %v7539
        %v7541 = vpop.f32.mrf.mxu0
        %v7542 = vadd.f32 %v3816, %v7541
        %v7543 = vpop.f32.mrf.mxu0
        %v7544 = vadd.f32 %v3820, %v7543
        %7545 = vdwg.mxu0
        %7546 = vmatprep.subr.bf16.mxu0 %v6374
        %7547 = vmatpush1.bf16.msra.mxu0 %v6373
        %7548 = vmatprep.subr.bf16.mxu0 %v6370
        %7549 = vmatpush1.bf16.msra.mxu0 %v6369
        %7550 = vmatprep.subr.bf16.mxu0 %v6366
        %7551 = vmatpush1.bf16.msra.mxu0 %v6365
        %7552 = vmatprep.subr.bf16.mxu0 %v6362
        %7553 = vmatpush1.bf16.msra.mxu0 %v6361
        %7554 = vmatprep.subr.bf16.mxu0 %v6358
        %7555 = vmatpush1.bf16.msra.mxu0 %v6357
        %7556 = vmatprep.subr.bf16.mxu0 %v6354
        %7557 = vmatpush1.bf16.msra.mxu0 %v6353
        %7558 = vmatprep.subr.bf16.mxu0 %v6350
        %7559 = vmatpush1.bf16.msra.mxu0 %v6349
        %7560 = vmatprep.subr.bf16.mxu0 %v6346
        %7561 = vmatpush1.bf16.msra.mxu0 %v6345
        %7562 = vmatprep.subr.bf16.mxu0 %v6406
        %7563 = vmatpush2.bf16.msra.mxu0 %v6405
        %7564 = vmatprep.subr.bf16.mxu0 %v6402
        %7565 = vmatpush2.bf16.msra.mxu0 %v6401
        %7566 = vmatprep.subr.bf16.mxu0 %v6398
        %7567 = vmatpush2.bf16.msra.mxu0 %v6397
        %7568 = vmatprep.subr.bf16.mxu0 %v6394
        %7569 = vmatpush2.bf16.msra.mxu0 %v6393
        %7570 = vmatprep.subr.bf16.mxu0 %v6390
        %7571 = vmatpush2.bf16.msra.mxu0 %v6389
        %7572 = vmatprep.subr.bf16.mxu0 %v6386
        %7573 = vmatpush2.bf16.msra.mxu0 %v6385
        %7574 = vmatprep.subr.bf16.mxu0 %v6382
        %7575 = vmatpush2.bf16.msra.mxu0 %v6381
        %7576 = vmatprep.subr.bf16.mxu0 %v6378
        %7577 = vmatpush2.bf16.msra.mxu0 %v6377
        %7578 = vmatprep.mubr.bf16.mxu0 %v4268
        %7579 = vmatmul.mubr.bf16.gmra.mxu0 %v4267
        %v7580 = vpop.f32.mrf.mxu0
        %v7581 = vadd.f32 %v7468, %v7580
        %v7582 = vpop.f32.mrf.mxu0
        %v7583 = vadd.f32 %v7470, %v7582
        %v7584 = vpop.f32.mrf.mxu0
        %v7585 = vadd.f32 %v7472, %v7584
        %v7586 = vpop.f32.mrf.mxu0
        %v7587 = vadd.f32 %v7474, %v7586
        %7588 = vmatprep.mubr.bf16.mxu0 %v4286
        %7589 = vmatmul.mubr.bf16.gmra.mxu0 %v4285
        %v7590 = vpop.f32.mrf.mxu0
        %v7591 = vadd.f32 %v7478, %v7590
        %v7592 = vpop.f32.mrf.mxu0
        %v7593 = vadd.f32 %v7480, %v7592
        %v7594 = vpop.f32.mrf.mxu0
        %v7595 = vadd.f32 %v7482, %v7594
        %v7596 = vpop.f32.mrf.mxu0
        %v7597 = vadd.f32 %v7484, %v7596
        %7598 = vmatprep.mubr.bf16.mxu0 %v4304
        %7599 = vmatmul.mubr.bf16.gmra.mxu0 %v4303
        %v7600 = vpop.f32.mrf.mxu0
        %v7601 = vadd.f32 %v7488, %v7600
        %v7602 = vpop.f32.mrf.mxu0
        %v7603 = vadd.f32 %v7490, %v7602
        %v7604 = vpop.f32.mrf.mxu0
        %v7605 = vadd.f32 %v7492, %v7604
        %v7606 = vpop.f32.mrf.mxu0
        %v7607 = vadd.f32 %v7494, %v7606
        %7608 = vmatprep.mubr.bf16.mxu0 %v4322
        %7609 = vmatmul.mubr.bf16.gmra.mxu0 %v4321
        %v7610 = vpop.f32.mrf.mxu0
        %v7611 = vadd.f32 %v7498, %v7610
        %v7612 = vpop.f32.mrf.mxu0
        %v7613 = vadd.f32 %v7500, %v7612
        %v7614 = vpop.f32.mrf.mxu0
        %v7615 = vadd.f32 %v7502, %v7614
        %v7616 = vpop.f32.mrf.mxu0
        %v7617 = vadd.f32 %v7504, %v7616
        %7618 = vmatprep.mubr.bf16.mxu0 %v4340
        %7619 = vmatmul.mubr.bf16.gmra.mxu0 %v4339
        %v7620 = vpop.f32.mrf.mxu0
        %v7621 = vadd.f32 %v7508, %v7620
        %v7622 = vpop.f32.mrf.mxu0
        %v7623 = vadd.f32 %v7510, %v7622
        %v7624 = vpop.f32.mrf.mxu0
        %v7625 = vadd.f32 %v7512, %v7624
        %v7626 = vpop.f32.mrf.mxu0
        %v7627 = vadd.f32 %v7514, %v7626
        %7628 = vmatprep.mubr.bf16.mxu0 %v4358
        %7629 = vmatmul.mubr.bf16.gmra.mxu0 %v4357
        %v7630 = vpop.f32.mrf.mxu0
        %v7631 = vadd.f32 %v7518, %v7630
        %v7632 = vpop.f32.mrf.mxu0
        %v7633 = vadd.f32 %v7520, %v7632
        %v7634 = vpop.f32.mrf.mxu0
        %v7635 = vadd.f32 %v7522, %v7634
        %v7636 = vpop.f32.mrf.mxu0
        %v7637 = vadd.f32 %v7524, %v7636
        %7638 = vmatprep.mubr.bf16.mxu0 %v4376
        %7639 = vmatmul.mubr.bf16.gmra.mxu0 %v4375
        %v7640 = vpop.f32.mrf.mxu0
        %v7641 = vadd.f32 %v7528, %v7640
        %v7642 = vpop.f32.mrf.mxu0
        %v7643 = vadd.f32 %v7530, %v7642
        %v7644 = vpop.f32.mrf.mxu0
        %v7645 = vadd.f32 %v7532, %v7644
        %v7646 = vpop.f32.mrf.mxu0
        %v7647 = vadd.f32 %v7534, %v7646
        %7648 = vmatprep.mubr.bf16.mxu0 %v4394
        %7649 = vmatmul.mubr.bf16.gmra.mxu0 %v4393
        %v7650 = vpop.f32.mrf.mxu0
        %v7651 = vadd.f32 %v7538, %v7650
        %v7652 = vpop.f32.mrf.mxu0
        %v7653 = vadd.f32 %v7540, %v7652
        %v7654 = vpop.f32.mrf.mxu0
        %v7655 = vadd.f32 %v7542, %v7654
        %v7656 = vpop.f32.mrf.mxu0
        %v7657 = vadd.f32 %v7544, %v7656
        %7658 = vdwg.mxu0
        %7659 = vmatprep.subr.bf16.mxu0 %v6438
        %7660 = vmatpush1.bf16.msra.mxu0 %v6437
        %7661 = vmatprep.subr.bf16.mxu0 %v6434
        %7662 = vmatpush1.bf16.msra.mxu0 %v6433
        %7663 = vmatprep.subr.bf16.mxu0 %v6430
        %7664 = vmatpush1.bf16.msra.mxu0 %v6429
        %7665 = vmatprep.subr.bf16.mxu0 %v6426
        %7666 = vmatpush1.bf16.msra.mxu0 %v6425
        %7667 = vmatprep.subr.bf16.mxu0 %v6422
        %7668 = vmatpush1.bf16.msra.mxu0 %v6421
        %7669 = vmatprep.subr.bf16.mxu0 %v6418
        %7670 = vmatpush1.bf16.msra.mxu0 %v6417
        %7671 = vmatprep.subr.bf16.mxu0 %v6414
        %7672 = vmatpush1.bf16.msra.mxu0 %v6413
        %7673 = vmatprep.subr.bf16.mxu0 %v6410
        %7674 = vmatpush1.bf16.msra.mxu0 %v6409
        %7675 = vmatprep.subr.bf16.mxu0 %v6470
        %7676 = vmatpush2.bf16.msra.mxu0 %v6469
        %7677 = vmatprep.subr.bf16.mxu0 %v6466
        %7678 = vmatpush2.bf16.msra.mxu0 %v6465
        %7679 = vmatprep.subr.bf16.mxu0 %v6462
        %7680 = vmatpush2.bf16.msra.mxu0 %v6461
        %7681 = vmatprep.subr.bf16.mxu0 %v6458
        %7682 = vmatpush2.bf16.msra.mxu0 %v6457
        %7683 = vmatprep.subr.bf16.mxu0 %v6454
        %7684 = vmatpush2.bf16.msra.mxu0 %v6453
        %7685 = vmatprep.subr.bf16.mxu0 %v6450
        %7686 = vmatpush2.bf16.msra.mxu0 %v6449
        %7687 = vmatprep.subr.bf16.mxu0 %v6446
        %7688 = vmatpush2.bf16.msra.mxu0 %v6445
        %7689 = vmatprep.subr.bf16.mxu0 %v6442
        %7690 = vmatpush2.bf16.msra.mxu0 %v6441
        %7691 = vmatprep.mubr.bf16.mxu0 %v4270
        %7692 = vmatmul.mubr.bf16.gmra.mxu0 %v4269
        %v7693 = vpop.f32.mrf.mxu0
        %v7694 = vadd.f32 %v7581, %v7693
        %v7695 = vpop.f32.mrf.mxu0
        %v7696 = vadd.f32 %v7583, %v7695
        %v7697 = vpop.f32.mrf.mxu0
        %v7698 = vadd.f32 %v7585, %v7697
        %v7699 = vpop.f32.mrf.mxu0
        %v7700 = vadd.f32 %v7587, %v7699
        %7701 = vmatprep.mubr.bf16.mxu0 %v4288
        %7702 = vmatmul.mubr.bf16.gmra.mxu0 %v4287
        %v7703 = vpop.f32.mrf.mxu0
        %v7704 = vadd.f32 %v7591, %v7703
        %v7705 = vpop.f32.mrf.mxu0
        %v7706 = vadd.f32 %v7593, %v7705
        %v7707 = vpop.f32.mrf.mxu0
        %v7708 = vadd.f32 %v7595, %v7707
        %v7709 = vpop.f32.mrf.mxu0
        %v7710 = vadd.f32 %v7597, %v7709
        %7711 = vmatprep.mubr.bf16.mxu0 %v4306
        %7712 = vmatmul.mubr.bf16.gmra.mxu0 %v4305
        %v7713 = vpop.f32.mrf.mxu0
        %v7714 = vadd.f32 %v7601, %v7713
        %v7715 = vpop.f32.mrf.mxu0
        %v7716 = vadd.f32 %v7603, %v7715
        %v7717 = vpop.f32.mrf.mxu0
        %v7718 = vadd.f32 %v7605, %v7717
        %v7719 = vpop.f32.mrf.mxu0
        %v7720 = vadd.f32 %v7607, %v7719
        %7721 = vmatprep.mubr.bf16.mxu0 %v4324
        %7722 = vmatmul.mubr.bf16.gmra.mxu0 %v4323
        %v7723 = vpop.f32.mrf.mxu0
        %v7724 = vadd.f32 %v7611, %v7723
        %v7725 = vpop.f32.mrf.mxu0
        %v7726 = vadd.f32 %v7613, %v7725
        %v7727 = vpop.f32.mrf.mxu0
        %v7728 = vadd.f32 %v7615, %v7727
        %v7729 = vpop.f32.mrf.mxu0
        %v7730 = vadd.f32 %v7617, %v7729
        %7731 = vmatprep.mubr.bf16.mxu0 %v4342
        %7732 = vmatmul.mubr.bf16.gmra.mxu0 %v4341
        %v7733 = vpop.f32.mrf.mxu0
        %v7734 = vadd.f32 %v7621, %v7733
        %v7735 = vpop.f32.mrf.mxu0
        %v7736 = vadd.f32 %v7623, %v7735
        %v7737 = vpop.f32.mrf.mxu0
        %v7738 = vadd.f32 %v7625, %v7737
        %v7739 = vpop.f32.mrf.mxu0
        %v7740 = vadd.f32 %v7627, %v7739
        %7741 = vmatprep.mubr.bf16.mxu0 %v4360
        %7742 = vmatmul.mubr.bf16.gmra.mxu0 %v4359
        %v7743 = vpop.f32.mrf.mxu0
        %v7744 = vadd.f32 %v7631, %v7743
        %v7745 = vpop.f32.mrf.mxu0
        %v7746 = vadd.f32 %v7633, %v7745
        %v7747 = vpop.f32.mrf.mxu0
        %v7748 = vadd.f32 %v7635, %v7747
        %v7749 = vpop.f32.mrf.mxu0
        %v7750 = vadd.f32 %v7637, %v7749
        %7751 = vmatprep.mubr.bf16.mxu0 %v4378
        %7752 = vmatmul.mubr.bf16.gmra.mxu0 %v4377
        %v7753 = vpop.f32.mrf.mxu0
        %v7754 = vadd.f32 %v7641, %v7753
        %v7755 = vpop.f32.mrf.mxu0
        %v7756 = vadd.f32 %v7643, %v7755
        %v7757 = vpop.f32.mrf.mxu0
        %v7758 = vadd.f32 %v7645, %v7757
        %v7759 = vpop.f32.mrf.mxu0
        %v7760 = vadd.f32 %v7647, %v7759
        %7761 = vmatprep.mubr.bf16.mxu0 %v4396
        %7762 = vmatmul.mubr.bf16.gmra.mxu0 %v4395
        %v7763 = vpop.f32.mrf.mxu0
        %v7764 = vadd.f32 %v7651, %v7763
        %v7765 = vpop.f32.mrf.mxu0
        %v7766 = vadd.f32 %v7653, %v7765
        %v7767 = vpop.f32.mrf.mxu0
        %v7768 = vadd.f32 %v7655, %v7767
        %v7769 = vpop.f32.mrf.mxu0
        %v7770 = vadd.f32 %v7657, %v7769
        %7771 = vdwg.mxu0
        %7772 = vmatprep.subr.bf16.mxu0 %v6502
        %7773 = vmatpush1.bf16.msra.mxu0 %v6501
        %7774 = vmatprep.subr.bf16.mxu0 %v6498
        %7775 = vmatpush1.bf16.msra.mxu0 %v6497
        %7776 = vmatprep.subr.bf16.mxu0 %v6494
        %7777 = vmatpush1.bf16.msra.mxu0 %v6493
        %7778 = vmatprep.subr.bf16.mxu0 %v6490
        %7779 = vmatpush1.bf16.msra.mxu0 %v6489
        %7780 = vmatprep.subr.bf16.mxu0 %v6486
        %7781 = vmatpush1.bf16.msra.mxu0 %v6485
        %7782 = vmatprep.subr.bf16.mxu0 %v6482
        %7783 = vmatpush1.bf16.msra.mxu0 %v6481
        %7784 = vmatprep.subr.bf16.mxu0 %v6478
        %7785 = vmatpush1.bf16.msra.mxu0 %v6477
        %7786 = vmatprep.subr.bf16.mxu0 %v6474
        %7787 = vmatpush1.bf16.msra.mxu0 %v6473
        %7788 = vmatprep.subr.bf16.mxu0 %v6534
        %7789 = vmatpush2.bf16.msra.mxu0 %v6533
        %7790 = vmatprep.subr.bf16.mxu0 %v6530
        %7791 = vmatpush2.bf16.msra.mxu0 %v6529
        %7792 = vmatprep.subr.bf16.mxu0 %v6526
        %7793 = vmatpush2.bf16.msra.mxu0 %v6525
        %7794 = vmatprep.subr.bf16.mxu0 %v6522
        %7795 = vmatpush2.bf16.msra.mxu0 %v6521
        %7796 = vmatprep.subr.bf16.mxu0 %v6518
        %7797 = vmatpush2.bf16.msra.mxu0 %v6517
        %7798 = vmatprep.subr.bf16.mxu0 %v6514
        %7799 = vmatpush2.bf16.msra.mxu0 %v6513
        %7800 = vmatprep.subr.bf16.mxu0 %v6510
        %7801 = vmatpush2.bf16.msra.mxu0 %v6509
        %7802 = vmatprep.subr.bf16.mxu0 %v6506
        %7803 = vmatpush2.bf16.msra.mxu0 %v6505
        %7804 = vmatprep.mubr.bf16.mxu0 %v4272
        %7805 = vmatmul.mubr.bf16.gmra.mxu0 %v4271
        %v7806 = vpop.f32.mrf.mxu0
        %v7807 = vadd.f32 %v7694, %v7806
        %v7808 = vpop.f32.mrf.mxu0
        %v7809 = vadd.f32 %v7696, %v7808
        %v7810 = vpop.f32.mrf.mxu0
        %v7811 = vadd.f32 %v7698, %v7810
        %v7812 = vpop.f32.mrf.mxu0
        %v7813 = vadd.f32 %v7700, %v7812
        %7814 = vmatprep.mubr.bf16.mxu0 %v4290
        %7815 = vmatmul.mubr.bf16.gmra.mxu0 %v4289
        %v7816 = vpop.f32.mrf.mxu0
        %v7817 = vadd.f32 %v7704, %v7816
        %v7818 = vpop.f32.mrf.mxu0
        %v7819 = vadd.f32 %v7706, %v7818
        %v7820 = vpop.f32.mrf.mxu0
        %v7821 = vadd.f32 %v7708, %v7820
        %v7822 = vpop.f32.mrf.mxu0
        %v7823 = vadd.f32 %v7710, %v7822
        %7824 = vmatprep.mubr.bf16.mxu0 %v4308
        %7825 = vmatmul.mubr.bf16.gmra.mxu0 %v4307
        %v7826 = vpop.f32.mrf.mxu0
        %v7827 = vadd.f32 %v7714, %v7826
        %v7828 = vpop.f32.mrf.mxu0
        %v7829 = vadd.f32 %v7716, %v7828
        %v7830 = vpop.f32.mrf.mxu0
        %v7831 = vadd.f32 %v7718, %v7830
        %v7832 = vpop.f32.mrf.mxu0
        %v7833 = vadd.f32 %v7720, %v7832
        %7834 = vmatprep.mubr.bf16.mxu0 %v4326
        %7835 = vmatmul.mubr.bf16.gmra.mxu0 %v4325
        %v7836 = vpop.f32.mrf.mxu0
        %v7837 = vadd.f32 %v7724, %v7836
        %v7838 = vpop.f32.mrf.mxu0
        %v7839 = vadd.f32 %v7726, %v7838
        %v7840 = vpop.f32.mrf.mxu0
        %v7841 = vadd.f32 %v7728, %v7840
        %v7842 = vpop.f32.mrf.mxu0
        %v7843 = vadd.f32 %v7730, %v7842
        %7844 = vmatprep.mubr.bf16.mxu0 %v4344
        %7845 = vmatmul.mubr.bf16.gmra.mxu0 %v4343
        %v7846 = vpop.f32.mrf.mxu0
        %v7847 = vadd.f32 %v7734, %v7846
        %v7848 = vpop.f32.mrf.mxu0
        %v7849 = vadd.f32 %v7736, %v7848
        %v7850 = vpop.f32.mrf.mxu0
        %v7851 = vadd.f32 %v7738, %v7850
        %v7852 = vpop.f32.mrf.mxu0
        %v7853 = vadd.f32 %v7740, %v7852
        %7854 = vmatprep.mubr.bf16.mxu0 %v4362
        %7855 = vmatmul.mubr.bf16.gmra.mxu0 %v4361
        %v7856 = vpop.f32.mrf.mxu0
        %v7857 = vadd.f32 %v7744, %v7856
        %v7858 = vpop.f32.mrf.mxu0
        %v7859 = vadd.f32 %v7746, %v7858
        %v7860 = vpop.f32.mrf.mxu0
        %v7861 = vadd.f32 %v7748, %v7860
        %v7862 = vpop.f32.mrf.mxu0
        %v7863 = vadd.f32 %v7750, %v7862
        %7864 = vmatprep.mubr.bf16.mxu0 %v4380
        %7865 = vmatmul.mubr.bf16.gmra.mxu0 %v4379
        %v7866 = vpop.f32.mrf.mxu0
        %v7867 = vadd.f32 %v7754, %v7866
        %v7868 = vpop.f32.mrf.mxu0
        %v7869 = vadd.f32 %v7756, %v7868
        %v7870 = vpop.f32.mrf.mxu0
        %v7871 = vadd.f32 %v7758, %v7870
        %v7872 = vpop.f32.mrf.mxu0
        %v7873 = vadd.f32 %v7760, %v7872
        %7874 = vmatprep.mubr.bf16.mxu0 %v4398
        %7875 = vmatmul.mubr.bf16.gmra.mxu0 %v4397
        %v7876 = vpop.f32.mrf.mxu0
        %v7877 = vadd.f32 %v7764, %v7876
        %v7878 = vpop.f32.mrf.mxu0
        %v7879 = vadd.f32 %v7766, %v7878
        %v7880 = vpop.f32.mrf.mxu0
        %v7881 = vadd.f32 %v7768, %v7880
        %v7882 = vpop.f32.mrf.mxu0
        %v7883 = vadd.f32 %v7770, %v7882
        %7884 = vdwg.mxu0
        %7885 = vmatprep.subr.bf16.mxu0 %v6566
        %7886 = vmatpush1.bf16.msra.mxu0 %v6565
        %7887 = vmatprep.subr.bf16.mxu0 %v6562
        %7888 = vmatpush1.bf16.msra.mxu0 %v6561
        %7889 = vmatprep.subr.bf16.mxu0 %v6558
        %7890 = vmatpush1.bf16.msra.mxu0 %v6557
        %7891 = vmatprep.subr.bf16.mxu0 %v6554
        %7892 = vmatpush1.bf16.msra.mxu0 %v6553
        %7893 = vmatprep.subr.bf16.mxu0 %v6550
        %7894 = vmatpush1.bf16.msra.mxu0 %v6549
        %7895 = vmatprep.subr.bf16.mxu0 %v6546
        %7896 = vmatpush1.bf16.msra.mxu0 %v6545
        %7897 = vmatprep.subr.bf16.mxu0 %v6542
        %7898 = vmatpush1.bf16.msra.mxu0 %v6541
        %7899 = vmatprep.subr.bf16.mxu0 %v6538
        %7900 = vmatpush1.bf16.msra.mxu0 %v6537
        %7901 = vmatprep.subr.bf16.mxu0 %v6598
        %7902 = vmatpush2.bf16.msra.mxu0 %v6597
        %7903 = vmatprep.subr.bf16.mxu0 %v6594
        %7904 = vmatpush2.bf16.msra.mxu0 %v6593
        %7905 = vmatprep.subr.bf16.mxu0 %v6590
        %7906 = vmatpush2.bf16.msra.mxu0 %v6589
        %7907 = vmatprep.subr.bf16.mxu0 %v6586
        %7908 = vmatpush2.bf16.msra.mxu0 %v6585
        %7909 = vmatprep.subr.bf16.mxu0 %v6582
        %7910 = vmatpush2.bf16.msra.mxu0 %v6581
        %7911 = vmatprep.subr.bf16.mxu0 %v6578
        %7912 = vmatpush2.bf16.msra.mxu0 %v6577
        %7913 = vmatprep.subr.bf16.mxu0 %v6574
        %7914 = vmatpush2.bf16.msra.mxu0 %v6573
        %7915 = vmatprep.subr.bf16.mxu0 %v6570
        %7916 = vmatpush2.bf16.msra.mxu0 %v6569
        %7917 = vmatprep.mubr.bf16.mxu0 %v4274
        %7918 = vmatmul.mubr.bf16.gmra.mxu0 %v4273
        %v7919 = vpop.f32.mrf.mxu0
        %v7920 = vadd.f32 %v7807, %v7919
        %v7921 = vpop.f32.mrf.mxu0
        %v7922 = vadd.f32 %v7809, %v7921
        %v7923 = vpop.f32.mrf.mxu0
        %v7924 = vadd.f32 %v7811, %v7923
        %v7925 = vpop.f32.mrf.mxu0
        %v7926 = vadd.f32 %v7813, %v7925
        %7927 = vmatprep.mubr.bf16.mxu0 %v4292
        %7928 = vmatmul.mubr.bf16.gmra.mxu0 %v4291
        %v7929 = vpop.f32.mrf.mxu0
        %v7930 = vadd.f32 %v7817, %v7929
        %v7931 = vpop.f32.mrf.mxu0
        %v7932 = vadd.f32 %v7819, %v7931
        %v7933 = vpop.f32.mrf.mxu0
        %v7934 = vadd.f32 %v7821, %v7933
        %v7935 = vpop.f32.mrf.mxu0
        %v7936 = vadd.f32 %v7823, %v7935
        %7937 = vmatprep.mubr.bf16.mxu0 %v4310
        %7938 = vmatmul.mubr.bf16.gmra.mxu0 %v4309
        %v7939 = vpop.f32.mrf.mxu0
        %v7940 = vadd.f32 %v7827, %v7939
        %v7941 = vpop.f32.mrf.mxu0
        %v7942 = vadd.f32 %v7829, %v7941
        %v7943 = vpop.f32.mrf.mxu0
        %v7944 = vadd.f32 %v7831, %v7943
        %v7945 = vpop.f32.mrf.mxu0
        %v7946 = vadd.f32 %v7833, %v7945
        %7947 = vmatprep.mubr.bf16.mxu0 %v4328
        %7948 = vmatmul.mubr.bf16.gmra.mxu0 %v4327
        %v7949 = vpop.f32.mrf.mxu0
        %v7950 = vadd.f32 %v7837, %v7949
        %v7951 = vpop.f32.mrf.mxu0
        %v7952 = vadd.f32 %v7839, %v7951
        %v7953 = vpop.f32.mrf.mxu0
        %v7954 = vadd.f32 %v7841, %v7953
        %v7955 = vpop.f32.mrf.mxu0
        %v7956 = vadd.f32 %v7843, %v7955
        %7957 = vmatprep.mubr.bf16.mxu0 %v4346
        %7958 = vmatmul.mubr.bf16.gmra.mxu0 %v4345
        %v7959 = vpop.f32.mrf.mxu0
        %v7960 = vadd.f32 %v7847, %v7959
        %v7961 = vpop.f32.mrf.mxu0
        %v7962 = vadd.f32 %v7849, %v7961
        %v7963 = vpop.f32.mrf.mxu0
        %v7964 = vadd.f32 %v7851, %v7963
        %v7965 = vpop.f32.mrf.mxu0
        %v7966 = vadd.f32 %v7853, %v7965
        %7967 = vmatprep.mubr.bf16.mxu0 %v4364
        %7968 = vmatmul.mubr.bf16.gmra.mxu0 %v4363
        %v7969 = vpop.f32.mrf.mxu0
        %v7970 = vadd.f32 %v7857, %v7969
        %v7971 = vpop.f32.mrf.mxu0
        %v7972 = vadd.f32 %v7859, %v7971
        %v7973 = vpop.f32.mrf.mxu0
        %v7974 = vadd.f32 %v7861, %v7973
        %v7975 = vpop.f32.mrf.mxu0
        %v7976 = vadd.f32 %v7863, %v7975
        %7977 = vmatprep.mubr.bf16.mxu0 %v4382
        %7978 = vmatmul.mubr.bf16.gmra.mxu0 %v4381
        %v7979 = vpop.f32.mrf.mxu0
        %v7980 = vadd.f32 %v7867, %v7979
        %v7981 = vpop.f32.mrf.mxu0
        %v7982 = vadd.f32 %v7869, %v7981
        %v7983 = vpop.f32.mrf.mxu0
        %v7984 = vadd.f32 %v7871, %v7983
        %v7985 = vpop.f32.mrf.mxu0
        %v7986 = vadd.f32 %v7873, %v7985
        %7987 = vmatprep.mubr.bf16.mxu0 %v4400
        %7988 = vmatmul.mubr.bf16.gmra.mxu0 %v4399
        %v7989 = vpop.f32.mrf.mxu0
        %v7990 = vadd.f32 %v7877, %v7989
        %v7991 = vpop.f32.mrf.mxu0
        %v7992 = vadd.f32 %v7879, %v7991
        %v7993 = vpop.f32.mrf.mxu0
        %v7994 = vadd.f32 %v7881, %v7993
        %v7995 = vpop.f32.mrf.mxu0
        %v7996 = vadd.f32 %v7883, %v7995
        %7997 = vdwg.mxu0
        %7998 = vmatprep.subr.bf16.mxu0 %v6630
        %7999 = vmatpush1.bf16.msra.mxu0 %v6629
        %8000 = vmatprep.subr.bf16.mxu0 %v6626
        %8001 = vmatpush1.bf16.msra.mxu0 %v6625
        %8002 = vmatprep.subr.bf16.mxu0 %v6622
        %8003 = vmatpush1.bf16.msra.mxu0 %v6621
        %8004 = vmatprep.subr.bf16.mxu0 %v6618
        %8005 = vmatpush1.bf16.msra.mxu0 %v6617
        %8006 = vmatprep.subr.bf16.mxu0 %v6614
        %8007 = vmatpush1.bf16.msra.mxu0 %v6613
        %8008 = vmatprep.subr.bf16.mxu0 %v6610
        %8009 = vmatpush1.bf16.msra.mxu0 %v6609
        %8010 = vmatprep.subr.bf16.mxu0 %v6606
        %8011 = vmatpush1.bf16.msra.mxu0 %v6605
        %8012 = vmatprep.subr.bf16.mxu0 %v6602
        %8013 = vmatpush1.bf16.msra.mxu0 %v6601
        %8014 = vmatprep.subr.bf16.mxu0 %v6662
        %8015 = vmatpush2.bf16.msra.mxu0 %v6661
        %8016 = vmatprep.subr.bf16.mxu0 %v6658
        %8017 = vmatpush2.bf16.msra.mxu0 %v6657
        %8018 = vmatprep.subr.bf16.mxu0 %v6654
        %8019 = vmatpush2.bf16.msra.mxu0 %v6653
        %8020 = vmatprep.subr.bf16.mxu0 %v6650
        %8021 = vmatpush2.bf16.msra.mxu0 %v6649
        %8022 = vmatprep.subr.bf16.mxu0 %v6646
        %8023 = vmatpush2.bf16.msra.mxu0 %v6645
        %8024 = vmatprep.subr.bf16.mxu0 %v6642
        %8025 = vmatpush2.bf16.msra.mxu0 %v6641
        %8026 = vmatprep.subr.bf16.mxu0 %v6638
        %8027 = vmatpush2.bf16.msra.mxu0 %v6637
        %8028 = vmatprep.subr.bf16.mxu0 %v6634
        %8029 = vmatpush2.bf16.msra.mxu0 %v6633
        %8030 = vmatprep.mubr.bf16.mxu0 %v4276
        %8031 = vmatmul.mubr.bf16.gmra.mxu0 %v4275
        %v8032 = vpop.f32.mrf.mxu0
        %v8033 = vadd.f32 %v7920, %v8032
        %v8034 = vpop.f32.mrf.mxu0
        %v8035 = vadd.f32 %v7922, %v8034
        %v8036 = vpop.f32.mrf.mxu0
        %v8037 = vadd.f32 %v7924, %v8036
        %v8038 = vpop.f32.mrf.mxu0
        %v8039 = vadd.f32 %v7926, %v8038
        %8040 = vmatprep.mubr.bf16.mxu0 %v4294
        %8041 = vmatmul.mubr.bf16.gmra.mxu0 %v4293
        %v8042 = vpop.f32.mrf.mxu0
        %v8043 = vadd.f32 %v7930, %v8042
        %v8044 = vpop.f32.mrf.mxu0
        %v8045 = vadd.f32 %v7932, %v8044
        %v8046 = vpop.f32.mrf.mxu0
        %v8047 = vadd.f32 %v7934, %v8046
        %v8048 = vpop.f32.mrf.mxu0
        %v8049 = vadd.f32 %v7936, %v8048
        %8050 = vmatprep.mubr.bf16.mxu0 %v4312
        %8051 = vmatmul.mubr.bf16.gmra.mxu0 %v4311
        %v8052 = vpop.f32.mrf.mxu0
        %v8053 = vadd.f32 %v7940, %v8052
        %v8054 = vpop.f32.mrf.mxu0
        %v8055 = vadd.f32 %v7942, %v8054
        %v8056 = vpop.f32.mrf.mxu0
        %v8057 = vadd.f32 %v7944, %v8056
        %v8058 = vpop.f32.mrf.mxu0
        %v8059 = vadd.f32 %v7946, %v8058
        %8060 = vmatprep.mubr.bf16.mxu0 %v4330
        %8061 = vmatmul.mubr.bf16.gmra.mxu0 %v4329
        %v8062 = vpop.f32.mrf.mxu0
        %v8063 = vadd.f32 %v7950, %v8062
        %v8064 = vpop.f32.mrf.mxu0
        %v8065 = vadd.f32 %v7952, %v8064
        %v8066 = vpop.f32.mrf.mxu0
        %v8067 = vadd.f32 %v7954, %v8066
        %v8068 = vpop.f32.mrf.mxu0
        %v8069 = vadd.f32 %v7956, %v8068
        %8070 = vmatprep.mubr.bf16.mxu0 %v4348
        %8071 = vmatmul.mubr.bf16.gmra.mxu0 %v4347
        %v8072 = vpop.f32.mrf.mxu0
        %v8073 = vadd.f32 %v7960, %v8072
        %v8074 = vpop.f32.mrf.mxu0
        %v8075 = vadd.f32 %v7962, %v8074
        %v8076 = vpop.f32.mrf.mxu0
        %v8077 = vadd.f32 %v7964, %v8076
        %v8078 = vpop.f32.mrf.mxu0
        %v8079 = vadd.f32 %v7966, %v8078
        %8080 = vmatprep.mubr.bf16.mxu0 %v4366
        %8081 = vmatmul.mubr.bf16.gmra.mxu0 %v4365
        %v8082 = vpop.f32.mrf.mxu0
        %v8083 = vadd.f32 %v7970, %v8082
        %v8084 = vpop.f32.mrf.mxu0
        %v8085 = vadd.f32 %v7972, %v8084
        %v8086 = vpop.f32.mrf.mxu0
        %v8087 = vadd.f32 %v7974, %v8086
        %v8088 = vpop.f32.mrf.mxu0
        %v8089 = vadd.f32 %v7976, %v8088
        %8090 = vmatprep.mubr.bf16.mxu0 %v4384
        %8091 = vmatmul.mubr.bf16.gmra.mxu0 %v4383
        %v8092 = vpop.f32.mrf.mxu0
        %v8093 = vadd.f32 %v7980, %v8092
        %v8094 = vpop.f32.mrf.mxu0
        %v8095 = vadd.f32 %v7982, %v8094
        %v8096 = vpop.f32.mrf.mxu0
        %v8097 = vadd.f32 %v7984, %v8096
        %v8098 = vpop.f32.mrf.mxu0
        %v8099 = vadd.f32 %v7986, %v8098
        %8100 = vmatprep.mubr.bf16.mxu0 %v4402
        %8101 = vmatmul.mubr.bf16.gmra.mxu0 %v4401
        %v8102 = vpop.f32.mrf.mxu0
        %v8103 = vadd.f32 %v7990, %v8102
        %v8104 = vpop.f32.mrf.mxu0
        %v8105 = vadd.f32 %v7992, %v8104
        %v8106 = vpop.f32.mrf.mxu0
        %v8107 = vadd.f32 %v7994, %v8106
        %v8108 = vpop.f32.mrf.mxu0
        %v8109 = vadd.f32 %v7996, %v8108
        %8110 = vdwg.mxu0
        %8111 = vmatprep.subr.bf16.mxu0 %v6694
        %8112 = vmatpush1.bf16.msra.mxu0 %v6693
        %8113 = vmatprep.subr.bf16.mxu0 %v6690
        %8114 = vmatpush1.bf16.msra.mxu0 %v6689
        %8115 = vmatprep.subr.bf16.mxu0 %v6686
        %8116 = vmatpush1.bf16.msra.mxu0 %v6685
        %8117 = vmatprep.subr.bf16.mxu0 %v6682
        %8118 = vmatpush1.bf16.msra.mxu0 %v6681
        %8119 = vmatprep.subr.bf16.mxu0 %v6678
        %8120 = vmatpush1.bf16.msra.mxu0 %v6677
        %8121 = vmatprep.subr.bf16.mxu0 %v6674
        %8122 = vmatpush1.bf16.msra.mxu0 %v6673
        %8123 = vmatprep.subr.bf16.mxu0 %v6670
        %8124 = vmatpush1.bf16.msra.mxu0 %v6669
        %8125 = vmatprep.subr.bf16.mxu0 %v6666
        %8126 = vmatpush1.bf16.msra.mxu0 %v6665
        %8127 = vmatprep.subr.bf16.mxu0 %v6726
        %8128 = vmatpush2.bf16.msra.mxu0 %v6725
        %8129 = vmatprep.subr.bf16.mxu0 %v6722
        %8130 = vmatpush2.bf16.msra.mxu0 %v6721
        %8131 = vmatprep.subr.bf16.mxu0 %v6718
        %8132 = vmatpush2.bf16.msra.mxu0 %v6717
        %8133 = vmatprep.subr.bf16.mxu0 %v6714
        %8134 = vmatpush2.bf16.msra.mxu0 %v6713
        %8135 = vmatprep.subr.bf16.mxu0 %v6710
        %8136 = vmatpush2.bf16.msra.mxu0 %v6709
        %8137 = vmatprep.subr.bf16.mxu0 %v6706
        %8138 = vmatpush2.bf16.msra.mxu0 %v6705
        %8139 = vmatprep.subr.bf16.mxu0 %v6702
        %8140 = vmatpush2.bf16.msra.mxu0 %v6701
        %8141 = vmatprep.subr.bf16.mxu0 %v6698
        %8142 = vmatpush2.bf16.msra.mxu0 %v6697
        %8143 = vmatprep.mubr.bf16.mxu0 %v4278
        %8144 = vmatmul.mubr.bf16.gmra.mxu0 %v4277
        %v8145 = vpop.f32.mrf.mxu0
        %v8146 = vadd.f32 %v8033, %v8145
        %v8147 = vpop.f32.mrf.mxu0
        %v8148 = vadd.f32 %v8035, %v8147
        %v8149 = vpop.f32.mrf.mxu0
        %v8150 = vadd.f32 %v8037, %v8149
        %v8151 = vpop.f32.mrf.mxu0
        %v8152 = vadd.f32 %v8039, %v8151
        %8153 = vmatprep.mubr.bf16.mxu0 %v4296
        %8154 = vmatmul.mubr.bf16.gmra.mxu0 %v4295
        %v8155 = vpop.f32.mrf.mxu0
        %v8156 = vadd.f32 %v8043, %v8155
        %v8157 = vpop.f32.mrf.mxu0
        %v8158 = vadd.f32 %v8045, %v8157
        %v8159 = vpop.f32.mrf.mxu0
        %v8160 = vadd.f32 %v8047, %v8159
        %v8161 = vpop.f32.mrf.mxu0
        %v8162 = vadd.f32 %v8049, %v8161
        %8163 = vmatprep.mubr.bf16.mxu0 %v4314
        %8164 = vmatmul.mubr.bf16.gmra.mxu0 %v4313
        %v8165 = vpop.f32.mrf.mxu0
        %v8166 = vadd.f32 %v8053, %v8165
        %v8167 = vpop.f32.mrf.mxu0
        %v8168 = vadd.f32 %v8055, %v8167
        %v8169 = vpop.f32.mrf.mxu0
        %v8170 = vadd.f32 %v8057, %v8169
        %v8171 = vpop.f32.mrf.mxu0
        %v8172 = vadd.f32 %v8059, %v8171
        %8173 = vmatprep.mubr.bf16.mxu0 %v4332
        %8174 = vmatmul.mubr.bf16.gmra.mxu0 %v4331
        %v8175 = vpop.f32.mrf.mxu0
        %v8176 = vadd.f32 %v8063, %v8175
        %v8177 = vpop.f32.mrf.mxu0
        %v8178 = vadd.f32 %v8065, %v8177
        %v8179 = vpop.f32.mrf.mxu0
        %v8180 = vadd.f32 %v8067, %v8179
        %v8181 = vpop.f32.mrf.mxu0
        %v8182 = vadd.f32 %v8069, %v8181
        %8183 = vmatprep.mubr.bf16.mxu0 %v4350
        %8184 = vmatmul.mubr.bf16.gmra.mxu0 %v4349
        %v8185 = vpop.f32.mrf.mxu0
        %v8186 = vadd.f32 %v8073, %v8185
        %v8187 = vpop.f32.mrf.mxu0
        %v8188 = vadd.f32 %v8075, %v8187
        %v8189 = vpop.f32.mrf.mxu0
        %v8190 = vadd.f32 %v8077, %v8189
        %v8191 = vpop.f32.mrf.mxu0
        %v8192 = vadd.f32 %v8079, %v8191
        %8193 = vmatprep.mubr.bf16.mxu0 %v4368
        %8194 = vmatmul.mubr.bf16.gmra.mxu0 %v4367
        %v8195 = vpop.f32.mrf.mxu0
        %v8196 = vadd.f32 %v8083, %v8195
        %v8197 = vpop.f32.mrf.mxu0
        %v8198 = vadd.f32 %v8085, %v8197
        %v8199 = vpop.f32.mrf.mxu0
        %v8200 = vadd.f32 %v8087, %v8199
        %v8201 = vpop.f32.mrf.mxu0
        %v8202 = vadd.f32 %v8089, %v8201
        %8203 = vmatprep.mubr.bf16.mxu0 %v4386
        %8204 = vmatmul.mubr.bf16.gmra.mxu0 %v4385
        %v8205 = vpop.f32.mrf.mxu0
        %v8206 = vadd.f32 %v8093, %v8205
        %v8207 = vpop.f32.mrf.mxu0
        %v8208 = vadd.f32 %v8095, %v8207
        %v8209 = vpop.f32.mrf.mxu0
        %v8210 = vadd.f32 %v8097, %v8209
        %v8211 = vpop.f32.mrf.mxu0
        %v8212 = vadd.f32 %v8099, %v8211
        %8213 = vmatprep.mubr.bf16.mxu0 %v4404
        %8214 = vmatmul.mubr.bf16.gmra.mxu0 %v4403
        %v8215 = vpop.f32.mrf.mxu0
        %v8216 = vadd.f32 %v8103, %v8215
        %v8217 = vpop.f32.mrf.mxu0
        %v8218 = vadd.f32 %v8105, %v8217
        %v8219 = vpop.f32.mrf.mxu0
        %v8220 = vadd.f32 %v8107, %v8219
        %v8221 = vpop.f32.mrf.mxu0
        %v8222 = vadd.f32 %v8109, %v8221
        %8223 = vdwg.mxu0
        %8224 = vmatprep.subr.bf16.mxu0 %v6758
        %8225 = vmatpush1.bf16.msra.mxu0 %v6757
        %8226 = vmatprep.subr.bf16.mxu0 %v6754
        %8227 = vmatpush1.bf16.msra.mxu0 %v6753
        %8228 = vmatprep.subr.bf16.mxu0 %v6750
        %8229 = vmatpush1.bf16.msra.mxu0 %v6749
        %8230 = vmatprep.subr.bf16.mxu0 %v6746
        %8231 = vmatpush1.bf16.msra.mxu0 %v6745
        %8232 = vmatprep.subr.bf16.mxu0 %v6742
        %8233 = vmatpush1.bf16.msra.mxu0 %v6741
        %8234 = vmatprep.subr.bf16.mxu0 %v6738
        %8235 = vmatpush1.bf16.msra.mxu0 %v6737
        %8236 = vmatprep.subr.bf16.mxu0 %v6734
        %8237 = vmatpush1.bf16.msra.mxu0 %v6733
        %8238 = vmatprep.subr.bf16.mxu0 %v6730
        %8239 = vmatpush1.bf16.msra.mxu0 %v6729
        %8240 = vmatprep.subr.bf16.mxu0 %v6790
        %8241 = vmatpush2.bf16.msra.mxu0 %v6789
        %8242 = vmatprep.subr.bf16.mxu0 %v6786
        %8243 = vmatpush2.bf16.msra.mxu0 %v6785
        %8244 = vmatprep.subr.bf16.mxu0 %v6782
        %8245 = vmatpush2.bf16.msra.mxu0 %v6781
        %8246 = vmatprep.subr.bf16.mxu0 %v6778
        %8247 = vmatpush2.bf16.msra.mxu0 %v6777
        %8248 = vmatprep.subr.bf16.mxu0 %v6774
        %8249 = vmatpush2.bf16.msra.mxu0 %v6773
        %8250 = vmatprep.subr.bf16.mxu0 %v6770
        %8251 = vmatpush2.bf16.msra.mxu0 %v6769
        %8252 = vmatprep.subr.bf16.mxu0 %v6766
        %8253 = vmatpush2.bf16.msra.mxu0 %v6765
        %8254 = vmatprep.subr.bf16.mxu0 %v6762
        %8255 = vmatpush2.bf16.msra.mxu0 %v6761
        %8256 = vmatprep.mubr.bf16.mxu0 %v4280
        %8257 = vmatmul.mubr.bf16.gmra.mxu0 %v4279
        %v8258 = vpop.f32.mrf.mxu0
        %v8259 = vadd.f32 %v8146, %v8258
        %v8260 = vpop.f32.mrf.mxu0
        %v8261 = vadd.f32 %v8148, %v8260
        %v8262 = vpop.f32.mrf.mxu0
        %v8263 = vadd.f32 %v8150, %v8262
        %v8264 = vpop.f32.mrf.mxu0
        %v8265 = vadd.f32 %v8152, %v8264
        %8266 = vmatprep.mubr.bf16.mxu0 %v4298
        %8267 = vmatmul.mubr.bf16.gmra.mxu0 %v4297
        %v8268 = vpop.f32.mrf.mxu0
        %v8269 = vadd.f32 %v8156, %v8268
        %v8270 = vpop.f32.mrf.mxu0
        %v8271 = vadd.f32 %v8158, %v8270
        %v8272 = vpop.f32.mrf.mxu0
        %v8273 = vadd.f32 %v8160, %v8272
        %v8274 = vpop.f32.mrf.mxu0
        %v8275 = vadd.f32 %v8162, %v8274
        %8276 = vmatprep.mubr.bf16.mxu0 %v4316
        %8277 = vmatmul.mubr.bf16.gmra.mxu0 %v4315
        %v8278 = vpop.f32.mrf.mxu0
        %v8279 = vadd.f32 %v8166, %v8278
        %v8280 = vpop.f32.mrf.mxu0
        %v8281 = vadd.f32 %v8168, %v8280
        %v8282 = vpop.f32.mrf.mxu0
        %v8283 = vadd.f32 %v8170, %v8282
        %v8284 = vpop.f32.mrf.mxu0
        %v8285 = vadd.f32 %v8172, %v8284
        %8286 = vmatprep.mubr.bf16.mxu0 %v4334
        %8287 = vmatmul.mubr.bf16.gmra.mxu0 %v4333
        %v8288 = vpop.f32.mrf.mxu0
        %v8289 = vadd.f32 %v8176, %v8288
        %v8290 = vpop.f32.mrf.mxu0
        %v8291 = vadd.f32 %v8178, %v8290
        %v8292 = vpop.f32.mrf.mxu0
        %v8293 = vadd.f32 %v8180, %v8292
        %v8294 = vpop.f32.mrf.mxu0
        %v8295 = vadd.f32 %v8182, %v8294
        %8296 = vmatprep.mubr.bf16.mxu0 %v4352
        %8297 = vmatmul.mubr.bf16.gmra.mxu0 %v4351
        %v8298 = vpop.f32.mrf.mxu0
        %v8299 = vadd.f32 %v8186, %v8298
        %v8300 = vpop.f32.mrf.mxu0
        %v8301 = vadd.f32 %v8188, %v8300
        %v8302 = vpop.f32.mrf.mxu0
        %v8303 = vadd.f32 %v8190, %v8302
        %v8304 = vpop.f32.mrf.mxu0
        %v8305 = vadd.f32 %v8192, %v8304
        %8306 = vmatprep.mubr.bf16.mxu0 %v4370
        %8307 = vmatmul.mubr.bf16.gmra.mxu0 %v4369
        %v8308 = vpop.f32.mrf.mxu0
        %v8309 = vadd.f32 %v8196, %v8308
        %v8310 = vpop.f32.mrf.mxu0
        %v8311 = vadd.f32 %v8198, %v8310
        %v8312 = vpop.f32.mrf.mxu0
        %v8313 = vadd.f32 %v8200, %v8312
        %v8314 = vpop.f32.mrf.mxu0
        %v8315 = vadd.f32 %v8202, %v8314
        %8316 = vmatprep.mubr.bf16.mxu0 %v4388
        %8317 = vmatmul.mubr.bf16.gmra.mxu0 %v4387
        %v8318 = vpop.f32.mrf.mxu0
        %v8319 = vadd.f32 %v8206, %v8318
        %v8320 = vpop.f32.mrf.mxu0
        %v8321 = vadd.f32 %v8208, %v8320
        %v8322 = vpop.f32.mrf.mxu0
        %v8323 = vadd.f32 %v8210, %v8322
        %v8324 = vpop.f32.mrf.mxu0
        %v8325 = vadd.f32 %v8212, %v8324
        %8326 = vmatprep.mubr.bf16.mxu0 %v4406
        %8327 = vmatmul.mubr.bf16.gmra.mxu0 %v4405
        %v8328 = vpop.f32.mrf.mxu0
        %v8329 = vadd.f32 %v8216, %v8328
        %v8330 = vpop.f32.mrf.mxu0
        %v8331 = vadd.f32 %v8218, %v8330
        %v8332 = vpop.f32.mrf.mxu0
        %v8333 = vadd.f32 %v8220, %v8332
        %v8334 = vpop.f32.mrf.mxu0
        %v8335 = vadd.f32 %v8222, %v8334
        %8336 = vdwg.mxu0
        %8337 = vmatprep.subr.bf16.mxu0 %v6822
        %8338 = vmatpush1.bf16.msra.mxu0 %v6821
        %8339 = vmatprep.subr.bf16.mxu0 %v6818
        %8340 = vmatpush1.bf16.msra.mxu0 %v6817
        %8341 = vmatprep.subr.bf16.mxu0 %v6814
        %8342 = vmatpush1.bf16.msra.mxu0 %v6813
        %8343 = vmatprep.subr.bf16.mxu0 %v6810
        %8344 = vmatpush1.bf16.msra.mxu0 %v6809
        %8345 = vmatprep.subr.bf16.mxu0 %v6806
        %8346 = vmatpush1.bf16.msra.mxu0 %v6805
        %8347 = vmatprep.subr.bf16.mxu0 %v6802
        %8348 = vmatpush1.bf16.msra.mxu0 %v6801
        %8349 = vmatprep.subr.bf16.mxu0 %v6798
        %8350 = vmatpush1.bf16.msra.mxu0 %v6797
        %8351 = vmatprep.subr.bf16.mxu0 %v6794
        %8352 = vmatpush1.bf16.msra.mxu0 %v6793
        %8353 = vmatprep.subr.bf16.mxu0 %v6854
        %8354 = vmatpush2.bf16.msra.mxu0 %v6853
        %8355 = vmatprep.subr.bf16.mxu0 %v6850
        %8356 = vmatpush2.bf16.msra.mxu0 %v6849
        %8357 = vmatprep.subr.bf16.mxu0 %v6846
        %8358 = vmatpush2.bf16.msra.mxu0 %v6845
        %8359 = vmatprep.subr.bf16.mxu0 %v6842
        %8360 = vmatpush2.bf16.msra.mxu0 %v6841
        %8361 = vmatprep.subr.bf16.mxu0 %v6838
        %8362 = vmatpush2.bf16.msra.mxu0 %v6837
        %8363 = vmatprep.subr.bf16.mxu0 %v6834
        %8364 = vmatpush2.bf16.msra.mxu0 %v6833
        %8365 = vmatprep.subr.bf16.mxu0 %v6830
        %8366 = vmatpush2.bf16.msra.mxu0 %v6829
        %8367 = vmatprep.subr.bf16.mxu0 %v6826
        %8368 = vmatpush2.bf16.msra.mxu0 %v6825
        %8369 = vmatprep.mubr.bf16.mxu0 %v4282
        %8370 = vmatmul.mubr.bf16.gmra.mxu0 %v4281
        %v8371 = vpop.f32.mrf.mxu0
        %v8372 = vadd.f32 %v8259, %v8371
        %v8373 = vpop.f32.mrf.mxu0
        %v8374 = vadd.f32 %v8261, %v8373
        %v8375 = vpop.f32.mrf.mxu0
        %v8376 = vadd.f32 %v8263, %v8375
        %v8377 = vpop.f32.mrf.mxu0
        %v8378 = vadd.f32 %v8265, %v8377
        %8379 = vmatprep.mubr.bf16.mxu0 %v4300
        %8380 = vmatmul.mubr.bf16.gmra.mxu0 %v4299
        %v8381 = vpop.f32.mrf.mxu0
        %v8382 = vadd.f32 %v8269, %v8381
        %v8383 = vpop.f32.mrf.mxu0
        %v8384 = vadd.f32 %v8271, %v8383
        %v8385 = vpop.f32.mrf.mxu0
        %v8386 = vadd.f32 %v8273, %v8385
        %v8387 = vpop.f32.mrf.mxu0
        %v8388 = vadd.f32 %v8275, %v8387
        %8389 = vmatprep.mubr.bf16.mxu0 %v4318
        %8390 = vmatmul.mubr.bf16.gmra.mxu0 %v4317
        %v8391 = vpop.f32.mrf.mxu0
        %v8392 = vadd.f32 %v8279, %v8391
        %v8393 = vpop.f32.mrf.mxu0
        %v8394 = vadd.f32 %v8281, %v8393
        %v8395 = vpop.f32.mrf.mxu0
        %v8396 = vadd.f32 %v8283, %v8395
        %v8397 = vpop.f32.mrf.mxu0
        %v8398 = vadd.f32 %v8285, %v8397
        %8399 = vmatprep.mubr.bf16.mxu0 %v4336
        %8400 = vmatmul.mubr.bf16.gmra.mxu0 %v4335
        %v8401 = vpop.f32.mrf.mxu0
        %v8402 = vadd.f32 %v8289, %v8401
        %v8403 = vpop.f32.mrf.mxu0
        %v8404 = vadd.f32 %v8291, %v8403
        %v8405 = vpop.f32.mrf.mxu0
        %v8406 = vadd.f32 %v8293, %v8405
        %v8407 = vpop.f32.mrf.mxu0
        %v8408 = vadd.f32 %v8295, %v8407
        %8409 = vmatprep.mubr.bf16.mxu0 %v4354
        %8410 = vmatmul.mubr.bf16.gmra.mxu0 %v4353
        %v8411 = vpop.f32.mrf.mxu0
        %v8412 = vadd.f32 %v8299, %v8411
        %v8413 = vpop.f32.mrf.mxu0
        %v8414 = vadd.f32 %v8301, %v8413
        %v8415 = vpop.f32.mrf.mxu0
        %v8416 = vadd.f32 %v8303, %v8415
        %v8417 = vpop.f32.mrf.mxu0
        %v8418 = vadd.f32 %v8305, %v8417
        %8419 = vmatprep.mubr.bf16.mxu0 %v4372
        %8420 = vmatmul.mubr.bf16.gmra.mxu0 %v4371
        %v8421 = vpop.f32.mrf.mxu0
        %v8422 = vadd.f32 %v8309, %v8421
        %v8423 = vpop.f32.mrf.mxu0
        %v8424 = vadd.f32 %v8311, %v8423
        %v8425 = vpop.f32.mrf.mxu0
        %v8426 = vadd.f32 %v8313, %v8425
        %v8427 = vpop.f32.mrf.mxu0
        %v8428 = vadd.f32 %v8315, %v8427
        %8429 = vmatprep.mubr.bf16.mxu0 %v4390
        %8430 = vmatmul.mubr.bf16.gmra.mxu0 %v4389
        %v8431 = vpop.f32.mrf.mxu0
        %v8432 = vadd.f32 %v8319, %v8431
        %v8433 = vpop.f32.mrf.mxu0
        %v8434 = vadd.f32 %v8321, %v8433
        %v8435 = vpop.f32.mrf.mxu0
        %v8436 = vadd.f32 %v8323, %v8435
        %v8437 = vpop.f32.mrf.mxu0
        %v8438 = vadd.f32 %v8325, %v8437
        %8439 = vmatprep.mubr.bf16.mxu0 %v4408
        %8440 = vmatmul.mubr.bf16.gmra.mxu0 %v4407
        %v8441 = vpop.f32.mrf.mxu0
        %v8442 = vadd.f32 %v8329, %v8441
        %v8443 = vpop.f32.mrf.mxu0
        %v8444 = vadd.f32 %v8331, %v8443
        %v8445 = vpop.f32.mrf.mxu0
        %v8446 = vadd.f32 %v8333, %v8445
        %v8447 = vpop.f32.mrf.mxu0
        %v8448 = vadd.f32 %v8335, %v8447
        %8449 = vdwg.mxu0
        %8450 = vmatprep.subr.bf16.mxu0 %v6312
        %8451 = vmatpush1.bf16.msra.mxu0 %v6311
        %8452 = vmatprep.subr.bf16.mxu0 %v6308
        %8453 = vmatpush1.bf16.msra.mxu0 %v6307
        %8454 = vmatprep.subr.bf16.mxu0 %v6304
        %8455 = vmatpush1.bf16.msra.mxu0 %v6303
        %8456 = vmatprep.subr.bf16.mxu0 %v6300
        %8457 = vmatpush1.bf16.msra.mxu0 %v6299
        %8458 = vmatprep.subr.bf16.mxu0 %v6296
        %8459 = vmatpush1.bf16.msra.mxu0 %v6295
        %8460 = vmatprep.subr.bf16.mxu0 %v6292
        %8461 = vmatpush1.bf16.msra.mxu0 %v6291
        %8462 = vmatprep.subr.bf16.mxu0 %v6288
        %8463 = vmatpush1.bf16.msra.mxu0 %v6287
        %8464 = vmatprep.subr.bf16.mxu0 %v6284
        %8465 = vmatpush1.bf16.msra.mxu0 %v6283
        %8466 = vmatprep.subr.bf16.mxu0 %v6344
        %8467 = vmatpush2.bf16.msra.mxu0 %v6343
        %8468 = vmatprep.subr.bf16.mxu0 %v6340
        %8469 = vmatpush2.bf16.msra.mxu0 %v6339
        %8470 = vmatprep.subr.bf16.mxu0 %v6336
        %8471 = vmatpush2.bf16.msra.mxu0 %v6335
        %8472 = vmatprep.subr.bf16.mxu0 %v6332
        %8473 = vmatpush2.bf16.msra.mxu0 %v6331
        %8474 = vmatprep.subr.bf16.mxu0 %v6328
        %8475 = vmatpush2.bf16.msra.mxu0 %v6327
        %8476 = vmatprep.subr.bf16.mxu0 %v6324
        %8477 = vmatpush2.bf16.msra.mxu0 %v6323
        %8478 = vmatprep.subr.bf16.mxu0 %v6320
        %8479 = vmatpush2.bf16.msra.mxu0 %v6319
        %8480 = vmatprep.subr.bf16.mxu0 %v6316
        %8481 = vmatpush2.bf16.msra.mxu0 %v6315
        %8482 = vmatprep.mubr.bf16.mxu0 %v4266
        %8483 = vmatmul.mubr.bf16.gmra.mxu0 %v4265
        %v8484 = vpop.f32.mrf.mxu0
        %v8485 = vadd.f32 %v3824, %v8484
        %v8486 = vpop.f32.mrf.mxu0
        %v8487 = vadd.f32 %v3828, %v8486
        %v8488 = vpop.f32.mrf.mxu0
        %v8489 = vadd.f32 %v3824, %v8488
        %v8490 = vpop.f32.mrf.mxu0
        %v8491 = vadd.f32 %v3828, %v8490
        %8492 = vmatprep.mubr.bf16.mxu0 %v4284
        %8493 = vmatmul.mubr.bf16.gmra.mxu0 %v4283
        %v8494 = vpop.f32.mrf.mxu0
        %v8495 = vadd.f32 %v3824, %v8494
        %v8496 = vpop.f32.mrf.mxu0
        %v8497 = vadd.f32 %v3828, %v8496
        %v8498 = vpop.f32.mrf.mxu0
        %v8499 = vadd.f32 %v3824, %v8498
        %v8500 = vpop.f32.mrf.mxu0
        %v8501 = vadd.f32 %v3828, %v8500
        %8502 = vmatprep.mubr.bf16.mxu0 %v4302
        %8503 = vmatmul.mubr.bf16.gmra.mxu0 %v4301
        %v8504 = vpop.f32.mrf.mxu0
        %v8505 = vadd.f32 %v3824, %v8504
        %v8506 = vpop.f32.mrf.mxu0
        %v8507 = vadd.f32 %v3828, %v8506
        %v8508 = vpop.f32.mrf.mxu0
        %v8509 = vadd.f32 %v3824, %v8508
        %v8510 = vpop.f32.mrf.mxu0
        %v8511 = vadd.f32 %v3828, %v8510
        %8512 = vmatprep.mubr.bf16.mxu0 %v4320
        %8513 = vmatmul.mubr.bf16.gmra.mxu0 %v4319
        %v8514 = vpop.f32.mrf.mxu0
        %v8515 = vadd.f32 %v3824, %v8514
        %v8516 = vpop.f32.mrf.mxu0
        %v8517 = vadd.f32 %v3828, %v8516
        %v8518 = vpop.f32.mrf.mxu0
        %v8519 = vadd.f32 %v3824, %v8518
        %v8520 = vpop.f32.mrf.mxu0
        %v8521 = vadd.f32 %v3828, %v8520
        %8522 = vmatprep.mubr.bf16.mxu0 %v4338
        %8523 = vmatmul.mubr.bf16.gmra.mxu0 %v4337
        %v8524 = vpop.f32.mrf.mxu0
        %v8525 = vadd.f32 %v3824, %v8524
        %v8526 = vpop.f32.mrf.mxu0
        %v8527 = vadd.f32 %v3828, %v8526
        %v8528 = vpop.f32.mrf.mxu0
        %v8529 = vadd.f32 %v3824, %v8528
        %v8530 = vpop.f32.mrf.mxu0
        %v8531 = vadd.f32 %v3828, %v8530
        %8532 = vmatprep.mubr.bf16.mxu0 %v4356
        %8533 = vmatmul.mubr.bf16.gmra.mxu0 %v4355
        %v8534 = vpop.f32.mrf.mxu0
        %v8535 = vadd.f32 %v3824, %v8534
        %v8536 = vpop.f32.mrf.mxu0
        %v8537 = vadd.f32 %v3828, %v8536
        %v8538 = vpop.f32.mrf.mxu0
        %v8539 = vadd.f32 %v3824, %v8538
        %v8540 = vpop.f32.mrf.mxu0
        %v8541 = vadd.f32 %v3828, %v8540
        %8542 = vmatprep.mubr.bf16.mxu0 %v4374
        %8543 = vmatmul.mubr.bf16.gmra.mxu0 %v4373
        %v8544 = vpop.f32.mrf.mxu0
        %v8545 = vadd.f32 %v3824, %v8544
        %v8546 = vpop.f32.mrf.mxu0
        %v8547 = vadd.f32 %v3828, %v8546
        %v8548 = vpop.f32.mrf.mxu0
        %v8549 = vadd.f32 %v3824, %v8548
        %v8550 = vpop.f32.mrf.mxu0
        %v8551 = vadd.f32 %v3828, %v8550
        %8552 = vmatprep.mubr.bf16.mxu0 %v4392
        %8553 = vmatmul.mubr.bf16.gmra.mxu0 %v4391
        %v8554 = vpop.f32.mrf.mxu0
        %v8555 = vadd.f32 %v3824, %v8554
        %v8556 = vpop.f32.mrf.mxu0
        %v8557 = vadd.f32 %v3828, %v8556
        %v8558 = vpop.f32.mrf.mxu0
        %v8559 = vadd.f32 %v3824, %v8558
        %v8560 = vpop.f32.mrf.mxu0
        %v8561 = vadd.f32 %v3828, %v8560
        %8562 = vdwg.mxu0
        %8563 = vmatprep.subr.bf16.mxu0 %v6376
        %8564 = vmatpush1.bf16.msra.mxu0 %v6375
        %8565 = vmatprep.subr.bf16.mxu0 %v6372
        %8566 = vmatpush1.bf16.msra.mxu0 %v6371
        %8567 = vmatprep.subr.bf16.mxu0 %v6368
        %8568 = vmatpush1.bf16.msra.mxu0 %v6367
        %8569 = vmatprep.subr.bf16.mxu0 %v6364
        %8570 = vmatpush1.bf16.msra.mxu0 %v6363
        %8571 = vmatprep.subr.bf16.mxu0 %v6360
        %8572 = vmatpush1.bf16.msra.mxu0 %v6359
        %8573 = vmatprep.subr.bf16.mxu0 %v6356
        %8574 = vmatpush1.bf16.msra.mxu0 %v6355
        %8575 = vmatprep.subr.bf16.mxu0 %v6352
        %8576 = vmatpush1.bf16.msra.mxu0 %v6351
        %8577 = vmatprep.subr.bf16.mxu0 %v6348
        %8578 = vmatpush1.bf16.msra.mxu0 %v6347
        %8579 = vmatprep.subr.bf16.mxu0 %v6408
        %8580 = vmatpush2.bf16.msra.mxu0 %v6407
        %8581 = vmatprep.subr.bf16.mxu0 %v6404
        %8582 = vmatpush2.bf16.msra.mxu0 %v6403
        %8583 = vmatprep.subr.bf16.mxu0 %v6400
        %8584 = vmatpush2.bf16.msra.mxu0 %v6399
        %8585 = vmatprep.subr.bf16.mxu0 %v6396
        %8586 = vmatpush2.bf16.msra.mxu0 %v6395
        %8587 = vmatprep.subr.bf16.mxu0 %v6392
        %8588 = vmatpush2.bf16.msra.mxu0 %v6391
        %8589 = vmatprep.subr.bf16.mxu0 %v6388
        %8590 = vmatpush2.bf16.msra.mxu0 %v6387
        %8591 = vmatprep.subr.bf16.mxu0 %v6384
        %8592 = vmatpush2.bf16.msra.mxu0 %v6383
        %8593 = vmatprep.subr.bf16.mxu0 %v6380
        %8594 = vmatpush2.bf16.msra.mxu0 %v6379
        %8595 = vmatprep.mubr.bf16.mxu0 %v4268
        %8596 = vmatmul.mubr.bf16.gmra.mxu0 %v4267
        %v8597 = vpop.f32.mrf.mxu0
        %v8598 = vadd.f32 %v8485, %v8597
        %v8599 = vpop.f32.mrf.mxu0
        %v8600 = vadd.f32 %v8487, %v8599
        %v8601 = vpop.f32.mrf.mxu0
        %v8602 = vadd.f32 %v8489, %v8601
        %v8603 = vpop.f32.mrf.mxu0
        %v8604 = vadd.f32 %v8491, %v8603
        %8605 = vmatprep.mubr.bf16.mxu0 %v4286
        %8606 = vmatmul.mubr.bf16.gmra.mxu0 %v4285
        %v8607 = vpop.f32.mrf.mxu0
        %v8608 = vadd.f32 %v8495, %v8607
        %v8609 = vpop.f32.mrf.mxu0
        %v8610 = vadd.f32 %v8497, %v8609
        %v8611 = vpop.f32.mrf.mxu0
        %v8612 = vadd.f32 %v8499, %v8611
        %v8613 = vpop.f32.mrf.mxu0
        %v8614 = vadd.f32 %v8501, %v8613
        %8615 = vmatprep.mubr.bf16.mxu0 %v4304
        %8616 = vmatmul.mubr.bf16.gmra.mxu0 %v4303
        %v8617 = vpop.f32.mrf.mxu0
        %v8618 = vadd.f32 %v8505, %v8617
        %v8619 = vpop.f32.mrf.mxu0
        %v8620 = vadd.f32 %v8507, %v8619
        %v8621 = vpop.f32.mrf.mxu0
        %v8622 = vadd.f32 %v8509, %v8621
        %v8623 = vpop.f32.mrf.mxu0
        %v8624 = vadd.f32 %v8511, %v8623
        %8625 = vmatprep.mubr.bf16.mxu0 %v4322
        %8626 = vmatmul.mubr.bf16.gmra.mxu0 %v4321
        %v8627 = vpop.f32.mrf.mxu0
        %v8628 = vadd.f32 %v8515, %v8627
        %v8629 = vpop.f32.mrf.mxu0
        %v8630 = vadd.f32 %v8517, %v8629
        %v8631 = vpop.f32.mrf.mxu0
        %v8632 = vadd.f32 %v8519, %v8631
        %v8633 = vpop.f32.mrf.mxu0
        %v8634 = vadd.f32 %v8521, %v8633
        %8635 = vmatprep.mubr.bf16.mxu0 %v4340
        %8636 = vmatmul.mubr.bf16.gmra.mxu0 %v4339
        %v8637 = vpop.f32.mrf.mxu0
        %v8638 = vadd.f32 %v8525, %v8637
        %v8639 = vpop.f32.mrf.mxu0
        %v8640 = vadd.f32 %v8527, %v8639
        %v8641 = vpop.f32.mrf.mxu0
        %v8642 = vadd.f32 %v8529, %v8641
        %v8643 = vpop.f32.mrf.mxu0
        %v8644 = vadd.f32 %v8531, %v8643
        %8645 = vmatprep.mubr.bf16.mxu0 %v4358
        %8646 = vmatmul.mubr.bf16.gmra.mxu0 %v4357
        %v8647 = vpop.f32.mrf.mxu0
        %v8648 = vadd.f32 %v8535, %v8647
        %v8649 = vpop.f32.mrf.mxu0
        %v8650 = vadd.f32 %v8537, %v8649
        %v8651 = vpop.f32.mrf.mxu0
        %v8652 = vadd.f32 %v8539, %v8651
        %v8653 = vpop.f32.mrf.mxu0
        %v8654 = vadd.f32 %v8541, %v8653
        %8655 = vmatprep.mubr.bf16.mxu0 %v4376
        %8656 = vmatmul.mubr.bf16.gmra.mxu0 %v4375
        %v8657 = vpop.f32.mrf.mxu0
        %v8658 = vadd.f32 %v8545, %v8657
        %v8659 = vpop.f32.mrf.mxu0
        %v8660 = vadd.f32 %v8547, %v8659
        %v8661 = vpop.f32.mrf.mxu0
        %v8662 = vadd.f32 %v8549, %v8661
        %v8663 = vpop.f32.mrf.mxu0
        %v8664 = vadd.f32 %v8551, %v8663
        %8665 = vmatprep.mubr.bf16.mxu0 %v4394
        %8666 = vmatmul.mubr.bf16.gmra.mxu0 %v4393
        %v8667 = vpop.f32.mrf.mxu0
        %v8668 = vadd.f32 %v8555, %v8667
        %v8669 = vpop.f32.mrf.mxu0
        %v8670 = vadd.f32 %v8557, %v8669
        %v8671 = vpop.f32.mrf.mxu0
        %v8672 = vadd.f32 %v8559, %v8671
        %v8673 = vpop.f32.mrf.mxu0
        %v8674 = vadd.f32 %v8561, %v8673
        %8675 = vdwg.mxu0
        %8676 = vmatprep.subr.bf16.mxu0 %v6440
        %8677 = vmatpush1.bf16.msra.mxu0 %v6439
        %8678 = vmatprep.subr.bf16.mxu0 %v6436
        %8679 = vmatpush1.bf16.msra.mxu0 %v6435
        %8680 = vmatprep.subr.bf16.mxu0 %v6432
        %8681 = vmatpush1.bf16.msra.mxu0 %v6431
        %8682 = vmatprep.subr.bf16.mxu0 %v6428
        %8683 = vmatpush1.bf16.msra.mxu0 %v6427
        %8684 = vmatprep.subr.bf16.mxu0 %v6424
        %8685 = vmatpush1.bf16.msra.mxu0 %v6423
        %8686 = vmatprep.subr.bf16.mxu0 %v6420
        %8687 = vmatpush1.bf16.msra.mxu0 %v6419
        %8688 = vmatprep.subr.bf16.mxu0 %v6416
        %8689 = vmatpush1.bf16.msra.mxu0 %v6415
        %8690 = vmatprep.subr.bf16.mxu0 %v6412
        %8691 = vmatpush1.bf16.msra.mxu0 %v6411
        %8692 = vmatprep.subr.bf16.mxu0 %v6472
        %8693 = vmatpush2.bf16.msra.mxu0 %v6471
        %8694 = vmatprep.subr.bf16.mxu0 %v6468
        %8695 = vmatpush2.bf16.msra.mxu0 %v6467
        %8696 = vmatprep.subr.bf16.mxu0 %v6464
        %8697 = vmatpush2.bf16.msra.mxu0 %v6463
        %8698 = vmatprep.subr.bf16.mxu0 %v6460
        %8699 = vmatpush2.bf16.msra.mxu0 %v6459
        %8700 = vmatprep.subr.bf16.mxu0 %v6456
        %8701 = vmatpush2.bf16.msra.mxu0 %v6455
        %8702 = vmatprep.subr.bf16.mxu0 %v6452
        %8703 = vmatpush2.bf16.msra.mxu0 %v6451
        %8704 = vmatprep.subr.bf16.mxu0 %v6448
        %8705 = vmatpush2.bf16.msra.mxu0 %v6447
        %8706 = vmatprep.subr.bf16.mxu0 %v6444
        %8707 = vmatpush2.bf16.msra.mxu0 %v6443
        %8708 = vmatprep.mubr.bf16.mxu0 %v4270
        %8709 = vmatmul.mubr.bf16.gmra.mxu0 %v4269
        %v8710 = vpop.f32.mrf.mxu0
        %v8711 = vadd.f32 %v8598, %v8710
        %v8712 = vpop.f32.mrf.mxu0
        %v8713 = vadd.f32 %v8600, %v8712
        %v8714 = vpop.f32.mrf.mxu0
        %v8715 = vadd.f32 %v8602, %v8714
        %v8716 = vpop.f32.mrf.mxu0
        %v8717 = vadd.f32 %v8604, %v8716
        %8718 = vmatprep.mubr.bf16.mxu0 %v4288
        %8719 = vmatmul.mubr.bf16.gmra.mxu0 %v4287
        %v8720 = vpop.f32.mrf.mxu0
        %v8721 = vadd.f32 %v8608, %v8720
        %v8722 = vpop.f32.mrf.mxu0
        %v8723 = vadd.f32 %v8610, %v8722
        %v8724 = vpop.f32.mrf.mxu0
        %v8725 = vadd.f32 %v8612, %v8724
        %v8726 = vpop.f32.mrf.mxu0
        %v8727 = vadd.f32 %v8614, %v8726
        %8728 = vmatprep.mubr.bf16.mxu0 %v4306
        %8729 = vmatmul.mubr.bf16.gmra.mxu0 %v4305
        %v8730 = vpop.f32.mrf.mxu0
        %v8731 = vadd.f32 %v8618, %v8730
        %v8732 = vpop.f32.mrf.mxu0
        %v8733 = vadd.f32 %v8620, %v8732
        %v8734 = vpop.f32.mrf.mxu0
        %v8735 = vadd.f32 %v8622, %v8734
        %v8736 = vpop.f32.mrf.mxu0
        %v8737 = vadd.f32 %v8624, %v8736
        %8738 = vmatprep.mubr.bf16.mxu0 %v4324
        %8739 = vmatmul.mubr.bf16.gmra.mxu0 %v4323
        %v8740 = vpop.f32.mrf.mxu0
        %v8741 = vadd.f32 %v8628, %v8740
        %v8742 = vpop.f32.mrf.mxu0
        %v8743 = vadd.f32 %v8630, %v8742
        %v8744 = vpop.f32.mrf.mxu0
        %v8745 = vadd.f32 %v8632, %v8744
        %v8746 = vpop.f32.mrf.mxu0
        %v8747 = vadd.f32 %v8634, %v8746
        %8748 = vmatprep.mubr.bf16.mxu0 %v4342
        %8749 = vmatmul.mubr.bf16.gmra.mxu0 %v4341
        %v8750 = vpop.f32.mrf.mxu0
        %v8751 = vadd.f32 %v8638, %v8750
        %v8752 = vpop.f32.mrf.mxu0
        %v8753 = vadd.f32 %v8640, %v8752
        %v8754 = vpop.f32.mrf.mxu0
        %v8755 = vadd.f32 %v8642, %v8754
        %v8756 = vpop.f32.mrf.mxu0
        %v8757 = vadd.f32 %v8644, %v8756
        %8758 = vmatprep.mubr.bf16.mxu0 %v4360
        %8759 = vmatmul.mubr.bf16.gmra.mxu0 %v4359
        %v8760 = vpop.f32.mrf.mxu0
        %v8761 = vadd.f32 %v8648, %v8760
        %v8762 = vpop.f32.mrf.mxu0
        %v8763 = vadd.f32 %v8650, %v8762
        %v8764 = vpop.f32.mrf.mxu0
        %v8765 = vadd.f32 %v8652, %v8764
        %v8766 = vpop.f32.mrf.mxu0
        %v8767 = vadd.f32 %v8654, %v8766
        %8768 = vmatprep.mubr.bf16.mxu0 %v4378
        %8769 = vmatmul.mubr.bf16.gmra.mxu0 %v4377
        %v8770 = vpop.f32.mrf.mxu0
        %v8771 = vadd.f32 %v8658, %v8770
        %v8772 = vpop.f32.mrf.mxu0
        %v8773 = vadd.f32 %v8660, %v8772
        %v8774 = vpop.f32.mrf.mxu0
        %v8775 = vadd.f32 %v8662, %v8774
        %v8776 = vpop.f32.mrf.mxu0
        %v8777 = vadd.f32 %v8664, %v8776
        %8778 = vmatprep.mubr.bf16.mxu0 %v4396
        %8779 = vmatmul.mubr.bf16.gmra.mxu0 %v4395
        %v8780 = vpop.f32.mrf.mxu0
        %v8781 = vadd.f32 %v8668, %v8780
        %v8782 = vpop.f32.mrf.mxu0
        %v8783 = vadd.f32 %v8670, %v8782
        %v8784 = vpop.f32.mrf.mxu0
        %v8785 = vadd.f32 %v8672, %v8784
        %v8786 = vpop.f32.mrf.mxu0
        %v8787 = vadd.f32 %v8674, %v8786
        %8788 = vdwg.mxu0
        %8789 = vmatprep.subr.bf16.mxu0 %v6504
        %8790 = vmatpush1.bf16.msra.mxu0 %v6503
        %8791 = vmatprep.subr.bf16.mxu0 %v6500
        %8792 = vmatpush1.bf16.msra.mxu0 %v6499
        %8793 = vmatprep.subr.bf16.mxu0 %v6496
        %8794 = vmatpush1.bf16.msra.mxu0 %v6495
        %8795 = vmatprep.subr.bf16.mxu0 %v6492
        %8796 = vmatpush1.bf16.msra.mxu0 %v6491
        %8797 = vmatprep.subr.bf16.mxu0 %v6488
        %8798 = vmatpush1.bf16.msra.mxu0 %v6487
        %8799 = vmatprep.subr.bf16.mxu0 %v6484
        %8800 = vmatpush1.bf16.msra.mxu0 %v6483
        %8801 = vmatprep.subr.bf16.mxu0 %v6480
        %8802 = vmatpush1.bf16.msra.mxu0 %v6479
        %8803 = vmatprep.subr.bf16.mxu0 %v6476
        %8804 = vmatpush1.bf16.msra.mxu0 %v6475
        %8805 = vmatprep.subr.bf16.mxu0 %v6536
        %8806 = vmatpush2.bf16.msra.mxu0 %v6535
        %8807 = vmatprep.subr.bf16.mxu0 %v6532
        %8808 = vmatpush2.bf16.msra.mxu0 %v6531
        %8809 = vmatprep.subr.bf16.mxu0 %v6528
        %8810 = vmatpush2.bf16.msra.mxu0 %v6527
        %8811 = vmatprep.subr.bf16.mxu0 %v6524
        %8812 = vmatpush2.bf16.msra.mxu0 %v6523
        %8813 = vmatprep.subr.bf16.mxu0 %v6520
        %8814 = vmatpush2.bf16.msra.mxu0 %v6519
        %8815 = vmatprep.subr.bf16.mxu0 %v6516
        %8816 = vmatpush2.bf16.msra.mxu0 %v6515
        %8817 = vmatprep.subr.bf16.mxu0 %v6512
        %8818 = vmatpush2.bf16.msra.mxu0 %v6511
        %8819 = vmatprep.subr.bf16.mxu0 %v6508
        %8820 = vmatpush2.bf16.msra.mxu0 %v6507
        %8821 = vmatprep.mubr.bf16.mxu0 %v4272
        %8822 = vmatmul.mubr.bf16.gmra.mxu0 %v4271
        %v8823 = vpop.f32.mrf.mxu0
        %v8824 = vadd.f32 %v8711, %v8823
        %v8825 = vpop.f32.mrf.mxu0
        %v8826 = vadd.f32 %v8713, %v8825
        %v8827 = vpop.f32.mrf.mxu0
        %v8828 = vadd.f32 %v8715, %v8827
        %v8829 = vpop.f32.mrf.mxu0
        %v8830 = vadd.f32 %v8717, %v8829
        %8831 = vmatprep.mubr.bf16.mxu0 %v4290
        %8832 = vmatmul.mubr.bf16.gmra.mxu0 %v4289
        %v8833 = vpop.f32.mrf.mxu0
        %v8834 = vadd.f32 %v8721, %v8833
        %v8835 = vpop.f32.mrf.mxu0
        %v8836 = vadd.f32 %v8723, %v8835
        %v8837 = vpop.f32.mrf.mxu0
        %v8838 = vadd.f32 %v8725, %v8837
        %v8839 = vpop.f32.mrf.mxu0
        %v8840 = vadd.f32 %v8727, %v8839
        %8841 = vmatprep.mubr.bf16.mxu0 %v4308
        %8842 = vmatmul.mubr.bf16.gmra.mxu0 %v4307
        %v8843 = vpop.f32.mrf.mxu0
        %v8844 = vadd.f32 %v8731, %v8843
        %v8845 = vpop.f32.mrf.mxu0
        %v8846 = vadd.f32 %v8733, %v8845
        %v8847 = vpop.f32.mrf.mxu0
        %v8848 = vadd.f32 %v8735, %v8847
        %v8849 = vpop.f32.mrf.mxu0
        %v8850 = vadd.f32 %v8737, %v8849
        %8851 = vmatprep.mubr.bf16.mxu0 %v4326
        %8852 = vmatmul.mubr.bf16.gmra.mxu0 %v4325
        %v8853 = vpop.f32.mrf.mxu0
        %v8854 = vadd.f32 %v8741, %v8853
        %v8855 = vpop.f32.mrf.mxu0
        %v8856 = vadd.f32 %v8743, %v8855
        %v8857 = vpop.f32.mrf.mxu0
        %v8858 = vadd.f32 %v8745, %v8857
        %v8859 = vpop.f32.mrf.mxu0
        %v8860 = vadd.f32 %v8747, %v8859
        %8861 = vmatprep.mubr.bf16.mxu0 %v4344
        %8862 = vmatmul.mubr.bf16.gmra.mxu0 %v4343
        %v8863 = vpop.f32.mrf.mxu0
        %v8864 = vadd.f32 %v8751, %v8863
        %v8865 = vpop.f32.mrf.mxu0
        %v8866 = vadd.f32 %v8753, %v8865
        %v8867 = vpop.f32.mrf.mxu0
        %v8868 = vadd.f32 %v8755, %v8867
        %v8869 = vpop.f32.mrf.mxu0
        %v8870 = vadd.f32 %v8757, %v8869
        %8871 = vmatprep.mubr.bf16.mxu0 %v4362
        %8872 = vmatmul.mubr.bf16.gmra.mxu0 %v4361
        %v8873 = vpop.f32.mrf.mxu0
        %v8874 = vadd.f32 %v8761, %v8873
        %v8875 = vpop.f32.mrf.mxu0
        %v8876 = vadd.f32 %v8763, %v8875
        %v8877 = vpop.f32.mrf.mxu0
        %v8878 = vadd.f32 %v8765, %v8877
        %v8879 = vpop.f32.mrf.mxu0
        %v8880 = vadd.f32 %v8767, %v8879
        %8881 = vmatprep.mubr.bf16.mxu0 %v4380
        %8882 = vmatmul.mubr.bf16.gmra.mxu0 %v4379
        %v8883 = vpop.f32.mrf.mxu0
        %v8884 = vadd.f32 %v8771, %v8883
        %v8885 = vpop.f32.mrf.mxu0
        %v8886 = vadd.f32 %v8773, %v8885
        %v8887 = vpop.f32.mrf.mxu0
        %v8888 = vadd.f32 %v8775, %v8887
        %v8889 = vpop.f32.mrf.mxu0
        %v8890 = vadd.f32 %v8777, %v8889
        %8891 = vmatprep.mubr.bf16.mxu0 %v4398
        %8892 = vmatmul.mubr.bf16.gmra.mxu0 %v4397
        %v8893 = vpop.f32.mrf.mxu0
        %v8894 = vadd.f32 %v8781, %v8893
        %v8895 = vpop.f32.mrf.mxu0
        %v8896 = vadd.f32 %v8783, %v8895
        %v8897 = vpop.f32.mrf.mxu0
        %v8898 = vadd.f32 %v8785, %v8897
        %v8899 = vpop.f32.mrf.mxu0
        %v8900 = vadd.f32 %v8787, %v8899
        %8901 = vdwg.mxu0
        %8902 = vmatprep.subr.bf16.mxu0 %v6568
        %8903 = vmatpush1.bf16.msra.mxu0 %v6567
        %8904 = vmatprep.subr.bf16.mxu0 %v6564
        %8905 = vmatpush1.bf16.msra.mxu0 %v6563
        %8906 = vmatprep.subr.bf16.mxu0 %v6560
        %8907 = vmatpush1.bf16.msra.mxu0 %v6559
        %8908 = vmatprep.subr.bf16.mxu0 %v6556
        %8909 = vmatpush1.bf16.msra.mxu0 %v6555
        %8910 = vmatprep.subr.bf16.mxu0 %v6552
        %8911 = vmatpush1.bf16.msra.mxu0 %v6551
        %8912 = vmatprep.subr.bf16.mxu0 %v6548
        %8913 = vmatpush1.bf16.msra.mxu0 %v6547
        %8914 = vmatprep.subr.bf16.mxu0 %v6544
        %8915 = vmatpush1.bf16.msra.mxu0 %v6543
        %8916 = vmatprep.subr.bf16.mxu0 %v6540
        %8917 = vmatpush1.bf16.msra.mxu0 %v6539
        %8918 = vmatprep.subr.bf16.mxu0 %v6600
        %8919 = vmatpush2.bf16.msra.mxu0 %v6599
        %8920 = vmatprep.subr.bf16.mxu0 %v6596
        %8921 = vmatpush2.bf16.msra.mxu0 %v6595
        %8922 = vmatprep.subr.bf16.mxu0 %v6592
        %8923 = vmatpush2.bf16.msra.mxu0 %v6591
        %8924 = vmatprep.subr.bf16.mxu0 %v6588
        %8925 = vmatpush2.bf16.msra.mxu0 %v6587
        %8926 = vmatprep.subr.bf16.mxu0 %v6584
        %8927 = vmatpush2.bf16.msra.mxu0 %v6583
        %8928 = vmatprep.subr.bf16.mxu0 %v6580
        %8929 = vmatpush2.bf16.msra.mxu0 %v6579
        %8930 = vmatprep.subr.bf16.mxu0 %v6576
        %8931 = vmatpush2.bf16.msra.mxu0 %v6575
        %8932 = vmatprep.subr.bf16.mxu0 %v6572
        %8933 = vmatpush2.bf16.msra.mxu0 %v6571
        %8934 = vmatprep.mubr.bf16.mxu0 %v4274
        %8935 = vmatmul.mubr.bf16.gmra.mxu0 %v4273
        %v8936 = vpop.f32.mrf.mxu0
        %v8937 = vadd.f32 %v8824, %v8936
        %v8938 = vpop.f32.mrf.mxu0
        %v8939 = vadd.f32 %v8826, %v8938
        %v8940 = vpop.f32.mrf.mxu0
        %v8941 = vadd.f32 %v8828, %v8940
        %v8942 = vpop.f32.mrf.mxu0
        %v8943 = vadd.f32 %v8830, %v8942
        %8944 = vmatprep.mubr.bf16.mxu0 %v4292
        %8945 = vmatmul.mubr.bf16.gmra.mxu0 %v4291
        %v8946 = vpop.f32.mrf.mxu0
        %v8947 = vadd.f32 %v8834, %v8946
        %v8948 = vpop.f32.mrf.mxu0
        %v8949 = vadd.f32 %v8836, %v8948
        %v8950 = vpop.f32.mrf.mxu0
        %v8951 = vadd.f32 %v8838, %v8950
        %v8952 = vpop.f32.mrf.mxu0
        %v8953 = vadd.f32 %v8840, %v8952
        %8954 = vmatprep.mubr.bf16.mxu0 %v4310
        %8955 = vmatmul.mubr.bf16.gmra.mxu0 %v4309
        %v8956 = vpop.f32.mrf.mxu0
        %v8957 = vadd.f32 %v8844, %v8956
        %v8958 = vpop.f32.mrf.mxu0
        %v8959 = vadd.f32 %v8846, %v8958
        %v8960 = vpop.f32.mrf.mxu0
        %v8961 = vadd.f32 %v8848, %v8960
        %v8962 = vpop.f32.mrf.mxu0
        %v8963 = vadd.f32 %v8850, %v8962
        %8964 = vmatprep.mubr.bf16.mxu0 %v4328
        %8965 = vmatmul.mubr.bf16.gmra.mxu0 %v4327
        %v8966 = vpop.f32.mrf.mxu0
        %v8967 = vadd.f32 %v8854, %v8966
        %v8968 = vpop.f32.mrf.mxu0
        %v8969 = vadd.f32 %v8856, %v8968
        %v8970 = vpop.f32.mrf.mxu0
        %v8971 = vadd.f32 %v8858, %v8970
        %v8972 = vpop.f32.mrf.mxu0
        %v8973 = vadd.f32 %v8860, %v8972
        %8974 = vmatprep.mubr.bf16.mxu0 %v4346
        %8975 = vmatmul.mubr.bf16.gmra.mxu0 %v4345
        %v8976 = vpop.f32.mrf.mxu0
        %v8977 = vadd.f32 %v8864, %v8976
        %v8978 = vpop.f32.mrf.mxu0
        %v8979 = vadd.f32 %v8866, %v8978
        %v8980 = vpop.f32.mrf.mxu0
        %v8981 = vadd.f32 %v8868, %v8980
        %v8982 = vpop.f32.mrf.mxu0
        %v8983 = vadd.f32 %v8870, %v8982
        %8984 = vmatprep.mubr.bf16.mxu0 %v4364
        %8985 = vmatmul.mubr.bf16.gmra.mxu0 %v4363
        %v8986 = vpop.f32.mrf.mxu0
        %v8987 = vadd.f32 %v8874, %v8986
        %v8988 = vpop.f32.mrf.mxu0
        %v8989 = vadd.f32 %v8876, %v8988
        %v8990 = vpop.f32.mrf.mxu0
        %v8991 = vadd.f32 %v8878, %v8990
        %v8992 = vpop.f32.mrf.mxu0
        %v8993 = vadd.f32 %v8880, %v8992
        %8994 = vmatprep.mubr.bf16.mxu0 %v4382
        %8995 = vmatmul.mubr.bf16.gmra.mxu0 %v4381
        %v8996 = vpop.f32.mrf.mxu0
        %v8997 = vadd.f32 %v8884, %v8996
        %v8998 = vpop.f32.mrf.mxu0
        %v8999 = vadd.f32 %v8886, %v8998
        %v9000 = vpop.f32.mrf.mxu0
        %v9001 = vadd.f32 %v8888, %v9000
        %v9002 = vpop.f32.mrf.mxu0
        %v9003 = vadd.f32 %v8890, %v9002
        %9004 = vmatprep.mubr.bf16.mxu0 %v4400
        %9005 = vmatmul.mubr.bf16.gmra.mxu0 %v4399
        %v9006 = vpop.f32.mrf.mxu0
        %v9007 = vadd.f32 %v8894, %v9006
        %v9008 = vpop.f32.mrf.mxu0
        %v9009 = vadd.f32 %v8896, %v9008
        %v9010 = vpop.f32.mrf.mxu0
        %v9011 = vadd.f32 %v8898, %v9010
        %v9012 = vpop.f32.mrf.mxu0
        %v9013 = vadd.f32 %v8900, %v9012
        %9014 = vdwg.mxu0
        %9015 = vmatprep.subr.bf16.mxu0 %v6632
        %9016 = vmatpush1.bf16.msra.mxu0 %v6631
        %9017 = vmatprep.subr.bf16.mxu0 %v6628
        %9018 = vmatpush1.bf16.msra.mxu0 %v6627
        %9019 = vmatprep.subr.bf16.mxu0 %v6624
        %9020 = vmatpush1.bf16.msra.mxu0 %v6623
        %9021 = vmatprep.subr.bf16.mxu0 %v6620
        %9022 = vmatpush1.bf16.msra.mxu0 %v6619
        %9023 = vmatprep.subr.bf16.mxu0 %v6616
        %9024 = vmatpush1.bf16.msra.mxu0 %v6615
        %9025 = vmatprep.subr.bf16.mxu0 %v6612
        %9026 = vmatpush1.bf16.msra.mxu0 %v6611
        %9027 = vmatprep.subr.bf16.mxu0 %v6608
        %9028 = vmatpush1.bf16.msra.mxu0 %v6607
        %9029 = vmatprep.subr.bf16.mxu0 %v6604
        %9030 = vmatpush1.bf16.msra.mxu0 %v6603
        %9031 = vmatprep.subr.bf16.mxu0 %v6664
        %9032 = vmatpush2.bf16.msra.mxu0 %v6663
        %9033 = vmatprep.subr.bf16.mxu0 %v6660
        %9034 = vmatpush2.bf16.msra.mxu0 %v6659
        %9035 = vmatprep.subr.bf16.mxu0 %v6656
        %9036 = vmatpush2.bf16.msra.mxu0 %v6655
        %9037 = vmatprep.subr.bf16.mxu0 %v6652
        %9038 = vmatpush2.bf16.msra.mxu0 %v6651
        %9039 = vmatprep.subr.bf16.mxu0 %v6648
        %9040 = vmatpush2.bf16.msra.mxu0 %v6647
        %9041 = vmatprep.subr.bf16.mxu0 %v6644
        %9042 = vmatpush2.bf16.msra.mxu0 %v6643
        %9043 = vmatprep.subr.bf16.mxu0 %v6640
        %9044 = vmatpush2.bf16.msra.mxu0 %v6639
        %9045 = vmatprep.subr.bf16.mxu0 %v6636
        %9046 = vmatpush2.bf16.msra.mxu0 %v6635
        %9047 = vmatprep.mubr.bf16.mxu0 %v4276
        %9048 = vmatmul.mubr.bf16.gmra.mxu0 %v4275
        %v9049 = vpop.f32.mrf.mxu0
        %v9050 = vadd.f32 %v8937, %v9049
        %v9051 = vpop.f32.mrf.mxu0
        %v9052 = vadd.f32 %v8939, %v9051
        %v9053 = vpop.f32.mrf.mxu0
        %v9054 = vadd.f32 %v8941, %v9053
        %v9055 = vpop.f32.mrf.mxu0
        %v9056 = vadd.f32 %v8943, %v9055
        %9057 = vmatprep.mubr.bf16.mxu0 %v4294
        %9058 = vmatmul.mubr.bf16.gmra.mxu0 %v4293
        %v9059 = vpop.f32.mrf.mxu0
        %v9060 = vadd.f32 %v8947, %v9059
        %v9061 = vpop.f32.mrf.mxu0
        %v9062 = vadd.f32 %v8949, %v9061
        %v9063 = vpop.f32.mrf.mxu0
        %v9064 = vadd.f32 %v8951, %v9063
        %v9065 = vpop.f32.mrf.mxu0
        %v9066 = vadd.f32 %v8953, %v9065
        %9067 = vmatprep.mubr.bf16.mxu0 %v4312
        %9068 = vmatmul.mubr.bf16.gmra.mxu0 %v4311
        %v9069 = vpop.f32.mrf.mxu0
        %v9070 = vadd.f32 %v8957, %v9069
        %v9071 = vpop.f32.mrf.mxu0
        %v9072 = vadd.f32 %v8959, %v9071
        %v9073 = vpop.f32.mrf.mxu0
        %v9074 = vadd.f32 %v8961, %v9073
        %v9075 = vpop.f32.mrf.mxu0
        %v9076 = vadd.f32 %v8963, %v9075
        %9077 = vmatprep.mubr.bf16.mxu0 %v4330
        %9078 = vmatmul.mubr.bf16.gmra.mxu0 %v4329
        %v9079 = vpop.f32.mrf.mxu0
        %v9080 = vadd.f32 %v8967, %v9079
        %v9081 = vpop.f32.mrf.mxu0
        %v9082 = vadd.f32 %v8969, %v9081
        %v9083 = vpop.f32.mrf.mxu0
        %v9084 = vadd.f32 %v8971, %v9083
        %v9085 = vpop.f32.mrf.mxu0
        %v9086 = vadd.f32 %v8973, %v9085
        %9087 = vmatprep.mubr.bf16.mxu0 %v4348
        %9088 = vmatmul.mubr.bf16.gmra.mxu0 %v4347
        %v9089 = vpop.f32.mrf.mxu0
        %v9090 = vadd.f32 %v8977, %v9089
        %v9091 = vpop.f32.mrf.mxu0
        %v9092 = vadd.f32 %v8979, %v9091
        %v9093 = vpop.f32.mrf.mxu0
        %v9094 = vadd.f32 %v8981, %v9093
        %v9095 = vpop.f32.mrf.mxu0
        %v9096 = vadd.f32 %v8983, %v9095
        %9097 = vmatprep.mubr.bf16.mxu0 %v4366
        %9098 = vmatmul.mubr.bf16.gmra.mxu0 %v4365
        %v9099 = vpop.f32.mrf.mxu0
        %v9100 = vadd.f32 %v8987, %v9099
        %v9101 = vpop.f32.mrf.mxu0
        %v9102 = vadd.f32 %v8989, %v9101
        %v9103 = vpop.f32.mrf.mxu0
        %v9104 = vadd.f32 %v8991, %v9103
        %v9105 = vpop.f32.mrf.mxu0
        %v9106 = vadd.f32 %v8993, %v9105
        %9107 = vmatprep.mubr.bf16.mxu0 %v4384
        %9108 = vmatmul.mubr.bf16.gmra.mxu0 %v4383
        %v9109 = vpop.f32.mrf.mxu0
        %v9110 = vadd.f32 %v8997, %v9109
        %v9111 = vpop.f32.mrf.mxu0
        %v9112 = vadd.f32 %v8999, %v9111
        %v9113 = vpop.f32.mrf.mxu0
        %v9114 = vadd.f32 %v9001, %v9113
        %v9115 = vpop.f32.mrf.mxu0
        %v9116 = vadd.f32 %v9003, %v9115
        %9117 = vmatprep.mubr.bf16.mxu0 %v4402
        %9118 = vmatmul.mubr.bf16.gmra.mxu0 %v4401
        %v9119 = vpop.f32.mrf.mxu0
        %v9120 = vadd.f32 %v9007, %v9119
        %v9121 = vpop.f32.mrf.mxu0
        %v9122 = vadd.f32 %v9009, %v9121
        %v9123 = vpop.f32.mrf.mxu0
        %v9124 = vadd.f32 %v9011, %v9123
        %v9125 = vpop.f32.mrf.mxu0
        %v9126 = vadd.f32 %v9013, %v9125
        %9127 = vdwg.mxu0
        %9128 = vmatprep.subr.bf16.mxu0 %v6696
        %9129 = vmatpush1.bf16.msra.mxu0 %v6695
        %9130 = vmatprep.subr.bf16.mxu0 %v6692
        %9131 = vmatpush1.bf16.msra.mxu0 %v6691
        %9132 = vmatprep.subr.bf16.mxu0 %v6688
        %9133 = vmatpush1.bf16.msra.mxu0 %v6687
        %9134 = vmatprep.subr.bf16.mxu0 %v6684
        %9135 = vmatpush1.bf16.msra.mxu0 %v6683
        %9136 = vmatprep.subr.bf16.mxu0 %v6680
        %9137 = vmatpush1.bf16.msra.mxu0 %v6679
        %9138 = vmatprep.subr.bf16.mxu0 %v6676
        %9139 = vmatpush1.bf16.msra.mxu0 %v6675
        %9140 = vmatprep.subr.bf16.mxu0 %v6672
        %9141 = vmatpush1.bf16.msra.mxu0 %v6671
        %9142 = vmatprep.subr.bf16.mxu0 %v6668
        %9143 = vmatpush1.bf16.msra.mxu0 %v6667
        %9144 = vmatprep.subr.bf16.mxu0 %v6728
        %9145 = vmatpush2.bf16.msra.mxu0 %v6727
        %9146 = vmatprep.subr.bf16.mxu0 %v6724
        %9147 = vmatpush2.bf16.msra.mxu0 %v6723
        %9148 = vmatprep.subr.bf16.mxu0 %v6720
        %9149 = vmatpush2.bf16.msra.mxu0 %v6719
        %9150 = vmatprep.subr.bf16.mxu0 %v6716
        %9151 = vmatpush2.bf16.msra.mxu0 %v6715
        %9152 = vmatprep.subr.bf16.mxu0 %v6712
        %9153 = vmatpush2.bf16.msra.mxu0 %v6711
        %9154 = vmatprep.subr.bf16.mxu0 %v6708
        %9155 = vmatpush2.bf16.msra.mxu0 %v6707
        %9156 = vmatprep.subr.bf16.mxu0 %v6704
        %9157 = vmatpush2.bf16.msra.mxu0 %v6703
        %9158 = vmatprep.subr.bf16.mxu0 %v6700
        %9159 = vmatpush2.bf16.msra.mxu0 %v6699
        %9160 = vmatprep.mubr.bf16.mxu0 %v4278
        %9161 = vmatmul.mubr.bf16.gmra.mxu0 %v4277
        %v9162 = vpop.f32.mrf.mxu0
        %v9163 = vadd.f32 %v9050, %v9162
        %v9164 = vpop.f32.mrf.mxu0
        %v9165 = vadd.f32 %v9052, %v9164
        %v9166 = vpop.f32.mrf.mxu0
        %v9167 = vadd.f32 %v9054, %v9166
        %v9168 = vpop.f32.mrf.mxu0
        %v9169 = vadd.f32 %v9056, %v9168
        %9170 = vmatprep.mubr.bf16.mxu0 %v4296
        %9171 = vmatmul.mubr.bf16.gmra.mxu0 %v4295
        %v9172 = vpop.f32.mrf.mxu0
        %v9173 = vadd.f32 %v9060, %v9172
        %v9174 = vpop.f32.mrf.mxu0
        %v9175 = vadd.f32 %v9062, %v9174
        %v9176 = vpop.f32.mrf.mxu0
        %v9177 = vadd.f32 %v9064, %v9176
        %v9178 = vpop.f32.mrf.mxu0
        %v9179 = vadd.f32 %v9066, %v9178
        %9180 = vmatprep.mubr.bf16.mxu0 %v4314
        %9181 = vmatmul.mubr.bf16.gmra.mxu0 %v4313
        %v9182 = vpop.f32.mrf.mxu0
        %v9183 = vadd.f32 %v9070, %v9182
        %v9184 = vpop.f32.mrf.mxu0
        %v9185 = vadd.f32 %v9072, %v9184
        %v9186 = vpop.f32.mrf.mxu0
        %v9187 = vadd.f32 %v9074, %v9186
        %v9188 = vpop.f32.mrf.mxu0
        %v9189 = vadd.f32 %v9076, %v9188
        %9190 = vmatprep.mubr.bf16.mxu0 %v4332
        %9191 = vmatmul.mubr.bf16.gmra.mxu0 %v4331
        %v9192 = vpop.f32.mrf.mxu0
        %v9193 = vadd.f32 %v9080, %v9192
        %v9194 = vpop.f32.mrf.mxu0
        %v9195 = vadd.f32 %v9082, %v9194
        %v9196 = vpop.f32.mrf.mxu0
        %v9197 = vadd.f32 %v9084, %v9196
        %v9198 = vpop.f32.mrf.mxu0
        %v9199 = vadd.f32 %v9086, %v9198
        %9200 = vmatprep.mubr.bf16.mxu0 %v4350
        %9201 = vmatmul.mubr.bf16.gmra.mxu0 %v4349
        %v9202 = vpop.f32.mrf.mxu0
        %v9203 = vadd.f32 %v9090, %v9202
        %v9204 = vpop.f32.mrf.mxu0
        %v9205 = vadd.f32 %v9092, %v9204
        %v9206 = vpop.f32.mrf.mxu0
        %v9207 = vadd.f32 %v9094, %v9206
        %v9208 = vpop.f32.mrf.mxu0
        %v9209 = vadd.f32 %v9096, %v9208
        %9210 = vmatprep.mubr.bf16.mxu0 %v4368
        %9211 = vmatmul.mubr.bf16.gmra.mxu0 %v4367
        %v9212 = vpop.f32.mrf.mxu0
        %v9213 = vadd.f32 %v9100, %v9212
        %v9214 = vpop.f32.mrf.mxu0
        %v9215 = vadd.f32 %v9102, %v9214
        %v9216 = vpop.f32.mrf.mxu0
        %v9217 = vadd.f32 %v9104, %v9216
        %v9218 = vpop.f32.mrf.mxu0
        %v9219 = vadd.f32 %v9106, %v9218
        %9220 = vmatprep.mubr.bf16.mxu0 %v4386
        %9221 = vmatmul.mubr.bf16.gmra.mxu0 %v4385
        %v9222 = vpop.f32.mrf.mxu0
        %v9223 = vadd.f32 %v9110, %v9222
        %v9224 = vpop.f32.mrf.mxu0
        %v9225 = vadd.f32 %v9112, %v9224
        %v9226 = vpop.f32.mrf.mxu0
        %v9227 = vadd.f32 %v9114, %v9226
        %v9228 = vpop.f32.mrf.mxu0
        %v9229 = vadd.f32 %v9116, %v9228
        %9230 = vmatprep.mubr.bf16.mxu0 %v4404
        %9231 = vmatmul.mubr.bf16.gmra.mxu0 %v4403
        %v9232 = vpop.f32.mrf.mxu0
        %v9233 = vadd.f32 %v9120, %v9232
        %v9234 = vpop.f32.mrf.mxu0
        %v9235 = vadd.f32 %v9122, %v9234
        %v9236 = vpop.f32.mrf.mxu0
        %v9237 = vadd.f32 %v9124, %v9236
        %v9238 = vpop.f32.mrf.mxu0
        %v9239 = vadd.f32 %v9126, %v9238
        %9240 = vdwg.mxu0
        %9241 = vmatprep.subr.bf16.mxu0 %v6760
        %9242 = vmatpush1.bf16.msra.mxu0 %v6759
        %9243 = vmatprep.subr.bf16.mxu0 %v6756
        %9244 = vmatpush1.bf16.msra.mxu0 %v6755
        %9245 = vmatprep.subr.bf16.mxu0 %v6752
        %9246 = vmatpush1.bf16.msra.mxu0 %v6751
        %9247 = vmatprep.subr.bf16.mxu0 %v6748
        %9248 = vmatpush1.bf16.msra.mxu0 %v6747
        %9249 = vmatprep.subr.bf16.mxu0 %v6744
        %9250 = vmatpush1.bf16.msra.mxu0 %v6743
        %9251 = vmatprep.subr.bf16.mxu0 %v6740
        %9252 = vmatpush1.bf16.msra.mxu0 %v6739
        %9253 = vmatprep.subr.bf16.mxu0 %v6736
        %9254 = vmatpush1.bf16.msra.mxu0 %v6735
        %9255 = vmatprep.subr.bf16.mxu0 %v6732
        %9256 = vmatpush1.bf16.msra.mxu0 %v6731
        %9257 = vmatprep.subr.bf16.mxu0 %v6792
        %9258 = vmatpush2.bf16.msra.mxu0 %v6791
        %9259 = vmatprep.subr.bf16.mxu0 %v6788
        %9260 = vmatpush2.bf16.msra.mxu0 %v6787
        %9261 = vmatprep.subr.bf16.mxu0 %v6784
        %9262 = vmatpush2.bf16.msra.mxu0 %v6783
        %9263 = vmatprep.subr.bf16.mxu0 %v6780
        %9264 = vmatpush2.bf16.msra.mxu0 %v6779
        %9265 = vmatprep.subr.bf16.mxu0 %v6776
        %9266 = vmatpush2.bf16.msra.mxu0 %v6775
        %9267 = vmatprep.subr.bf16.mxu0 %v6772
        %9268 = vmatpush2.bf16.msra.mxu0 %v6771
        %9269 = vmatprep.subr.bf16.mxu0 %v6768
        %9270 = vmatpush2.bf16.msra.mxu0 %v6767
        %9271 = vmatprep.subr.bf16.mxu0 %v6764
        %9272 = vmatpush2.bf16.msra.mxu0 %v6763
        %9273 = vmatprep.mubr.bf16.mxu0 %v4280
        %9274 = vmatmul.mubr.bf16.gmra.mxu0 %v4279
        %v9275 = vpop.f32.mrf.mxu0
        %v9276 = vadd.f32 %v9163, %v9275
        %v9277 = vpop.f32.mrf.mxu0
        %v9278 = vadd.f32 %v9165, %v9277
        %v9279 = vpop.f32.mrf.mxu0
        %v9280 = vadd.f32 %v9167, %v9279
        %v9281 = vpop.f32.mrf.mxu0
        %v9282 = vadd.f32 %v9169, %v9281
        %9283 = vmatprep.mubr.bf16.mxu0 %v4298
        %9284 = vmatmul.mubr.bf16.gmra.mxu0 %v4297
        %v9285 = vpop.f32.mrf.mxu0
        %v9286 = vadd.f32 %v9173, %v9285
        %v9287 = vpop.f32.mrf.mxu0
        %v9288 = vadd.f32 %v9175, %v9287
        %v9289 = vpop.f32.mrf.mxu0
        %v9290 = vadd.f32 %v9177, %v9289
        %v9291 = vpop.f32.mrf.mxu0
        %v9292 = vadd.f32 %v9179, %v9291
        %9293 = vmatprep.mubr.bf16.mxu0 %v4316
        %9294 = vmatmul.mubr.bf16.gmra.mxu0 %v4315
        %v9295 = vpop.f32.mrf.mxu0
        %v9296 = vadd.f32 %v9183, %v9295
        %v9297 = vpop.f32.mrf.mxu0
        %v9298 = vadd.f32 %v9185, %v9297
        %v9299 = vpop.f32.mrf.mxu0
        %v9300 = vadd.f32 %v9187, %v9299
        %v9301 = vpop.f32.mrf.mxu0
        %v9302 = vadd.f32 %v9189, %v9301
        %9303 = vmatprep.mubr.bf16.mxu0 %v4334
        %9304 = vmatmul.mubr.bf16.gmra.mxu0 %v4333
        %v9305 = vpop.f32.mrf.mxu0
        %v9306 = vadd.f32 %v9193, %v9305
        %v9307 = vpop.f32.mrf.mxu0
        %v9308 = vadd.f32 %v9195, %v9307
        %v9309 = vpop.f32.mrf.mxu0
        %v9310 = vadd.f32 %v9197, %v9309
        %v9311 = vpop.f32.mrf.mxu0
        %v9312 = vadd.f32 %v9199, %v9311
        %9313 = vmatprep.mubr.bf16.mxu0 %v4352
        %9314 = vmatmul.mubr.bf16.gmra.mxu0 %v4351
        %v9315 = vpop.f32.mrf.mxu0
        %v9316 = vadd.f32 %v9203, %v9315
        %v9317 = vpop.f32.mrf.mxu0
        %v9318 = vadd.f32 %v9205, %v9317
        %v9319 = vpop.f32.mrf.mxu0
        %v9320 = vadd.f32 %v9207, %v9319
        %v9321 = vpop.f32.mrf.mxu0
        %v9322 = vadd.f32 %v9209, %v9321
        %9323 = vmatprep.mubr.bf16.mxu0 %v4370
        %9324 = vmatmul.mubr.bf16.gmra.mxu0 %v4369
        %v9325 = vpop.f32.mrf.mxu0
        %v9326 = vadd.f32 %v9213, %v9325
        %v9327 = vpop.f32.mrf.mxu0
        %v9328 = vadd.f32 %v9215, %v9327
        %v9329 = vpop.f32.mrf.mxu0
        %v9330 = vadd.f32 %v9217, %v9329
        %v9331 = vpop.f32.mrf.mxu0
        %v9332 = vadd.f32 %v9219, %v9331
        %9333 = vmatprep.mubr.bf16.mxu0 %v4388
        %9334 = vmatmul.mubr.bf16.gmra.mxu0 %v4387
        %v9335 = vpop.f32.mrf.mxu0
        %v9336 = vadd.f32 %v9223, %v9335
        %v9337 = vpop.f32.mrf.mxu0
        %v9338 = vadd.f32 %v9225, %v9337
        %v9339 = vpop.f32.mrf.mxu0
        %v9340 = vadd.f32 %v9227, %v9339
        %v9341 = vpop.f32.mrf.mxu0
        %v9342 = vadd.f32 %v9229, %v9341
        %9343 = vmatprep.mubr.bf16.mxu0 %v4406
        %9344 = vmatmul.mubr.bf16.gmra.mxu0 %v4405
        %v9345 = vpop.f32.mrf.mxu0
        %v9346 = vadd.f32 %v9233, %v9345
        %v9347 = vpop.f32.mrf.mxu0
        %v9348 = vadd.f32 %v9235, %v9347
        %v9349 = vpop.f32.mrf.mxu0
        %v9350 = vadd.f32 %v9237, %v9349
        %v9351 = vpop.f32.mrf.mxu0
        %v9352 = vadd.f32 %v9239, %v9351
        %9353 = vdwg.mxu0
        %9354 = vmatprep.subr.bf16.mxu0 %v6824
        %9355 = vmatpush1.bf16.msra.mxu0 %v6823
        %9356 = vmatprep.subr.bf16.mxu0 %v6820
        %9357 = vmatpush1.bf16.msra.mxu0 %v6819
        %9358 = vmatprep.subr.bf16.mxu0 %v6816
        %9359 = vmatpush1.bf16.msra.mxu0 %v6815
        %9360 = vmatprep.subr.bf16.mxu0 %v6812
        %9361 = vmatpush1.bf16.msra.mxu0 %v6811
        %9362 = vmatprep.subr.bf16.mxu0 %v6808
        %9363 = vmatpush1.bf16.msra.mxu0 %v6807
        %9364 = vmatprep.subr.bf16.mxu0 %v6804
        %9365 = vmatpush1.bf16.msra.mxu0 %v6803
        %9366 = vmatprep.subr.bf16.mxu0 %v6800
        %9367 = vmatpush1.bf16.msra.mxu0 %v6799
        %9368 = vmatprep.subr.bf16.mxu0 %v6796
        %9369 = vmatpush1.bf16.msra.mxu0 %v6795
        %9370 = vmatprep.subr.bf16.mxu0 %v6856
        %9371 = vmatpush2.bf16.msra.mxu0 %v6855
        %9372 = vmatprep.subr.bf16.mxu0 %v6852
        %9373 = vmatpush2.bf16.msra.mxu0 %v6851
        %9374 = vmatprep.subr.bf16.mxu0 %v6848
        %9375 = vmatpush2.bf16.msra.mxu0 %v6847
        %9376 = vmatprep.subr.bf16.mxu0 %v6844
        %9377 = vmatpush2.bf16.msra.mxu0 %v6843
        %9378 = vmatprep.subr.bf16.mxu0 %v6840
        %9379 = vmatpush2.bf16.msra.mxu0 %v6839
        %9380 = vmatprep.subr.bf16.mxu0 %v6836
        %9381 = vmatpush2.bf16.msra.mxu0 %v6835
        %9382 = vmatprep.subr.bf16.mxu0 %v6832
        %9383 = vmatpush2.bf16.msra.mxu0 %v6831
        %9384 = vmatprep.subr.bf16.mxu0 %v6828
        %9385 = vmatpush2.bf16.msra.mxu0 %v6827
        %9386 = vmatprep.mubr.bf16.mxu0 %v4282
        %9387 = vmatmul.mubr.bf16.gmra.mxu0 %v4281
        %v9388 = vpop.f32.mrf.mxu0
        %v9389 = vadd.f32 %v9276, %v9388
        %v9390 = vpop.f32.mrf.mxu0
        %v9391 = vadd.f32 %v9278, %v9390
        %v9392 = vpop.f32.mrf.mxu0
        %v9393 = vadd.f32 %v9280, %v9392
        %v9394 = vpop.f32.mrf.mxu0
        %v9395 = vadd.f32 %v9282, %v9394
        %9396 = vmatprep.mubr.bf16.mxu0 %v4300
        %9397 = vmatmul.mubr.bf16.gmra.mxu0 %v4299
        %v9398 = vpop.f32.mrf.mxu0
        %v9399 = vadd.f32 %v9286, %v9398
        %v9400 = vpop.f32.mrf.mxu0
        %v9401 = vadd.f32 %v9288, %v9400
        %v9402 = vpop.f32.mrf.mxu0
        %v9403 = vadd.f32 %v9290, %v9402
        %v9404 = vpop.f32.mrf.mxu0
        %v9405 = vadd.f32 %v9292, %v9404
        %9406 = vmatprep.mubr.bf16.mxu0 %v4318
        %9407 = vmatmul.mubr.bf16.gmra.mxu0 %v4317
        %v9408 = vpop.f32.mrf.mxu0
        %v9409 = vadd.f32 %v9296, %v9408
        %v9410 = vpop.f32.mrf.mxu0
        %v9411 = vadd.f32 %v9298, %v9410
        %v9412 = vpop.f32.mrf.mxu0
        %v9413 = vadd.f32 %v9300, %v9412
        %v9414 = vpop.f32.mrf.mxu0
        %v9415 = vadd.f32 %v9302, %v9414
        %9416 = vmatprep.mubr.bf16.mxu0 %v4336
        %9417 = vmatmul.mubr.bf16.gmra.mxu0 %v4335
        %v9418 = vpop.f32.mrf.mxu0
        %v9419 = vadd.f32 %v9306, %v9418
        %v9420 = vpop.f32.mrf.mxu0
        %v9421 = vadd.f32 %v9308, %v9420
        %v9422 = vpop.f32.mrf.mxu0
        %v9423 = vadd.f32 %v9310, %v9422
        %v9424 = vpop.f32.mrf.mxu0
        %v9425 = vadd.f32 %v9312, %v9424
        %9426 = vmatprep.mubr.bf16.mxu0 %v4354
        %9427 = vmatmul.mubr.bf16.gmra.mxu0 %v4353
        %v9428 = vpop.f32.mrf.mxu0
        %v9429 = vadd.f32 %v9316, %v9428
        %v9430 = vpop.f32.mrf.mxu0
        %v9431 = vadd.f32 %v9318, %v9430
        %v9432 = vpop.f32.mrf.mxu0
        %v9433 = vadd.f32 %v9320, %v9432
        %v9434 = vpop.f32.mrf.mxu0
        %v9435 = vadd.f32 %v9322, %v9434
        %9436 = vmatprep.mubr.bf16.mxu0 %v4372
        %9437 = vmatmul.mubr.bf16.gmra.mxu0 %v4371
        %v9438 = vpop.f32.mrf.mxu0
        %v9439 = vadd.f32 %v9326, %v9438
        %v9440 = vpop.f32.mrf.mxu0
        %v9441 = vadd.f32 %v9328, %v9440
        %v9442 = vpop.f32.mrf.mxu0
        %v9443 = vadd.f32 %v9330, %v9442
        %v9444 = vpop.f32.mrf.mxu0
        %v9445 = vadd.f32 %v9332, %v9444
        %9446 = vmatprep.mubr.bf16.mxu0 %v4390
        %9447 = vmatmul.mubr.bf16.gmra.mxu0 %v4389
        %v9448 = vpop.f32.mrf.mxu0
        %v9449 = vadd.f32 %v9336, %v9448
        %v9450 = vpop.f32.mrf.mxu0
        %v9451 = vadd.f32 %v9338, %v9450
        %v9452 = vpop.f32.mrf.mxu0
        %v9453 = vadd.f32 %v9340, %v9452
        %v9454 = vpop.f32.mrf.mxu0
        %v9455 = vadd.f32 %v9342, %v9454
        %9456 = vmatprep.mubr.bf16.mxu0 %v4408
        %9457 = vmatmul.mubr.bf16.gmra.mxu0 %v4407
        %v9458 = vpop.f32.mrf.mxu0
        %v9459 = vadd.f32 %v9346, %v9458
        %v9460 = vpop.f32.mrf.mxu0
        %v9461 = vadd.f32 %v9348, %v9460
        %v9462 = vpop.f32.mrf.mxu0
        %v9463 = vadd.f32 %v9350, %v9462
        %v9464 = vpop.f32.mrf.mxu0
        %v9465 = vadd.f32 %v9352, %v9464
        %9466 = vdwg.mxu0
        %v9467 = vmax.f32 %v8372, 0.0
        %v9468 = vmax.f32 %v8374, 0.0
        %v9469 = vmax.f32 %v9389, 0.0
        %v9470 = vmax.f32 %v9391, 0.0
        %v9471 = vmax.f32 %v8376, 0.0
        %v9472 = vmax.f32 %v8378, 0.0
        %v9473 = vmax.f32 %v9393, 0.0
        %v9474 = vmax.f32 %v9395, 0.0
        %v9475 = vmax.f32 %v8382, 0.0
        %v9476 = vmax.f32 %v8384, 0.0
        %v9477 = vmax.f32 %v9399, 0.0
        %v9478 = vmax.f32 %v9401, 0.0
        %v9479 = vmax.f32 %v8386, 0.0
        %v9480 = vmax.f32 %v8388, 0.0
        %v9481 = vmax.f32 %v9403, 0.0
        %v9482 = vmax.f32 %v9405, 0.0
        %v9483 = vmax.f32 %v8392, 0.0
        %v9484 = vmax.f32 %v8394, 0.0
        %v9485 = vmax.f32 %v9409, 0.0
        %v9486 = vmax.f32 %v9411, 0.0
        %v9487 = vmax.f32 %v8396, 0.0
        %v9488 = vmax.f32 %v8398, 0.0
        %v9489 = vmax.f32 %v9413, 0.0
        %v9490 = vmax.f32 %v9415, 0.0
        %v9491 = vmax.f32 %v8402, 0.0
        %v9492 = vmax.f32 %v8404, 0.0
        %v9493 = vmax.f32 %v9419, 0.0
        %v9494 = vmax.f32 %v9421, 0.0
        %v9495 = vmax.f32 %v8406, 0.0
        %v9496 = vmax.f32 %v8408, 0.0
        %v9497 = vmax.f32 %v9423, 0.0
        %v9498 = vmax.f32 %v9425, 0.0
        %v9499 = vmax.f32 %v8412, 0.0
        %v9500 = vmax.f32 %v8414, 0.0
        %v9501 = vmax.f32 %v9429, 0.0
        %v9502 = vmax.f32 %v9431, 0.0
        %v9503 = vmax.f32 %v8416, 0.0
        %v9504 = vmax.f32 %v8418, 0.0
        %v9505 = vmax.f32 %v9433, 0.0
        %v9506 = vmax.f32 %v9435, 0.0
        %v9507 = vmax.f32 %v8422, 0.0
        %v9508 = vmax.f32 %v8424, 0.0
        %v9509 = vmax.f32 %v9439, 0.0
        %v9510 = vmax.f32 %v9441, 0.0
        %v9511 = vmax.f32 %v8426, 0.0
        %v9512 = vmax.f32 %v8428, 0.0
        %v9513 = vmax.f32 %v9443, 0.0
        %v9514 = vmax.f32 %v9445, 0.0
        %v9515 = vmax.f32 %v8432, 0.0
        %v9516 = vmax.f32 %v8434, 0.0
        %v9517 = vmax.f32 %v9449, 0.0
        %v9518 = vmax.f32 %v9451, 0.0
        %v9519 = vmax.f32 %v8436, 0.0
        %v9520 = vmax.f32 %v8438, 0.0
        %v9521 = vmax.f32 %v9453, 0.0
        %v9522 = vmax.f32 %v9455, 0.0
        %v9523 = vmax.f32 %v8442, 0.0
        %v9524 = vmax.f32 %v8444, 0.0
        %v9525 = vmax.f32 %v9459, 0.0
        %v9526 = vmax.f32 %v9461, 0.0
        %v9527 = vmax.f32 %v8446, 0.0
        %v9528 = vmax.f32 %v8448, 0.0
        %v9529 = vmax.f32 %v9463, 0.0
        %v9530 = vmax.f32 %v9465, 0.0
        %v9531 = vadd.f32 %v9467, %v9468
        %v9532 = vadd.f32 %v9531, %v9469
        %v9533 = vadd.f32 %v9532, %v9470
        %9534 = vadd.xlane.f32.xlu0 %v9533
        %v9535 = vpop.xlane.xlu0 %9534
        %v9536 = vadd.f32 %v9471, %v9472
        %v9537 = vadd.f32 %v9536, %v9473
        %v9538 = vadd.f32 %v9537, %v9474
        %9539 = vadd.xlane.f32.xlu0 %v9538
        %v9540 = vpop.xlane.xlu0 %9539
        %v9541 = vadd.f32 %v9475, %v9476
        %v9542 = vadd.f32 %v9541, %v9477
        %v9543 = vadd.f32 %v9542, %v9478
        %9544 = vadd.xlane.f32.xlu0 %v9543
        %v9545 = vpop.xlane.xlu0 %9544
        %v9546 = vadd.f32 %v9479, %v9480
        %v9547 = vadd.f32 %v9546, %v9481
        %v9548 = vadd.f32 %v9547, %v9482
        %9549 = vadd.xlane.f32.xlu0 %v9548
        %v9550 = vpop.xlane.xlu0 %9549
        %v9551 = vadd.f32 %v9483, %v9484
        %v9552 = vadd.f32 %v9551, %v9485
        %v9553 = vadd.f32 %v9552, %v9486
        %9554 = vadd.xlane.f32.xlu0 %v9553
        %v9555 = vpop.xlane.xlu0 %9554
        %v9556 = vadd.f32 %v9487, %v9488
        %v9557 = vadd.f32 %v9556, %v9489
        %v9558 = vadd.f32 %v9557, %v9490
        %9559 = vadd.xlane.f32.xlu0 %v9558
        %v9560 = vpop.xlane.xlu0 %9559
        %v9561 = vadd.f32 %v9491, %v9492
        %v9562 = vadd.f32 %v9561, %v9493
        %v9563 = vadd.f32 %v9562, %v9494
        %9564 = vadd.xlane.f32.xlu0 %v9563
        %v9565 = vpop.xlane.xlu0 %9564
        %v9566 = vadd.f32 %v9495, %v9496
        %v9567 = vadd.f32 %v9566, %v9497
        %v9568 = vadd.f32 %v9567, %v9498
        %9569 = vadd.xlane.f32.xlu0 %v9568
        %v9570 = vpop.xlane.xlu0 %9569
        %v9571 = vadd.f32 %v9499, %v9500
        %v9572 = vadd.f32 %v9571, %v9501
        %v9573 = vadd.f32 %v9572, %v9502
        %9574 = vadd.xlane.f32.xlu0 %v9573
        %v9575 = vpop.xlane.xlu0 %9574
        %v9576 = vadd.f32 %v9503, %v9504
        %v9577 = vadd.f32 %v9576, %v9505
        %v9578 = vadd.f32 %v9577, %v9506
        %9579 = vadd.xlane.f32.xlu0 %v9578
        %v9580 = vpop.xlane.xlu0 %9579
        %v9581 = vadd.f32 %v9507, %v9508
        %v9582 = vadd.f32 %v9581, %v9509
        %v9583 = vadd.f32 %v9582, %v9510
        %9584 = vadd.xlane.f32.xlu0 %v9583
        %v9585 = vpop.xlane.xlu0 %9584
        %v9586 = vadd.f32 %v9511, %v9512
        %v9587 = vadd.f32 %v9586, %v9513
        %v9588 = vadd.f32 %v9587, %v9514
        %9589 = vadd.xlane.f32.xlu0 %v9588
        %v9590 = vpop.xlane.xlu0 %9589
        %v9591 = vadd.f32 %v9515, %v9516
        %v9592 = vadd.f32 %v9591, %v9517
        %v9593 = vadd.f32 %v9592, %v9518
        %9594 = vadd.xlane.f32.xlu0 %v9593
        %v9595 = vpop.xlane.xlu0 %9594
        %v9596 = vadd.f32 %v9519, %v9520
        %v9597 = vadd.f32 %v9596, %v9521
        %v9598 = vadd.f32 %v9597, %v9522
        %9599 = vadd.xlane.f32.xlu0 %v9598
        %v9600 = vpop.xlane.xlu0 %9599
        %v9601 = vadd.f32 %v9523, %v9524
        %v9602 = vadd.f32 %v9601, %v9525
        %v9603 = vadd.f32 %v9602, %v9526
        %9604 = vadd.xlane.f32.xlu0 %v9603
        %v9605 = vpop.xlane.xlu0 %9604
        %v9606 = vadd.f32 %v9527, %v9528
        %v9607 = vadd.f32 %v9606, %v9529
        %v9608 = vadd.f32 %v9607, %v9530
        %9609 = vadd.xlane.f32.xlu0 %v9608
        %v9610 = vpop.xlane.xlu0 %9609
        %v9611 = vld [vmem:[#allocation4] sm:$0xff]
        %v9612 = vld [vmem:[#allocation4 + $0x8] sm:$0xff]
        %v9613 = vld [vmem:[#allocation4 + $0x10] sm:$0xff]
        %v9614 = vld [vmem:[#allocation4 + $0x18] sm:$0xff]
        %v9615 = vld [vmem:[#allocation4 + $0x20] sm:$0xff]
        %v9616 = vld [vmem:[#allocation4 + $0x28] sm:$0xff]
        %v9617 = vld [vmem:[#allocation4 + $0x30] sm:$0xff]
        %v9618 = vld [vmem:[#allocation4 + $0x38] sm:$0xff]
        %v9619 = vld [vmem:[#allocation4 + $0x40] sm:$0xff]
        %v9620 = vld [vmem:[#allocation4 + $0x48] sm:$0xff]
        %v9621 = vld [vmem:[#allocation4 + $0x50] sm:$0xff]
        %v9622 = vld [vmem:[#allocation4 + $0x58] sm:$0xff]
        %v9623 = vld [vmem:[#allocation4 + $0x60] sm:$0xff]
        %v9624 = vld [vmem:[#allocation4 + $0x68] sm:$0xff]
        %v9625 = vld [vmem:[#allocation4 + $0x70] sm:$0xff]
        %v9626 = vld [vmem:[#allocation4 + $0x78] sm:$0xff]
        %v9627 = vld [vmem:[#allocation4 + $0x80] sm:$0xff]
        %v9628 = vld [vmem:[#allocation4 + $0x88] sm:$0xff]
        %v9629 = vld [vmem:[#allocation4 + $0x90] sm:$0xff]
        %v9630 = vld [vmem:[#allocation4 + $0x98] sm:$0xff]
        %v9631 = vld [vmem:[#allocation4 + $0xa0] sm:$0xff]
        %v9632 = vld [vmem:[#allocation4 + $0xa8] sm:$0xff]
        %v9633 = vld [vmem:[#allocation4 + $0xb0] sm:$0xff]
        %v9634 = vld [vmem:[#allocation4 + $0xb8] sm:$0xff]
        %v9635 = vld [vmem:[#allocation4 + $0xc0] sm:$0xff]
        %v9636 = vld [vmem:[#allocation4 + $0xc8] sm:$0xff]
        %v9637 = vld [vmem:[#allocation4 + $0xd0] sm:$0xff]
        %v9638 = vld [vmem:[#allocation4 + $0xd8] sm:$0xff]
        %v9639 = vld [vmem:[#allocation4 + $0xe0] sm:$0xff]
        %v9640 = vld [vmem:[#allocation4 + $0xe8] sm:$0xff]
        %v9641 = vld [vmem:[#allocation4 + $0xf0] sm:$0xff]
        %v9642 = vld [vmem:[#allocation4 + $0xf8] sm:$0xff]
        %v9643 = vmul.f32 %v9611, %v9535
        %v9644 = vmul.f32 %v9612, %v9535
        %v9645 = vmul.f32 %v9613, %v9535
        %v9646 = vmul.f32 %v9614, %v9535
        %v9647 = vmul.f32 %v9615, %v9540
        %v9648 = vmul.f32 %v9616, %v9540
        %v9649 = vmul.f32 %v9617, %v9540
        %v9650 = vmul.f32 %v9618, %v9540
        %v9651 = vmul.f32 %v9619, %v9545
        %v9652 = vmul.f32 %v9620, %v9545
        %v9653 = vmul.f32 %v9621, %v9545
        %v9654 = vmul.f32 %v9622, %v9545
        %v9655 = vmul.f32 %v9623, %v9550
        %v9656 = vmul.f32 %v9624, %v9550
        %v9657 = vmul.f32 %v9625, %v9550
        %v9658 = vmul.f32 %v9626, %v9550
        %v9659 = vmul.f32 %v9627, %v9555
        %v9660 = vmul.f32 %v9628, %v9555
        %v9661 = vmul.f32 %v9629, %v9555
        %v9662 = vmul.f32 %v9630, %v9555
        %v9663 = vmul.f32 %v9631, %v9560
        %v9664 = vmul.f32 %v9632, %v9560
        %v9665 = vmul.f32 %v9633, %v9560
        %v9666 = vmul.f32 %v9634, %v9560
        %v9667 = vmul.f32 %v9635, %v9565
        %v9668 = vmul.f32 %v9636, %v9565
        %v9669 = vmul.f32 %v9637, %v9565
        %v9670 = vmul.f32 %v9638, %v9565
        %v9671 = vmul.f32 %v9639, %v9570
        %v9672 = vmul.f32 %v9640, %v9570
        %v9673 = vmul.f32 %v9641, %v9570
        %v9674 = vmul.f32 %v9642, %v9570
        %v9675 = vadd.f32 %v9643, %v9647
        %v9676 = vadd.f32 %v9675, %v9651
        %v9677 = vadd.f32 %v9676, %v9655
        %v9678 = vadd.f32 %v9677, %v9659
        %v9679 = vadd.f32 %v9678, %v9663
        %v9680 = vadd.f32 %v9679, %v9667
        %v9681 = vadd.f32 %v9680, %v9671
        %v9682 = vrot.slane %v9681, 4
        %v9683 = vadd.f32 %v9681, %v9682
        %v9684 = vrot.slane %v9683, 2
        %v9685 = vadd.f32 %v9683, %v9684
        %v9686 = vrot.slane %v9685, 1
        %v9687 = vadd.f32 %v9685, %v9686
        %v9688 = vadd.f32 %v9644, %v9648
        %v9689 = vadd.f32 %v9688, %v9652
        %v9690 = vadd.f32 %v9689, %v9656
        %v9691 = vadd.f32 %v9690, %v9660
        %v9692 = vadd.f32 %v9691, %v9664
        %v9693 = vadd.f32 %v9692, %v9668
        %v9694 = vadd.f32 %v9693, %v9672
        %v9695 = vrot.slane %v9694, 4
        %v9696 = vadd.f32 %v9694, %v9695
        %v9697 = vrot.slane %v9696, 2
        %v9698 = vadd.f32 %v9696, %v9697
        %v9699 = vrot.slane %v9698, 1
        %v9700 = vadd.f32 %v9698, %v9699
        %v9701 = vadd.f32 %v9645, %v9649
        %v9702 = vadd.f32 %v9701, %v9653
        %v9703 = vadd.f32 %v9702, %v9657
        %v9704 = vadd.f32 %v9703, %v9661
        %v9705 = vadd.f32 %v9704, %v9665
        %v9706 = vadd.f32 %v9705, %v9669
        %v9707 = vadd.f32 %v9706, %v9673
        %v9708 = vrot.slane %v9707, 4
        %v9709 = vadd.f32 %v9707, %v9708
        %v9710 = vrot.slane %v9709, 2
        %v9711 = vadd.f32 %v9709, %v9710
        %v9712 = vrot.slane %v9711, 1
        %v9713 = vadd.f32 %v9711, %v9712
        %v9714 = vadd.f32 %v9646, %v9650
        %v9715 = vadd.f32 %v9714, %v9654
        %v9716 = vadd.f32 %v9715, %v9658
        %v9717 = vadd.f32 %v9716, %v9662
        %v9718 = vadd.f32 %v9717, %v9666
        %v9719 = vadd.f32 %v9718, %v9670
        %v9720 = vadd.f32 %v9719, %v9674
        %v9721 = vrot.slane %v9720, 4
        %v9722 = vadd.f32 %v9720, %v9721
        %v9723 = vrot.slane %v9722, 2
        %v9724 = vadd.f32 %v9722, %v9723
        %v9725 = vrot.slane %v9724, 1
        %v9726 = vadd.f32 %v9724, %v9725
        %v9727 = vld [vmem:[#allocation4 + $0x100] sm:$0xff]
        %v9728 = vld [vmem:[#allocation4 + $0x108] sm:$0xff]
        %v9729 = vld [vmem:[#allocation4 + $0x110] sm:$0xff]
        %v9730 = vld [vmem:[#allocation4 + $0x118] sm:$0xff]
        %v9731 = vld [vmem:[#allocation4 + $0x120] sm:$0xff]
        %v9732 = vld [vmem:[#allocation4 + $0x128] sm:$0xff]
        %v9733 = vld [vmem:[#allocation4 + $0x130] sm:$0xff]
        %v9734 = vld [vmem:[#allocation4 + $0x138] sm:$0xff]
        %v9735 = vld [vmem:[#allocation4 + $0x140] sm:$0xff]
        %v9736 = vld [vmem:[#allocation4 + $0x148] sm:$0xff]
        %v9737 = vld [vmem:[#allocation4 + $0x150] sm:$0xff]
        %v9738 = vld [vmem:[#allocation4 + $0x158] sm:$0xff]
        %v9739 = vld [vmem:[#allocation4 + $0x160] sm:$0xff]
        %v9740 = vld [vmem:[#allocation4 + $0x168] sm:$0xff]
        %v9741 = vld [vmem:[#allocation4 + $0x170] sm:$0xff]
        %v9742 = vld [vmem:[#allocation4 + $0x178] sm:$0xff]
        %v9743 = vld [vmem:[#allocation4 + $0x180] sm:$0xff]
        %v9744 = vld [vmem:[#allocation4 + $0x188] sm:$0xff]
        %v9745 = vld [vmem:[#allocation4 + $0x190] sm:$0xff]
        %v9746 = vld [vmem:[#allocation4 + $0x198] sm:$0xff]
        %v9747 = vld [vmem:[#allocation4 + $0x1a0] sm:$0xff]
        %v9748 = vld [vmem:[#allocation4 + $0x1a8] sm:$0xff]
        %v9749 = vld [vmem:[#allocation4 + $0x1b0] sm:$0xff]
        %v9750 = vld [vmem:[#allocation4 + $0x1b8] sm:$0xff]
        %v9751 = vld [vmem:[#allocation4 + $0x1c0] sm:$0xff]
        %v9752 = vld [vmem:[#allocation4 + $0x1c8] sm:$0xff]
        %v9753 = vld [vmem:[#allocation4 + $0x1d0] sm:$0xff]
        %v9754 = vld [vmem:[#allocation4 + $0x1d8] sm:$0xff]
        %v9755 = vld [vmem:[#allocation4 + $0x1e0] sm:$0xff]
        %v9756 = vld [vmem:[#allocation4 + $0x1e8] sm:$0xff]
        %v9757 = vld [vmem:[#allocation4 + $0x1f0] sm:$0xff]
        %v9758 = vld [vmem:[#allocation4 + $0x1f8] sm:$0xff]
        %v9759 = vmul.f32 %v9727, %v9575
        %v9760 = vmul.f32 %v9728, %v9575
        %v9761 = vmul.f32 %v9729, %v9575
        %v9762 = vmul.f32 %v9730, %v9575
        %v9763 = vmul.f32 %v9731, %v9580
        %v9764 = vmul.f32 %v9732, %v9580
        %v9765 = vmul.f32 %v9733, %v9580
        %v9766 = vmul.f32 %v9734, %v9580
        %v9767 = vmul.f32 %v9735, %v9585
        %v9768 = vmul.f32 %v9736, %v9585
        %v9769 = vmul.f32 %v9737, %v9585
        %v9770 = vmul.f32 %v9738, %v9585
        %v9771 = vmul.f32 %v9739, %v9590
        %v9772 = vmul.f32 %v9740, %v9590
        %v9773 = vmul.f32 %v9741, %v9590
        %v9774 = vmul.f32 %v9742, %v9590
        %v9775 = vmul.f32 %v9743, %v9595
        %v9776 = vmul.f32 %v9744, %v9595
        %v9777 = vmul.f32 %v9745, %v9595
        %v9778 = vmul.f32 %v9746, %v9595
        %v9779 = vmul.f32 %v9747, %v9600
        %v9780 = vmul.f32 %v9748, %v9600
        %v9781 = vmul.f32 %v9749, %v9600
        %v9782 = vmul.f32 %v9750, %v9600
        %v9783 = vmul.f32 %v9751, %v9605
        %v9784 = vmul.f32 %v9752, %v9605
        %v9785 = vmul.f32 %v9753, %v9605
        %v9786 = vmul.f32 %v9754, %v9605
        %v9787 = vmul.f32 %v9755, %v9610
        %v9788 = vmul.f32 %v9756, %v9610
        %v9789 = vmul.f32 %v9757, %v9610
        %v9790 = vmul.f32 %v9758, %v9610
        %v9791 = vadd.f32 %v9759, %v9763
        %v9792 = vadd.f32 %v9791, %v9767
        %v9793 = vadd.f32 %v9792, %v9771
        %v9794 = vadd.f32 %v9793, %v9775
        %v9795 = vadd.f32 %v9794, %v9779
        %v9796 = vadd.f32 %v9795, %v9783
        %v9797 = vadd.f32 %v9796, %v9787
        %v9798 = vrot.slane %v9797, 4
        %v9799 = vadd.f32 %v9797, %v9798
        %v9800 = vrot.slane %v9799, 2
        %v9801 = vadd.f32 %v9799, %v9800
        %v9802 = vrot.slane %v9801, 1
        %v9803 = vadd.f32 %v9801, %v9802
        %v9804 = vadd.f32 %v9760, %v9764
        %v9805 = vadd.f32 %v9804, %v9768
        %v9806 = vadd.f32 %v9805, %v9772
        %v9807 = vadd.f32 %v9806, %v9776
        %v9808 = vadd.f32 %v9807, %v9780
        %v9809 = vadd.f32 %v9808, %v9784
        %v9810 = vadd.f32 %v9809, %v9788
        %v9811 = vrot.slane %v9810, 4
        %v9812 = vadd.f32 %v9810, %v9811
        %v9813 = vrot.slane %v9812, 2
        %v9814 = vadd.f32 %v9812, %v9813
        %v9815 = vrot.slane %v9814, 1
        %v9816 = vadd.f32 %v9814, %v9815
        %v9817 = vadd.f32 %v9761, %v9765
        %v9818 = vadd.f32 %v9817, %v9769
        %v9819 = vadd.f32 %v9818, %v9773
        %v9820 = vadd.f32 %v9819, %v9777
        %v9821 = vadd.f32 %v9820, %v9781
        %v9822 = vadd.f32 %v9821, %v9785
        %v9823 = vadd.f32 %v9822, %v9789
        %v9824 = vrot.slane %v9823, 4
        %v9825 = vadd.f32 %v9823, %v9824
        %v9826 = vrot.slane %v9825, 2
        %v9827 = vadd.f32 %v9825, %v9826
        %v9828 = vrot.slane %v9827, 1
        %v9829 = vadd.f32 %v9827, %v9828
        %v9830 = vadd.f32 %v9762, %v9766
        %v9831 = vadd.f32 %v9830, %v9770
        %v9832 = vadd.f32 %v9831, %v9774
        %v9833 = vadd.f32 %v9832, %v9778
        %v9834 = vadd.f32 %v9833, %v9782
        %v9835 = vadd.f32 %v9834, %v9786
        %v9836 = vadd.f32 %v9835, %v9790
        %v9837 = vrot.slane %v9836, 4
        %v9838 = vadd.f32 %v9836, %v9837
        %v9839 = vrot.slane %v9838, 2
        %v9840 = vadd.f32 %v9838, %v9839
        %v9841 = vrot.slane %v9840, 1
        %v9842 = vadd.f32 %v9840, %v9841
        %vm9843 = vcmask 1040384
        %v9844 = vsel %vm9843, %v9687, %v9803
        %v9845 = vsel %vm9843, %v9700, %v9816
        %v9846 = vsel %vm9843, %v9713, %v9829
        %v9847 = vsel %vm9843, %v9726, %v9842
        %v9848 = vmul.f32 %v9844, 0.015625
        %v9849 = vmul.f32 %v9845, 0.015625
        %v9850 = vmul.f32 %v9846, 0.015625
        %v9851 = vmul.f32 %v9847, 0.015625
        %v9852 = vld [vmem:[%s307] sm:$0xff]
        %v9853 = vld [vmem:[%s307 + $0x8] sm:$0xff]
        %v9854 = vld [vmem:[%s307 + $0x10] sm:$0xff]
        %v9855 = vld [vmem:[%s307 + $0x18] sm:$0xff]
        %v9856 = vld [vmem:[%s307 + $0x20] sm:$0xff]
        %v9857 = vld [vmem:[%s307 + $0x28] sm:$0xff]
        %v9858 = vld [vmem:[%s307 + $0x30] sm:$0xff]
        %v9859 = vld [vmem:[%s307 + $0x38] sm:$0xff]
        %v9860 = vld [vmem:[%s307 + $0x40] sm:$0xff]
        %v9861 = vld [vmem:[%s307 + $0x48] sm:$0xff]
        %v9862 = vld [vmem:[%s307 + $0x50] sm:$0xff]
        %v9863 = vld [vmem:[%s307 + $0x58] sm:$0xff]
        %v9864 = vld [vmem:[%s307 + $0x60] sm:$0xff]
        %v9865 = vld [vmem:[%s307 + $0x68] sm:$0xff]
        %v9866 = vld [vmem:[%s307 + $0x70] sm:$0xff]
        %v9867 = vld [vmem:[%s307 + $0x78] sm:$0xff]
        %v9868 = vld [vmem:[%s307 + $0x80] sm:$0xff]
        %v9869 = vld [vmem:[%s307 + $0x88] sm:$0xff]
        %v9870 = vld [vmem:[%s307 + $0x90] sm:$0xff]
        %v9871 = vld [vmem:[%s307 + $0x98] sm:$0xff]
        %v9872 = vld [vmem:[%s307 + $0xa0] sm:$0xff]
        %v9873 = vld [vmem:[%s307 + $0xa8] sm:$0xff]
        %v9874 = vld [vmem:[%s307 + $0xb0] sm:$0xff]
        %v9875 = vld [vmem:[%s307 + $0xb8] sm:$0xff]
        %v9876 = vld [vmem:[%s307 + $0xc0] sm:$0xff]
        %v9877 = vld [vmem:[%s307 + $0xc8] sm:$0xff]
        %v9878 = vld [vmem:[%s307 + $0xd0] sm:$0xff]
        %v9879 = vld [vmem:[%s307 + $0xd8] sm:$0xff]
        %v9880 = vld [vmem:[%s307 + $0xe0] sm:$0xff]
        %v9881 = vld [vmem:[%s307 + $0xe8] sm:$0xff]
        %v9882 = vld [vmem:[%s307 + $0xf0] sm:$0xff]
        %v9883 = vld [vmem:[%s307 + $0xf8] sm:$0xff]
        %v9884 = vld [vmem:[%s307 + $0x102] ss:$0 sm:$0xff]
        %s9885 = scalar_lea.vmem %s307, 259 [#allocation11]
        %v9886 = vld [vmem:[%s9885] ss:$8 sm:$0xf]
        %9887 = vmatprep.subr.mxu0 0.0
        %9888 = vmatpush1.xpose.msra.mxu0 0.0
        %9889 = vmatprep.subr.mxu0 0.0
        %9890 = vmatpush1.xpose.msra.mxu0 0.0
        %9891 = vmatprep.subr.mxu0 0.0
        %9892 = vmatpush1.xpose.msra.mxu0 0.0
        %9893 = vmatprep.subr.mxu0 0.0
        %9894 = vmatpush1.xpose.msra.mxu0 0.0
        %9895 = vmatprep.subr.mxu0 0.0
        %9896 = vmatpush1.xpose.msra.mxu0 0.0
        %9897 = vmatprep.subr.mxu0 0.0
        %9898 = vmatpush1.xpose.msra.mxu0 0.0
        %9899 = vmatprep.subr.mxu0 0.0
        %9900 = vmatpush1.xpose.msra.mxu0 0.0
        %9901 = vmatprep.subr.mxu0 0.0
        %9902 = vmatpush1.xpose.msra.mxu0 0.0
        %9903 = vmatprep.subr.mxu0 0.0
        %9904 = vmatpush1.xpose.msra.mxu0 0.0
        %9905 = vmatprep.subr.mxu0 0.0
        %9906 = vmatpush1.xpose.msra.mxu0 0.0
        %9907 = vmatprep.subr.mxu0 0.0
        %9908 = vmatpush1.xpose.msra.mxu0 0.0
        %9909 = vmatprep.subr.mxu0 0.0
        %9910 = vmatpush1.xpose.msra.mxu0 0.0
        %9911 = vmatprep.subr.mxu0 %v9865
        %9912 = vmatpush1.xpose.msra.mxu0 %v9864
        %9913 = vmatprep.subr.mxu0 %v9861
        %9914 = vmatpush1.xpose.msra.mxu0 %v9860
        %9915 = vmatprep.subr.mxu0 %v9857
        %9916 = vmatpush1.xpose.msra.mxu0 %v9856
        %9917 = vmatprep.subr.mxu0 %v9853
        %9918 = vmatpush1.xpose.msra.mxu0 %v9852
        %9919 = vmatprep.subr.mxu0 0.0
        %9920 = vmatpush2.xpose.msra.mxu0 0.0
        %9921 = vmatprep.subr.mxu0 0.0
        %9922 = vmatpush2.xpose.msra.mxu0 0.0
        %9923 = vmatprep.subr.mxu0 0.0
        %9924 = vmatpush2.xpose.msra.mxu0 0.0
        %9925 = vmatprep.subr.mxu0 0.0
        %9926 = vmatpush2.xpose.msra.mxu0 0.0
        %9927 = vmatprep.subr.mxu0 0.0
        %9928 = vmatpush2.xpose.msra.mxu0 0.0
        %9929 = vmatprep.subr.mxu0 0.0
        %9930 = vmatpush2.xpose.msra.mxu0 0.0
        %9931 = vmatprep.subr.mxu0 0.0
        %9932 = vmatpush2.xpose.msra.mxu0 0.0
        %9933 = vmatprep.subr.mxu0 0.0
        %9934 = vmatpush2.xpose.msra.mxu0 0.0
        %9935 = vmatprep.subr.mxu0 0.0
        %9936 = vmatpush2.xpose.msra.mxu0 0.0
        %9937 = vmatprep.subr.mxu0 0.0
        %9938 = vmatpush2.xpose.msra.mxu0 0.0
        %9939 = vmatprep.subr.mxu0 0.0
        %9940 = vmatpush2.xpose.msra.mxu0 0.0
        %9941 = vmatprep.subr.mxu0 0.0
        %9942 = vmatpush2.xpose.msra.mxu0 0.0
        %9943 = vmatprep.subr.mxu0 0.0
        %9944 = vmatpush2.xpose.msra.mxu0 0.0
        %9945 = vmatprep.subr.mxu0 0.0
        %9946 = vmatpush2.xpose.msra.mxu0 0.0
        %9947 = vmatprep.subr.mxu0 0.0
        %9948 = vmatpush2.xpose.msra.mxu0 0.0
        %9949 = vmatprep.subr.mxu0 0.0
        %9950 = vmatpush2.xpose.msra.mxu0 0.0
        %9951 = vmatprep.mubr.f32.mxu0 %v9849
        %9952 = vmatmul.mubr.f32.gmra.mxu0 %v9848
        %v9953 = vpop.f32.mrf.mxu0
        %v9954 = vadd.f32 %v9884, %v9953
        %v9955 = vpop.f32.mrf.mxu0
        %9956 = vdwg.mxu0
        %9957 = vmatprep.subr.mxu0 0.0
        %9958 = vmatpush1.xpose.msra.mxu0 0.0
        %9959 = vmatprep.subr.mxu0 0.0
        %9960 = vmatpush1.xpose.msra.mxu0 0.0
        %9961 = vmatprep.subr.mxu0 0.0
        %9962 = vmatpush1.xpose.msra.mxu0 0.0
        %9963 = vmatprep.subr.mxu0 0.0
        %9964 = vmatpush1.xpose.msra.mxu0 0.0
        %9965 = vmatprep.subr.mxu0 0.0
        %9966 = vmatpush1.xpose.msra.mxu0 0.0
        %9967 = vmatprep.subr.mxu0 0.0
        %9968 = vmatpush1.xpose.msra.mxu0 0.0
        %9969 = vmatprep.subr.mxu0 0.0
        %9970 = vmatpush1.xpose.msra.mxu0 0.0
        %9971 = vmatprep.subr.mxu0 0.0
        %9972 = vmatpush1.xpose.msra.mxu0 0.0
        %9973 = vmatprep.subr.mxu0 0.0
        %9974 = vmatpush1.xpose.msra.mxu0 0.0
        %9975 = vmatprep.subr.mxu0 0.0
        %9976 = vmatpush1.xpose.msra.mxu0 0.0
        %9977 = vmatprep.subr.mxu0 0.0
        %9978 = vmatpush1.xpose.msra.mxu0 0.0
        %9979 = vmatprep.subr.mxu0 0.0
        %9980 = vmatpush1.xpose.msra.mxu0 0.0
        %9981 = vmatprep.subr.mxu0 %v9867
        %9982 = vmatpush1.xpose.msra.mxu0 %v9866
        %9983 = vmatprep.subr.mxu0 %v9863
        %9984 = vmatpush1.xpose.msra.mxu0 %v9862
        %9985 = vmatprep.subr.mxu0 %v9859
        %9986 = vmatpush1.xpose.msra.mxu0 %v9858
        %9987 = vmatprep.subr.mxu0 %v9855
        %9988 = vmatpush1.xpose.msra.mxu0 %v9854
        %9989 = vmatprep.subr.mxu0 0.0
        %9990 = vmatpush2.xpose.msra.mxu0 0.0
        %9991 = vmatprep.subr.mxu0 0.0
        %9992 = vmatpush2.xpose.msra.mxu0 0.0
        %9993 = vmatprep.subr.mxu0 0.0
        %9994 = vmatpush2.xpose.msra.mxu0 0.0
        %9995 = vmatprep.subr.mxu0 0.0
        %9996 = vmatpush2.xpose.msra.mxu0 0.0
        %9997 = vmatprep.subr.mxu0 0.0
        %9998 = vmatpush2.xpose.msra.mxu0 0.0
        %9999 = vmatprep.subr.mxu0 0.0
        %10000 = vmatpush2.xpose.msra.mxu0 0.0
        %10001 = vmatprep.subr.mxu0 0.0
        %10002 = vmatpush2.xpose.msra.mxu0 0.0
        %10003 = vmatprep.subr.mxu0 0.0
        %10004 = vmatpush2.xpose.msra.mxu0 0.0
        %10005 = vmatprep.subr.mxu0 0.0
        %10006 = vmatpush2.xpose.msra.mxu0 0.0
        %10007 = vmatprep.subr.mxu0 0.0
        %10008 = vmatpush2.xpose.msra.mxu0 0.0
        %10009 = vmatprep.subr.mxu0 0.0
        %10010 = vmatpush2.xpose.msra.mxu0 0.0
        %10011 = vmatprep.subr.mxu0 0.0
        %10012 = vmatpush2.xpose.msra.mxu0 0.0
        %10013 = vmatprep.subr.mxu0 0.0
        %10014 = vmatpush2.xpose.msra.mxu0 0.0
        %10015 = vmatprep.subr.mxu0 0.0
        %10016 = vmatpush2.xpose.msra.mxu0 0.0
        %10017 = vmatprep.subr.mxu0 0.0
        %10018 = vmatpush2.xpose.msra.mxu0 0.0
        %10019 = vmatprep.subr.mxu0 0.0
        %10020 = vmatpush2.xpose.msra.mxu0 0.0
        %10021 = vmatprep.mubr.f32.mxu0 %v9851
        %10022 = vmatmul.mubr.f32.gmra.mxu0 %v9850
        %v10023 = vpop.f32.mrf.mxu0
        %v10024 = vadd.f32 %v9954, %v10023
        %v10025 = vpop.f32.mrf.mxu0
        %10026 = vdwg.mxu0
        %v10027 = vmax.f32 %v10024, 0.0
        %v10029 = vlaneseq
        %v10030 = vshrl.u32 %v10029, 7
        %v10031 = vsub.s32 0, %v10030
        %v10032 = vrot.slane %v9886, %v10031
        %v10033 = vlaneseq
        %v10034 = vshrl.u32 %v10033, 7
        %v10035 = vsub.s32 1, %v10034
        %v10036 = vrot.slane %v9886, %v10035
        %v10037 = vlaneseq
        %v10038 = vshrl.u32 %v10037, 7
        %v10039 = vsub.s32 2, %v10038
        %v10040 = vrot.slane %v9886, %v10039
        %v10041 = vlaneseq
        %v10042 = vshrl.u32 %v10041, 7
        %v10043 = vsub.s32 3, %v10042
        %v10044 = vrot.slane %v9886, %v10043
        %vm10049 = vcmask 261120
        %v10051 = vsel %vm10049, %v10027, 0
        %10053 = vmatprep.subr.mxu0 0.0
        %10054 = vmatpush1.msra.mxu0 0.0
        %10055 = vmatprep.subr.mxu0 0.0
        %10056 = vmatpush1.msra.mxu0 0.0
        %10057 = vmatprep.subr.mxu0 0.0
        %10058 = vmatpush1.msra.mxu0 0.0
        %10059 = vmatprep.subr.mxu0 0.0
        %10060 = vmatpush1.msra.mxu0 0.0
        %10061 = vmatprep.subr.mxu0 0.0
        %10062 = vmatpush1.msra.mxu0 0.0
        %10063 = vmatprep.subr.mxu0 0.0
        %10064 = vmatpush1.msra.mxu0 0.0
        %10065 = vmatprep.subr.mxu0 0.0
        %10066 = vmatpush1.msra.mxu0 0.0
        %10067 = vmatprep.subr.mxu0 0.0
        %10068 = vmatpush1.msra.mxu0 0.0
        %10069 = vmatprep.subr.mxu0 0.0
        %10070 = vmatpush1.msra.mxu0 0.0
        %10071 = vmatprep.subr.mxu0 0.0
        %10072 = vmatpush1.msra.mxu0 0.0
        %10073 = vmatprep.subr.mxu0 0.0
        %10074 = vmatpush1.msra.mxu0 0.0
        %10075 = vmatprep.subr.mxu0 0.0
        %10076 = vmatpush1.msra.mxu0 0.0
        %10077 = vmatprep.subr.mxu0 %v9881
        %10078 = vmatpush1.msra.mxu0 %v9880
        %10079 = vmatprep.subr.mxu0 %v9877
        %10080 = vmatpush1.msra.mxu0 %v9876
        %10081 = vmatprep.subr.mxu0 %v9873
        %10082 = vmatpush1.msra.mxu0 %v9872
        %10083 = vmatprep.subr.mxu0 %v9869
        %10084 = vmatpush1.msra.mxu0 %v9868
        %10085 = vmatprep.subr.mxu0 0.0
        %10086 = vmatpush2.msra.mxu0 0.0
        %10087 = vmatprep.subr.mxu0 0.0
        %10088 = vmatpush2.msra.mxu0 0.0
        %10089 = vmatprep.subr.mxu0 0.0
        %10090 = vmatpush2.msra.mxu0 0.0
        %10091 = vmatprep.subr.mxu0 0.0
        %10092 = vmatpush2.msra.mxu0 0.0
        %10093 = vmatprep.subr.mxu0 0.0
        %10094 = vmatpush2.msra.mxu0 0.0
        %10095 = vmatprep.subr.mxu0 0.0
        %10096 = vmatpush2.msra.mxu0 0.0
        %10097 = vmatprep.subr.mxu0 0.0
        %10098 = vmatpush2.msra.mxu0 0.0
        %10099 = vmatprep.subr.mxu0 0.0
        %10100 = vmatpush2.msra.mxu0 0.0
        %10101 = vmatprep.subr.mxu0 0.0
        %10102 = vmatpush2.msra.mxu0 0.0
        %10103 = vmatprep.subr.mxu0 0.0
        %10104 = vmatpush2.msra.mxu0 0.0
        %10105 = vmatprep.subr.mxu0 0.0
        %10106 = vmatpush2.msra.mxu0 0.0
        %10107 = vmatprep.subr.mxu0 0.0
        %10108 = vmatpush2.msra.mxu0 0.0
        %10109 = vmatprep.subr.mxu0 0.0
        %10110 = vmatpush2.msra.mxu0 0.0
        %10111 = vmatprep.subr.mxu0 0.0
        %10112 = vmatpush2.msra.mxu0 0.0
        %10113 = vmatprep.subr.mxu0 0.0
        %10114 = vmatpush2.msra.mxu0 0.0
        %10115 = vmatprep.subr.mxu0 0.0
        %10116 = vmatpush2.msra.mxu0 0.0
        %10117 = vmatprep.mubr.f32.mxu0 0.0
        %10118 = vmatmul.mubr.f32.gmra.mxu0 %v10051
        %v10119 = vpop.f32.mrf.mxu0
        %v10120 = vadd.f32 %v10032, %v10119
        %v10121 = vpop.f32.mrf.mxu0
        %v10122 = vadd.f32 %v10036, %v10121
        %10123 = vdwg.mxu0
        %10124 = vmatprep.subr.mxu0 0.0
        %10125 = vmatpush1.msra.mxu0 0.0
        %10126 = vmatprep.subr.mxu0 0.0
        %10127 = vmatpush1.msra.mxu0 0.0
        %10128 = vmatprep.subr.mxu0 0.0
        %10129 = vmatpush1.msra.mxu0 0.0
        %10130 = vmatprep.subr.mxu0 0.0
        %10131 = vmatpush1.msra.mxu0 0.0
        %10132 = vmatprep.subr.mxu0 0.0
        %10133 = vmatpush1.msra.mxu0 0.0
        %10134 = vmatprep.subr.mxu0 0.0
        %10135 = vmatpush1.msra.mxu0 0.0
        %10136 = vmatprep.subr.mxu0 0.0
        %10137 = vmatpush1.msra.mxu0 0.0
        %10138 = vmatprep.subr.mxu0 0.0
        %10139 = vmatpush1.msra.mxu0 0.0
        %10140 = vmatprep.subr.mxu0 0.0
        %10141 = vmatpush1.msra.mxu0 0.0
        %10142 = vmatprep.subr.mxu0 0.0
        %10143 = vmatpush1.msra.mxu0 0.0
        %10144 = vmatprep.subr.mxu0 0.0
        %10145 = vmatpush1.msra.mxu0 0.0
        %10146 = vmatprep.subr.mxu0 0.0
        %10147 = vmatpush1.msra.mxu0 0.0
        %10148 = vmatprep.subr.mxu0 %v9883
        %10149 = vmatpush1.msra.mxu0 %v9882
        %10150 = vmatprep.subr.mxu0 %v9879
        %10151 = vmatpush1.msra.mxu0 %v9878
        %10152 = vmatprep.subr.mxu0 %v9875
        %10153 = vmatpush1.msra.mxu0 %v9874
        %10154 = vmatprep.subr.mxu0 %v9871
        %10155 = vmatpush1.msra.mxu0 %v9870
        %10156 = vmatprep.subr.mxu0 0.0
        %10157 = vmatpush2.msra.mxu0 0.0
        %10158 = vmatprep.subr.mxu0 0.0
        %10159 = vmatpush2.msra.mxu0 0.0
        %10160 = vmatprep.subr.mxu0 0.0
        %10161 = vmatpush2.msra.mxu0 0.0
        %10162 = vmatprep.subr.mxu0 0.0
        %10163 = vmatpush2.msra.mxu0 0.0
        %10164 = vmatprep.subr.mxu0 0.0
        %10165 = vmatpush2.msra.mxu0 0.0
        %10166 = vmatprep.subr.mxu0 0.0
        %10167 = vmatpush2.msra.mxu0 0.0
        %10168 = vmatprep.subr.mxu0 0.0
        %10169 = vmatpush2.msra.mxu0 0.0
        %10170 = vmatprep.subr.mxu0 0.0
        %10171 = vmatpush2.msra.mxu0 0.0
        %10172 = vmatprep.subr.mxu0 0.0
        %10173 = vmatpush2.msra.mxu0 0.0
        %10174 = vmatprep.subr.mxu0 0.0
        %10175 = vmatpush2.msra.mxu0 0.0
        %10176 = vmatprep.subr.mxu0 0.0
        %10177 = vmatpush2.msra.mxu0 0.0
        %10178 = vmatprep.subr.mxu0 0.0
        %10179 = vmatpush2.msra.mxu0 0.0
        %10180 = vmatprep.subr.mxu0 0.0
        %10181 = vmatpush2.msra.mxu0 0.0
        %10182 = vmatprep.subr.mxu0 0.0
        %10183 = vmatpush2.msra.mxu0 0.0
        %10184 = vmatprep.subr.mxu0 0.0
        %10185 = vmatpush2.msra.mxu0 0.0
        %10186 = vmatprep.subr.mxu0 0.0
        %10187 = vmatpush2.msra.mxu0 0.0
        %10188 = vmatprep.mubr.f32.mxu0 0.0
        %10189 = vmatmul.mubr.f32.gmra.mxu0 %v10051
        %v10190 = vpop.f32.mrf.mxu0
        %v10191 = vadd.f32 %v10040, %v10190
        %v10192 = vpop.f32.mrf.mxu0
        %v10193 = vadd.f32 %v10044, %v10192
        %10194 = vdwg.mxu0
        %v10195 = vsub.f32 0.0, %v10120
        %v10196 = vsub.f32 0.0, %v10122
        %v10197 = vsub.f32 0.0, %v10191
        %v10198 = vsub.f32 0.0, %v10193
        %v10199 = vmul.f32 %v10195, 1.442695
        %v10200 = vpow.pop %v10199
        %v10201 = vmul.f32 %v10196, 1.442695
        %v10202 = vpow.pop %v10201
        %v10203 = vmul.f32 %v10197, 1.442695
        %v10204 = vpow.pop %v10203
        %v10205 = vmul.f32 %v10198, 1.442695
        %v10206 = vpow.pop %v10205
        %v10207 = vadd.f32 %v10200, 1.0
        %v10208 = vadd.f32 %v10202, 1.0
        %v10209 = vadd.f32 %v10204, 1.0
        %v10210 = vadd.f32 %v10206, 1.0
        %v10211 = vrcp.pop %v10207
        %v10212 = vmul.f32 1.0, %v10211
        %v10213 = vrcp.pop %v10208
        %v10214 = vmul.f32 1.0, %v10213
        %v10215 = vrcp.pop %v10209
        %v10216 = vmul.f32 1.0, %v10215
        %v10217 = vrcp.pop %v10210
        %v10218 = vmul.f32 1.0, %v10217
        %v10219 = vmul.f32 %v9848, %v10212
        %v10220 = vmul.f32 %v9849, %v10214
        %v10221 = vmul.f32 %v9850, %v10216
        %v10222 = vmul.f32 %v9851, %v10218
        %v10227 = vcombine.low %v10219, %v10220
        %v10228 = vcombine.low %v10221, %v10222
        %v10230 = vunpack.c.l.s4 1983009808
        %v10231 = vunpack.c.0.s8 %v10230
        %v10232 = vlaneseq
        %v10233 = vshrl.u32 %v10232, 7
        %v10234 = vsub.s32 %v10231, %v10233
        %v10235 = vrot.slane %v10227, %v10234
        %v10237 = vunpack.c.l.s4 1983009808
        %v10238 = vunpack.c.0.s8 %v10237
        %v10239 = vlaneseq
        %v10240 = vshrl.u32 %v10239, 7
        %v10241 = vsub.s32 %v10238, %v10240
        %v10242 = vrot.slane %v10228, %v10241
        %v10243 = vcombine.low %v10235, %v10242
        %10245 = vst [vmem:[%s343] sm:$0xff] %v10243
        %s10246 = sand.u32 %s149, 1
        %s10247 = scalar_lea.sflag [#allocation6], %s10246
        %s10248 = sand.u32 %s149, 1
        %s10249 = smul.addr %s10248, 8
        %s10250 = scalar_lea.vmem [#allocation12], %s10249
        // Predicated region
        $region61: #{tpu_custom_call.1} parent=39 // pred_check
          %p10251 = pneg %p159
        $region62: #{tpu_custom_call.1} parent=39 // pred_check_branch
          %10253 = sbr.rel (%p10251) target = $region64
        $region63: #{tpu_custom_call.1} parent=39 // pred_region
          %s10255 = ssub.s32 128, 128
          %10256 = vsyncadd %s10247, %s10255
          %s10257 = smul.addr %s21, 4
          %s10258 = smul.addr %s10257, 32
          %s10259 = scalar_lea.hbm %s5, %s10258
          %s10261 = sshll.u32 %s10250, 4
          %s10262 = int_to_ptr.vmem [resolvable:$true] %s10261
          %10264 = dma.vmem_to_hbm [thread:$0]  %s10262, 128, %s10259, %s10247
        $region64: #{tpu_custom_call.1} parent=39 // pred_fallthru
          _
      $region40: #{tpu_custom_call.1} parent=5 // pred_fallthru
        _
      %p10265 = scmp.le.s32.totalorder 2, %s16
      // Predicated region
      $region65: #{tpu_custom_call.1} parent=5 // pred_check
        %p10266 = pneg %p10265
      $region66: #{tpu_custom_call.1} parent=5 // pred_check_branch
        %10268 = sbr.rel (%p10266) target = $region68
      $region67: #{tpu_custom_call.1} parent=5 // pred_region
        %s10269 = ssub.s32 %s16, 2
        // Predicated region
        $region69: #{tpu_custom_call.1} parent=67 // pred_check
          %p10270 = pneg %p165
        $region70: #{tpu_custom_call.1} parent=67 // pred_check_branch
          %10272 = sbr.rel (%p10270) target = $region72
        $region71: #{tpu_custom_call.1} parent=67 // pred_region
          %s10273 = sand.u32 %s150, 1
          %s10274 = scalar_lea.sflag [#allocation6], %s10273
          %s10275 = sand.u32 %s150, 1
          %s10276 = smul.addr %s10275, 8
          %s10277 = scalar_lea.vmem [#allocation12], %s10276
          %10278 = dma.done %s10274, 128
        $region72: #{tpu_custom_call.1} parent=67 // pred_fallthru
          _
      $region68: #{tpu_custom_call.1} parent=5 // pred_fallthru
        _
    $region6: #{tpu_custom_call.1} parent=1 // loop_footer
      %s20 = sadd.s32 1, %s16
    $region7: #{tpu_custom_call.1} parent=1 // loop_footer_branch
      %15 = sbr.rel target = $region3
    $region8: #{tpu_custom_call.1} parent=1 // loop_exit
      _
    %10279 = vsyncpa [#allocation5], 1
    %s10280 = scalar_lea.sflag [#allocation5], 1
    %10281 = vsyncpa %s10280, 1
    %10282 = vsyncpa [#allocation8], 1
    %10283 = vsyncpa [#allocation6], 1
    %s10284 = scalar_lea.sflag [#allocation6], 1
    %10285 = vsyncpa %s10284, 1

</llo_original>
